<compile_context>
chip_gen: v5e
topology: v5e:2x2
jax: 0.10.0
libtpu: 0.0.40
codegen_flags: <defaults>
</compile_context>

<pallas_src>
import functools

import numpy as np

import jax
import jax.numpy as jnp
from jax import lax
from jax.experimental import pallas as pl
from jax.experimental.pallas import tpu as pltpu

LANES = 128
CHUNK = 8            # sublane rows per inner iteration: one (8,128) vreg per quantity
MAX_TILE_ROWS = 256  # rows per grid step; ~20 MiB double-buffered -> safe on v7x 64 MiB


# ---------------------------------------------------------------------------
# Pallas kernel: full history filter + open-loop prediction for one batch tile
# ---------------------------------------------------------------------------
def _kalman_cv_kernel(q_ref, r_ref, pdiag_ref, z_ref, out_ref, *, dt, chunk):
    # q_ref    : SMEM (16,) flattened process-noise Q (4x4, symmetric)
    # r_ref    : SMEM (3,)  measurement-noise upper triangle [R00, R01, R11]
    # pdiag_ref: SMEM (4,)  initial covariance diagonal
    # z_ref    : VMEM (seq_len, 2, rows, 128) packed measurements (x plane, y plane)
    # out_ref  : VMEM (len_pred, 5, rows, 128), channels [mu_x, mu_y, sx, sy, rho]
    seq_len = z_ref.shape[0]
    len_pred = out_ref.shape[0]
    rows, lanes = z_ref.shape[2], z_ref.shape[3]

    dtf = jnp.float32(dt)
    inv_dt = jnp.float32(1.0 / float(dt))
    zero = jnp.zeros((chunk, lanes), jnp.float32)

    # ---- hoisted SMEM-scalar -> vreg broadcasts (reused by every chunk/step) ----
    Qv = {(i, j): zero + q_ref[4 * i + j] for i in range(4) for j in range(i, 4)}
    R00 = zero + r_ref[0]
    R01 = zero + r_ref[1]          # == R10 (R symmetric)
    R11 = zero + r_ref[2]
    P0d = [zero + pdiag_ref[i] for i in range(4)]

    def p_get(P, i, j):
        # P carries only the upper triangle (symmetric throughout).
        return P[(i, j)] if i <= j else P[(j, i)]

    def kalman_pred(X, P):
        # X_pred = F X with F = I + dt on (0,1) and (2,3)
        Xn = [X[0] + dtf * X[1], X[1], X[2] + dtf * X[3], X[3]]

        def fp(i, j):                     # (F @ P)[i][j]
            if i == 0:
                return p_get(P, 0, j) + dtf * p_get(P, 1, j)
            if i == 2:
                return p_get(P, 2, j) + dtf * p_get(P, 3, j)
            return p_get(P, i, j)

        Pn = {}
        for i in range(4):
            for j in range(i, 4):
                if j == 0:
                    v = fp(i, 0) + dtf * fp(i, 1)
                elif j == 2:
                    v = fp(i, 2) + dtf * fp(i, 3)
                else:
                    v = fp(i, j)
                Pn[(i, j)] = v + Qv[(i, j)]
        return Xn, Pn

    def kalman_step(X, P, zx, zy):
        X, P = kalman_pred(X, P)

        # innovation: H picks state rows 0 and 2; S is symmetric (S01 == S10)
        y0 = zx - X[0]
        y1 = zy - X[2]
        S00 = P[(0, 0)] + R00
        S01 = P[(0, 2)] + R01
        S11 = P[(2, 2)] + R11

        # K = (P H^T) S^{-1} via closed-form symmetric 2x2 inverse.
        # Reciprocal on the EUP slot (free) + one Newton step for f32 accuracy.
        det = S00 * S11 - S01 * S01
        r0 = pl.reciprocal(det, approx=True)
        inv_det = r0 * (2.0 - det * r0)
        K = []
        for i in range(4):
            pi0 = p_get(P, i, 0)
            pi2 = p_get(P, i, 2)
            K.append(((pi0 * S11 - pi2 * S01) * inv_det,
                      (pi2 * S00 - pi0 * S01) * inv_det))

        # state update
        Xn = [X[i] + K[i][0] * y0 + K[i][1] * y1 for i in range(4)]

        # Joseph-form covariance update exploiting H structure + P/R symmetry:
        #   M  = (I - K H) P   -> M[i][j] = P[i][j] - K[i][0] P[0][j] - K[i][1] P[2][j]
        #   Pn = M (I - K H)^T + K R K^T
        m_idx = [(i, j) for i in range(4) for j in range(i, 4)]
        m_idx += [(1, 0), (2, 0), (3, 0), (3, 2)]
        M = {(i, j): (p_get(P, i, j)
                      - K[i][0] * p_get(P, 0, j)
                      - K[i][1] * p_get(P, 2, j)) for (i, j) in m_idx}
        KR0 = [K[i][0] * R00 + K[i][1] * R01 for i in range(4)]
        KR1 = [K[i][0] * R01 + K[i][1] * R11 for i in range(4)]
        Pn = {}
        for i in range(4):
            for j in range(i, 4):
                Pn[(i, j)] = (M[(i, j)]
                              - M[(i, 0)] * K[j][0] - M[(i, 2)] * K[j][1]
                              + KR0[i] * K[j][0] + KR1[i] * K[j][1])
        return Xn, Pn

    def process_chunk(row0):
        # ---- Kalman init from first two measurements -------------------------
        z0x = z_ref[0, 0, pl.ds(row0, chunk), :]
        z0y = z_ref[0, 1, pl.ds(row0, chunk), :]
        z1x = z_ref[1, 0, pl.ds(row0, chunk), :]
        z1y = z_ref[1, 1, pl.ds(row0, chunk), :]
        X = [z0x, (z1x - z0x) * inv_dt, z0y, (z1y - z0y) * inv_dt]
        P = {(i, j): (P0d[i] if i == j else zero)
             for i in range(4) for j in range(i, 4)}

        # ---- history filter (tiny trip counts -> full unroll) ----------------
        # TODO(synk): for non-toy seq_len/len_pred carry (X, P-upper-tri) through
        # lax.fori_loop instead of Python-unrolling the time loops.
        for t in range(1, seq_len):
            zx = z_ref[t, 0, pl.ds(row0, chunk), :]
            zy = z_ref[t, 1, pl.ds(row0, chunk), :]
            X, P = kalman_step(X, P, zx, zy)

        # ---- open-loop prediction: per-channel aligned tile stores -----------
        for t in range(len_pred):
            X, P = kalman_pred(X, P)
            sx = jnp.sqrt(P[(0, 0)])
            sy = jnp.sqrt(P[(2, 2)])
            rho = P[(0, 2)] * lax.rsqrt(P[(0, 0)] * P[(2, 2)])  # == (P02+P20)/(2 sx sy)
            out_ref[t, 0, pl.ds(row0, chunk), :] = X[0]
            out_ref[t, 1, pl.ds(row0, chunk), :] = X[2]
            out_ref[t, 2, pl.ds(row0, chunk), :] = sx
            out_ref[t, 3, pl.ds(row0, chunk), :] = sy
            out_ref[t, 4, pl.ds(row0, chunk), :] = rho

    num_chunks = rows // chunk
    if num_chunks <= 1:
        process_chunk(0)
    else:
        @pl.loop(0, num_chunks)
        def _(c):
            process_chunk(pl.multiple_of(c * chunk, chunk))


# ---------------------------------------------------------------------------
# Parameter setup (deterministic, matching nn.Module __init__ values)
# ---------------------------------------------------------------------------
def init_params():
    return {
        "position_std_x": jnp.ones((1,), jnp.float32) * 0.12,
        "position_std_y": jnp.ones((1,), jnp.float32) * 15.21,
        "velocity_std_x": jnp.ones((1,), jnp.float32) * 0.014,
        "velocity_std_y": jnp.ones((1,), jnp.float32) * 31.37,
        "acceleration_std_x": jnp.ones((1,), jnp.float32) * 0.53,
        "acceleration_std_y": jnp.ones((1,), jnp.float32) * 4.33,
        "GR_": jnp.array([[3.385e-28, 5.0867e-19],
                          [-1.2177e-27, 6.0785e-19]], jnp.float32),
        "coef_G": jnp.array([[-0.40431, -0.0062302, 1.9845, -4.9377],
                             [0.017677, 8.6025e-05, 0.39515, 0.046597],
                             [-1.0531, -0.0003664, 0.028276, -0.1062],
                             [-0.54513, 5.8622e-05, -0.014437, 0.024759]],
                            jnp.float32),
    }


def _build_QR_pdiag(params, dt):
    """Constant (data-independent) matrices Q, R, P0-diag in plain JAX f32."""
    coef_G = params["coef_G"]
    GR = params["GR_"]
    ax = params["acceleration_std_x"][0]
    ay = params["acceleration_std_y"][0]
    G_ = jnp.array([dt * dt / 2.0, dt, dt * dt / 2.0, dt], jnp.float32)
    Rho = coef_G @ coef_G.T
    Q = jnp.outer(G_, G_) * Rho
    blk = jnp.ones((2, 2), jnp.float32)
    scale = jnp.concatenate([
        jnp.concatenate([ax * ax * blk, ax * ay * blk], axis=1),
        jnp.concatenate([ax * ay * blk, ay * ay * blk], axis=1)], axis=0)
    Q = Q * scale
    R = GR @ GR.T
    pdiag = jnp.stack([params["position_std_x"][0] ** 2,
                       params["velocity_std_x"][0] ** 2,
                       params["position_std_y"][0] ** 2,
                       params["velocity_std_y"][0] ** 2])
    return Q, R, pdiag


# ---------------------------------------------------------------------------
# Wrapper
# ---------------------------------------------------------------------------
def _choose_tiling(nb):
    """Pick rows-per-grid-step and padded row count for nb (128-lane) rows."""
    if nb <= CHUNK:
        return nb, nb                       # one small full-dim block
    # >= 2 grid steps so the 'parallel' axis shards across both v7x TensorCores,
    # rows a multiple of CHUNK, capped so double-buffered VMEM stays ~20 MiB.
    half = -(-nb // 2)
    tr = -(-half // CHUNK) * CHUNK
    tr = min(MAX_TILE_ROWS, tr)
    nb_pad = -(-nb // tr) * tr
    return tr, nb_pad


def kalman_cv_forward(hist, len_pred, params, dt, channels_last=True):
    """hist: (seq_len, batch, 2) float32.

    Returns (len_pred, batch, 5) when channels_last=True (PyTorch layout), or the
    kernel-native (len_pred, 5, batch) when channels_last=False (skips the extra
    whole-output HBM transpose pass; preferred for large batch).
    """
    seq_len, batch, _ = hist.shape
    Q, R, pdiag = _build_QR_pdiag(params, dt)
    r_flat = jnp.stack([R[0, 0], R[0, 1], R[1, 1]])     # symmetric -> upper triangle

    nb = pl.cdiv(batch, LANES)
    tile_rows, nb_pad = _choose_tiling(nb)
    b_pad = nb_pad * LANES
    chunk = min(CHUNK, tile_rows)

    # Pad batch with edge values (not zeros) so padded lanes stay well-conditioned.
    z = jnp.pad(hist.astype(jnp.float32), ((0, 0), (0, b_pad - batch), (0, 0)),
                mode="edge")
    # Single packed measurement input: (seq_len, 2, nb_pad, 128).
    z = jnp.transpose(z.reshape(seq_len, nb_pad, LANES, 2), (0, 3, 1, 2))

    grid = (nb_pad // tile_rows,)
    z_tile_bytes = seq_len * 2 * tile_rows * LANES * 4
    out_tile_bytes = len_pred * 5 * tile_rows * LANES * 4
    vmem_limit = int(min(max(2 * (z_tile_bytes + out_tile_bytes) + (4 << 20),
                             16 << 20), 56 << 20))

    kernel = functools.partial(_kalman_cv_kernel, dt=float(dt), chunk=chunk)
    out = pl.pallas_call(
        kernel,
        out_shape=jax.ShapeDtypeStruct((len_pred, 5, nb_pad, LANES), jnp.float32),
        grid=grid,
        in_specs=[
            pl.BlockSpec(memory_space=pltpu.MemorySpace.SMEM),   # Q flat (16,)
            pl.BlockSpec(memory_space=pltpu.MemorySpace.SMEM),   # R upper tri (3,)
            pl.BlockSpec(memory_space=pltpu.MemorySpace.SMEM),   # P0 diag (4,)
            pl.BlockSpec((seq_len, 2, tile_rows, LANES), lambda i: (0, 0, i, 0)),
        ],
        out_specs=pl.BlockSpec((len_pred, 5, tile_rows, LANES),
                               lambda i: (0, 0, i, 0)),
        compiler_params=pltpu.CompilerParams(
            dimension_semantics=("parallel",),
            vmem_limit_bytes=vmem_limit),
    )(Q.reshape(16), r_flat, pdiag, z)

    out = out.reshape(len_pred, 5, b_pad)[:, :, :batch]   # kernel-native (T, 5, batch)
    if channels_last:
        # Spec-compatible (T, batch, 5). For large batch prefer channels_last=False
        # and fold this layout change into the consumer's first fusion instead.
        out = jnp.transpose(out, (0, 2, 1))
    return out


# ---------------------------------------------------------------------------
# float64 NumPy reference (exact mirror of the torch module, dense matmul form)
# ---------------------------------------------------------------------------
def kalman_cv_reference(hist, len_pred, params, dt):
    hist = np.asarray(hist, np.float64)
    seq_len, batch, _ = hist.shape
    p = {k: np.asarray(v, np.float64) for k, v in params.items()}
    ax = p["acceleration_std_x"][0]
    ay = p["acceleration_std_y"][0]
    G_ = np.array([dt * dt / 2.0, dt, dt * dt / 2.0, dt], np.float64)
    Q = np.outer(G_, G_) * (p["coef_G"] @ p["coef_G"].T)
    Q[:2, :2] *= ax * ax
    Q[2:, 2:] *= ay * ay
    Q[:2, 2:] *= ax * ay
    Q[2:, :2] *= ax * ay
    R = p["GR_"] @ p["GR_"].T
    H = np.zeros((2, 4)); H[0, 0] = 1.0; H[1, 2] = 1.0
    Ht = np.zeros((4, 2)); Ht[0, 0] = 1.0; Ht[2, 1] = 1.0
    F = np.eye(4); F[0, 1] = dt; F[2, 3] = dt
    Id = np.eye(4)
    Z = hist[..., None]                                  # (S, B, 2, 1)

    def pred(X, P):
        return F @ X, F @ P @ F.T + Q

    def step(X, P, Zt):
        X, P = pred(X, P)
        y = Zt - H @ X
        S = H @ P @ Ht + R
        K = np.swapaxes(
            np.linalg.solve(np.swapaxes(S, -1, -2), H @ np.swapaxes(P, -1, -2)),
            -1, -2)
        X = X + K @ y
        ImKH = Id - K @ H
        KRK = K @ R @ np.swapaxes(K, -1, -2)
        P = ImKH @ P @ np.swapaxes(ImKH, -1, -2) + KRK
        return X, P

    V0 = (Z[1] - Z[0]) / dt
    X = Ht @ Z[0]
    X[:, 1, 0] = V0[:, 0, 0]
    X[:, 3, 0] = V0[:, 1, 0]
    P = np.zeros((batch, 4, 4))
    P[:, 0, 0] = p["position_std_x"][0] ** 2
    P[:, 1, 1] = p["velocity_std_x"][0] ** 2
    P[:, 2, 2] = p["position_std_y"][0] ** 2
    P[:, 3, 3] = p["velocity_std_y"][0] ** 2
    for t in range(1, seq_len):
        X, P = step(X, P, Z[t])

    out = np.zeros((len_pred, batch, 5))
    for t in range(len_pred):
        X, P = pred(X, P)
        mu = (H @ X)[:, :, 0]
        Pp = H @ P @ Ht
        sx = np.sqrt(Pp[:, 0, 0])
        sy = np.sqrt(Pp[:, 1, 1])
        rho = (Pp[:, 0, 1] + Pp[:, 1, 0]) / (2.0 * sx * sy)
        out[t] = np.concatenate([mu, sx[:, None], sy[:, None], rho[:, None]], axis=1)
    return out


def _check(out, hist, len_pred, params, dt, tol=2e-3):
    ref = kalman_cv_reference(np.asarray(hist), len_pred, params, dt)
    out_np = np.asarray(out, np.float64)
    assert out_np.shape == ref.shape, (out_np.shape, ref.shape)
    assert np.all(np.isfinite(out_np))
    max_err = float(np.max(np.abs(out_np - ref)))
    assert np.allclose(out_np, ref, rtol=tol, atol=tol), max_err


if __name__ == "__main__":
    key = jax.random.PRNGKey(0)
    params = init_params()
    dt = 0.1
    seq_len, len_pred = 8, 12

    # Small, module-consistent shapes (single tiny tile path).
    batch = 4
    hist = jax.random.normal(key, (seq_len, batch, 2), dtype=jnp.float32)
    out = jax.block_until_ready(kalman_cv_forward(hist, len_pred, params, dt))
    assert out.shape == (len_pred, batch, 5), out.shape
    _check(out, hist, len_pred, params, dt)

    # Medium batch: exercises the multi-chunk inner loop, grid >= 2 and padding.
    key2 = jax.random.split(key)[0]
    batch2 = 3200
    hist2 = jax.random.normal(key2, (seq_len, batch2, 2), dtype=jnp.float32)
    out2 = jax.block_until_ready(kalman_cv_forward(hist2, len_pred, params, dt))
    assert out2.shape == (len_pred, batch2, 5), out2.shape
    _check(out2, hist2, len_pred, params, dt)

    print("KERNEL_OK")
</pallas_src>

<mosaic_0001>
module attributes {stable_mosaic.version = 11 : i64} {
  func.func @_kalman_cv_kernel(%arg0: i32, %arg1: memref<16xf32, #tpu.memory_space<smem>>, %arg2: memref<3xf32, #tpu.memory_space<smem>>, %arg3: memref<4xf32, #tpu.memory_space<smem>>, %arg4: memref<8x2x1x128xf32, #tpu.memory_space<vmem>>, %arg5: memref<12x5x1x128xf32, #tpu.memory_space<vmem>>) attributes {dimension_semantics = [#tpu.dimension_semantics<parallel>], iteration_bounds = array<i64: 1>, scalar_prefetch = 0 : i64, scratch_operands = 0 : i64, tpu.core_type = #tpu.core_type<tc>, window_params = [{transform_indices = @transform_0, window_bounds = array<i64: 16>}, {transform_indices = @transform_1, window_bounds = array<i64: 3>}, {transform_indices = @transform_2, window_bounds = array<i64: 4>}, {transform_indices = @transform_3, window_bounds = array<i64: 8, 2, 1, 128>}, {transform_indices = @transform_4, window_bounds = array<i64: 12, 5, 1, 128>}]} {
    %cst = arith.constant 0.000000e+00 : f32
    %0 = vector.broadcast %cst : f32 to vector<1x128xf32>
    %c0 = arith.constant 0 : index
    %1 = memref.load %arg1[%c0] : memref<16xf32, #tpu.memory_space<smem>>
    %2 = vector.broadcast %1 : f32 to vector<1x128xf32>
    %3 = arith.addf %0, %2 : vector<1x128xf32>
    %c1 = arith.constant 1 : index
    %4 = memref.load %arg1[%c1] : memref<16xf32, #tpu.memory_space<smem>>
    %5 = vector.broadcast %4 : f32 to vector<1x128xf32>
    %6 = arith.addf %0, %5 : vector<1x128xf32>
    %c2 = arith.constant 2 : index
    %7 = memref.load %arg1[%c2] : memref<16xf32, #tpu.memory_space<smem>>
    %8 = vector.broadcast %7 : f32 to vector<1x128xf32>
    %9 = arith.addf %0, %8 : vector<1x128xf32>
    %c3 = arith.constant 3 : index
    %10 = memref.load %arg1[%c3] : memref<16xf32, #tpu.memory_space<smem>>
    %11 = vector.broadcast %10 : f32 to vector<1x128xf32>
    %12 = arith.addf %0, %11 : vector<1x128xf32>
    %c5 = arith.constant 5 : index
    %13 = memref.load %arg1[%c5] : memref<16xf32, #tpu.memory_space<smem>>
    %14 = vector.broadcast %13 : f32 to vector<1x128xf32>
    %15 = arith.addf %0, %14 : vector<1x128xf32>
    %c6 = arith.constant 6 : index
    %16 = memref.load %arg1[%c6] : memref<16xf32, #tpu.memory_space<smem>>
    %17 = vector.broadcast %16 : f32 to vector<1x128xf32>
    %18 = arith.addf %0, %17 : vector<1x128xf32>
    %c7 = arith.constant 7 : index
    %19 = memref.load %arg1[%c7] : memref<16xf32, #tpu.memory_space<smem>>
    %20 = vector.broadcast %19 : f32 to vector<1x128xf32>
    %21 = arith.addf %0, %20 : vector<1x128xf32>
    %c10 = arith.constant 10 : index
    %22 = memref.load %arg1[%c10] : memref<16xf32, #tpu.memory_space<smem>>
    %23 = vector.broadcast %22 : f32 to vector<1x128xf32>
    %24 = arith.addf %0, %23 : vector<1x128xf32>
    %c11 = arith.constant 11 : index
    %25 = memref.load %arg1[%c11] : memref<16xf32, #tpu.memory_space<smem>>
    %26 = vector.broadcast %25 : f32 to vector<1x128xf32>
    %27 = arith.addf %0, %26 : vector<1x128xf32>
    %c15 = arith.constant 15 : index
    %28 = memref.load %arg1[%c15] : memref<16xf32, #tpu.memory_space<smem>>
    %29 = vector.broadcast %28 : f32 to vector<1x128xf32>
    %30 = arith.addf %0, %29 : vector<1x128xf32>
    %c0_0 = arith.constant 0 : index
    %31 = memref.load %arg2[%c0_0] : memref<3xf32, #tpu.memory_space<smem>>
    %32 = vector.broadcast %31 : f32 to vector<1x128xf32>
    %33 = arith.addf %0, %32 : vector<1x128xf32>
    %c1_1 = arith.constant 1 : index
    %34 = memref.load %arg2[%c1_1] : memref<3xf32, #tpu.memory_space<smem>>
    %35 = vector.broadcast %34 : f32 to vector<1x128xf32>
    %36 = arith.addf %0, %35 : vector<1x128xf32>
    %c2_2 = arith.constant 2 : index
    %37 = memref.load %arg2[%c2_2] : memref<3xf32, #tpu.memory_space<smem>>
    %38 = vector.broadcast %37 : f32 to vector<1x128xf32>
    %39 = arith.addf %0, %38 : vector<1x128xf32>
    %c0_3 = arith.constant 0 : index
    %40 = memref.load %arg3[%c0_3] : memref<4xf32, #tpu.memory_space<smem>>
    %41 = vector.broadcast %40 : f32 to vector<1x128xf32>
    %42 = arith.addf %0, %41 : vector<1x128xf32>
    %c1_4 = arith.constant 1 : index
    %43 = memref.load %arg3[%c1_4] : memref<4xf32, #tpu.memory_space<smem>>
    %44 = vector.broadcast %43 : f32 to vector<1x128xf32>
    %45 = arith.addf %0, %44 : vector<1x128xf32>
    %c2_5 = arith.constant 2 : index
    %46 = memref.load %arg3[%c2_5] : memref<4xf32, #tpu.memory_space<smem>>
    %47 = vector.broadcast %46 : f32 to vector<1x128xf32>
    %48 = arith.addf %0, %47 : vector<1x128xf32>
    %c3_6 = arith.constant 3 : index
    %49 = memref.load %arg3[%c3_6] : memref<4xf32, #tpu.memory_space<smem>>
    %50 = vector.broadcast %49 : f32 to vector<1x128xf32>
    %51 = arith.addf %0, %50 : vector<1x128xf32>
    %c0_7 = arith.constant 0 : index
    %c0_8 = arith.constant 0 : index
    %c0_9 = arith.constant 0 : index
    %c0_10 = arith.constant 0 : index
    %52 = vector.load %arg4[%c0_7, %c0_8, %c0_9, %c0_10] : memref<8x2x1x128xf32, #tpu.memory_space<vmem>>, vector<1x1x1x128xf32>
    %53 = vector.shape_cast %52 : vector<1x1x1x128xf32> to vector<1x128xf32>
    %c0_11 = arith.constant 0 : index
    %c1_12 = arith.constant 1 : index
    %c0_13 = arith.constant 0 : index
    %c0_14 = arith.constant 0 : index
    %54 = vector.load %arg4[%c0_11, %c1_12, %c0_13, %c0_14] : memref<8x2x1x128xf32, #tpu.memory_space<vmem>>, vector<1x1x1x128xf32>
    %55 = vector.shape_cast %54 : vector<1x1x1x128xf32> to vector<1x128xf32>
    %c1_15 = arith.constant 1 : index
    %c0_16 = arith.constant 0 : index
    %c0_17 = arith.constant 0 : index
    %c0_18 = arith.constant 0 : index
    %56 = vector.load %arg4[%c1_15, %c0_16, %c0_17, %c0_18] : memref<8x2x1x128xf32, #tpu.memory_space<vmem>>, vector<1x1x1x128xf32>
    %57 = vector.shape_cast %56 : vector<1x1x1x128xf32> to vector<1x128xf32>
    %c1_19 = arith.constant 1 : index
    %c1_20 = arith.constant 1 : index
    %c0_21 = arith.constant 0 : index
    %c0_22 = arith.constant 0 : index
    %58 = vector.load %arg4[%c1_19, %c1_20, %c0_21, %c0_22] : memref<8x2x1x128xf32, #tpu.memory_space<vmem>>, vector<1x1x1x128xf32>
    %59 = vector.shape_cast %58 : vector<1x1x1x128xf32> to vector<1x128xf32>
    %60 = arith.subf %57, %53 : vector<1x128xf32>
    %cst_23 = arith.constant 1.000000e+01 : f32
    %61 = vector.broadcast %cst_23 : f32 to vector<1x128xf32>
    %62 = arith.mulf %60, %61 : vector<1x128xf32>
    %63 = arith.subf %59, %55 : vector<1x128xf32>
    %cst_24 = arith.constant 1.000000e+01 : f32
    %64 = vector.broadcast %cst_24 : f32 to vector<1x128xf32>
    %65 = arith.mulf %63, %64 : vector<1x128xf32>
    %c1_25 = arith.constant 1 : index
    %c0_26 = arith.constant 0 : index
    %c0_27 = arith.constant 0 : index
    %c0_28 = arith.constant 0 : index
    %66 = vector.load %arg4[%c1_25, %c0_26, %c0_27, %c0_28] : memref<8x2x1x128xf32, #tpu.memory_space<vmem>>, vector<1x1x1x128xf32>
    %67 = vector.shape_cast %66 : vector<1x1x1x128xf32> to vector<1x128xf32>
    %c1_29 = arith.constant 1 : index
    %c1_30 = arith.constant 1 : index
    %c0_31 = arith.constant 0 : index
    %c0_32 = arith.constant 0 : index
    %68 = vector.load %arg4[%c1_29, %c1_30, %c0_31, %c0_32] : memref<8x2x1x128xf32, #tpu.memory_space<vmem>>, vector<1x1x1x128xf32>
    %69 = vector.shape_cast %68 : vector<1x1x1x128xf32> to vector<1x128xf32>
    %cst_33 = arith.constant 1.000000e-01 : f32
    %70 = vector.broadcast %cst_33 : f32 to vector<1x128xf32>
    %71 = arith.mulf %70, %62 : vector<1x128xf32>
    %72 = arith.addf %53, %71 : vector<1x128xf32>
    %cst_34 = arith.constant 1.000000e-01 : f32
    %73 = vector.broadcast %cst_34 : f32 to vector<1x128xf32>
    %74 = arith.mulf %73, %65 : vector<1x128xf32>
    %75 = arith.addf %55, %74 : vector<1x128xf32>
    %cst_35 = arith.constant 1.000000e-01 : f32
    %76 = vector.broadcast %cst_35 : f32 to vector<1x128xf32>
    %77 = arith.mulf %76, %0 : vector<1x128xf32>
    %78 = arith.addf %42, %77 : vector<1x128xf32>
    %cst_36 = arith.constant 1.000000e-01 : f32
    %79 = vector.broadcast %cst_36 : f32 to vector<1x128xf32>
    %80 = arith.mulf %79, %45 : vector<1x128xf32>
    %81 = arith.addf %0, %80 : vector<1x128xf32>
    %cst_37 = arith.constant 1.000000e-01 : f32
    %82 = vector.broadcast %cst_37 : f32 to vector<1x128xf32>
    %83 = arith.mulf %82, %81 : vector<1x128xf32>
    %84 = arith.addf %78, %83 : vector<1x128xf32>
    %85 = arith.addf %84, %3 : vector<1x128xf32>
    %cst_38 = arith.constant 1.000000e-01 : f32
    %86 = vector.broadcast %cst_38 : f32 to vector<1x128xf32>
    %87 = arith.mulf %86, %45 : vector<1x128xf32>
    %88 = arith.addf %0, %87 : vector<1x128xf32>
    %89 = arith.addf %88, %6 : vector<1x128xf32>
    %cst_39 = arith.constant 1.000000e-01 : f32
    %90 = vector.broadcast %cst_39 : f32 to vector<1x128xf32>
    %91 = arith.mulf %90, %0 : vector<1x128xf32>
    %92 = arith.addf %0, %91 : vector<1x128xf32>
    %cst_40 = arith.constant 1.000000e-01 : f32
    %93 = vector.broadcast %cst_40 : f32 to vector<1x128xf32>
    %94 = arith.mulf %93, %0 : vector<1x128xf32>
    %95 = arith.addf %0, %94 : vector<1x128xf32>
    %cst_41 = arith.constant 1.000000e-01 : f32
    %96 = vector.broadcast %cst_41 : f32 to vector<1x128xf32>
    %97 = arith.mulf %96, %95 : vector<1x128xf32>
    %98 = arith.addf %92, %97 : vector<1x128xf32>
    %99 = arith.addf %98, %9 : vector<1x128xf32>
    %cst_42 = arith.constant 1.000000e-01 : f32
    %100 = vector.broadcast %cst_42 : f32 to vector<1x128xf32>
    %101 = arith.mulf %100, %0 : vector<1x128xf32>
    %102 = arith.addf %0, %101 : vector<1x128xf32>
    %103 = arith.addf %102, %12 : vector<1x128xf32>
    %104 = arith.addf %45, %15 : vector<1x128xf32>
    %cst_43 = arith.constant 1.000000e-01 : f32
    %105 = vector.broadcast %cst_43 : f32 to vector<1x128xf32>
    %106 = arith.mulf %105, %0 : vector<1x128xf32>
    %107 = arith.addf %0, %106 : vector<1x128xf32>
    %108 = arith.addf %107, %18 : vector<1x128xf32>
    %109 = arith.addf %0, %21 : vector<1x128xf32>
    %cst_44 = arith.constant 1.000000e-01 : f32
    %110 = vector.broadcast %cst_44 : f32 to vector<1x128xf32>
    %111 = arith.mulf %110, %0 : vector<1x128xf32>
    %112 = arith.addf %48, %111 : vector<1x128xf32>
    %cst_45 = arith.constant 1.000000e-01 : f32
    %113 = vector.broadcast %cst_45 : f32 to vector<1x128xf32>
    %114 = arith.mulf %113, %51 : vector<1x128xf32>
    %115 = arith.addf %0, %114 : vector<1x128xf32>
    %cst_46 = arith.constant 1.000000e-01 : f32
    %116 = vector.broadcast %cst_46 : f32 to vector<1x128xf32>
    %117 = arith.mulf %116, %115 : vector<1x128xf32>
    %118 = arith.addf %112, %117 : vector<1x128xf32>
    %119 = arith.addf %118, %24 : vector<1x128xf32>
    %cst_47 = arith.constant 1.000000e-01 : f32
    %120 = vector.broadcast %cst_47 : f32 to vector<1x128xf32>
    %121 = arith.mulf %120, %51 : vector<1x128xf32>
    %122 = arith.addf %0, %121 : vector<1x128xf32>
    %123 = arith.addf %122, %27 : vector<1x128xf32>
    %124 = arith.addf %51, %30 : vector<1x128xf32>
    %125 = arith.subf %67, %72 : vector<1x128xf32>
    %126 = arith.subf %69, %75 : vector<1x128xf32>
    %127 = arith.addf %85, %33 : vector<1x128xf32>
    %128 = arith.addf %99, %36 : vector<1x128xf32>
    %129 = arith.addf %119, %39 : vector<1x128xf32>
    %130 = arith.mulf %127, %129 : vector<1x128xf32>
    %131 = arith.mulf %128, %128 : vector<1x128xf32>
    %132 = arith.subf %130, %131 : vector<1x128xf32>
    %133 = tpu.reciprocal %132 {approx = true} : vector<1x128xf32> -> vector<1x128xf32>
    %134 = arith.mulf %132, %133 : vector<1x128xf32>
    %cst_48 = arith.constant 2.000000e+00 : f32
    %135 = vector.broadcast %cst_48 : f32 to vector<1x128xf32>
    %136 = arith.subf %135, %134 : vector<1x128xf32>
    %137 = arith.mulf %133, %136 : vector<1x128xf32>
    %138 = arith.mulf %85, %129 : vector<1x128xf32>
    %139 = arith.mulf %99, %128 : vector<1x128xf32>
    %140 = arith.subf %138, %139 : vector<1x128xf32>
    %141 = arith.mulf %140, %137 : vector<1x128xf32>
    %142 = arith.mulf %99, %127 : vector<1x128xf32>
    %143 = arith.mulf %85, %128 : vector<1x128xf32>
    %144 = arith.subf %142, %143 : vector<1x128xf32>
    %145 = arith.mulf %144, %137 : vector<1x128xf32>
    %146 = arith.mulf %89, %129 : vector<1x128xf32>
    %147 = arith.mulf %108, %128 : vector<1x128xf32>
    %148 = arith.subf %146, %147 : vector<1x128xf32>
    %149 = arith.mulf %148, %137 : vector<1x128xf32>
    %150 = arith.mulf %108, %127 : vector<1x128xf32>
    %151 = arith.mulf %89, %128 : vector<1x128xf32>
    %152 = arith.subf %150, %151 : vector<1x128xf32>
    %153 = arith.mulf %152, %137 : vector<1x128xf32>
    %154 = arith.mulf %99, %129 : vector<1x128xf32>
    %155 = arith.mulf %119, %128 : vector<1x128xf32>
    %156 = arith.subf %154, %155 : vector<1x128xf32>
    %157 = arith.mulf %156, %137 : vector<1x128xf32>
    %158 = arith.mulf %119, %127 : vector<1x128xf32>
    %159 = arith.mulf %99, %128 : vector<1x128xf32>
    %160 = arith.subf %158, %159 : vector<1x128xf32>
    %161 = arith.mulf %160, %137 : vector<1x128xf32>
    %162 = arith.mulf %103, %129 : vector<1x128xf32>
    %163 = arith.mulf %123, %128 : vector<1x128xf32>
    %164 = arith.subf %162, %163 : vector<1x128xf32>
    %165 = arith.mulf %164, %137 : vector<1x128xf32>
    %166 = arith.mulf %123, %127 : vector<1x128xf32>
    %167 = arith.mulf %103, %128 : vector<1x128xf32>
    %168 = arith.subf %166, %167 : vector<1x128xf32>
    %169 = arith.mulf %168, %137 : vector<1x128xf32>
    %170 = arith.mulf %141, %125 : vector<1x128xf32>
    %171 = arith.addf %72, %170 : vector<1x128xf32>
    %172 = arith.mulf %145, %126 : vector<1x128xf32>
    %173 = arith.addf %171, %172 : vector<1x128xf32>
    %174 = arith.mulf %149, %125 : vector<1x128xf32>
    %175 = arith.addf %62, %174 : vector<1x128xf32>
    %176 = arith.mulf %153, %126 : vector<1x128xf32>
    %177 = arith.addf %175, %176 : vector<1x128xf32>
    %178 = arith.mulf %157, %125 : vector<1x128xf32>
    %179 = arith.addf %75, %178 : vector<1x128xf32>
    %180 = arith.mulf %161, %126 : vector<1x128xf32>
    %181 = arith.addf %179, %180 : vector<1x128xf32>
    %182 = arith.mulf %165, %125 : vector<1x128xf32>
    %183 = arith.addf %65, %182 : vector<1x128xf32>
    %184 = arith.mulf %169, %126 : vector<1x128xf32>
    %185 = arith.addf %183, %184 : vector<1x128xf32>
    %186 = arith.mulf %141, %85 : vector<1x128xf32>
    %187 = arith.subf %85, %186 : vector<1x128xf32>
    %188 = arith.mulf %145, %99 : vector<1x128xf32>
    %189 = arith.subf %187, %188 : vector<1x128xf32>
    %190 = arith.mulf %141, %89 : vector<1x128xf32>
    %191 = arith.subf %89, %190 : vector<1x128xf32>
    %192 = arith.mulf %145, %108 : vector<1x128xf32>
    %193 = arith.subf %191, %192 : vector<1x128xf32>
    %194 = arith.mulf %141, %99 : vector<1x128xf32>
    %195 = arith.subf %99, %194 : vector<1x128xf32>
    %196 = arith.mulf %145, %119 : vector<1x128xf32>
    %197 = arith.subf %195, %196 : vector<1x128xf32>
    %198 = arith.mulf %141, %103 : vector<1x128xf32>
    %199 = arith.subf %103, %198 : vector<1x128xf32>
    %200 = arith.mulf %145, %123 : vector<1x128xf32>
    %201 = arith.subf %199, %200 : vector<1x128xf32>
    %202 = arith.mulf %149, %89 : vector<1x128xf32>
    %203 = arith.subf %104, %202 : vector<1x128xf32>
    %204 = arith.mulf %153, %108 : vector<1x128xf32>
    %205 = arith.subf %203, %204 : vector<1x128xf32>
    %206 = arith.mulf %149, %99 : vector<1x128xf32>
    %207 = arith.subf %108, %206 : vector<1x128xf32>
    %208 = arith.mulf %153, %119 : vector<1x128xf32>
    %209 = arith.subf %207, %208 : vector<1x128xf32>
    %210 = arith.mulf %149, %103 : vector<1x128xf32>
    %211 = arith.subf %109, %210 : vector<1x128xf32>
    %212 = arith.mulf %153, %123 : vector<1x128xf32>
    %213 = arith.subf %211, %212 : vector<1x128xf32>
    %214 = arith.mulf %157, %99 : vector<1x128xf32>
    %215 = arith.subf %119, %214 : vector<1x128xf32>
    %216 = arith.mulf %161, %119 : vector<1x128xf32>
    %217 = arith.subf %215, %216 : vector<1x128xf32>
    %218 = arith.mulf %157, %103 : vector<1x128xf32>
    %219 = arith.subf %123, %218 : vector<1x128xf32>
    %220 = arith.mulf %161, %123 : vector<1x128xf32>
    %221 = arith.subf %219, %220 : vector<1x128xf32>
    %222 = arith.mulf %165, %103 : vector<1x128xf32>
    %223 = arith.subf %124, %222 : vector<1x128xf32>
    %224 = arith.mulf %169, %123 : vector<1x128xf32>
    %225 = arith.subf %223, %224 : vector<1x128xf32>
    %226 = arith.mulf %149, %85 : vector<1x128xf32>
    %227 = arith.subf %89, %226 : vector<1x128xf32>
    %228 = arith.mulf %153, %99 : vector<1x128xf32>
    %229 = arith.subf %227, %228 : vector<1x128xf32>
    %230 = arith.mulf %157, %85 : vector<1x128xf32>
    %231 = arith.subf %99, %230 : vector<1x128xf32>
    %232 = arith.mulf %161, %99 : vector<1x128xf32>
    %233 = arith.subf %231, %232 : vector<1x128xf32>
    %234 = arith.mulf %165, %85 : vector<1x128xf32>
    %235 = arith.subf %103, %234 : vector<1x128xf32>
    %236 = arith.mulf %169, %99 : vector<1x128xf32>
    %237 = arith.subf %235, %236 : vector<1x128xf32>
    %238 = arith.mulf %165, %99 : vector<1x128xf32>
    %239 = arith.subf %123, %238 : vector<1x128xf32>
    %240 = arith.mulf %169, %119 : vector<1x128xf32>
    %241 = arith.subf %239, %240 : vector<1x128xf32>
    %242 = arith.mulf %141, %33 : vector<1x128xf32>
    %243 = arith.mulf %145, %36 : vector<1x128xf32>
    %244 = arith.addf %242, %243 : vector<1x128xf32>
    %245 = arith.mulf %149, %33 : vector<1x128xf32>
    %246 = arith.mulf %153, %36 : vector<1x128xf32>
    %247 = arith.addf %245, %246 : vector<1x128xf32>
    %248 = arith.mulf %157, %33 : vector<1x128xf32>
    %249 = arith.mulf %161, %36 : vector<1x128xf32>
    %250 = arith.addf %248, %249 : vector<1x128xf32>
    %251 = arith.mulf %165, %33 : vector<1x128xf32>
    %252 = arith.mulf %169, %36 : vector<1x128xf32>
    %253 = arith.addf %251, %252 : vector<1x128xf32>
    %254 = arith.mulf %141, %36 : vector<1x128xf32>
    %255 = arith.mulf %145, %39 : vector<1x128xf32>
    %256 = arith.addf %254, %255 : vector<1x128xf32>
    %257 = arith.mulf %149, %36 : vector<1x128xf32>
    %258 = arith.mulf %153, %39 : vector<1x128xf32>
    %259 = arith.addf %257, %258 : vector<1x128xf32>
    %260 = arith.mulf %157, %36 : vector<1x128xf32>
    %261 = arith.mulf %161, %39 : vector<1x128xf32>
    %262 = arith.addf %260, %261 : vector<1x128xf32>
    %263 = arith.mulf %165, %36 : vector<1x128xf32>
    %264 = arith.mulf %169, %39 : vector<1x128xf32>
    %265 = arith.addf %263, %264 : vector<1x128xf32>
    %266 = arith.mulf %189, %141 : vector<1x128xf32>
    %267 = arith.subf %189, %266 : vector<1x128xf32>
    %268 = arith.mulf %197, %145 : vector<1x128xf32>
    %269 = arith.subf %267, %268 : vector<1x128xf32>
    %270 = arith.mulf %244, %141 : vector<1x128xf32>
    %271 = arith.addf %269, %270 : vector<1x128xf32>
    %272 = arith.mulf %256, %145 : vector<1x128xf32>
    %273 = arith.addf %271, %272 : vector<1x128xf32>
    %274 = arith.mulf %189, %149 : vector<1x128xf32>
    %275 = arith.subf %193, %274 : vector<1x128xf32>
    %276 = arith.mulf %197, %153 : vector<1x128xf32>
    %277 = arith.subf %275, %276 : vector<1x128xf32>
    %278 = arith.mulf %244, %149 : vector<1x128xf32>
    %279 = arith.addf %277, %278 : vector<1x128xf32>
    %280 = arith.mulf %256, %153 : vector<1x128xf32>
    %281 = arith.addf %279, %280 : vector<1x128xf32>
    %282 = arith.mulf %189, %157 : vector<1x128xf32>
    %283 = arith.subf %197, %282 : vector<1x128xf32>
    %284 = arith.mulf %197, %161 : vector<1x128xf32>
    %285 = arith.subf %283, %284 : vector<1x128xf32>
    %286 = arith.mulf %244, %157 : vector<1x128xf32>
    %287 = arith.addf %285, %286 : vector<1x128xf32>
    %288 = arith.mulf %256, %161 : vector<1x128xf32>
    %289 = arith.addf %287, %288 : vector<1x128xf32>
    %290 = arith.mulf %189, %165 : vector<1x128xf32>
    %291 = arith.subf %201, %290 : vector<1x128xf32>
    %292 = arith.mulf %197, %169 : vector<1x128xf32>
    %293 = arith.subf %291, %292 : vector<1x128xf32>
    %294 = arith.mulf %244, %165 : vector<1x128xf32>
    %295 = arith.addf %293, %294 : vector<1x128xf32>
    %296 = arith.mulf %256, %169 : vector<1x128xf32>
    %297 = arith.addf %295, %296 : vector<1x128xf32>
    %298 = arith.mulf %229, %149 : vector<1x128xf32>
    %299 = arith.subf %205, %298 : vector<1x128xf32>
    %300 = arith.mulf %209, %153 : vector<1x128xf32>
    %301 = arith.subf %299, %300 : vector<1x128xf32>
    %302 = arith.mulf %247, %149 : vector<1x128xf32>
    %303 = arith.addf %301, %302 : vector<1x128xf32>
    %304 = arith.mulf %259, %153 : vector<1x128xf32>
    %305 = arith.addf %303, %304 : vector<1x128xf32>
    %306 = arith.mulf %229, %157 : vector<1x128xf32>
    %307 = arith.subf %209, %306 : vector<1x128xf32>
    %308 = arith.mulf %209, %161 : vector<1x128xf32>
    %309 = arith.subf %307, %308 : vector<1x128xf32>
    %310 = arith.mulf %247, %157 : vector<1x128xf32>
    %311 = arith.addf %309, %310 : vector<1x128xf32>
    %312 = arith.mulf %259, %161 : vector<1x128xf32>
    %313 = arith.addf %311, %312 : vector<1x128xf32>
    %314 = arith.mulf %229, %165 : vector<1x128xf32>
    %315 = arith.subf %213, %314 : vector<1x128xf32>
    %316 = arith.mulf %209, %169 : vector<1x128xf32>
    %317 = arith.subf %315, %316 : vector<1x128xf32>
    %318 = arith.mulf %247, %165 : vector<1x128xf32>
    %319 = arith.addf %317, %318 : vector<1x128xf32>
    %320 = arith.mulf %259, %169 : vector<1x128xf32>
    %321 = arith.addf %319, %320 : vector<1x128xf32>
    %322 = arith.mulf %233, %157 : vector<1x128xf32>
    %323 = arith.subf %217, %322 : vector<1x128xf32>
    %324 = arith.mulf %217, %161 : vector<1x128xf32>
    %325 = arith.subf %323, %324 : vector<1x128xf32>
    %326 = arith.mulf %250, %157 : vector<1x128xf32>
    %327 = arith.addf %325, %326 : vector<1x128xf32>
    %328 = arith.mulf %262, %161 : vector<1x128xf32>
    %329 = arith.addf %327, %328 : vector<1x128xf32>
    %330 = arith.mulf %233, %165 : vector<1x128xf32>
    %331 = arith.subf %221, %330 : vector<1x128xf32>
    %332 = arith.mulf %217, %169 : vector<1x128xf32>
    %333 = arith.subf %331, %332 : vector<1x128xf32>
    %334 = arith.mulf %250, %165 : vector<1x128xf32>
    %335 = arith.addf %333, %334 : vector<1x128xf32>
    %336 = arith.mulf %262, %169 : vector<1x128xf32>
    %337 = arith.addf %335, %336 : vector<1x128xf32>
    %338 = arith.mulf %237, %165 : vector<1x128xf32>
    %339 = arith.subf %225, %338 : vector<1x128xf32>
    %340 = arith.mulf %241, %169 : vector<1x128xf32>
    %341 = arith.subf %339, %340 : vector<1x128xf32>
    %342 = arith.mulf %253, %165 : vector<1x128xf32>
    %343 = arith.addf %341, %342 : vector<1x128xf32>
    %344 = arith.mulf %265, %169 : vector<1x128xf32>
    %345 = arith.addf %343, %344 : vector<1x128xf32>
    %c2_49 = arith.constant 2 : index
    %c0_50 = arith.constant 0 : index
    %c0_51 = arith.constant 0 : index
    %c0_52 = arith.constant 0 : index
    %346 = vector.load %arg4[%c2_49, %c0_50, %c0_51, %c0_52] : memref<8x2x1x128xf32, #tpu.memory_space<vmem>>, vector<1x1x1x128xf32>
    %347 = vector.shape_cast %346 : vector<1x1x1x128xf32> to vector<1x128xf32>
    %c2_53 = arith.constant 2 : index
    %c1_54 = arith.constant 1 : index
    %c0_55 = arith.constant 0 : index
    %c0_56 = arith.constant 0 : index
    %348 = vector.load %arg4[%c2_53, %c1_54, %c0_55, %c0_56] : memref<8x2x1x128xf32, #tpu.memory_space<vmem>>, vector<1x1x1x128xf32>
    %349 = vector.shape_cast %348 : vector<1x1x1x128xf32> to vector<1x128xf32>
    %cst_57 = arith.constant 1.000000e-01 : f32
    %350 = vector.broadcast %cst_57 : f32 to vector<1x128xf32>
    %351 = arith.mulf %350, %177 : vector<1x128xf32>
    %352 = arith.addf %173, %351 : vector<1x128xf32>
    %cst_58 = arith.constant 1.000000e-01 : f32
    %353 = vector.broadcast %cst_58 : f32 to vector<1x128xf32>
    %354 = arith.mulf %353, %185 : vector<1x128xf32>
    %355 = arith.addf %181, %354 : vector<1x128xf32>
    %cst_59 = arith.constant 1.000000e-01 : f32
    %356 = vector.broadcast %cst_59 : f32 to vector<1x128xf32>
    %357 = arith.mulf %356, %281 : vector<1x128xf32>
    %358 = arith.addf %273, %357 : vector<1x128xf32>
    %cst_60 = arith.constant 1.000000e-01 : f32
    %359 = vector.broadcast %cst_60 : f32 to vector<1x128xf32>
    %360 = arith.mulf %359, %305 : vector<1x128xf32>
    %361 = arith.addf %281, %360 : vector<1x128xf32>
    %cst_61 = arith.constant 1.000000e-01 : f32
    %362 = vector.broadcast %cst_61 : f32 to vector<1x128xf32>
    %363 = arith.mulf %362, %361 : vector<1x128xf32>
    %364 = arith.addf %358, %363 : vector<1x128xf32>
    %365 = arith.addf %364, %3 : vector<1x128xf32>
    %cst_62 = arith.constant 1.000000e-01 : f32
    %366 = vector.broadcast %cst_62 : f32 to vector<1x128xf32>
    %367 = arith.mulf %366, %305 : vector<1x128xf32>
    %368 = arith.addf %281, %367 : vector<1x128xf32>
    %369 = arith.addf %368, %6 : vector<1x128xf32>
    %cst_63 = arith.constant 1.000000e-01 : f32
    %370 = vector.broadcast %cst_63 : f32 to vector<1x128xf32>
    %371 = arith.mulf %370, %313 : vector<1x128xf32>
    %372 = arith.addf %289, %371 : vector<1x128xf32>
    %cst_64 = arith.constant 1.000000e-01 : f32
    %373 = vector.broadcast %cst_64 : f32 to vector<1x128xf32>
    %374 = arith.mulf %373, %321 : vector<1x128xf32>
    %375 = arith.addf %297, %374 : vector<1x128xf32>
    %cst_65 = arith.constant 1.000000e-01 : f32
    %376 = vector.broadcast %cst_65 : f32 to vector<1x128xf32>
    %377 = arith.mulf %376, %375 : vector<1x128xf32>
    %378 = arith.addf %372, %377 : vector<1x128xf32>
    %379 = arith.addf %378, %9 : vector<1x128xf32>
    %cst_66 = arith.constant 1.000000e-01 : f32
    %380 = vector.broadcast %cst_66 : f32 to vector<1x128xf32>
    %381 = arith.mulf %380, %321 : vector<1x128xf32>
    %382 = arith.addf %297, %381 : vector<1x128xf32>
    %383 = arith.addf %382, %12 : vector<1x128xf32>
    %384 = arith.addf %305, %15 : vector<1x128xf32>
    %cst_67 = arith.constant 1.000000e-01 : f32
    %385 = vector.broadcast %cst_67 : f32 to vector<1x128xf32>
    %386 = arith.mulf %385, %321 : vector<1x128xf32>
    %387 = arith.addf %313, %386 : vector<1x128xf32>
    %388 = arith.addf %387, %18 : vector<1x128xf32>
    %389 = arith.addf %321, %21 : vector<1x128xf32>
    %cst_68 = arith.constant 1.000000e-01 : f32
    %390 = vector.broadcast %cst_68 : f32 to vector<1x128xf32>
    %391 = arith.mulf %390, %337 : vector<1x128xf32>
    %392 = arith.addf %329, %391 : vector<1x128xf32>
    %cst_69 = arith.constant 1.000000e-01 : f32
    %393 = vector.broadcast %cst_69 : f32 to vector<1x128xf32>
    %394 = arith.mulf %393, %345 : vector<1x128xf32>
    %395 = arith.addf %337, %394 : vector<1x128xf32>
    %cst_70 = arith.constant 1.000000e-01 : f32
    %396 = vector.broadcast %cst_70 : f32 to vector<1x128xf32>
    %397 = arith.mulf %396, %395 : vector<1x128xf32>
    %398 = arith.addf %392, %397 : vector<1x128xf32>
    %399 = arith.addf %398, %24 : vector<1x128xf32>
    %cst_71 = arith.constant 1.000000e-01 : f32
    %400 = vector.broadcast %cst_71 : f32 to vector<1x128xf32>
    %401 = arith.mulf %400, %345 : vector<1x128xf32>
    %402 = arith.addf %337, %401 : vector<1x128xf32>
    %403 = arith.addf %402, %27 : vector<1x128xf32>
    %404 = arith.addf %345, %30 : vector<1x128xf32>
    %405 = arith.subf %347, %352 : vector<1x128xf32>
    %406 = arith.subf %349, %355 : vector<1x128xf32>
    %407 = arith.addf %365, %33 : vector<1x128xf32>
    %408 = arith.addf %379, %36 : vector<1x128xf32>
    %409 = arith.addf %399, %39 : vector<1x128xf32>
    %410 = arith.mulf %407, %409 : vector<1x128xf32>
    %411 = arith.mulf %408, %408 : vector<1x128xf32>
    %412 = arith.subf %410, %411 : vector<1x128xf32>
    %413 = tpu.reciprocal %412 {approx = true} : vector<1x128xf32> -> vector<1x128xf32>
    %414 = arith.mulf %412, %413 : vector<1x128xf32>
    %cst_72 = arith.constant 2.000000e+00 : f32
    %415 = vector.broadcast %cst_72 : f32 to vector<1x128xf32>
    %416 = arith.subf %415, %414 : vector<1x128xf32>
    %417 = arith.mulf %413, %416 : vector<1x128xf32>
    %418 = arith.mulf %365, %409 : vector<1x128xf32>
    %419 = arith.mulf %379, %408 : vector<1x128xf32>
    %420 = arith.subf %418, %419 : vector<1x128xf32>
    %421 = arith.mulf %420, %417 : vector<1x128xf32>
    %422 = arith.mulf %379, %407 : vector<1x128xf32>
    %423 = arith.mulf %365, %408 : vector<1x128xf32>
    %424 = arith.subf %422, %423 : vector<1x128xf32>
    %425 = arith.mulf %424, %417 : vector<1x128xf32>
    %426 = arith.mulf %369, %409 : vector<1x128xf32>
    %427 = arith.mulf %388, %408 : vector<1x128xf32>
    %428 = arith.subf %426, %427 : vector<1x128xf32>
    %429 = arith.mulf %428, %417 : vector<1x128xf32>
    %430 = arith.mulf %388, %407 : vector<1x128xf32>
    %431 = arith.mulf %369, %408 : vector<1x128xf32>
    %432 = arith.subf %430, %431 : vector<1x128xf32>
    %433 = arith.mulf %432, %417 : vector<1x128xf32>
    %434 = arith.mulf %379, %409 : vector<1x128xf32>
    %435 = arith.mulf %399, %408 : vector<1x128xf32>
    %436 = arith.subf %434, %435 : vector<1x128xf32>
    %437 = arith.mulf %436, %417 : vector<1x128xf32>
    %438 = arith.mulf %399, %407 : vector<1x128xf32>
    %439 = arith.mulf %379, %408 : vector<1x128xf32>
    %440 = arith.subf %438, %439 : vector<1x128xf32>
    %441 = arith.mulf %440, %417 : vector<1x128xf32>
    %442 = arith.mulf %383, %409 : vector<1x128xf32>
    %443 = arith.mulf %403, %408 : vector<1x128xf32>
    %444 = arith.subf %442, %443 : vector<1x128xf32>
    %445 = arith.mulf %444, %417 : vector<1x128xf32>
    %446 = arith.mulf %403, %407 : vector<1x128xf32>
    %447 = arith.mulf %383, %408 : vector<1x128xf32>
    %448 = arith.subf %446, %447 : vector<1x128xf32>
    %449 = arith.mulf %448, %417 : vector<1x128xf32>
    %450 = arith.mulf %421, %405 : vector<1x128xf32>
    %451 = arith.addf %352, %450 : vector<1x128xf32>
    %452 = arith.mulf %425, %406 : vector<1x128xf32>
    %453 = arith.addf %451, %452 : vector<1x128xf32>
    %454 = arith.mulf %429, %405 : vector<1x128xf32>
    %455 = arith.addf %177, %454 : vector<1x128xf32>
    %456 = arith.mulf %433, %406 : vector<1x128xf32>
    %457 = arith.addf %455, %456 : vector<1x128xf32>
    %458 = arith.mulf %437, %405 : vector<1x128xf32>
    %459 = arith.addf %355, %458 : vector<1x128xf32>
    %460 = arith.mulf %441, %406 : vector<1x128xf32>
    %461 = arith.addf %459, %460 : vector<1x128xf32>
    %462 = arith.mulf %445, %405 : vector<1x128xf32>
    %463 = arith.addf %185, %462 : vector<1x128xf32>
    %464 = arith.mulf %449, %406 : vector<1x128xf32>
    %465 = arith.addf %463, %464 : vector<1x128xf32>
    %466 = arith.mulf %421, %365 : vector<1x128xf32>
    %467 = arith.subf %365, %466 : vector<1x128xf32>
    %468 = arith.mulf %425, %379 : vector<1x128xf32>
    %469 = arith.subf %467, %468 : vector<1x128xf32>
    %470 = arith.mulf %421, %369 : vector<1x128xf32>
    %471 = arith.subf %369, %470 : vector<1x128xf32>
    %472 = arith.mulf %425, %388 : vector<1x128xf32>
    %473 = arith.subf %471, %472 : vector<1x128xf32>
    %474 = arith.mulf %421, %379 : vector<1x128xf32>
    %475 = arith.subf %379, %474 : vector<1x128xf32>
    %476 = arith.mulf %425, %399 : vector<1x128xf32>
    %477 = arith.subf %475, %476 : vector<1x128xf32>
    %478 = arith.mulf %421, %383 : vector<1x128xf32>
    %479 = arith.subf %383, %478 : vector<1x128xf32>
    %480 = arith.mulf %425, %403 : vector<1x128xf32>
    %481 = arith.subf %479, %480 : vector<1x128xf32>
    %482 = arith.mulf %429, %369 : vector<1x128xf32>
    %483 = arith.subf %384, %482 : vector<1x128xf32>
    %484 = arith.mulf %433, %388 : vector<1x128xf32>
    %485 = arith.subf %483, %484 : vector<1x128xf32>
    %486 = arith.mulf %429, %379 : vector<1x128xf32>
    %487 = arith.subf %388, %486 : vector<1x128xf32>
    %488 = arith.mulf %433, %399 : vector<1x128xf32>
    %489 = arith.subf %487, %488 : vector<1x128xf32>
    %490 = arith.mulf %429, %383 : vector<1x128xf32>
    %491 = arith.subf %389, %490 : vector<1x128xf32>
    %492 = arith.mulf %433, %403 : vector<1x128xf32>
    %493 = arith.subf %491, %492 : vector<1x128xf32>
    %494 = arith.mulf %437, %379 : vector<1x128xf32>
    %495 = arith.subf %399, %494 : vector<1x128xf32>
    %496 = arith.mulf %441, %399 : vector<1x128xf32>
    %497 = arith.subf %495, %496 : vector<1x128xf32>
    %498 = arith.mulf %437, %383 : vector<1x128xf32>
    %499 = arith.subf %403, %498 : vector<1x128xf32>
    %500 = arith.mulf %441, %403 : vector<1x128xf32>
    %501 = arith.subf %499, %500 : vector<1x128xf32>
    %502 = arith.mulf %445, %383 : vector<1x128xf32>
    %503 = arith.subf %404, %502 : vector<1x128xf32>
    %504 = arith.mulf %449, %403 : vector<1x128xf32>
    %505 = arith.subf %503, %504 : vector<1x128xf32>
    %506 = arith.mulf %429, %365 : vector<1x128xf32>
    %507 = arith.subf %369, %506 : vector<1x128xf32>
    %508 = arith.mulf %433, %379 : vector<1x128xf32>
    %509 = arith.subf %507, %508 : vector<1x128xf32>
    %510 = arith.mulf %437, %365 : vector<1x128xf32>
    %511 = arith.subf %379, %510 : vector<1x128xf32>
    %512 = arith.mulf %441, %379 : vector<1x128xf32>
    %513 = arith.subf %511, %512 : vector<1x128xf32>
    %514 = arith.mulf %445, %365 : vector<1x128xf32>
    %515 = arith.subf %383, %514 : vector<1x128xf32>
    %516 = arith.mulf %449, %379 : vector<1x128xf32>
    %517 = arith.subf %515, %516 : vector<1x128xf32>
    %518 = arith.mulf %445, %379 : vector<1x128xf32>
    %519 = arith.subf %403, %518 : vector<1x128xf32>
    %520 = arith.mulf %449, %399 : vector<1x128xf32>
    %521 = arith.subf %519, %520 : vector<1x128xf32>
    %522 = arith.mulf %421, %33 : vector<1x128xf32>
    %523 = arith.mulf %425, %36 : vector<1x128xf32>
    %524 = arith.addf %522, %523 : vector<1x128xf32>
    %525 = arith.mulf %429, %33 : vector<1x128xf32>
    %526 = arith.mulf %433, %36 : vector<1x128xf32>
    %527 = arith.addf %525, %526 : vector<1x128xf32>
    %528 = arith.mulf %437, %33 : vector<1x128xf32>
    %529 = arith.mulf %441, %36 : vector<1x128xf32>
    %530 = arith.addf %528, %529 : vector<1x128xf32>
    %531 = arith.mulf %445, %33 : vector<1x128xf32>
    %532 = arith.mulf %449, %36 : vector<1x128xf32>
    %533 = arith.addf %531, %532 : vector<1x128xf32>
    %534 = arith.mulf %421, %36 : vector<1x128xf32>
    %535 = arith.mulf %425, %39 : vector<1x128xf32>
    %536 = arith.addf %534, %535 : vector<1x128xf32>
    %537 = arith.mulf %429, %36 : vector<1x128xf32>
    %538 = arith.mulf %433, %39 : vector<1x128xf32>
    %539 = arith.addf %537, %538 : vector<1x128xf32>
    %540 = arith.mulf %437, %36 : vector<1x128xf32>
    %541 = arith.mulf %441, %39 : vector<1x128xf32>
    %542 = arith.addf %540, %541 : vector<1x128xf32>
    %543 = arith.mulf %445, %36 : vector<1x128xf32>
    %544 = arith.mulf %449, %39 : vector<1x128xf32>
    %545 = arith.addf %543, %544 : vector<1x128xf32>
    %546 = arith.mulf %469, %421 : vector<1x128xf32>
    %547 = arith.subf %469, %546 : vector<1x128xf32>
    %548 = arith.mulf %477, %425 : vector<1x128xf32>
    %549 = arith.subf %547, %548 : vector<1x128xf32>
    %550 = arith.mulf %524, %421 : vector<1x128xf32>
    %551 = arith.addf %549, %550 : vector<1x128xf32>
    %552 = arith.mulf %536, %425 : vector<1x128xf32>
    %553 = arith.addf %551, %552 : vector<1x128xf32>
    %554 = arith.mulf %469, %429 : vector<1x128xf32>
    %555 = arith.subf %473, %554 : vector<1x128xf32>
    %556 = arith.mulf %477, %433 : vector<1x128xf32>
    %557 = arith.subf %555, %556 : vector<1x128xf32>
    %558 = arith.mulf %524, %429 : vector<1x128xf32>
    %559 = arith.addf %557, %558 : vector<1x128xf32>
    %560 = arith.mulf %536, %433 : vector<1x128xf32>
    %561 = arith.addf %559, %560 : vector<1x128xf32>
    %562 = arith.mulf %469, %437 : vector<1x128xf32>
    %563 = arith.subf %477, %562 : vector<1x128xf32>
    %564 = arith.mulf %477, %441 : vector<1x128xf32>
    %565 = arith.subf %563, %564 : vector<1x128xf32>
    %566 = arith.mulf %524, %437 : vector<1x128xf32>
    %567 = arith.addf %565, %566 : vector<1x128xf32>
    %568 = arith.mulf %536, %441 : vector<1x128xf32>
    %569 = arith.addf %567, %568 : vector<1x128xf32>
    %570 = arith.mulf %469, %445 : vector<1x128xf32>
    %571 = arith.subf %481, %570 : vector<1x128xf32>
    %572 = arith.mulf %477, %449 : vector<1x128xf32>
    %573 = arith.subf %571, %572 : vector<1x128xf32>
    %574 = arith.mulf %524, %445 : vector<1x128xf32>
    %575 = arith.addf %573, %574 : vector<1x128xf32>
    %576 = arith.mulf %536, %449 : vector<1x128xf32>
    %577 = arith.addf %575, %576 : vector<1x128xf32>
    %578 = arith.mulf %509, %429 : vector<1x128xf32>
    %579 = arith.subf %485, %578 : vector<1x128xf32>
    %580 = arith.mulf %489, %433 : vector<1x128xf32>
    %581 = arith.subf %579, %580 : vector<1x128xf32>
    %582 = arith.mulf %527, %429 : vector<1x128xf32>
    %583 = arith.addf %581, %582 : vector<1x128xf32>
    %584 = arith.mulf %539, %433 : vector<1x128xf32>
    %585 = arith.addf %583, %584 : vector<1x128xf32>
    %586 = arith.mulf %509, %437 : vector<1x128xf32>
    %587 = arith.subf %489, %586 : vector<1x128xf32>
    %588 = arith.mulf %489, %441 : vector<1x128xf32>
    %589 = arith.subf %587, %588 : vector<1x128xf32>
    %590 = arith.mulf %527, %437 : vector<1x128xf32>
    %591 = arith.addf %589, %590 : vector<1x128xf32>
    %592 = arith.mulf %539, %441 : vector<1x128xf32>
    %593 = arith.addf %591, %592 : vector<1x128xf32>
    %594 = arith.mulf %509, %445 : vector<1x128xf32>
    %595 = arith.subf %493, %594 : vector<1x128xf32>
    %596 = arith.mulf %489, %449 : vector<1x128xf32>
    %597 = arith.subf %595, %596 : vector<1x128xf32>
    %598 = arith.mulf %527, %445 : vector<1x128xf32>
    %599 = arith.addf %597, %598 : vector<1x128xf32>
    %600 = arith.mulf %539, %449 : vector<1x128xf32>
    %601 = arith.addf %599, %600 : vector<1x128xf32>
    %602 = arith.mulf %513, %437 : vector<1x128xf32>
    %603 = arith.subf %497, %602 : vector<1x128xf32>
    %604 = arith.mulf %497, %441 : vector<1x128xf32>
    %605 = arith.subf %603, %604 : vector<1x128xf32>
    %606 = arith.mulf %530, %437 : vector<1x128xf32>
    %607 = arith.addf %605, %606 : vector<1x128xf32>
    %608 = arith.mulf %542, %441 : vector<1x128xf32>
    %609 = arith.addf %607, %608 : vector<1x128xf32>
    %610 = arith.mulf %513, %445 : vector<1x128xf32>
    %611 = arith.subf %501, %610 : vector<1x128xf32>
    %612 = arith.mulf %497, %449 : vector<1x128xf32>
    %613 = arith.subf %611, %612 : vector<1x128xf32>
    %614 = arith.mulf %530, %445 : vector<1x128xf32>
    %615 = arith.addf %613, %614 : vector<1x128xf32>
    %616 = arith.mulf %542, %449 : vector<1x128xf32>
    %617 = arith.addf %615, %616 : vector<1x128xf32>
    %618 = arith.mulf %517, %445 : vector<1x128xf32>
    %619 = arith.subf %505, %618 : vector<1x128xf32>
    %620 = arith.mulf %521, %449 : vector<1x128xf32>
    %621 = arith.subf %619, %620 : vector<1x128xf32>
    %622 = arith.mulf %533, %445 : vector<1x128xf32>
    %623 = arith.addf %621, %622 : vector<1x128xf32>
    %624 = arith.mulf %545, %449 : vector<1x128xf32>
    %625 = arith.addf %623, %624 : vector<1x128xf32>
    %c3_73 = arith.constant 3 : index
    %c0_74 = arith.constant 0 : index
    %c0_75 = arith.constant 0 : index
    %c0_76 = arith.constant 0 : index
    %626 = vector.load %arg4[%c3_73, %c0_74, %c0_75, %c0_76] : memref<8x2x1x128xf32, #tpu.memory_space<vmem>>, vector<1x1x1x128xf32>
    %627 = vector.shape_cast %626 : vector<1x1x1x128xf32> to vector<1x128xf32>
    %c3_77 = arith.constant 3 : index
    %c1_78 = arith.constant 1 : index
    %c0_79 = arith.constant 0 : index
    %c0_80 = arith.constant 0 : index
    %628 = vector.load %arg4[%c3_77, %c1_78, %c0_79, %c0_80] : memref<8x2x1x128xf32, #tpu.memory_space<vmem>>, vector<1x1x1x128xf32>
    %629 = vector.shape_cast %628 : vector<1x1x1x128xf32> to vector<1x128xf32>
    %cst_81 = arith.constant 1.000000e-01 : f32
    %630 = vector.broadcast %cst_81 : f32 to vector<1x128xf32>
    %631 = arith.mulf %630, %457 : vector<1x128xf32>
    %632 = arith.addf %453, %631 : vector<1x128xf32>
    %cst_82 = arith.constant 1.000000e-01 : f32
    %633 = vector.broadcast %cst_82 : f32 to vector<1x128xf32>
    %634 = arith.mulf %633, %465 : vector<1x128xf32>
    %635 = arith.addf %461, %634 : vector<1x128xf32>
    %cst_83 = arith.constant 1.000000e-01 : f32
    %636 = vector.broadcast %cst_83 : f32 to vector<1x128xf32>
    %637 = arith.mulf %636, %561 : vector<1x128xf32>
    %638 = arith.addf %553, %637 : vector<1x128xf32>
    %cst_84 = arith.constant 1.000000e-01 : f32
    %639 = vector.broadcast %cst_84 : f32 to vector<1x128xf32>
    %640 = arith.mulf %639, %585 : vector<1x128xf32>
    %641 = arith.addf %561, %640 : vector<1x128xf32>
    %cst_85 = arith.constant 1.000000e-01 : f32
    %642 = vector.broadcast %cst_85 : f32 to vector<1x128xf32>
    %643 = arith.mulf %642, %641 : vector<1x128xf32>
    %644 = arith.addf %638, %643 : vector<1x128xf32>
    %645 = arith.addf %644, %3 : vector<1x128xf32>
    %cst_86 = arith.constant 1.000000e-01 : f32
    %646 = vector.broadcast %cst_86 : f32 to vector<1x128xf32>
    %647 = arith.mulf %646, %585 : vector<1x128xf32>
    %648 = arith.addf %561, %647 : vector<1x128xf32>
    %649 = arith.addf %648, %6 : vector<1x128xf32>
    %cst_87 = arith.constant 1.000000e-01 : f32
    %650 = vector.broadcast %cst_87 : f32 to vector<1x128xf32>
    %651 = arith.mulf %650, %593 : vector<1x128xf32>
    %652 = arith.addf %569, %651 : vector<1x128xf32>
    %cst_88 = arith.constant 1.000000e-01 : f32
    %653 = vector.broadcast %cst_88 : f32 to vector<1x128xf32>
    %654 = arith.mulf %653, %601 : vector<1x128xf32>
    %655 = arith.addf %577, %654 : vector<1x128xf32>
    %cst_89 = arith.constant 1.000000e-01 : f32
    %656 = vector.broadcast %cst_89 : f32 to vector<1x128xf32>
    %657 = arith.mulf %656, %655 : vector<1x128xf32>
    %658 = arith.addf %652, %657 : vector<1x128xf32>
    %659 = arith.addf %658, %9 : vector<1x128xf32>
    %cst_90 = arith.constant 1.000000e-01 : f32
    %660 = vector.broadcast %cst_90 : f32 to vector<1x128xf32>
    %661 = arith.mulf %660, %601 : vector<1x128xf32>
    %662 = arith.addf %577, %661 : vector<1x128xf32>
    %663 = arith.addf %662, %12 : vector<1x128xf32>
    %664 = arith.addf %585, %15 : vector<1x128xf32>
    %cst_91 = arith.constant 1.000000e-01 : f32
    %665 = vector.broadcast %cst_91 : f32 to vector<1x128xf32>
    %666 = arith.mulf %665, %601 : vector<1x128xf32>
    %667 = arith.addf %593, %666 : vector<1x128xf32>
    %668 = arith.addf %667, %18 : vector<1x128xf32>
    %669 = arith.addf %601, %21 : vector<1x128xf32>
    %cst_92 = arith.constant 1.000000e-01 : f32
    %670 = vector.broadcast %cst_92 : f32 to vector<1x128xf32>
    %671 = arith.mulf %670, %617 : vector<1x128xf32>
    %672 = arith.addf %609, %671 : vector<1x128xf32>
    %cst_93 = arith.constant 1.000000e-01 : f32
    %673 = vector.broadcast %cst_93 : f32 to vector<1x128xf32>
    %674 = arith.mulf %673, %625 : vector<1x128xf32>
    %675 = arith.addf %617, %674 : vector<1x128xf32>
    %cst_94 = arith.constant 1.000000e-01 : f32
    %676 = vector.broadcast %cst_94 : f32 to vector<1x128xf32>
    %677 = arith.mulf %676, %675 : vector<1x128xf32>
    %678 = arith.addf %672, %677 : vector<1x128xf32>
    %679 = arith.addf %678, %24 : vector<1x128xf32>
    %cst_95 = arith.constant 1.000000e-01 : f32
    %680 = vector.broadcast %cst_95 : f32 to vector<1x128xf32>
    %681 = arith.mulf %680, %625 : vector<1x128xf32>
    %682 = arith.addf %617, %681 : vector<1x128xf32>
    %683 = arith.addf %682, %27 : vector<1x128xf32>
    %684 = arith.addf %625, %30 : vector<1x128xf32>
    %685 = arith.subf %627, %632 : vector<1x128xf32>
    %686 = arith.subf %629, %635 : vector<1x128xf32>
    %687 = arith.addf %645, %33 : vector<1x128xf32>
    %688 = arith.addf %659, %36 : vector<1x128xf32>
    %689 = arith.addf %679, %39 : vector<1x128xf32>
    %690 = arith.mulf %687, %689 : vector<1x128xf32>
    %691 = arith.mulf %688, %688 : vector<1x128xf32>
    %692 = arith.subf %690, %691 : vector<1x128xf32>
    %693 = tpu.reciprocal %692 {approx = true} : vector<1x128xf32> -> vector<1x128xf32>
    %694 = arith.mulf %692, %693 : vector<1x128xf32>
    %cst_96 = arith.constant 2.000000e+00 : f32
    %695 = vector.broadcast %cst_96 : f32 to vector<1x128xf32>
    %696 = arith.subf %695, %694 : vector<1x128xf32>
    %697 = arith.mulf %693, %696 : vector<1x128xf32>
    %698 = arith.mulf %645, %689 : vector<1x128xf32>
    %699 = arith.mulf %659, %688 : vector<1x128xf32>
    %700 = arith.subf %698, %699 : vector<1x128xf32>
    %701 = arith.mulf %700, %697 : vector<1x128xf32>
    %702 = arith.mulf %659, %687 : vector<1x128xf32>
    %703 = arith.mulf %645, %688 : vector<1x128xf32>
    %704 = arith.subf %702, %703 : vector<1x128xf32>
    %705 = arith.mulf %704, %697 : vector<1x128xf32>
    %706 = arith.mulf %649, %689 : vector<1x128xf32>
    %707 = arith.mulf %668, %688 : vector<1x128xf32>
    %708 = arith.subf %706, %707 : vector<1x128xf32>
    %709 = arith.mulf %708, %697 : vector<1x128xf32>
    %710 = arith.mulf %668, %687 : vector<1x128xf32>
    %711 = arith.mulf %649, %688 : vector<1x128xf32>
    %712 = arith.subf %710, %711 : vector<1x128xf32>
    %713 = arith.mulf %712, %697 : vector<1x128xf32>
    %714 = arith.mulf %659, %689 : vector<1x128xf32>
    %715 = arith.mulf %679, %688 : vector<1x128xf32>
    %716 = arith.subf %714, %715 : vector<1x128xf32>
    %717 = arith.mulf %716, %697 : vector<1x128xf32>
    %718 = arith.mulf %679, %687 : vector<1x128xf32>
    %719 = arith.mulf %659, %688 : vector<1x128xf32>
    %720 = arith.subf %718, %719 : vector<1x128xf32>
    %721 = arith.mulf %720, %697 : vector<1x128xf32>
    %722 = arith.mulf %663, %689 : vector<1x128xf32>
    %723 = arith.mulf %683, %688 : vector<1x128xf32>
    %724 = arith.subf %722, %723 : vector<1x128xf32>
    %725 = arith.mulf %724, %697 : vector<1x128xf32>
    %726 = arith.mulf %683, %687 : vector<1x128xf32>
    %727 = arith.mulf %663, %688 : vector<1x128xf32>
    %728 = arith.subf %726, %727 : vector<1x128xf32>
    %729 = arith.mulf %728, %697 : vector<1x128xf32>
    %730 = arith.mulf %701, %685 : vector<1x128xf32>
    %731 = arith.addf %632, %730 : vector<1x128xf32>
    %732 = arith.mulf %705, %686 : vector<1x128xf32>
    %733 = arith.addf %731, %732 : vector<1x128xf32>
    %734 = arith.mulf %709, %685 : vector<1x128xf32>
    %735 = arith.addf %457, %734 : vector<1x128xf32>
    %736 = arith.mulf %713, %686 : vector<1x128xf32>
    %737 = arith.addf %735, %736 : vector<1x128xf32>
    %738 = arith.mulf %717, %685 : vector<1x128xf32>
    %739 = arith.addf %635, %738 : vector<1x128xf32>
    %740 = arith.mulf %721, %686 : vector<1x128xf32>
    %741 = arith.addf %739, %740 : vector<1x128xf32>
    %742 = arith.mulf %725, %685 : vector<1x128xf32>
    %743 = arith.addf %465, %742 : vector<1x128xf32>
    %744 = arith.mulf %729, %686 : vector<1x128xf32>
    %745 = arith.addf %743, %744 : vector<1x128xf32>
    %746 = arith.mulf %701, %645 : vector<1x128xf32>
    %747 = arith.subf %645, %746 : vector<1x128xf32>
    %748 = arith.mulf %705, %659 : vector<1x128xf32>
    %749 = arith.subf %747, %748 : vector<1x128xf32>
    %750 = arith.mulf %701, %649 : vector<1x128xf32>
    %751 = arith.subf %649, %750 : vector<1x128xf32>
    %752 = arith.mulf %705, %668 : vector<1x128xf32>
    %753 = arith.subf %751, %752 : vector<1x128xf32>
    %754 = arith.mulf %701, %659 : vector<1x128xf32>
    %755 = arith.subf %659, %754 : vector<1x128xf32>
    %756 = arith.mulf %705, %679 : vector<1x128xf32>
    %757 = arith.subf %755, %756 : vector<1x128xf32>
    %758 = arith.mulf %701, %663 : vector<1x128xf32>
    %759 = arith.subf %663, %758 : vector<1x128xf32>
    %760 = arith.mulf %705, %683 : vector<1x128xf32>
    %761 = arith.subf %759, %760 : vector<1x128xf32>
    %762 = arith.mulf %709, %649 : vector<1x128xf32>
    %763 = arith.subf %664, %762 : vector<1x128xf32>
    %764 = arith.mulf %713, %668 : vector<1x128xf32>
    %765 = arith.subf %763, %764 : vector<1x128xf32>
    %766 = arith.mulf %709, %659 : vector<1x128xf32>
    %767 = arith.subf %668, %766 : vector<1x128xf32>
    %768 = arith.mulf %713, %679 : vector<1x128xf32>
    %769 = arith.subf %767, %768 : vector<1x128xf32>
    %770 = arith.mulf %709, %663 : vector<1x128xf32>
    %771 = arith.subf %669, %770 : vector<1x128xf32>
    %772 = arith.mulf %713, %683 : vector<1x128xf32>
    %773 = arith.subf %771, %772 : vector<1x128xf32>
    %774 = arith.mulf %717, %659 : vector<1x128xf32>
    %775 = arith.subf %679, %774 : vector<1x128xf32>
    %776 = arith.mulf %721, %679 : vector<1x128xf32>
    %777 = arith.subf %775, %776 : vector<1x128xf32>
    %778 = arith.mulf %717, %663 : vector<1x128xf32>
    %779 = arith.subf %683, %778 : vector<1x128xf32>
    %780 = arith.mulf %721, %683 : vector<1x128xf32>
    %781 = arith.subf %779, %780 : vector<1x128xf32>
    %782 = arith.mulf %725, %663 : vector<1x128xf32>
    %783 = arith.subf %684, %782 : vector<1x128xf32>
    %784 = arith.mulf %729, %683 : vector<1x128xf32>
    %785 = arith.subf %783, %784 : vector<1x128xf32>
    %786 = arith.mulf %709, %645 : vector<1x128xf32>
    %787 = arith.subf %649, %786 : vector<1x128xf32>
    %788 = arith.mulf %713, %659 : vector<1x128xf32>
    %789 = arith.subf %787, %788 : vector<1x128xf32>
    %790 = arith.mulf %717, %645 : vector<1x128xf32>
    %791 = arith.subf %659, %790 : vector<1x128xf32>
    %792 = arith.mulf %721, %659 : vector<1x128xf32>
    %793 = arith.subf %791, %792 : vector<1x128xf32>
    %794 = arith.mulf %725, %645 : vector<1x128xf32>
    %795 = arith.subf %663, %794 : vector<1x128xf32>
    %796 = arith.mulf %729, %659 : vector<1x128xf32>
    %797 = arith.subf %795, %796 : vector<1x128xf32>
    %798 = arith.mulf %725, %659 : vector<1x128xf32>
    %799 = arith.subf %683, %798 : vector<1x128xf32>
    %800 = arith.mulf %729, %679 : vector<1x128xf32>
    %801 = arith.subf %799, %800 : vector<1x128xf32>
    %802 = arith.mulf %701, %33 : vector<1x128xf32>
    %803 = arith.mulf %705, %36 : vector<1x128xf32>
    %804 = arith.addf %802, %803 : vector<1x128xf32>
    %805 = arith.mulf %709, %33 : vector<1x128xf32>
    %806 = arith.mulf %713, %36 : vector<1x128xf32>
    %807 = arith.addf %805, %806 : vector<1x128xf32>
    %808 = arith.mulf %717, %33 : vector<1x128xf32>
    %809 = arith.mulf %721, %36 : vector<1x128xf32>
    %810 = arith.addf %808, %809 : vector<1x128xf32>
    %811 = arith.mulf %725, %33 : vector<1x128xf32>
    %812 = arith.mulf %729, %36 : vector<1x128xf32>
    %813 = arith.addf %811, %812 : vector<1x128xf32>
    %814 = arith.mulf %701, %36 : vector<1x128xf32>
    %815 = arith.mulf %705, %39 : vector<1x128xf32>
    %816 = arith.addf %814, %815 : vector<1x128xf32>
    %817 = arith.mulf %709, %36 : vector<1x128xf32>
    %818 = arith.mulf %713, %39 : vector<1x128xf32>
    %819 = arith.addf %817, %818 : vector<1x128xf32>
    %820 = arith.mulf %717, %36 : vector<1x128xf32>
    %821 = arith.mulf %721, %39 : vector<1x128xf32>
    %822 = arith.addf %820, %821 : vector<1x128xf32>
    %823 = arith.mulf %725, %36 : vector<1x128xf32>
    %824 = arith.mulf %729, %39 : vector<1x128xf32>
    %825 = arith.addf %823, %824 : vector<1x128xf32>
    %826 = arith.mulf %749, %701 : vector<1x128xf32>
    %827 = arith.subf %749, %826 : vector<1x128xf32>
    %828 = arith.mulf %757, %705 : vector<1x128xf32>
    %829 = arith.subf %827, %828 : vector<1x128xf32>
    %830 = arith.mulf %804, %701 : vector<1x128xf32>
    %831 = arith.addf %829, %830 : vector<1x128xf32>
    %832 = arith.mulf %816, %705 : vector<1x128xf32>
    %833 = arith.addf %831, %832 : vector<1x128xf32>
    %834 = arith.mulf %749, %709 : vector<1x128xf32>
    %835 = arith.subf %753, %834 : vector<1x128xf32>
    %836 = arith.mulf %757, %713 : vector<1x128xf32>
    %837 = arith.subf %835, %836 : vector<1x128xf32>
    %838 = arith.mulf %804, %709 : vector<1x128xf32>
    %839 = arith.addf %837, %838 : vector<1x128xf32>
    %840 = arith.mulf %816, %713 : vector<1x128xf32>
    %841 = arith.addf %839, %840 : vector<1x128xf32>
    %842 = arith.mulf %749, %717 : vector<1x128xf32>
    %843 = arith.subf %757, %842 : vector<1x128xf32>
    %844 = arith.mulf %757, %721 : vector<1x128xf32>
    %845 = arith.subf %843, %844 : vector<1x128xf32>
    %846 = arith.mulf %804, %717 : vector<1x128xf32>
    %847 = arith.addf %845, %846 : vector<1x128xf32>
    %848 = arith.mulf %816, %721 : vector<1x128xf32>
    %849 = arith.addf %847, %848 : vector<1x128xf32>
    %850 = arith.mulf %749, %725 : vector<1x128xf32>
    %851 = arith.subf %761, %850 : vector<1x128xf32>
    %852 = arith.mulf %757, %729 : vector<1x128xf32>
    %853 = arith.subf %851, %852 : vector<1x128xf32>
    %854 = arith.mulf %804, %725 : vector<1x128xf32>
    %855 = arith.addf %853, %854 : vector<1x128xf32>
    %856 = arith.mulf %816, %729 : vector<1x128xf32>
    %857 = arith.addf %855, %856 : vector<1x128xf32>
    %858 = arith.mulf %789, %709 : vector<1x128xf32>
    %859 = arith.subf %765, %858 : vector<1x128xf32>
    %860 = arith.mulf %769, %713 : vector<1x128xf32>
    %861 = arith.subf %859, %860 : vector<1x128xf32>
    %862 = arith.mulf %807, %709 : vector<1x128xf32>
    %863 = arith.addf %861, %862 : vector<1x128xf32>
    %864 = arith.mulf %819, %713 : vector<1x128xf32>
    %865 = arith.addf %863, %864 : vector<1x128xf32>
    %866 = arith.mulf %789, %717 : vector<1x128xf32>
    %867 = arith.subf %769, %866 : vector<1x128xf32>
    %868 = arith.mulf %769, %721 : vector<1x128xf32>
    %869 = arith.subf %867, %868 : vector<1x128xf32>
    %870 = arith.mulf %807, %717 : vector<1x128xf32>
    %871 = arith.addf %869, %870 : vector<1x128xf32>
    %872 = arith.mulf %819, %721 : vector<1x128xf32>
    %873 = arith.addf %871, %872 : vector<1x128xf32>
    %874 = arith.mulf %789, %725 : vector<1x128xf32>
    %875 = arith.subf %773, %874 : vector<1x128xf32>
    %876 = arith.mulf %769, %729 : vector<1x128xf32>
    %877 = arith.subf %875, %876 : vector<1x128xf32>
    %878 = arith.mulf %807, %725 : vector<1x128xf32>
    %879 = arith.addf %877, %878 : vector<1x128xf32>
    %880 = arith.mulf %819, %729 : vector<1x128xf32>
    %881 = arith.addf %879, %880 : vector<1x128xf32>
    %882 = arith.mulf %793, %717 : vector<1x128xf32>
    %883 = arith.subf %777, %882 : vector<1x128xf32>
    %884 = arith.mulf %777, %721 : vector<1x128xf32>
    %885 = arith.subf %883, %884 : vector<1x128xf32>
    %886 = arith.mulf %810, %717 : vector<1x128xf32>
    %887 = arith.addf %885, %886 : vector<1x128xf32>
    %888 = arith.mulf %822, %721 : vector<1x128xf32>
    %889 = arith.addf %887, %888 : vector<1x128xf32>
    %890 = arith.mulf %793, %725 : vector<1x128xf32>
    %891 = arith.subf %781, %890 : vector<1x128xf32>
    %892 = arith.mulf %777, %729 : vector<1x128xf32>
    %893 = arith.subf %891, %892 : vector<1x128xf32>
    %894 = arith.mulf %810, %725 : vector<1x128xf32>
    %895 = arith.addf %893, %894 : vector<1x128xf32>
    %896 = arith.mulf %822, %729 : vector<1x128xf32>
    %897 = arith.addf %895, %896 : vector<1x128xf32>
    %898 = arith.mulf %797, %725 : vector<1x128xf32>
    %899 = arith.subf %785, %898 : vector<1x128xf32>
    %900 = arith.mulf %801, %729 : vector<1x128xf32>
    %901 = arith.subf %899, %900 : vector<1x128xf32>
    %902 = arith.mulf %813, %725 : vector<1x128xf32>
    %903 = arith.addf %901, %902 : vector<1x128xf32>
    %904 = arith.mulf %825, %729 : vector<1x128xf32>
    %905 = arith.addf %903, %904 : vector<1x128xf32>
    %c4 = arith.constant 4 : index
    %c0_97 = arith.constant 0 : index
    %c0_98 = arith.constant 0 : index
    %c0_99 = arith.constant 0 : index
    %906 = vector.load %arg4[%c4, %c0_97, %c0_98, %c0_99] : memref<8x2x1x128xf32, #tpu.memory_space<vmem>>, vector<1x1x1x128xf32>
    %907 = vector.shape_cast %906 : vector<1x1x1x128xf32> to vector<1x128xf32>
    %c4_100 = arith.constant 4 : index
    %c1_101 = arith.constant 1 : index
    %c0_102 = arith.constant 0 : index
    %c0_103 = arith.constant 0 : index
    %908 = vector.load %arg4[%c4_100, %c1_101, %c0_102, %c0_103] : memref<8x2x1x128xf32, #tpu.memory_space<vmem>>, vector<1x1x1x128xf32>
    %909 = vector.shape_cast %908 : vector<1x1x1x128xf32> to vector<1x128xf32>
    %cst_104 = arith.constant 1.000000e-01 : f32
    %910 = vector.broadcast %cst_104 : f32 to vector<1x128xf32>
    %911 = arith.mulf %910, %737 : vector<1x128xf32>
    %912 = arith.addf %733, %911 : vector<1x128xf32>
    %cst_105 = arith.constant 1.000000e-01 : f32
    %913 = vector.broadcast %cst_105 : f32 to vector<1x128xf32>
    %914 = arith.mulf %913, %745 : vector<1x128xf32>
    %915 = arith.addf %741, %914 : vector<1x128xf32>
    %cst_106 = arith.constant 1.000000e-01 : f32
    %916 = vector.broadcast %cst_106 : f32 to vector<1x128xf32>
    %917 = arith.mulf %916, %841 : vector<1x128xf32>
    %918 = arith.addf %833, %917 : vector<1x128xf32>
    %cst_107 = arith.constant 1.000000e-01 : f32
    %919 = vector.broadcast %cst_107 : f32 to vector<1x128xf32>
    %920 = arith.mulf %919, %865 : vector<1x128xf32>
    %921 = arith.addf %841, %920 : vector<1x128xf32>
    %cst_108 = arith.constant 1.000000e-01 : f32
    %922 = vector.broadcast %cst_108 : f32 to vector<1x128xf32>
    %923 = arith.mulf %922, %921 : vector<1x128xf32>
    %924 = arith.addf %918, %923 : vector<1x128xf32>
    %925 = arith.addf %924, %3 : vector<1x128xf32>
    %cst_109 = arith.constant 1.000000e-01 : f32
    %926 = vector.broadcast %cst_109 : f32 to vector<1x128xf32>
    %927 = arith.mulf %926, %865 : vector<1x128xf32>
    %928 = arith.addf %841, %927 : vector<1x128xf32>
    %929 = arith.addf %928, %6 : vector<1x128xf32>
    %cst_110 = arith.constant 1.000000e-01 : f32
    %930 = vector.broadcast %cst_110 : f32 to vector<1x128xf32>
    %931 = arith.mulf %930, %873 : vector<1x128xf32>
    %932 = arith.addf %849, %931 : vector<1x128xf32>
    %cst_111 = arith.constant 1.000000e-01 : f32
    %933 = vector.broadcast %cst_111 : f32 to vector<1x128xf32>
    %934 = arith.mulf %933, %881 : vector<1x128xf32>
    %935 = arith.addf %857, %934 : vector<1x128xf32>
    %cst_112 = arith.constant 1.000000e-01 : f32
    %936 = vector.broadcast %cst_112 : f32 to vector<1x128xf32>
    %937 = arith.mulf %936, %935 : vector<1x128xf32>
    %938 = arith.addf %932, %937 : vector<1x128xf32>
    %939 = arith.addf %938, %9 : vector<1x128xf32>
    %cst_113 = arith.constant 1.000000e-01 : f32
    %940 = vector.broadcast %cst_113 : f32 to vector<1x128xf32>
    %941 = arith.mulf %940, %881 : vector<1x128xf32>
    %942 = arith.addf %857, %941 : vector<1x128xf32>
    %943 = arith.addf %942, %12 : vector<1x128xf32>
    %944 = arith.addf %865, %15 : vector<1x128xf32>
    %cst_114 = arith.constant 1.000000e-01 : f32
    %945 = vector.broadcast %cst_114 : f32 to vector<1x128xf32>
    %946 = arith.mulf %945, %881 : vector<1x128xf32>
    %947 = arith.addf %873, %946 : vector<1x128xf32>
    %948 = arith.addf %947, %18 : vector<1x128xf32>
    %949 = arith.addf %881, %21 : vector<1x128xf32>
    %cst_115 = arith.constant 1.000000e-01 : f32
    %950 = vector.broadcast %cst_115 : f32 to vector<1x128xf32>
    %951 = arith.mulf %950, %897 : vector<1x128xf32>
    %952 = arith.addf %889, %951 : vector<1x128xf32>
    %cst_116 = arith.constant 1.000000e-01 : f32
    %953 = vector.broadcast %cst_116 : f32 to vector<1x128xf32>
    %954 = arith.mulf %953, %905 : vector<1x128xf32>
    %955 = arith.addf %897, %954 : vector<1x128xf32>
    %cst_117 = arith.constant 1.000000e-01 : f32
    %956 = vector.broadcast %cst_117 : f32 to vector<1x128xf32>
    %957 = arith.mulf %956, %955 : vector<1x128xf32>
    %958 = arith.addf %952, %957 : vector<1x128xf32>
    %959 = arith.addf %958, %24 : vector<1x128xf32>
    %cst_118 = arith.constant 1.000000e-01 : f32
    %960 = vector.broadcast %cst_118 : f32 to vector<1x128xf32>
    %961 = arith.mulf %960, %905 : vector<1x128xf32>
    %962 = arith.addf %897, %961 : vector<1x128xf32>
    %963 = arith.addf %962, %27 : vector<1x128xf32>
    %964 = arith.addf %905, %30 : vector<1x128xf32>
    %965 = arith.subf %907, %912 : vector<1x128xf32>
    %966 = arith.subf %909, %915 : vector<1x128xf32>
    %967 = arith.addf %925, %33 : vector<1x128xf32>
    %968 = arith.addf %939, %36 : vector<1x128xf32>
    %969 = arith.addf %959, %39 : vector<1x128xf32>
    %970 = arith.mulf %967, %969 : vector<1x128xf32>
    %971 = arith.mulf %968, %968 : vector<1x128xf32>
    %972 = arith.subf %970, %971 : vector<1x128xf32>
    %973 = tpu.reciprocal %972 {approx = true} : vector<1x128xf32> -> vector<1x128xf32>
    %974 = arith.mulf %972, %973 : vector<1x128xf32>
    %cst_119 = arith.constant 2.000000e+00 : f32
    %975 = vector.broadcast %cst_119 : f32 to vector<1x128xf32>
    %976 = arith.subf %975, %974 : vector<1x128xf32>
    %977 = arith.mulf %973, %976 : vector<1x128xf32>
    %978 = arith.mulf %925, %969 : vector<1x128xf32>
    %979 = arith.mulf %939, %968 : vector<1x128xf32>
    %980 = arith.subf %978, %979 : vector<1x128xf32>
    %981 = arith.mulf %980, %977 : vector<1x128xf32>
    %982 = arith.mulf %939, %967 : vector<1x128xf32>
    %983 = arith.mulf %925, %968 : vector<1x128xf32>
    %984 = arith.subf %982, %983 : vector<1x128xf32>
    %985 = arith.mulf %984, %977 : vector<1x128xf32>
    %986 = arith.mulf %929, %969 : vector<1x128xf32>
    %987 = arith.mulf %948, %968 : vector<1x128xf32>
    %988 = arith.subf %986, %987 : vector<1x128xf32>
    %989 = arith.mulf %988, %977 : vector<1x128xf32>
    %990 = arith.mulf %948, %967 : vector<1x128xf32>
    %991 = arith.mulf %929, %968 : vector<1x128xf32>
    %992 = arith.subf %990, %991 : vector<1x128xf32>
    %993 = arith.mulf %992, %977 : vector<1x128xf32>
    %994 = arith.mulf %939, %969 : vector<1x128xf32>
    %995 = arith.mulf %959, %968 : vector<1x128xf32>
    %996 = arith.subf %994, %995 : vector<1x128xf32>
    %997 = arith.mulf %996, %977 : vector<1x128xf32>
    %998 = arith.mulf %959, %967 : vector<1x128xf32>
    %999 = arith.mulf %939, %968 : vector<1x128xf32>
    %1000 = arith.subf %998, %999 : vector<1x128xf32>
    %1001 = arith.mulf %1000, %977 : vector<1x128xf32>
    %1002 = arith.mulf %943, %969 : vector<1x128xf32>
    %1003 = arith.mulf %963, %968 : vector<1x128xf32>
    %1004 = arith.subf %1002, %1003 : vector<1x128xf32>
    %1005 = arith.mulf %1004, %977 : vector<1x128xf32>
    %1006 = arith.mulf %963, %967 : vector<1x128xf32>
    %1007 = arith.mulf %943, %968 : vector<1x128xf32>
    %1008 = arith.subf %1006, %1007 : vector<1x128xf32>
    %1009 = arith.mulf %1008, %977 : vector<1x128xf32>
    %1010 = arith.mulf %981, %965 : vector<1x128xf32>
    %1011 = arith.addf %912, %1010 : vector<1x128xf32>
    %1012 = arith.mulf %985, %966 : vector<1x128xf32>
    %1013 = arith.addf %1011, %1012 : vector<1x128xf32>
    %1014 = arith.mulf %989, %965 : vector<1x128xf32>
    %1015 = arith.addf %737, %1014 : vector<1x128xf32>
    %1016 = arith.mulf %993, %966 : vector<1x128xf32>
    %1017 = arith.addf %1015, %1016 : vector<1x128xf32>
    %1018 = arith.mulf %997, %965 : vector<1x128xf32>
    %1019 = arith.addf %915, %1018 : vector<1x128xf32>
    %1020 = arith.mulf %1001, %966 : vector<1x128xf32>
    %1021 = arith.addf %1019, %1020 : vector<1x128xf32>
    %1022 = arith.mulf %1005, %965 : vector<1x128xf32>
    %1023 = arith.addf %745, %1022 : vector<1x128xf32>
    %1024 = arith.mulf %1009, %966 : vector<1x128xf32>
    %1025 = arith.addf %1023, %1024 : vector<1x128xf32>
    %1026 = arith.mulf %981, %925 : vector<1x128xf32>
    %1027 = arith.subf %925, %1026 : vector<1x128xf32>
    %1028 = arith.mulf %985, %939 : vector<1x128xf32>
    %1029 = arith.subf %1027, %1028 : vector<1x128xf32>
    %1030 = arith.mulf %981, %929 : vector<1x128xf32>
    %1031 = arith.subf %929, %1030 : vector<1x128xf32>
    %1032 = arith.mulf %985, %948 : vector<1x128xf32>
    %1033 = arith.subf %1031, %1032 : vector<1x128xf32>
    %1034 = arith.mulf %981, %939 : vector<1x128xf32>
    %1035 = arith.subf %939, %1034 : vector<1x128xf32>
    %1036 = arith.mulf %985, %959 : vector<1x128xf32>
    %1037 = arith.subf %1035, %1036 : vector<1x128xf32>
    %1038 = arith.mulf %981, %943 : vector<1x128xf32>
    %1039 = arith.subf %943, %1038 : vector<1x128xf32>
    %1040 = arith.mulf %985, %963 : vector<1x128xf32>
    %1041 = arith.subf %1039, %1040 : vector<1x128xf32>
    %1042 = arith.mulf %989, %929 : vector<1x128xf32>
    %1043 = arith.subf %944, %1042 : vector<1x128xf32>
    %1044 = arith.mulf %993, %948 : vector<1x128xf32>
    %1045 = arith.subf %1043, %1044 : vector<1x128xf32>
    %1046 = arith.mulf %989, %939 : vector<1x128xf32>
    %1047 = arith.subf %948, %1046 : vector<1x128xf32>
    %1048 = arith.mulf %993, %959 : vector<1x128xf32>
    %1049 = arith.subf %1047, %1048 : vector<1x128xf32>
    %1050 = arith.mulf %989, %943 : vector<1x128xf32>
    %1051 = arith.subf %949, %1050 : vector<1x128xf32>
    %1052 = arith.mulf %993, %963 : vector<1x128xf32>
    %1053 = arith.subf %1051, %1052 : vector<1x128xf32>
    %1054 = arith.mulf %997, %939 : vector<1x128xf32>
    %1055 = arith.subf %959, %1054 : vector<1x128xf32>
    %1056 = arith.mulf %1001, %959 : vector<1x128xf32>
    %1057 = arith.subf %1055, %1056 : vector<1x128xf32>
    %1058 = arith.mulf %997, %943 : vector<1x128xf32>
    %1059 = arith.subf %963, %1058 : vector<1x128xf32>
    %1060 = arith.mulf %1001, %963 : vector<1x128xf32>
    %1061 = arith.subf %1059, %1060 : vector<1x128xf32>
    %1062 = arith.mulf %1005, %943 : vector<1x128xf32>
    %1063 = arith.subf %964, %1062 : vector<1x128xf32>
    %1064 = arith.mulf %1009, %963 : vector<1x128xf32>
    %1065 = arith.subf %1063, %1064 : vector<1x128xf32>
    %1066 = arith.mulf %989, %925 : vector<1x128xf32>
    %1067 = arith.subf %929, %1066 : vector<1x128xf32>
    %1068 = arith.mulf %993, %939 : vector<1x128xf32>
    %1069 = arith.subf %1067, %1068 : vector<1x128xf32>
    %1070 = arith.mulf %997, %925 : vector<1x128xf32>
    %1071 = arith.subf %939, %1070 : vector<1x128xf32>
    %1072 = arith.mulf %1001, %939 : vector<1x128xf32>
    %1073 = arith.subf %1071, %1072 : vector<1x128xf32>
    %1074 = arith.mulf %1005, %925 : vector<1x128xf32>
    %1075 = arith.subf %943, %1074 : vector<1x128xf32>
    %1076 = arith.mulf %1009, %939 : vector<1x128xf32>
    %1077 = arith.subf %1075, %1076 : vector<1x128xf32>
    %1078 = arith.mulf %1005, %939 : vector<1x128xf32>
    %1079 = arith.subf %963, %1078 : vector<1x128xf32>
    %1080 = arith.mulf %1009, %959 : vector<1x128xf32>
    %1081 = arith.subf %1079, %1080 : vector<1x128xf32>
    %1082 = arith.mulf %981, %33 : vector<1x128xf32>
    %1083 = arith.mulf %985, %36 : vector<1x128xf32>
    %1084 = arith.addf %1082, %1083 : vector<1x128xf32>
    %1085 = arith.mulf %989, %33 : vector<1x128xf32>
    %1086 = arith.mulf %993, %36 : vector<1x128xf32>
    %1087 = arith.addf %1085, %1086 : vector<1x128xf32>
    %1088 = arith.mulf %997, %33 : vector<1x128xf32>
    %1089 = arith.mulf %1001, %36 : vector<1x128xf32>
    %1090 = arith.addf %1088, %1089 : vector<1x128xf32>
    %1091 = arith.mulf %1005, %33 : vector<1x128xf32>
    %1092 = arith.mulf %1009, %36 : vector<1x128xf32>
    %1093 = arith.addf %1091, %1092 : vector<1x128xf32>
    %1094 = arith.mulf %981, %36 : vector<1x128xf32>
    %1095 = arith.mulf %985, %39 : vector<1x128xf32>
    %1096 = arith.addf %1094, %1095 : vector<1x128xf32>
    %1097 = arith.mulf %989, %36 : vector<1x128xf32>
    %1098 = arith.mulf %993, %39 : vector<1x128xf32>
    %1099 = arith.addf %1097, %1098 : vector<1x128xf32>
    %1100 = arith.mulf %997, %36 : vector<1x128xf32>
    %1101 = arith.mulf %1001, %39 : vector<1x128xf32>
    %1102 = arith.addf %1100, %1101 : vector<1x128xf32>
    %1103 = arith.mulf %1005, %36 : vector<1x128xf32>
    %1104 = arith.mulf %1009, %39 : vector<1x128xf32>
    %1105 = arith.addf %1103, %1104 : vector<1x128xf32>
    %1106 = arith.mulf %1029, %981 : vector<1x128xf32>
    %1107 = arith.subf %1029, %1106 : vector<1x128xf32>
    %1108 = arith.mulf %1037, %985 : vector<1x128xf32>
    %1109 = arith.subf %1107, %1108 : vector<1x128xf32>
    %1110 = arith.mulf %1084, %981 : vector<1x128xf32>
    %1111 = arith.addf %1109, %1110 : vector<1x128xf32>
    %1112 = arith.mulf %1096, %985 : vector<1x128xf32>
    %1113 = arith.addf %1111, %1112 : vector<1x128xf32>
    %1114 = arith.mulf %1029, %989 : vector<1x128xf32>
    %1115 = arith.subf %1033, %1114 : vector<1x128xf32>
    %1116 = arith.mulf %1037, %993 : vector<1x128xf32>
    %1117 = arith.subf %1115, %1116 : vector<1x128xf32>
    %1118 = arith.mulf %1084, %989 : vector<1x128xf32>
    %1119 = arith.addf %1117, %1118 : vector<1x128xf32>
    %1120 = arith.mulf %1096, %993 : vector<1x128xf32>
    %1121 = arith.addf %1119, %1120 : vector<1x128xf32>
    %1122 = arith.mulf %1029, %997 : vector<1x128xf32>
    %1123 = arith.subf %1037, %1122 : vector<1x128xf32>
    %1124 = arith.mulf %1037, %1001 : vector<1x128xf32>
    %1125 = arith.subf %1123, %1124 : vector<1x128xf32>
    %1126 = arith.mulf %1084, %997 : vector<1x128xf32>
    %1127 = arith.addf %1125, %1126 : vector<1x128xf32>
    %1128 = arith.mulf %1096, %1001 : vector<1x128xf32>
    %1129 = arith.addf %1127, %1128 : vector<1x128xf32>
    %1130 = arith.mulf %1029, %1005 : vector<1x128xf32>
    %1131 = arith.subf %1041, %1130 : vector<1x128xf32>
    %1132 = arith.mulf %1037, %1009 : vector<1x128xf32>
    %1133 = arith.subf %1131, %1132 : vector<1x128xf32>
    %1134 = arith.mulf %1084, %1005 : vector<1x128xf32>
    %1135 = arith.addf %1133, %1134 : vector<1x128xf32>
    %1136 = arith.mulf %1096, %1009 : vector<1x128xf32>
    %1137 = arith.addf %1135, %1136 : vector<1x128xf32>
    %1138 = arith.mulf %1069, %989 : vector<1x128xf32>
    %1139 = arith.subf %1045, %1138 : vector<1x128xf32>
    %1140 = arith.mulf %1049, %993 : vector<1x128xf32>
    %1141 = arith.subf %1139, %1140 : vector<1x128xf32>
    %1142 = arith.mulf %1087, %989 : vector<1x128xf32>
    %1143 = arith.addf %1141, %1142 : vector<1x128xf32>
    %1144 = arith.mulf %1099, %993 : vector<1x128xf32>
    %1145 = arith.addf %1143, %1144 : vector<1x128xf32>
    %1146 = arith.mulf %1069, %997 : vector<1x128xf32>
    %1147 = arith.subf %1049, %1146 : vector<1x128xf32>
    %1148 = arith.mulf %1049, %1001 : vector<1x128xf32>
    %1149 = arith.subf %1147, %1148 : vector<1x128xf32>
    %1150 = arith.mulf %1087, %997 : vector<1x128xf32>
    %1151 = arith.addf %1149, %1150 : vector<1x128xf32>
    %1152 = arith.mulf %1099, %1001 : vector<1x128xf32>
    %1153 = arith.addf %1151, %1152 : vector<1x128xf32>
    %1154 = arith.mulf %1069, %1005 : vector<1x128xf32>
    %1155 = arith.subf %1053, %1154 : vector<1x128xf32>
    %1156 = arith.mulf %1049, %1009 : vector<1x128xf32>
    %1157 = arith.subf %1155, %1156 : vector<1x128xf32>
    %1158 = arith.mulf %1087, %1005 : vector<1x128xf32>
    %1159 = arith.addf %1157, %1158 : vector<1x128xf32>
    %1160 = arith.mulf %1099, %1009 : vector<1x128xf32>
    %1161 = arith.addf %1159, %1160 : vector<1x128xf32>
    %1162 = arith.mulf %1073, %997 : vector<1x128xf32>
    %1163 = arith.subf %1057, %1162 : vector<1x128xf32>
    %1164 = arith.mulf %1057, %1001 : vector<1x128xf32>
    %1165 = arith.subf %1163, %1164 : vector<1x128xf32>
    %1166 = arith.mulf %1090, %997 : vector<1x128xf32>
    %1167 = arith.addf %1165, %1166 : vector<1x128xf32>
    %1168 = arith.mulf %1102, %1001 : vector<1x128xf32>
    %1169 = arith.addf %1167, %1168 : vector<1x128xf32>
    %1170 = arith.mulf %1073, %1005 : vector<1x128xf32>
    %1171 = arith.subf %1061, %1170 : vector<1x128xf32>
    %1172 = arith.mulf %1057, %1009 : vector<1x128xf32>
    %1173 = arith.subf %1171, %1172 : vector<1x128xf32>
    %1174 = arith.mulf %1090, %1005 : vector<1x128xf32>
    %1175 = arith.addf %1173, %1174 : vector<1x128xf32>
    %1176 = arith.mulf %1102, %1009 : vector<1x128xf32>
    %1177 = arith.addf %1175, %1176 : vector<1x128xf32>
    %1178 = arith.mulf %1077, %1005 : vector<1x128xf32>
    %1179 = arith.subf %1065, %1178 : vector<1x128xf32>
    %1180 = arith.mulf %1081, %1009 : vector<1x128xf32>
    %1181 = arith.subf %1179, %1180 : vector<1x128xf32>
    %1182 = arith.mulf %1093, %1005 : vector<1x128xf32>
    %1183 = arith.addf %1181, %1182 : vector<1x128xf32>
    %1184 = arith.mulf %1105, %1009 : vector<1x128xf32>
    %1185 = arith.addf %1183, %1184 : vector<1x128xf32>
    %c5_120 = arith.constant 5 : index
    %c0_121 = arith.constant 0 : index
    %c0_122 = arith.constant 0 : index
    %c0_123 = arith.constant 0 : index
    %1186 = vector.load %arg4[%c5_120, %c0_121, %c0_122, %c0_123] : memref<8x2x1x128xf32, #tpu.memory_space<vmem>>, vector<1x1x1x128xf32>
    %1187 = vector.shape_cast %1186 : vector<1x1x1x128xf32> to vector<1x128xf32>
    %c5_124 = arith.constant 5 : index
    %c1_125 = arith.constant 1 : index
    %c0_126 = arith.constant 0 : index
    %c0_127 = arith.constant 0 : index
    %1188 = vector.load %arg4[%c5_124, %c1_125, %c0_126, %c0_127] : memref<8x2x1x128xf32, #tpu.memory_space<vmem>>, vector<1x1x1x128xf32>
    %1189 = vector.shape_cast %1188 : vector<1x1x1x128xf32> to vector<1x128xf32>
    %cst_128 = arith.constant 1.000000e-01 : f32
    %1190 = vector.broadcast %cst_128 : f32 to vector<1x128xf32>
    %1191 = arith.mulf %1190, %1017 : vector<1x128xf32>
    %1192 = arith.addf %1013, %1191 : vector<1x128xf32>
    %cst_129 = arith.constant 1.000000e-01 : f32
    %1193 = vector.broadcast %cst_129 : f32 to vector<1x128xf32>
    %1194 = arith.mulf %1193, %1025 : vector<1x128xf32>
    %1195 = arith.addf %1021, %1194 : vector<1x128xf32>
    %cst_130 = arith.constant 1.000000e-01 : f32
    %1196 = vector.broadcast %cst_130 : f32 to vector<1x128xf32>
    %1197 = arith.mulf %1196, %1121 : vector<1x128xf32>
    %1198 = arith.addf %1113, %1197 : vector<1x128xf32>
    %cst_131 = arith.constant 1.000000e-01 : f32
    %1199 = vector.broadcast %cst_131 : f32 to vector<1x128xf32>
    %1200 = arith.mulf %1199, %1145 : vector<1x128xf32>
    %1201 = arith.addf %1121, %1200 : vector<1x128xf32>
    %cst_132 = arith.constant 1.000000e-01 : f32
    %1202 = vector.broadcast %cst_132 : f32 to vector<1x128xf32>
    %1203 = arith.mulf %1202, %1201 : vector<1x128xf32>
    %1204 = arith.addf %1198, %1203 : vector<1x128xf32>
    %1205 = arith.addf %1204, %3 : vector<1x128xf32>
    %cst_133 = arith.constant 1.000000e-01 : f32
    %1206 = vector.broadcast %cst_133 : f32 to vector<1x128xf32>
    %1207 = arith.mulf %1206, %1145 : vector<1x128xf32>
    %1208 = arith.addf %1121, %1207 : vector<1x128xf32>
    %1209 = arith.addf %1208, %6 : vector<1x128xf32>
    %cst_134 = arith.constant 1.000000e-01 : f32
    %1210 = vector.broadcast %cst_134 : f32 to vector<1x128xf32>
    %1211 = arith.mulf %1210, %1153 : vector<1x128xf32>
    %1212 = arith.addf %1129, %1211 : vector<1x128xf32>
    %cst_135 = arith.constant 1.000000e-01 : f32
    %1213 = vector.broadcast %cst_135 : f32 to vector<1x128xf32>
    %1214 = arith.mulf %1213, %1161 : vector<1x128xf32>
    %1215 = arith.addf %1137, %1214 : vector<1x128xf32>
    %cst_136 = arith.constant 1.000000e-01 : f32
    %1216 = vector.broadcast %cst_136 : f32 to vector<1x128xf32>
    %1217 = arith.mulf %1216, %1215 : vector<1x128xf32>
    %1218 = arith.addf %1212, %1217 : vector<1x128xf32>
    %1219 = arith.addf %1218, %9 : vector<1x128xf32>
    %cst_137 = arith.constant 1.000000e-01 : f32
    %1220 = vector.broadcast %cst_137 : f32 to vector<1x128xf32>
    %1221 = arith.mulf %1220, %1161 : vector<1x128xf32>
    %1222 = arith.addf %1137, %1221 : vector<1x128xf32>
    %1223 = arith.addf %1222, %12 : vector<1x128xf32>
    %1224 = arith.addf %1145, %15 : vector<1x128xf32>
    %cst_138 = arith.constant 1.000000e-01 : f32
    %1225 = vector.broadcast %cst_138 : f32 to vector<1x128xf32>
    %1226 = arith.mulf %1225, %1161 : vector<1x128xf32>
    %1227 = arith.addf %1153, %1226 : vector<1x128xf32>
    %1228 = arith.addf %1227, %18 : vector<1x128xf32>
    %1229 = arith.addf %1161, %21 : vector<1x128xf32>
    %cst_139 = arith.constant 1.000000e-01 : f32
    %1230 = vector.broadcast %cst_139 : f32 to vector<1x128xf32>
    %1231 = arith.mulf %1230, %1177 : vector<1x128xf32>
    %1232 = arith.addf %1169, %1231 : vector<1x128xf32>
    %cst_140 = arith.constant 1.000000e-01 : f32
    %1233 = vector.broadcast %cst_140 : f32 to vector<1x128xf32>
    %1234 = arith.mulf %1233, %1185 : vector<1x128xf32>
    %1235 = arith.addf %1177, %1234 : vector<1x128xf32>
    %cst_141 = arith.constant 1.000000e-01 : f32
    %1236 = vector.broadcast %cst_141 : f32 to vector<1x128xf32>
    %1237 = arith.mulf %1236, %1235 : vector<1x128xf32>
    %1238 = arith.addf %1232, %1237 : vector<1x128xf32>
    %1239 = arith.addf %1238, %24 : vector<1x128xf32>
    %cst_142 = arith.constant 1.000000e-01 : f32
    %1240 = vector.broadcast %cst_142 : f32 to vector<1x128xf32>
    %1241 = arith.mulf %1240, %1185 : vector<1x128xf32>
    %1242 = arith.addf %1177, %1241 : vector<1x128xf32>
    %1243 = arith.addf %1242, %27 : vector<1x128xf32>
    %1244 = arith.addf %1185, %30 : vector<1x128xf32>
    %1245 = arith.subf %1187, %1192 : vector<1x128xf32>
    %1246 = arith.subf %1189, %1195 : vector<1x128xf32>
    %1247 = arith.addf %1205, %33 : vector<1x128xf32>
    %1248 = arith.addf %1219, %36 : vector<1x128xf32>
    %1249 = arith.addf %1239, %39 : vector<1x128xf32>
    %1250 = arith.mulf %1247, %1249 : vector<1x128xf32>
    %1251 = arith.mulf %1248, %1248 : vector<1x128xf32>
    %1252 = arith.subf %1250, %1251 : vector<1x128xf32>
    %1253 = tpu.reciprocal %1252 {approx = true} : vector<1x128xf32> -> vector<1x128xf32>
    %1254 = arith.mulf %1252, %1253 : vector<1x128xf32>
    %cst_143 = arith.constant 2.000000e+00 : f32
    %1255 = vector.broadcast %cst_143 : f32 to vector<1x128xf32>
    %1256 = arith.subf %1255, %1254 : vector<1x128xf32>
    %1257 = arith.mulf %1253, %1256 : vector<1x128xf32>
    %1258 = arith.mulf %1205, %1249 : vector<1x128xf32>
    %1259 = arith.mulf %1219, %1248 : vector<1x128xf32>
    %1260 = arith.subf %1258, %1259 : vector<1x128xf32>
    %1261 = arith.mulf %1260, %1257 : vector<1x128xf32>
    %1262 = arith.mulf %1219, %1247 : vector<1x128xf32>
    %1263 = arith.mulf %1205, %1248 : vector<1x128xf32>
    %1264 = arith.subf %1262, %1263 : vector<1x128xf32>
    %1265 = arith.mulf %1264, %1257 : vector<1x128xf32>
    %1266 = arith.mulf %1209, %1249 : vector<1x128xf32>
    %1267 = arith.mulf %1228, %1248 : vector<1x128xf32>
    %1268 = arith.subf %1266, %1267 : vector<1x128xf32>
    %1269 = arith.mulf %1268, %1257 : vector<1x128xf32>
    %1270 = arith.mulf %1228, %1247 : vector<1x128xf32>
    %1271 = arith.mulf %1209, %1248 : vector<1x128xf32>
    %1272 = arith.subf %1270, %1271 : vector<1x128xf32>
    %1273 = arith.mulf %1272, %1257 : vector<1x128xf32>
    %1274 = arith.mulf %1219, %1249 : vector<1x128xf32>
    %1275 = arith.mulf %1239, %1248 : vector<1x128xf32>
    %1276 = arith.subf %1274, %1275 : vector<1x128xf32>
    %1277 = arith.mulf %1276, %1257 : vector<1x128xf32>
    %1278 = arith.mulf %1239, %1247 : vector<1x128xf32>
    %1279 = arith.mulf %1219, %1248 : vector<1x128xf32>
    %1280 = arith.subf %1278, %1279 : vector<1x128xf32>
    %1281 = arith.mulf %1280, %1257 : vector<1x128xf32>
    %1282 = arith.mulf %1223, %1249 : vector<1x128xf32>
    %1283 = arith.mulf %1243, %1248 : vector<1x128xf32>
    %1284 = arith.subf %1282, %1283 : vector<1x128xf32>
    %1285 = arith.mulf %1284, %1257 : vector<1x128xf32>
    %1286 = arith.mulf %1243, %1247 : vector<1x128xf32>
    %1287 = arith.mulf %1223, %1248 : vector<1x128xf32>
    %1288 = arith.subf %1286, %1287 : vector<1x128xf32>
    %1289 = arith.mulf %1288, %1257 : vector<1x128xf32>
    %1290 = arith.mulf %1261, %1245 : vector<1x128xf32>
    %1291 = arith.addf %1192, %1290 : vector<1x128xf32>
    %1292 = arith.mulf %1265, %1246 : vector<1x128xf32>
    %1293 = arith.addf %1291, %1292 : vector<1x128xf32>
    %1294 = arith.mulf %1269, %1245 : vector<1x128xf32>
    %1295 = arith.addf %1017, %1294 : vector<1x128xf32>
    %1296 = arith.mulf %1273, %1246 : vector<1x128xf32>
    %1297 = arith.addf %1295, %1296 : vector<1x128xf32>
    %1298 = arith.mulf %1277, %1245 : vector<1x128xf32>
    %1299 = arith.addf %1195, %1298 : vector<1x128xf32>
    %1300 = arith.mulf %1281, %1246 : vector<1x128xf32>
    %1301 = arith.addf %1299, %1300 : vector<1x128xf32>
    %1302 = arith.mulf %1285, %1245 : vector<1x128xf32>
    %1303 = arith.addf %1025, %1302 : vector<1x128xf32>
    %1304 = arith.mulf %1289, %1246 : vector<1x128xf32>
    %1305 = arith.addf %1303, %1304 : vector<1x128xf32>
    %1306 = arith.mulf %1261, %1205 : vector<1x128xf32>
    %1307 = arith.subf %1205, %1306 : vector<1x128xf32>
    %1308 = arith.mulf %1265, %1219 : vector<1x128xf32>
    %1309 = arith.subf %1307, %1308 : vector<1x128xf32>
    %1310 = arith.mulf %1261, %1209 : vector<1x128xf32>
    %1311 = arith.subf %1209, %1310 : vector<1x128xf32>
    %1312 = arith.mulf %1265, %1228 : vector<1x128xf32>
    %1313 = arith.subf %1311, %1312 : vector<1x128xf32>
    %1314 = arith.mulf %1261, %1219 : vector<1x128xf32>
    %1315 = arith.subf %1219, %1314 : vector<1x128xf32>
    %1316 = arith.mulf %1265, %1239 : vector<1x128xf32>
    %1317 = arith.subf %1315, %1316 : vector<1x128xf32>
    %1318 = arith.mulf %1261, %1223 : vector<1x128xf32>
    %1319 = arith.subf %1223, %1318 : vector<1x128xf32>
    %1320 = arith.mulf %1265, %1243 : vector<1x128xf32>
    %1321 = arith.subf %1319, %1320 : vector<1x128xf32>
    %1322 = arith.mulf %1269, %1209 : vector<1x128xf32>
    %1323 = arith.subf %1224, %1322 : vector<1x128xf32>
    %1324 = arith.mulf %1273, %1228 : vector<1x128xf32>
    %1325 = arith.subf %1323, %1324 : vector<1x128xf32>
    %1326 = arith.mulf %1269, %1219 : vector<1x128xf32>
    %1327 = arith.subf %1228, %1326 : vector<1x128xf32>
    %1328 = arith.mulf %1273, %1239 : vector<1x128xf32>
    %1329 = arith.subf %1327, %1328 : vector<1x128xf32>
    %1330 = arith.mulf %1269, %1223 : vector<1x128xf32>
    %1331 = arith.subf %1229, %1330 : vector<1x128xf32>
    %1332 = arith.mulf %1273, %1243 : vector<1x128xf32>
    %1333 = arith.subf %1331, %1332 : vector<1x128xf32>
    %1334 = arith.mulf %1277, %1219 : vector<1x128xf32>
    %1335 = arith.subf %1239, %1334 : vector<1x128xf32>
    %1336 = arith.mulf %1281, %1239 : vector<1x128xf32>
    %1337 = arith.subf %1335, %1336 : vector<1x128xf32>
    %1338 = arith.mulf %1277, %1223 : vector<1x128xf32>
    %1339 = arith.subf %1243, %1338 : vector<1x128xf32>
    %1340 = arith.mulf %1281, %1243 : vector<1x128xf32>
    %1341 = arith.subf %1339, %1340 : vector<1x128xf32>
    %1342 = arith.mulf %1285, %1223 : vector<1x128xf32>
    %1343 = arith.subf %1244, %1342 : vector<1x128xf32>
    %1344 = arith.mulf %1289, %1243 : vector<1x128xf32>
    %1345 = arith.subf %1343, %1344 : vector<1x128xf32>
    %1346 = arith.mulf %1269, %1205 : vector<1x128xf32>
    %1347 = arith.subf %1209, %1346 : vector<1x128xf32>
    %1348 = arith.mulf %1273, %1219 : vector<1x128xf32>
    %1349 = arith.subf %1347, %1348 : vector<1x128xf32>
    %1350 = arith.mulf %1277, %1205 : vector<1x128xf32>
    %1351 = arith.subf %1219, %1350 : vector<1x128xf32>
    %1352 = arith.mulf %1281, %1219 : vector<1x128xf32>
    %1353 = arith.subf %1351, %1352 : vector<1x128xf32>
    %1354 = arith.mulf %1285, %1205 : vector<1x128xf32>
    %1355 = arith.subf %1223, %1354 : vector<1x128xf32>
    %1356 = arith.mulf %1289, %1219 : vector<1x128xf32>
    %1357 = arith.subf %1355, %1356 : vector<1x128xf32>
    %1358 = arith.mulf %1285, %1219 : vector<1x128xf32>
    %1359 = arith.subf %1243, %1358 : vector<1x128xf32>
    %1360 = arith.mulf %1289, %1239 : vector<1x128xf32>
    %1361 = arith.subf %1359, %1360 : vector<1x128xf32>
    %1362 = arith.mulf %1261, %33 : vector<1x128xf32>
    %1363 = arith.mulf %1265, %36 : vector<1x128xf32>
    %1364 = arith.addf %1362, %1363 : vector<1x128xf32>
    %1365 = arith.mulf %1269, %33 : vector<1x128xf32>
    %1366 = arith.mulf %1273, %36 : vector<1x128xf32>
    %1367 = arith.addf %1365, %1366 : vector<1x128xf32>
    %1368 = arith.mulf %1277, %33 : vector<1x128xf32>
    %1369 = arith.mulf %1281, %36 : vector<1x128xf32>
    %1370 = arith.addf %1368, %1369 : vector<1x128xf32>
    %1371 = arith.mulf %1285, %33 : vector<1x128xf32>
    %1372 = arith.mulf %1289, %36 : vector<1x128xf32>
    %1373 = arith.addf %1371, %1372 : vector<1x128xf32>
    %1374 = arith.mulf %1261, %36 : vector<1x128xf32>
    %1375 = arith.mulf %1265, %39 : vector<1x128xf32>
    %1376 = arith.addf %1374, %1375 : vector<1x128xf32>
    %1377 = arith.mulf %1269, %36 : vector<1x128xf32>
    %1378 = arith.mulf %1273, %39 : vector<1x128xf32>
    %1379 = arith.addf %1377, %1378 : vector<1x128xf32>
    %1380 = arith.mulf %1277, %36 : vector<1x128xf32>
    %1381 = arith.mulf %1281, %39 : vector<1x128xf32>
    %1382 = arith.addf %1380, %1381 : vector<1x128xf32>
    %1383 = arith.mulf %1285, %36 : vector<1x128xf32>
    %1384 = arith.mulf %1289, %39 : vector<1x128xf32>
    %1385 = arith.addf %1383, %1384 : vector<1x128xf32>
    %1386 = arith.mulf %1309, %1261 : vector<1x128xf32>
    %1387 = arith.subf %1309, %1386 : vector<1x128xf32>
    %1388 = arith.mulf %1317, %1265 : vector<1x128xf32>
    %1389 = arith.subf %1387, %1388 : vector<1x128xf32>
    %1390 = arith.mulf %1364, %1261 : vector<1x128xf32>
    %1391 = arith.addf %1389, %1390 : vector<1x128xf32>
    %1392 = arith.mulf %1376, %1265 : vector<1x128xf32>
    %1393 = arith.addf %1391, %1392 : vector<1x128xf32>
    %1394 = arith.mulf %1309, %1269 : vector<1x128xf32>
    %1395 = arith.subf %1313, %1394 : vector<1x128xf32>
    %1396 = arith.mulf %1317, %1273 : vector<1x128xf32>
    %1397 = arith.subf %1395, %1396 : vector<1x128xf32>
    %1398 = arith.mulf %1364, %1269 : vector<1x128xf32>
    %1399 = arith.addf %1397, %1398 : vector<1x128xf32>
    %1400 = arith.mulf %1376, %1273 : vector<1x128xf32>
    %1401 = arith.addf %1399, %1400 : vector<1x128xf32>
    %1402 = arith.mulf %1309, %1277 : vector<1x128xf32>
    %1403 = arith.subf %1317, %1402 : vector<1x128xf32>
    %1404 = arith.mulf %1317, %1281 : vector<1x128xf32>
    %1405 = arith.subf %1403, %1404 : vector<1x128xf32>
    %1406 = arith.mulf %1364, %1277 : vector<1x128xf32>
    %1407 = arith.addf %1405, %1406 : vector<1x128xf32>
    %1408 = arith.mulf %1376, %1281 : vector<1x128xf32>
    %1409 = arith.addf %1407, %1408 : vector<1x128xf32>
    %1410 = arith.mulf %1309, %1285 : vector<1x128xf32>
    %1411 = arith.subf %1321, %1410 : vector<1x128xf32>
    %1412 = arith.mulf %1317, %1289 : vector<1x128xf32>
    %1413 = arith.subf %1411, %1412 : vector<1x128xf32>
    %1414 = arith.mulf %1364, %1285 : vector<1x128xf32>
    %1415 = arith.addf %1413, %1414 : vector<1x128xf32>
    %1416 = arith.mulf %1376, %1289 : vector<1x128xf32>
    %1417 = arith.addf %1415, %1416 : vector<1x128xf32>
    %1418 = arith.mulf %1349, %1269 : vector<1x128xf32>
    %1419 = arith.subf %1325, %1418 : vector<1x128xf32>
    %1420 = arith.mulf %1329, %1273 : vector<1x128xf32>
    %1421 = arith.subf %1419, %1420 : vector<1x128xf32>
    %1422 = arith.mulf %1367, %1269 : vector<1x128xf32>
    %1423 = arith.addf %1421, %1422 : vector<1x128xf32>
    %1424 = arith.mulf %1379, %1273 : vector<1x128xf32>
    %1425 = arith.addf %1423, %1424 : vector<1x128xf32>
    %1426 = arith.mulf %1349, %1277 : vector<1x128xf32>
    %1427 = arith.subf %1329, %1426 : vector<1x128xf32>
    %1428 = arith.mulf %1329, %1281 : vector<1x128xf32>
    %1429 = arith.subf %1427, %1428 : vector<1x128xf32>
    %1430 = arith.mulf %1367, %1277 : vector<1x128xf32>
    %1431 = arith.addf %1429, %1430 : vector<1x128xf32>
    %1432 = arith.mulf %1379, %1281 : vector<1x128xf32>
    %1433 = arith.addf %1431, %1432 : vector<1x128xf32>
    %1434 = arith.mulf %1349, %1285 : vector<1x128xf32>
    %1435 = arith.subf %1333, %1434 : vector<1x128xf32>
    %1436 = arith.mulf %1329, %1289 : vector<1x128xf32>
    %1437 = arith.subf %1435, %1436 : vector<1x128xf32>
    %1438 = arith.mulf %1367, %1285 : vector<1x128xf32>
    %1439 = arith.addf %1437, %1438 : vector<1x128xf32>
    %1440 = arith.mulf %1379, %1289 : vector<1x128xf32>
    %1441 = arith.addf %1439, %1440 : vector<1x128xf32>
    %1442 = arith.mulf %1353, %1277 : vector<1x128xf32>
    %1443 = arith.subf %1337, %1442 : vector<1x128xf32>
    %1444 = arith.mulf %1337, %1281 : vector<1x128xf32>
    %1445 = arith.subf %1443, %1444 : vector<1x128xf32>
    %1446 = arith.mulf %1370, %1277 : vector<1x128xf32>
    %1447 = arith.addf %1445, %1446 : vector<1x128xf32>
    %1448 = arith.mulf %1382, %1281 : vector<1x128xf32>
    %1449 = arith.addf %1447, %1448 : vector<1x128xf32>
    %1450 = arith.mulf %1353, %1285 : vector<1x128xf32>
    %1451 = arith.subf %1341, %1450 : vector<1x128xf32>
    %1452 = arith.mulf %1337, %1289 : vector<1x128xf32>
    %1453 = arith.subf %1451, %1452 : vector<1x128xf32>
    %1454 = arith.mulf %1370, %1285 : vector<1x128xf32>
    %1455 = arith.addf %1453, %1454 : vector<1x128xf32>
    %1456 = arith.mulf %1382, %1289 : vector<1x128xf32>
    %1457 = arith.addf %1455, %1456 : vector<1x128xf32>
    %1458 = arith.mulf %1357, %1285 : vector<1x128xf32>
    %1459 = arith.subf %1345, %1458 : vector<1x128xf32>
    %1460 = arith.mulf %1361, %1289 : vector<1x128xf32>
    %1461 = arith.subf %1459, %1460 : vector<1x128xf32>
    %1462 = arith.mulf %1373, %1285 : vector<1x128xf32>
    %1463 = arith.addf %1461, %1462 : vector<1x128xf32>
    %1464 = arith.mulf %1385, %1289 : vector<1x128xf32>
    %1465 = arith.addf %1463, %1464 : vector<1x128xf32>
    %c6_144 = arith.constant 6 : index
    %c0_145 = arith.constant 0 : index
    %c0_146 = arith.constant 0 : index
    %c0_147 = arith.constant 0 : index
    %1466 = vector.load %arg4[%c6_144, %c0_145, %c0_146, %c0_147] : memref<8x2x1x128xf32, #tpu.memory_space<vmem>>, vector<1x1x1x128xf32>
    %1467 = vector.shape_cast %1466 : vector<1x1x1x128xf32> to vector<1x128xf32>
    %c6_148 = arith.constant 6 : index
    %c1_149 = arith.constant 1 : index
    %c0_150 = arith.constant 0 : index
    %c0_151 = arith.constant 0 : index
    %1468 = vector.load %arg4[%c6_148, %c1_149, %c0_150, %c0_151] : memref<8x2x1x128xf32, #tpu.memory_space<vmem>>, vector<1x1x1x128xf32>
    %1469 = vector.shape_cast %1468 : vector<1x1x1x128xf32> to vector<1x128xf32>
    %cst_152 = arith.constant 1.000000e-01 : f32
    %1470 = vector.broadcast %cst_152 : f32 to vector<1x128xf32>
    %1471 = arith.mulf %1470, %1297 : vector<1x128xf32>
    %1472 = arith.addf %1293, %1471 : vector<1x128xf32>
    %cst_153 = arith.constant 1.000000e-01 : f32
    %1473 = vector.broadcast %cst_153 : f32 to vector<1x128xf32>
    %1474 = arith.mulf %1473, %1305 : vector<1x128xf32>
    %1475 = arith.addf %1301, %1474 : vector<1x128xf32>
    %cst_154 = arith.constant 1.000000e-01 : f32
    %1476 = vector.broadcast %cst_154 : f32 to vector<1x128xf32>
    %1477 = arith.mulf %1476, %1401 : vector<1x128xf32>
    %1478 = arith.addf %1393, %1477 : vector<1x128xf32>
    %cst_155 = arith.constant 1.000000e-01 : f32
    %1479 = vector.broadcast %cst_155 : f32 to vector<1x128xf32>
    %1480 = arith.mulf %1479, %1425 : vector<1x128xf32>
    %1481 = arith.addf %1401, %1480 : vector<1x128xf32>
    %cst_156 = arith.constant 1.000000e-01 : f32
    %1482 = vector.broadcast %cst_156 : f32 to vector<1x128xf32>
    %1483 = arith.mulf %1482, %1481 : vector<1x128xf32>
    %1484 = arith.addf %1478, %1483 : vector<1x128xf32>
    %1485 = arith.addf %1484, %3 : vector<1x128xf32>
    %cst_157 = arith.constant 1.000000e-01 : f32
    %1486 = vector.broadcast %cst_157 : f32 to vector<1x128xf32>
    %1487 = arith.mulf %1486, %1425 : vector<1x128xf32>
    %1488 = arith.addf %1401, %1487 : vector<1x128xf32>
    %1489 = arith.addf %1488, %6 : vector<1x128xf32>
    %cst_158 = arith.constant 1.000000e-01 : f32
    %1490 = vector.broadcast %cst_158 : f32 to vector<1x128xf32>
    %1491 = arith.mulf %1490, %1433 : vector<1x128xf32>
    %1492 = arith.addf %1409, %1491 : vector<1x128xf32>
    %cst_159 = arith.constant 1.000000e-01 : f32
    %1493 = vector.broadcast %cst_159 : f32 to vector<1x128xf32>
    %1494 = arith.mulf %1493, %1441 : vector<1x128xf32>
    %1495 = arith.addf %1417, %1494 : vector<1x128xf32>
    %cst_160 = arith.constant 1.000000e-01 : f32
    %1496 = vector.broadcast %cst_160 : f32 to vector<1x128xf32>
    %1497 = arith.mulf %1496, %1495 : vector<1x128xf32>
    %1498 = arith.addf %1492, %1497 : vector<1x128xf32>
    %1499 = arith.addf %1498, %9 : vector<1x128xf32>
    %cst_161 = arith.constant 1.000000e-01 : f32
    %1500 = vector.broadcast %cst_161 : f32 to vector<1x128xf32>
    %1501 = arith.mulf %1500, %1441 : vector<1x128xf32>
    %1502 = arith.addf %1417, %1501 : vector<1x128xf32>
    %1503 = arith.addf %1502, %12 : vector<1x128xf32>
    %1504 = arith.addf %1425, %15 : vector<1x128xf32>
    %cst_162 = arith.constant 1.000000e-01 : f32
    %1505 = vector.broadcast %cst_162 : f32 to vector<1x128xf32>
    %1506 = arith.mulf %1505, %1441 : vector<1x128xf32>
    %1507 = arith.addf %1433, %1506 : vector<1x128xf32>
    %1508 = arith.addf %1507, %18 : vector<1x128xf32>
    %1509 = arith.addf %1441, %21 : vector<1x128xf32>
    %cst_163 = arith.constant 1.000000e-01 : f32
    %1510 = vector.broadcast %cst_163 : f32 to vector<1x128xf32>
    %1511 = arith.mulf %1510, %1457 : vector<1x128xf32>
    %1512 = arith.addf %1449, %1511 : vector<1x128xf32>
    %cst_164 = arith.constant 1.000000e-01 : f32
    %1513 = vector.broadcast %cst_164 : f32 to vector<1x128xf32>
    %1514 = arith.mulf %1513, %1465 : vector<1x128xf32>
    %1515 = arith.addf %1457, %1514 : vector<1x128xf32>
    %cst_165 = arith.constant 1.000000e-01 : f32
    %1516 = vector.broadcast %cst_165 : f32 to vector<1x128xf32>
    %1517 = arith.mulf %1516, %1515 : vector<1x128xf32>
    %1518 = arith.addf %1512, %1517 : vector<1x128xf32>
    %1519 = arith.addf %1518, %24 : vector<1x128xf32>
    %cst_166 = arith.constant 1.000000e-01 : f32
    %1520 = vector.broadcast %cst_166 : f32 to vector<1x128xf32>
    %1521 = arith.mulf %1520, %1465 : vector<1x128xf32>
    %1522 = arith.addf %1457, %1521 : vector<1x128xf32>
    %1523 = arith.addf %1522, %27 : vector<1x128xf32>
    %1524 = arith.addf %1465, %30 : vector<1x128xf32>
    %1525 = arith.subf %1467, %1472 : vector<1x128xf32>
    %1526 = arith.subf %1469, %1475 : vector<1x128xf32>
    %1527 = arith.addf %1485, %33 : vector<1x128xf32>
    %1528 = arith.addf %1499, %36 : vector<1x128xf32>
    %1529 = arith.addf %1519, %39 : vector<1x128xf32>
    %1530 = arith.mulf %1527, %1529 : vector<1x128xf32>
    %1531 = arith.mulf %1528, %1528 : vector<1x128xf32>
    %1532 = arith.subf %1530, %1531 : vector<1x128xf32>
    %1533 = tpu.reciprocal %1532 {approx = true} : vector<1x128xf32> -> vector<1x128xf32>
    %1534 = arith.mulf %1532, %1533 : vector<1x128xf32>
    %cst_167 = arith.constant 2.000000e+00 : f32
    %1535 = vector.broadcast %cst_167 : f32 to vector<1x128xf32>
    %1536 = arith.subf %1535, %1534 : vector<1x128xf32>
    %1537 = arith.mulf %1533, %1536 : vector<1x128xf32>
    %1538 = arith.mulf %1485, %1529 : vector<1x128xf32>
    %1539 = arith.mulf %1499, %1528 : vector<1x128xf32>
    %1540 = arith.subf %1538, %1539 : vector<1x128xf32>
    %1541 = arith.mulf %1540, %1537 : vector<1x128xf32>
    %1542 = arith.mulf %1499, %1527 : vector<1x128xf32>
    %1543 = arith.mulf %1485, %1528 : vector<1x128xf32>
    %1544 = arith.subf %1542, %1543 : vector<1x128xf32>
    %1545 = arith.mulf %1544, %1537 : vector<1x128xf32>
    %1546 = arith.mulf %1489, %1529 : vector<1x128xf32>
    %1547 = arith.mulf %1508, %1528 : vector<1x128xf32>
    %1548 = arith.subf %1546, %1547 : vector<1x128xf32>
    %1549 = arith.mulf %1548, %1537 : vector<1x128xf32>
    %1550 = arith.mulf %1508, %1527 : vector<1x128xf32>
    %1551 = arith.mulf %1489, %1528 : vector<1x128xf32>
    %1552 = arith.subf %1550, %1551 : vector<1x128xf32>
    %1553 = arith.mulf %1552, %1537 : vector<1x128xf32>
    %1554 = arith.mulf %1499, %1529 : vector<1x128xf32>
    %1555 = arith.mulf %1519, %1528 : vector<1x128xf32>
    %1556 = arith.subf %1554, %1555 : vector<1x128xf32>
    %1557 = arith.mulf %1556, %1537 : vector<1x128xf32>
    %1558 = arith.mulf %1519, %1527 : vector<1x128xf32>
    %1559 = arith.mulf %1499, %1528 : vector<1x128xf32>
    %1560 = arith.subf %1558, %1559 : vector<1x128xf32>
    %1561 = arith.mulf %1560, %1537 : vector<1x128xf32>
    %1562 = arith.mulf %1503, %1529 : vector<1x128xf32>
    %1563 = arith.mulf %1523, %1528 : vector<1x128xf32>
    %1564 = arith.subf %1562, %1563 : vector<1x128xf32>
    %1565 = arith.mulf %1564, %1537 : vector<1x128xf32>
    %1566 = arith.mulf %1523, %1527 : vector<1x128xf32>
    %1567 = arith.mulf %1503, %1528 : vector<1x128xf32>
    %1568 = arith.subf %1566, %1567 : vector<1x128xf32>
    %1569 = arith.mulf %1568, %1537 : vector<1x128xf32>
    %1570 = arith.mulf %1541, %1525 : vector<1x128xf32>
    %1571 = arith.addf %1472, %1570 : vector<1x128xf32>
    %1572 = arith.mulf %1545, %1526 : vector<1x128xf32>
    %1573 = arith.addf %1571, %1572 : vector<1x128xf32>
    %1574 = arith.mulf %1549, %1525 : vector<1x128xf32>
    %1575 = arith.addf %1297, %1574 : vector<1x128xf32>
    %1576 = arith.mulf %1553, %1526 : vector<1x128xf32>
    %1577 = arith.addf %1575, %1576 : vector<1x128xf32>
    %1578 = arith.mulf %1557, %1525 : vector<1x128xf32>
    %1579 = arith.addf %1475, %1578 : vector<1x128xf32>
    %1580 = arith.mulf %1561, %1526 : vector<1x128xf32>
    %1581 = arith.addf %1579, %1580 : vector<1x128xf32>
    %1582 = arith.mulf %1565, %1525 : vector<1x128xf32>
    %1583 = arith.addf %1305, %1582 : vector<1x128xf32>
    %1584 = arith.mulf %1569, %1526 : vector<1x128xf32>
    %1585 = arith.addf %1583, %1584 : vector<1x128xf32>
    %1586 = arith.mulf %1541, %1485 : vector<1x128xf32>
    %1587 = arith.subf %1485, %1586 : vector<1x128xf32>
    %1588 = arith.mulf %1545, %1499 : vector<1x128xf32>
    %1589 = arith.subf %1587, %1588 : vector<1x128xf32>
    %1590 = arith.mulf %1541, %1489 : vector<1x128xf32>
    %1591 = arith.subf %1489, %1590 : vector<1x128xf32>
    %1592 = arith.mulf %1545, %1508 : vector<1x128xf32>
    %1593 = arith.subf %1591, %1592 : vector<1x128xf32>
    %1594 = arith.mulf %1541, %1499 : vector<1x128xf32>
    %1595 = arith.subf %1499, %1594 : vector<1x128xf32>
    %1596 = arith.mulf %1545, %1519 : vector<1x128xf32>
    %1597 = arith.subf %1595, %1596 : vector<1x128xf32>
    %1598 = arith.mulf %1541, %1503 : vector<1x128xf32>
    %1599 = arith.subf %1503, %1598 : vector<1x128xf32>
    %1600 = arith.mulf %1545, %1523 : vector<1x128xf32>
    %1601 = arith.subf %1599, %1600 : vector<1x128xf32>
    %1602 = arith.mulf %1549, %1489 : vector<1x128xf32>
    %1603 = arith.subf %1504, %1602 : vector<1x128xf32>
    %1604 = arith.mulf %1553, %1508 : vector<1x128xf32>
    %1605 = arith.subf %1603, %1604 : vector<1x128xf32>
    %1606 = arith.mulf %1549, %1499 : vector<1x128xf32>
    %1607 = arith.subf %1508, %1606 : vector<1x128xf32>
    %1608 = arith.mulf %1553, %1519 : vector<1x128xf32>
    %1609 = arith.subf %1607, %1608 : vector<1x128xf32>
    %1610 = arith.mulf %1549, %1503 : vector<1x128xf32>
    %1611 = arith.subf %1509, %1610 : vector<1x128xf32>
    %1612 = arith.mulf %1553, %1523 : vector<1x128xf32>
    %1613 = arith.subf %1611, %1612 : vector<1x128xf32>
    %1614 = arith.mulf %1557, %1499 : vector<1x128xf32>
    %1615 = arith.subf %1519, %1614 : vector<1x128xf32>
    %1616 = arith.mulf %1561, %1519 : vector<1x128xf32>
    %1617 = arith.subf %1615, %1616 : vector<1x128xf32>
    %1618 = arith.mulf %1557, %1503 : vector<1x128xf32>
    %1619 = arith.subf %1523, %1618 : vector<1x128xf32>
    %1620 = arith.mulf %1561, %1523 : vector<1x128xf32>
    %1621 = arith.subf %1619, %1620 : vector<1x128xf32>
    %1622 = arith.mulf %1565, %1503 : vector<1x128xf32>
    %1623 = arith.subf %1524, %1622 : vector<1x128xf32>
    %1624 = arith.mulf %1569, %1523 : vector<1x128xf32>
    %1625 = arith.subf %1623, %1624 : vector<1x128xf32>
    %1626 = arith.mulf %1549, %1485 : vector<1x128xf32>
    %1627 = arith.subf %1489, %1626 : vector<1x128xf32>
    %1628 = arith.mulf %1553, %1499 : vector<1x128xf32>
    %1629 = arith.subf %1627, %1628 : vector<1x128xf32>
    %1630 = arith.mulf %1557, %1485 : vector<1x128xf32>
    %1631 = arith.subf %1499, %1630 : vector<1x128xf32>
    %1632 = arith.mulf %1561, %1499 : vector<1x128xf32>
    %1633 = arith.subf %1631, %1632 : vector<1x128xf32>
    %1634 = arith.mulf %1565, %1485 : vector<1x128xf32>
    %1635 = arith.subf %1503, %1634 : vector<1x128xf32>
    %1636 = arith.mulf %1569, %1499 : vector<1x128xf32>
    %1637 = arith.subf %1635, %1636 : vector<1x128xf32>
    %1638 = arith.mulf %1565, %1499 : vector<1x128xf32>
    %1639 = arith.subf %1523, %1638 : vector<1x128xf32>
    %1640 = arith.mulf %1569, %1519 : vector<1x128xf32>
    %1641 = arith.subf %1639, %1640 : vector<1x128xf32>
    %1642 = arith.mulf %1541, %33 : vector<1x128xf32>
    %1643 = arith.mulf %1545, %36 : vector<1x128xf32>
    %1644 = arith.addf %1642, %1643 : vector<1x128xf32>
    %1645 = arith.mulf %1549, %33 : vector<1x128xf32>
    %1646 = arith.mulf %1553, %36 : vector<1x128xf32>
    %1647 = arith.addf %1645, %1646 : vector<1x128xf32>
    %1648 = arith.mulf %1557, %33 : vector<1x128xf32>
    %1649 = arith.mulf %1561, %36 : vector<1x128xf32>
    %1650 = arith.addf %1648, %1649 : vector<1x128xf32>
    %1651 = arith.mulf %1565, %33 : vector<1x128xf32>
    %1652 = arith.mulf %1569, %36 : vector<1x128xf32>
    %1653 = arith.addf %1651, %1652 : vector<1x128xf32>
    %1654 = arith.mulf %1541, %36 : vector<1x128xf32>
    %1655 = arith.mulf %1545, %39 : vector<1x128xf32>
    %1656 = arith.addf %1654, %1655 : vector<1x128xf32>
    %1657 = arith.mulf %1549, %36 : vector<1x128xf32>
    %1658 = arith.mulf %1553, %39 : vector<1x128xf32>
    %1659 = arith.addf %1657, %1658 : vector<1x128xf32>
    %1660 = arith.mulf %1557, %36 : vector<1x128xf32>
    %1661 = arith.mulf %1561, %39 : vector<1x128xf32>
    %1662 = arith.addf %1660, %1661 : vector<1x128xf32>
    %1663 = arith.mulf %1565, %36 : vector<1x128xf32>
    %1664 = arith.mulf %1569, %39 : vector<1x128xf32>
    %1665 = arith.addf %1663, %1664 : vector<1x128xf32>
    %1666 = arith.mulf %1589, %1541 : vector<1x128xf32>
    %1667 = arith.subf %1589, %1666 : vector<1x128xf32>
    %1668 = arith.mulf %1597, %1545 : vector<1x128xf32>
    %1669 = arith.subf %1667, %1668 : vector<1x128xf32>
    %1670 = arith.mulf %1644, %1541 : vector<1x128xf32>
    %1671 = arith.addf %1669, %1670 : vector<1x128xf32>
    %1672 = arith.mulf %1656, %1545 : vector<1x128xf32>
    %1673 = arith.addf %1671, %1672 : vector<1x128xf32>
    %1674 = arith.mulf %1589, %1549 : vector<1x128xf32>
    %1675 = arith.subf %1593, %1674 : vector<1x128xf32>
    %1676 = arith.mulf %1597, %1553 : vector<1x128xf32>
    %1677 = arith.subf %1675, %1676 : vector<1x128xf32>
    %1678 = arith.mulf %1644, %1549 : vector<1x128xf32>
    %1679 = arith.addf %1677, %1678 : vector<1x128xf32>
    %1680 = arith.mulf %1656, %1553 : vector<1x128xf32>
    %1681 = arith.addf %1679, %1680 : vector<1x128xf32>
    %1682 = arith.mulf %1589, %1557 : vector<1x128xf32>
    %1683 = arith.subf %1597, %1682 : vector<1x128xf32>
    %1684 = arith.mulf %1597, %1561 : vector<1x128xf32>
    %1685 = arith.subf %1683, %1684 : vector<1x128xf32>
    %1686 = arith.mulf %1644, %1557 : vector<1x128xf32>
    %1687 = arith.addf %1685, %1686 : vector<1x128xf32>
    %1688 = arith.mulf %1656, %1561 : vector<1x128xf32>
    %1689 = arith.addf %1687, %1688 : vector<1x128xf32>
    %1690 = arith.mulf %1589, %1565 : vector<1x128xf32>
    %1691 = arith.subf %1601, %1690 : vector<1x128xf32>
    %1692 = arith.mulf %1597, %1569 : vector<1x128xf32>
    %1693 = arith.subf %1691, %1692 : vector<1x128xf32>
    %1694 = arith.mulf %1644, %1565 : vector<1x128xf32>
    %1695 = arith.addf %1693, %1694 : vector<1x128xf32>
    %1696 = arith.mulf %1656, %1569 : vector<1x128xf32>
    %1697 = arith.addf %1695, %1696 : vector<1x128xf32>
    %1698 = arith.mulf %1629, %1549 : vector<1x128xf32>
    %1699 = arith.subf %1605, %1698 : vector<1x128xf32>
    %1700 = arith.mulf %1609, %1553 : vector<1x128xf32>
    %1701 = arith.subf %1699, %1700 : vector<1x128xf32>
    %1702 = arith.mulf %1647, %1549 : vector<1x128xf32>
    %1703 = arith.addf %1701, %1702 : vector<1x128xf32>
    %1704 = arith.mulf %1659, %1553 : vector<1x128xf32>
    %1705 = arith.addf %1703, %1704 : vector<1x128xf32>
    %1706 = arith.mulf %1629, %1557 : vector<1x128xf32>
    %1707 = arith.subf %1609, %1706 : vector<1x128xf32>
    %1708 = arith.mulf %1609, %1561 : vector<1x128xf32>
    %1709 = arith.subf %1707, %1708 : vector<1x128xf32>
    %1710 = arith.mulf %1647, %1557 : vector<1x128xf32>
    %1711 = arith.addf %1709, %1710 : vector<1x128xf32>
    %1712 = arith.mulf %1659, %1561 : vector<1x128xf32>
    %1713 = arith.addf %1711, %1712 : vector<1x128xf32>
    %1714 = arith.mulf %1629, %1565 : vector<1x128xf32>
    %1715 = arith.subf %1613, %1714 : vector<1x128xf32>
    %1716 = arith.mulf %1609, %1569 : vector<1x128xf32>
    %1717 = arith.subf %1715, %1716 : vector<1x128xf32>
    %1718 = arith.mulf %1647, %1565 : vector<1x128xf32>
    %1719 = arith.addf %1717, %1718 : vector<1x128xf32>
    %1720 = arith.mulf %1659, %1569 : vector<1x128xf32>
    %1721 = arith.addf %1719, %1720 : vector<1x128xf32>
    %1722 = arith.mulf %1633, %1557 : vector<1x128xf32>
    %1723 = arith.subf %1617, %1722 : vector<1x128xf32>
    %1724 = arith.mulf %1617, %1561 : vector<1x128xf32>
    %1725 = arith.subf %1723, %1724 : vector<1x128xf32>
    %1726 = arith.mulf %1650, %1557 : vector<1x128xf32>
    %1727 = arith.addf %1725, %1726 : vector<1x128xf32>
    %1728 = arith.mulf %1662, %1561 : vector<1x128xf32>
    %1729 = arith.addf %1727, %1728 : vector<1x128xf32>
    %1730 = arith.mulf %1633, %1565 : vector<1x128xf32>
    %1731 = arith.subf %1621, %1730 : vector<1x128xf32>
    %1732 = arith.mulf %1617, %1569 : vector<1x128xf32>
    %1733 = arith.subf %1731, %1732 : vector<1x128xf32>
    %1734 = arith.mulf %1650, %1565 : vector<1x128xf32>
    %1735 = arith.addf %1733, %1734 : vector<1x128xf32>
    %1736 = arith.mulf %1662, %1569 : vector<1x128xf32>
    %1737 = arith.addf %1735, %1736 : vector<1x128xf32>
    %1738 = arith.mulf %1637, %1565 : vector<1x128xf32>
    %1739 = arith.subf %1625, %1738 : vector<1x128xf32>
    %1740 = arith.mulf %1641, %1569 : vector<1x128xf32>
    %1741 = arith.subf %1739, %1740 : vector<1x128xf32>
    %1742 = arith.mulf %1653, %1565 : vector<1x128xf32>
    %1743 = arith.addf %1741, %1742 : vector<1x128xf32>
    %1744 = arith.mulf %1665, %1569 : vector<1x128xf32>
    %1745 = arith.addf %1743, %1744 : vector<1x128xf32>
    %c7_168 = arith.constant 7 : index
    %c0_169 = arith.constant 0 : index
    %c0_170 = arith.constant 0 : index
    %c0_171 = arith.constant 0 : index
    %1746 = vector.load %arg4[%c7_168, %c0_169, %c0_170, %c0_171] : memref<8x2x1x128xf32, #tpu.memory_space<vmem>>, vector<1x1x1x128xf32>
    %1747 = vector.shape_cast %1746 : vector<1x1x1x128xf32> to vector<1x128xf32>
    %c7_172 = arith.constant 7 : index
    %c1_173 = arith.constant 1 : index
    %c0_174 = arith.constant 0 : index
    %c0_175 = arith.constant 0 : index
    %1748 = vector.load %arg4[%c7_172, %c1_173, %c0_174, %c0_175] : memref<8x2x1x128xf32, #tpu.memory_space<vmem>>, vector<1x1x1x128xf32>
    %1749 = vector.shape_cast %1748 : vector<1x1x1x128xf32> to vector<1x128xf32>
    %cst_176 = arith.constant 1.000000e-01 : f32
    %1750 = vector.broadcast %cst_176 : f32 to vector<1x128xf32>
    %1751 = arith.mulf %1750, %1577 : vector<1x128xf32>
    %1752 = arith.addf %1573, %1751 : vector<1x128xf32>
    %cst_177 = arith.constant 1.000000e-01 : f32
    %1753 = vector.broadcast %cst_177 : f32 to vector<1x128xf32>
    %1754 = arith.mulf %1753, %1585 : vector<1x128xf32>
    %1755 = arith.addf %1581, %1754 : vector<1x128xf32>
    %cst_178 = arith.constant 1.000000e-01 : f32
    %1756 = vector.broadcast %cst_178 : f32 to vector<1x128xf32>
    %1757 = arith.mulf %1756, %1681 : vector<1x128xf32>
    %1758 = arith.addf %1673, %1757 : vector<1x128xf32>
    %cst_179 = arith.constant 1.000000e-01 : f32
    %1759 = vector.broadcast %cst_179 : f32 to vector<1x128xf32>
    %1760 = arith.mulf %1759, %1705 : vector<1x128xf32>
    %1761 = arith.addf %1681, %1760 : vector<1x128xf32>
    %cst_180 = arith.constant 1.000000e-01 : f32
    %1762 = vector.broadcast %cst_180 : f32 to vector<1x128xf32>
    %1763 = arith.mulf %1762, %1761 : vector<1x128xf32>
    %1764 = arith.addf %1758, %1763 : vector<1x128xf32>
    %1765 = arith.addf %1764, %3 : vector<1x128xf32>
    %cst_181 = arith.constant 1.000000e-01 : f32
    %1766 = vector.broadcast %cst_181 : f32 to vector<1x128xf32>
    %1767 = arith.mulf %1766, %1705 : vector<1x128xf32>
    %1768 = arith.addf %1681, %1767 : vector<1x128xf32>
    %1769 = arith.addf %1768, %6 : vector<1x128xf32>
    %cst_182 = arith.constant 1.000000e-01 : f32
    %1770 = vector.broadcast %cst_182 : f32 to vector<1x128xf32>
    %1771 = arith.mulf %1770, %1713 : vector<1x128xf32>
    %1772 = arith.addf %1689, %1771 : vector<1x128xf32>
    %cst_183 = arith.constant 1.000000e-01 : f32
    %1773 = vector.broadcast %cst_183 : f32 to vector<1x128xf32>
    %1774 = arith.mulf %1773, %1721 : vector<1x128xf32>
    %1775 = arith.addf %1697, %1774 : vector<1x128xf32>
    %cst_184 = arith.constant 1.000000e-01 : f32
    %1776 = vector.broadcast %cst_184 : f32 to vector<1x128xf32>
    %1777 = arith.mulf %1776, %1775 : vector<1x128xf32>
    %1778 = arith.addf %1772, %1777 : vector<1x128xf32>
    %1779 = arith.addf %1778, %9 : vector<1x128xf32>
    %cst_185 = arith.constant 1.000000e-01 : f32
    %1780 = vector.broadcast %cst_185 : f32 to vector<1x128xf32>
    %1781 = arith.mulf %1780, %1721 : vector<1x128xf32>
    %1782 = arith.addf %1697, %1781 : vector<1x128xf32>
    %1783 = arith.addf %1782, %12 : vector<1x128xf32>
    %1784 = arith.addf %1705, %15 : vector<1x128xf32>
    %cst_186 = arith.constant 1.000000e-01 : f32
    %1785 = vector.broadcast %cst_186 : f32 to vector<1x128xf32>
    %1786 = arith.mulf %1785, %1721 : vector<1x128xf32>
    %1787 = arith.addf %1713, %1786 : vector<1x128xf32>
    %1788 = arith.addf %1787, %18 : vector<1x128xf32>
    %1789 = arith.addf %1721, %21 : vector<1x128xf32>
    %cst_187 = arith.constant 1.000000e-01 : f32
    %1790 = vector.broadcast %cst_187 : f32 to vector<1x128xf32>
    %1791 = arith.mulf %1790, %1737 : vector<1x128xf32>
    %1792 = arith.addf %1729, %1791 : vector<1x128xf32>
    %cst_188 = arith.constant 1.000000e-01 : f32
    %1793 = vector.broadcast %cst_188 : f32 to vector<1x128xf32>
    %1794 = arith.mulf %1793, %1745 : vector<1x128xf32>
    %1795 = arith.addf %1737, %1794 : vector<1x128xf32>
    %cst_189 = arith.constant 1.000000e-01 : f32
    %1796 = vector.broadcast %cst_189 : f32 to vector<1x128xf32>
    %1797 = arith.mulf %1796, %1795 : vector<1x128xf32>
    %1798 = arith.addf %1792, %1797 : vector<1x128xf32>
    %1799 = arith.addf %1798, %24 : vector<1x128xf32>
    %cst_190 = arith.constant 1.000000e-01 : f32
    %1800 = vector.broadcast %cst_190 : f32 to vector<1x128xf32>
    %1801 = arith.mulf %1800, %1745 : vector<1x128xf32>
    %1802 = arith.addf %1737, %1801 : vector<1x128xf32>
    %1803 = arith.addf %1802, %27 : vector<1x128xf32>
    %1804 = arith.addf %1745, %30 : vector<1x128xf32>
    %1805 = arith.subf %1747, %1752 : vector<1x128xf32>
    %1806 = arith.subf %1749, %1755 : vector<1x128xf32>
    %1807 = arith.addf %1765, %33 : vector<1x128xf32>
    %1808 = arith.addf %1779, %36 : vector<1x128xf32>
    %1809 = arith.addf %1799, %39 : vector<1x128xf32>
    %1810 = arith.mulf %1807, %1809 : vector<1x128xf32>
    %1811 = arith.mulf %1808, %1808 : vector<1x128xf32>
    %1812 = arith.subf %1810, %1811 : vector<1x128xf32>
    %1813 = tpu.reciprocal %1812 {approx = true} : vector<1x128xf32> -> vector<1x128xf32>
    %1814 = arith.mulf %1812, %1813 : vector<1x128xf32>
    %cst_191 = arith.constant 2.000000e+00 : f32
    %1815 = vector.broadcast %cst_191 : f32 to vector<1x128xf32>
    %1816 = arith.subf %1815, %1814 : vector<1x128xf32>
    %1817 = arith.mulf %1813, %1816 : vector<1x128xf32>
    %1818 = arith.mulf %1765, %1809 : vector<1x128xf32>
    %1819 = arith.mulf %1779, %1808 : vector<1x128xf32>
    %1820 = arith.subf %1818, %1819 : vector<1x128xf32>
    %1821 = arith.mulf %1820, %1817 : vector<1x128xf32>
    %1822 = arith.mulf %1779, %1807 : vector<1x128xf32>
    %1823 = arith.mulf %1765, %1808 : vector<1x128xf32>
    %1824 = arith.subf %1822, %1823 : vector<1x128xf32>
    %1825 = arith.mulf %1824, %1817 : vector<1x128xf32>
    %1826 = arith.mulf %1769, %1809 : vector<1x128xf32>
    %1827 = arith.mulf %1788, %1808 : vector<1x128xf32>
    %1828 = arith.subf %1826, %1827 : vector<1x128xf32>
    %1829 = arith.mulf %1828, %1817 : vector<1x128xf32>
    %1830 = arith.mulf %1788, %1807 : vector<1x128xf32>
    %1831 = arith.mulf %1769, %1808 : vector<1x128xf32>
    %1832 = arith.subf %1830, %1831 : vector<1x128xf32>
    %1833 = arith.mulf %1832, %1817 : vector<1x128xf32>
    %1834 = arith.mulf %1779, %1809 : vector<1x128xf32>
    %1835 = arith.mulf %1799, %1808 : vector<1x128xf32>
    %1836 = arith.subf %1834, %1835 : vector<1x128xf32>
    %1837 = arith.mulf %1836, %1817 : vector<1x128xf32>
    %1838 = arith.mulf %1799, %1807 : vector<1x128xf32>
    %1839 = arith.mulf %1779, %1808 : vector<1x128xf32>
    %1840 = arith.subf %1838, %1839 : vector<1x128xf32>
    %1841 = arith.mulf %1840, %1817 : vector<1x128xf32>
    %1842 = arith.mulf %1783, %1809 : vector<1x128xf32>
    %1843 = arith.mulf %1803, %1808 : vector<1x128xf32>
    %1844 = arith.subf %1842, %1843 : vector<1x128xf32>
    %1845 = arith.mulf %1844, %1817 : vector<1x128xf32>
    %1846 = arith.mulf %1803, %1807 : vector<1x128xf32>
    %1847 = arith.mulf %1783, %1808 : vector<1x128xf32>
    %1848 = arith.subf %1846, %1847 : vector<1x128xf32>
    %1849 = arith.mulf %1848, %1817 : vector<1x128xf32>
    %1850 = arith.mulf %1821, %1805 : vector<1x128xf32>
    %1851 = arith.addf %1752, %1850 : vector<1x128xf32>
    %1852 = arith.mulf %1825, %1806 : vector<1x128xf32>
    %1853 = arith.addf %1851, %1852 : vector<1x128xf32>
    %1854 = arith.mulf %1829, %1805 : vector<1x128xf32>
    %1855 = arith.addf %1577, %1854 : vector<1x128xf32>
    %1856 = arith.mulf %1833, %1806 : vector<1x128xf32>
    %1857 = arith.addf %1855, %1856 : vector<1x128xf32>
    %1858 = arith.mulf %1837, %1805 : vector<1x128xf32>
    %1859 = arith.addf %1755, %1858 : vector<1x128xf32>
    %1860 = arith.mulf %1841, %1806 : vector<1x128xf32>
    %1861 = arith.addf %1859, %1860 : vector<1x128xf32>
    %1862 = arith.mulf %1845, %1805 : vector<1x128xf32>
    %1863 = arith.addf %1585, %1862 : vector<1x128xf32>
    %1864 = arith.mulf %1849, %1806 : vector<1x128xf32>
    %1865 = arith.addf %1863, %1864 : vector<1x128xf32>
    %1866 = arith.mulf %1821, %1765 : vector<1x128xf32>
    %1867 = arith.subf %1765, %1866 : vector<1x128xf32>
    %1868 = arith.mulf %1825, %1779 : vector<1x128xf32>
    %1869 = arith.subf %1867, %1868 : vector<1x128xf32>
    %1870 = arith.mulf %1821, %1769 : vector<1x128xf32>
    %1871 = arith.subf %1769, %1870 : vector<1x128xf32>
    %1872 = arith.mulf %1825, %1788 : vector<1x128xf32>
    %1873 = arith.subf %1871, %1872 : vector<1x128xf32>
    %1874 = arith.mulf %1821, %1779 : vector<1x128xf32>
    %1875 = arith.subf %1779, %1874 : vector<1x128xf32>
    %1876 = arith.mulf %1825, %1799 : vector<1x128xf32>
    %1877 = arith.subf %1875, %1876 : vector<1x128xf32>
    %1878 = arith.mulf %1821, %1783 : vector<1x128xf32>
    %1879 = arith.subf %1783, %1878 : vector<1x128xf32>
    %1880 = arith.mulf %1825, %1803 : vector<1x128xf32>
    %1881 = arith.subf %1879, %1880 : vector<1x128xf32>
    %1882 = arith.mulf %1829, %1769 : vector<1x128xf32>
    %1883 = arith.subf %1784, %1882 : vector<1x128xf32>
    %1884 = arith.mulf %1833, %1788 : vector<1x128xf32>
    %1885 = arith.subf %1883, %1884 : vector<1x128xf32>
    %1886 = arith.mulf %1829, %1779 : vector<1x128xf32>
    %1887 = arith.subf %1788, %1886 : vector<1x128xf32>
    %1888 = arith.mulf %1833, %1799 : vector<1x128xf32>
    %1889 = arith.subf %1887, %1888 : vector<1x128xf32>
    %1890 = arith.mulf %1829, %1783 : vector<1x128xf32>
    %1891 = arith.subf %1789, %1890 : vector<1x128xf32>
    %1892 = arith.mulf %1833, %1803 : vector<1x128xf32>
    %1893 = arith.subf %1891, %1892 : vector<1x128xf32>
    %1894 = arith.mulf %1837, %1779 : vector<1x128xf32>
    %1895 = arith.subf %1799, %1894 : vector<1x128xf32>
    %1896 = arith.mulf %1841, %1799 : vector<1x128xf32>
    %1897 = arith.subf %1895, %1896 : vector<1x128xf32>
    %1898 = arith.mulf %1837, %1783 : vector<1x128xf32>
    %1899 = arith.subf %1803, %1898 : vector<1x128xf32>
    %1900 = arith.mulf %1841, %1803 : vector<1x128xf32>
    %1901 = arith.subf %1899, %1900 : vector<1x128xf32>
    %1902 = arith.mulf %1845, %1783 : vector<1x128xf32>
    %1903 = arith.subf %1804, %1902 : vector<1x128xf32>
    %1904 = arith.mulf %1849, %1803 : vector<1x128xf32>
    %1905 = arith.subf %1903, %1904 : vector<1x128xf32>
    %1906 = arith.mulf %1829, %1765 : vector<1x128xf32>
    %1907 = arith.subf %1769, %1906 : vector<1x128xf32>
    %1908 = arith.mulf %1833, %1779 : vector<1x128xf32>
    %1909 = arith.subf %1907, %1908 : vector<1x128xf32>
    %1910 = arith.mulf %1837, %1765 : vector<1x128xf32>
    %1911 = arith.subf %1779, %1910 : vector<1x128xf32>
    %1912 = arith.mulf %1841, %1779 : vector<1x128xf32>
    %1913 = arith.subf %1911, %1912 : vector<1x128xf32>
    %1914 = arith.mulf %1845, %1765 : vector<1x128xf32>
    %1915 = arith.subf %1783, %1914 : vector<1x128xf32>
    %1916 = arith.mulf %1849, %1779 : vector<1x128xf32>
    %1917 = arith.subf %1915, %1916 : vector<1x128xf32>
    %1918 = arith.mulf %1845, %1779 : vector<1x128xf32>
    %1919 = arith.subf %1803, %1918 : vector<1x128xf32>
    %1920 = arith.mulf %1849, %1799 : vector<1x128xf32>
    %1921 = arith.subf %1919, %1920 : vector<1x128xf32>
    %1922 = arith.mulf %1821, %33 : vector<1x128xf32>
    %1923 = arith.mulf %1825, %36 : vector<1x128xf32>
    %1924 = arith.addf %1922, %1923 : vector<1x128xf32>
    %1925 = arith.mulf %1829, %33 : vector<1x128xf32>
    %1926 = arith.mulf %1833, %36 : vector<1x128xf32>
    %1927 = arith.addf %1925, %1926 : vector<1x128xf32>
    %1928 = arith.mulf %1837, %33 : vector<1x128xf32>
    %1929 = arith.mulf %1841, %36 : vector<1x128xf32>
    %1930 = arith.addf %1928, %1929 : vector<1x128xf32>
    %1931 = arith.mulf %1845, %33 : vector<1x128xf32>
    %1932 = arith.mulf %1849, %36 : vector<1x128xf32>
    %1933 = arith.addf %1931, %1932 : vector<1x128xf32>
    %1934 = arith.mulf %1821, %36 : vector<1x128xf32>
    %1935 = arith.mulf %1825, %39 : vector<1x128xf32>
    %1936 = arith.addf %1934, %1935 : vector<1x128xf32>
    %1937 = arith.mulf %1829, %36 : vector<1x128xf32>
    %1938 = arith.mulf %1833, %39 : vector<1x128xf32>
    %1939 = arith.addf %1937, %1938 : vector<1x128xf32>
    %1940 = arith.mulf %1837, %36 : vector<1x128xf32>
    %1941 = arith.mulf %1841, %39 : vector<1x128xf32>
    %1942 = arith.addf %1940, %1941 : vector<1x128xf32>
    %1943 = arith.mulf %1845, %36 : vector<1x128xf32>
    %1944 = arith.mulf %1849, %39 : vector<1x128xf32>
    %1945 = arith.addf %1943, %1944 : vector<1x128xf32>
    %1946 = arith.mulf %1869, %1821 : vector<1x128xf32>
    %1947 = arith.subf %1869, %1946 : vector<1x128xf32>
    %1948 = arith.mulf %1877, %1825 : vector<1x128xf32>
    %1949 = arith.subf %1947, %1948 : vector<1x128xf32>
    %1950 = arith.mulf %1924, %1821 : vector<1x128xf32>
    %1951 = arith.addf %1949, %1950 : vector<1x128xf32>
    %1952 = arith.mulf %1936, %1825 : vector<1x128xf32>
    %1953 = arith.addf %1951, %1952 : vector<1x128xf32>
    %1954 = arith.mulf %1869, %1829 : vector<1x128xf32>
    %1955 = arith.subf %1873, %1954 : vector<1x128xf32>
    %1956 = arith.mulf %1877, %1833 : vector<1x128xf32>
    %1957 = arith.subf %1955, %1956 : vector<1x128xf32>
    %1958 = arith.mulf %1924, %1829 : vector<1x128xf32>
    %1959 = arith.addf %1957, %1958 : vector<1x128xf32>
    %1960 = arith.mulf %1936, %1833 : vector<1x128xf32>
    %1961 = arith.addf %1959, %1960 : vector<1x128xf32>
    %1962 = arith.mulf %1869, %1837 : vector<1x128xf32>
    %1963 = arith.subf %1877, %1962 : vector<1x128xf32>
    %1964 = arith.mulf %1877, %1841 : vector<1x128xf32>
    %1965 = arith.subf %1963, %1964 : vector<1x128xf32>
    %1966 = arith.mulf %1924, %1837 : vector<1x128xf32>
    %1967 = arith.addf %1965, %1966 : vector<1x128xf32>
    %1968 = arith.mulf %1936, %1841 : vector<1x128xf32>
    %1969 = arith.addf %1967, %1968 : vector<1x128xf32>
    %1970 = arith.mulf %1869, %1845 : vector<1x128xf32>
    %1971 = arith.subf %1881, %1970 : vector<1x128xf32>
    %1972 = arith.mulf %1877, %1849 : vector<1x128xf32>
    %1973 = arith.subf %1971, %1972 : vector<1x128xf32>
    %1974 = arith.mulf %1924, %1845 : vector<1x128xf32>
    %1975 = arith.addf %1973, %1974 : vector<1x128xf32>
    %1976 = arith.mulf %1936, %1849 : vector<1x128xf32>
    %1977 = arith.addf %1975, %1976 : vector<1x128xf32>
    %1978 = arith.mulf %1909, %1829 : vector<1x128xf32>
    %1979 = arith.subf %1885, %1978 : vector<1x128xf32>
    %1980 = arith.mulf %1889, %1833 : vector<1x128xf32>
    %1981 = arith.subf %1979, %1980 : vector<1x128xf32>
    %1982 = arith.mulf %1927, %1829 : vector<1x128xf32>
    %1983 = arith.addf %1981, %1982 : vector<1x128xf32>
    %1984 = arith.mulf %1939, %1833 : vector<1x128xf32>
    %1985 = arith.addf %1983, %1984 : vector<1x128xf32>
    %1986 = arith.mulf %1909, %1837 : vector<1x128xf32>
    %1987 = arith.subf %1889, %1986 : vector<1x128xf32>
    %1988 = arith.mulf %1889, %1841 : vector<1x128xf32>
    %1989 = arith.subf %1987, %1988 : vector<1x128xf32>
    %1990 = arith.mulf %1927, %1837 : vector<1x128xf32>
    %1991 = arith.addf %1989, %1990 : vector<1x128xf32>
    %1992 = arith.mulf %1939, %1841 : vector<1x128xf32>
    %1993 = arith.addf %1991, %1992 : vector<1x128xf32>
    %1994 = arith.mulf %1909, %1845 : vector<1x128xf32>
    %1995 = arith.subf %1893, %1994 : vector<1x128xf32>
    %1996 = arith.mulf %1889, %1849 : vector<1x128xf32>
    %1997 = arith.subf %1995, %1996 : vector<1x128xf32>
    %1998 = arith.mulf %1927, %1845 : vector<1x128xf32>
    %1999 = arith.addf %1997, %1998 : vector<1x128xf32>
    %2000 = arith.mulf %1939, %1849 : vector<1x128xf32>
    %2001 = arith.addf %1999, %2000 : vector<1x128xf32>
    %2002 = arith.mulf %1913, %1837 : vector<1x128xf32>
    %2003 = arith.subf %1897, %2002 : vector<1x128xf32>
    %2004 = arith.mulf %1897, %1841 : vector<1x128xf32>
    %2005 = arith.subf %2003, %2004 : vector<1x128xf32>
    %2006 = arith.mulf %1930, %1837 : vector<1x128xf32>
    %2007 = arith.addf %2005, %2006 : vector<1x128xf32>
    %2008 = arith.mulf %1942, %1841 : vector<1x128xf32>
    %2009 = arith.addf %2007, %2008 : vector<1x128xf32>
    %2010 = arith.mulf %1913, %1845 : vector<1x128xf32>
    %2011 = arith.subf %1901, %2010 : vector<1x128xf32>
    %2012 = arith.mulf %1897, %1849 : vector<1x128xf32>
    %2013 = arith.subf %2011, %2012 : vector<1x128xf32>
    %2014 = arith.mulf %1930, %1845 : vector<1x128xf32>
    %2015 = arith.addf %2013, %2014 : vector<1x128xf32>
    %2016 = arith.mulf %1942, %1849 : vector<1x128xf32>
    %2017 = arith.addf %2015, %2016 : vector<1x128xf32>
    %2018 = arith.mulf %1917, %1845 : vector<1x128xf32>
    %2019 = arith.subf %1905, %2018 : vector<1x128xf32>
    %2020 = arith.mulf %1921, %1849 : vector<1x128xf32>
    %2021 = arith.subf %2019, %2020 : vector<1x128xf32>
    %2022 = arith.mulf %1933, %1845 : vector<1x128xf32>
    %2023 = arith.addf %2021, %2022 : vector<1x128xf32>
    %2024 = arith.mulf %1945, %1849 : vector<1x128xf32>
    %2025 = arith.addf %2023, %2024 : vector<1x128xf32>
    %cst_192 = arith.constant 1.000000e-01 : f32
    %2026 = vector.broadcast %cst_192 : f32 to vector<1x128xf32>
    %2027 = arith.mulf %2026, %1857 : vector<1x128xf32>
    %2028 = arith.addf %1853, %2027 : vector<1x128xf32>
    %cst_193 = arith.constant 1.000000e-01 : f32
    %2029 = vector.broadcast %cst_193 : f32 to vector<1x128xf32>
    %2030 = arith.mulf %2029, %1865 : vector<1x128xf32>
    %2031 = arith.addf %1861, %2030 : vector<1x128xf32>
    %cst_194 = arith.constant 1.000000e-01 : f32
    %2032 = vector.broadcast %cst_194 : f32 to vector<1x128xf32>
    %2033 = arith.mulf %2032, %1961 : vector<1x128xf32>
    %2034 = arith.addf %1953, %2033 : vector<1x128xf32>
    %cst_195 = arith.constant 1.000000e-01 : f32
    %2035 = vector.broadcast %cst_195 : f32 to vector<1x128xf32>
    %2036 = arith.mulf %2035, %1985 : vector<1x128xf32>
    %2037 = arith.addf %1961, %2036 : vector<1x128xf32>
    %cst_196 = arith.constant 1.000000e-01 : f32
    %2038 = vector.broadcast %cst_196 : f32 to vector<1x128xf32>
    %2039 = arith.mulf %2038, %2037 : vector<1x128xf32>
    %2040 = arith.addf %2034, %2039 : vector<1x128xf32>
    %2041 = arith.addf %2040, %3 : vector<1x128xf32>
    %cst_197 = arith.constant 1.000000e-01 : f32
    %2042 = vector.broadcast %cst_197 : f32 to vector<1x128xf32>
    %2043 = arith.mulf %2042, %1985 : vector<1x128xf32>
    %2044 = arith.addf %1961, %2043 : vector<1x128xf32>
    %2045 = arith.addf %2044, %6 : vector<1x128xf32>
    %cst_198 = arith.constant 1.000000e-01 : f32
    %2046 = vector.broadcast %cst_198 : f32 to vector<1x128xf32>
    %2047 = arith.mulf %2046, %1993 : vector<1x128xf32>
    %2048 = arith.addf %1969, %2047 : vector<1x128xf32>
    %cst_199 = arith.constant 1.000000e-01 : f32
    %2049 = vector.broadcast %cst_199 : f32 to vector<1x128xf32>
    %2050 = arith.mulf %2049, %2001 : vector<1x128xf32>
    %2051 = arith.addf %1977, %2050 : vector<1x128xf32>
    %cst_200 = arith.constant 1.000000e-01 : f32
    %2052 = vector.broadcast %cst_200 : f32 to vector<1x128xf32>
    %2053 = arith.mulf %2052, %2051 : vector<1x128xf32>
    %2054 = arith.addf %2048, %2053 : vector<1x128xf32>
    %2055 = arith.addf %2054, %9 : vector<1x128xf32>
    %cst_201 = arith.constant 1.000000e-01 : f32
    %2056 = vector.broadcast %cst_201 : f32 to vector<1x128xf32>
    %2057 = arith.mulf %2056, %2001 : vector<1x128xf32>
    %2058 = arith.addf %1977, %2057 : vector<1x128xf32>
    %2059 = arith.addf %2058, %12 : vector<1x128xf32>
    %2060 = arith.addf %1985, %15 : vector<1x128xf32>
    %cst_202 = arith.constant 1.000000e-01 : f32
    %2061 = vector.broadcast %cst_202 : f32 to vector<1x128xf32>
    %2062 = arith.mulf %2061, %2001 : vector<1x128xf32>
    %2063 = arith.addf %1993, %2062 : vector<1x128xf32>
    %2064 = arith.addf %2063, %18 : vector<1x128xf32>
    %2065 = arith.addf %2001, %21 : vector<1x128xf32>
    %cst_203 = arith.constant 1.000000e-01 : f32
    %2066 = vector.broadcast %cst_203 : f32 to vector<1x128xf32>
    %2067 = arith.mulf %2066, %2017 : vector<1x128xf32>
    %2068 = arith.addf %2009, %2067 : vector<1x128xf32>
    %cst_204 = arith.constant 1.000000e-01 : f32
    %2069 = vector.broadcast %cst_204 : f32 to vector<1x128xf32>
    %2070 = arith.mulf %2069, %2025 : vector<1x128xf32>
    %2071 = arith.addf %2017, %2070 : vector<1x128xf32>
    %cst_205 = arith.constant 1.000000e-01 : f32
    %2072 = vector.broadcast %cst_205 : f32 to vector<1x128xf32>
    %2073 = arith.mulf %2072, %2071 : vector<1x128xf32>
    %2074 = arith.addf %2068, %2073 : vector<1x128xf32>
    %2075 = arith.addf %2074, %24 : vector<1x128xf32>
    %cst_206 = arith.constant 1.000000e-01 : f32
    %2076 = vector.broadcast %cst_206 : f32 to vector<1x128xf32>
    %2077 = arith.mulf %2076, %2025 : vector<1x128xf32>
    %2078 = arith.addf %2017, %2077 : vector<1x128xf32>
    %2079 = arith.addf %2078, %27 : vector<1x128xf32>
    %2080 = arith.addf %2025, %30 : vector<1x128xf32>
    %2081 = math.sqrt %2041 : vector<1x128xf32>
    %2082 = math.sqrt %2075 : vector<1x128xf32>
    %2083 = arith.mulf %2041, %2075 : vector<1x128xf32>
    %2084 = math.rsqrt %2083 : vector<1x128xf32>
    %2085 = arith.mulf %2055, %2084 : vector<1x128xf32>
    %c0_207 = arith.constant 0 : index
    %c0_208 = arith.constant 0 : index
    %c0_209 = arith.constant 0 : index
    %c0_210 = arith.constant 0 : index
    %2086 = vector.load %arg5[%c0_207, %c0_208, %c0_209, %c0_210] : memref<12x5x1x128xf32, #tpu.memory_space<vmem>>, vector<1x1x1x128xf32>
    %2087 = vector.shape_cast %2086 : vector<1x1x1x128xf32> to vector<1x128xf32>
    %2088 = vector.shape_cast %2028 : vector<1x128xf32> to vector<1x1x1x128xf32>
    tpu.vector_store %arg5[%c0_207, %c0_208, %c0_209, %c0_210], %2088 {strides = array<i32>} : memref<12x5x1x128xf32, #tpu.memory_space<vmem>>, vector<1x1x1x128xf32>,
    %c0_211 = arith.constant 0 : index
    %c1_212 = arith.constant 1 : index
    %c0_213 = arith.constant 0 : index
    %c0_214 = arith.constant 0 : index
    %2089 = vector.load %arg5[%c0_211, %c1_212, %c0_213, %c0_214] : memref<12x5x1x128xf32, #tpu.memory_space<vmem>>, vector<1x1x1x128xf32>
    %2090 = vector.shape_cast %2089 : vector<1x1x1x128xf32> to vector<1x128xf32>
    %2091 = vector.shape_cast %2031 : vector<1x128xf32> to vector<1x1x1x128xf32>
    tpu.vector_store %arg5[%c0_211, %c1_212, %c0_213, %c0_214], %2091 {strides = array<i32>} : memref<12x5x1x128xf32, #tpu.memory_space<vmem>>, vector<1x1x1x128xf32>,
    %c0_215 = arith.constant 0 : index
    %c2_216 = arith.constant 2 : index
    %c0_217 = arith.constant 0 : index
    %c0_218 = arith.constant 0 : index
    %2092 = vector.load %arg5[%c0_215, %c2_216, %c0_217, %c0_218] : memref<12x5x1x128xf32, #tpu.memory_space<vmem>>, vector<1x1x1x128xf32>
    %2093 = vector.shape_cast %2092 : vector<1x1x1x128xf32> to vector<1x128xf32>
    %2094 = vector.shape_cast %2081 : vector<1x128xf32> to vector<1x1x1x128xf32>
    tpu.vector_store %arg5[%c0_215, %c2_216, %c0_217, %c0_218], %2094 {strides = array<i32>} : memref<12x5x1x128xf32, #tpu.memory_space<vmem>>, vector<1x1x1x128xf32>,
    %c0_219 = arith.constant 0 : index
    %c3_220 = arith.constant 3 : index
    %c0_221 = arith.constant 0 : index
    %c0_222 = arith.constant 0 : index
    %2095 = vector.load %arg5[%c0_219, %c3_220, %c0_221, %c0_222] : memref<12x5x1x128xf32, #tpu.memory_space<vmem>>, vector<1x1x1x128xf32>
    %2096 = vector.shape_cast %2095 : vector<1x1x1x128xf32> to vector<1x128xf32>
    %2097 = vector.shape_cast %2082 : vector<1x128xf32> to vector<1x1x1x128xf32>
    tpu.vector_store %arg5[%c0_219, %c3_220, %c0_221, %c0_222], %2097 {strides = array<i32>} : memref<12x5x1x128xf32, #tpu.memory_space<vmem>>, vector<1x1x1x128xf32>,
    %c0_223 = arith.constant 0 : index
    %c4_224 = arith.constant 4 : index
    %c0_225 = arith.constant 0 : index
    %c0_226 = arith.constant 0 : index
    %2098 = vector.load %arg5[%c0_223, %c4_224, %c0_225, %c0_226] : memref<12x5x1x128xf32, #tpu.memory_space<vmem>>, vector<1x1x1x128xf32>
    %2099 = vector.shape_cast %2098 : vector<1x1x1x128xf32> to vector<1x128xf32>
    %2100 = vector.shape_cast %2085 : vector<1x128xf32> to vector<1x1x1x128xf32>
    tpu.vector_store %arg5[%c0_223, %c4_224, %c0_225, %c0_226], %2100 {strides = array<i32>} : memref<12x5x1x128xf32, #tpu.memory_space<vmem>>, vector<1x1x1x128xf32>,
    %cst_227 = arith.constant 1.000000e-01 : f32
    %2101 = vector.broadcast %cst_227 : f32 to vector<1x128xf32>
    %2102 = arith.mulf %2101, %1857 : vector<1x128xf32>
    %2103 = arith.addf %2028, %2102 : vector<1x128xf32>
    %cst_228 = arith.constant 1.000000e-01 : f32
    %2104 = vector.broadcast %cst_228 : f32 to vector<1x128xf32>
    %2105 = arith.mulf %2104, %1865 : vector<1x128xf32>
    %2106 = arith.addf %2031, %2105 : vector<1x128xf32>
    %cst_229 = arith.constant 1.000000e-01 : f32
    %2107 = vector.broadcast %cst_229 : f32 to vector<1x128xf32>
    %2108 = arith.mulf %2107, %2045 : vector<1x128xf32>
    %2109 = arith.addf %2041, %2108 : vector<1x128xf32>
    %cst_230 = arith.constant 1.000000e-01 : f32
    %2110 = vector.broadcast %cst_230 : f32 to vector<1x128xf32>
    %2111 = arith.mulf %2110, %2060 : vector<1x128xf32>
    %2112 = arith.addf %2045, %2111 : vector<1x128xf32>
    %cst_231 = arith.constant 1.000000e-01 : f32
    %2113 = vector.broadcast %cst_231 : f32 to vector<1x128xf32>
    %2114 = arith.mulf %2113, %2112 : vector<1x128xf32>
    %2115 = arith.addf %2109, %2114 : vector<1x128xf32>
    %2116 = arith.addf %2115, %3 : vector<1x128xf32>
    %cst_232 = arith.constant 1.000000e-01 : f32
    %2117 = vector.broadcast %cst_232 : f32 to vector<1x128xf32>
    %2118 = arith.mulf %2117, %2060 : vector<1x128xf32>
    %2119 = arith.addf %2045, %2118 : vector<1x128xf32>
    %2120 = arith.addf %2119, %6 : vector<1x128xf32>
    %cst_233 = arith.constant 1.000000e-01 : f32
    %2121 = vector.broadcast %cst_233 : f32 to vector<1x128xf32>
    %2122 = arith.mulf %2121, %2064 : vector<1x128xf32>
    %2123 = arith.addf %2055, %2122 : vector<1x128xf32>
    %cst_234 = arith.constant 1.000000e-01 : f32
    %2124 = vector.broadcast %cst_234 : f32 to vector<1x128xf32>
    %2125 = arith.mulf %2124, %2065 : vector<1x128xf32>
    %2126 = arith.addf %2059, %2125 : vector<1x128xf32>
    %cst_235 = arith.constant 1.000000e-01 : f32
    %2127 = vector.broadcast %cst_235 : f32 to vector<1x128xf32>
    %2128 = arith.mulf %2127, %2126 : vector<1x128xf32>
    %2129 = arith.addf %2123, %2128 : vector<1x128xf32>
    %2130 = arith.addf %2129, %9 : vector<1x128xf32>
    %cst_236 = arith.constant 1.000000e-01 : f32
    %2131 = vector.broadcast %cst_236 : f32 to vector<1x128xf32>
    %2132 = arith.mulf %2131, %2065 : vector<1x128xf32>
    %2133 = arith.addf %2059, %2132 : vector<1x128xf32>
    %2134 = arith.addf %2133, %12 : vector<1x128xf32>
    %2135 = arith.addf %2060, %15 : vector<1x128xf32>
    %cst_237 = arith.constant 1.000000e-01 : f32
    %2136 = vector.broadcast %cst_237 : f32 to vector<1x128xf32>
    %2137 = arith.mulf %2136, %2065 : vector<1x128xf32>
    %2138 = arith.addf %2064, %2137 : vector<1x128xf32>
    %2139 = arith.addf %2138, %18 : vector<1x128xf32>
    %2140 = arith.addf %2065, %21 : vector<1x128xf32>
    %cst_238 = arith.constant 1.000000e-01 : f32
    %2141 = vector.broadcast %cst_238 : f32 to vector<1x128xf32>
    %2142 = arith.mulf %2141, %2079 : vector<1x128xf32>
    %2143 = arith.addf %2075, %2142 : vector<1x128xf32>
    %cst_239 = arith.constant 1.000000e-01 : f32
    %2144 = vector.broadcast %cst_239 : f32 to vector<1x128xf32>
    %2145 = arith.mulf %2144, %2080 : vector<1x128xf32>
    %2146 = arith.addf %2079, %2145 : vector<1x128xf32>
    %cst_240 = arith.constant 1.000000e-01 : f32
    %2147 = vector.broadcast %cst_240 : f32 to vector<1x128xf32>
    %2148 = arith.mulf %2147, %2146 : vector<1x128xf32>
    %2149 = arith.addf %2143, %2148 : vector<1x128xf32>
    %2150 = arith.addf %2149, %24 : vector<1x128xf32>
    %cst_241 = arith.constant 1.000000e-01 : f32
    %2151 = vector.broadcast %cst_241 : f32 to vector<1x128xf32>
    %2152 = arith.mulf %2151, %2080 : vector<1x128xf32>
    %2153 = arith.addf %2079, %2152 : vector<1x128xf32>
    %2154 = arith.addf %2153, %27 : vector<1x128xf32>
    %2155 = arith.addf %2080, %30 : vector<1x128xf32>
    %2156 = math.sqrt %2116 : vector<1x128xf32>
    %2157 = math.sqrt %2150 : vector<1x128xf32>
    %2158 = arith.mulf %2116, %2150 : vector<1x128xf32>
    %2159 = math.rsqrt %2158 : vector<1x128xf32>
    %2160 = arith.mulf %2130, %2159 : vector<1x128xf32>
    %c1_242 = arith.constant 1 : index
    %c0_243 = arith.constant 0 : index
    %c0_244 = arith.constant 0 : index
    %c0_245 = arith.constant 0 : index
    %2161 = vector.load %arg5[%c1_242, %c0_243, %c0_244, %c0_245] : memref<12x5x1x128xf32, #tpu.memory_space<vmem>>, vector<1x1x1x128xf32>
    %2162 = vector.shape_cast %2161 : vector<1x1x1x128xf32> to vector<1x128xf32>
    %2163 = vector.shape_cast %2103 : vector<1x128xf32> to vector<1x1x1x128xf32>
    tpu.vector_store %arg5[%c1_242, %c0_243, %c0_244, %c0_245], %2163 {strides = array<i32>} : memref<12x5x1x128xf32, #tpu.memory_space<vmem>>, vector<1x1x1x128xf32>,
    %c1_246 = arith.constant 1 : index
    %c1_247 = arith.constant 1 : index
    %c0_248 = arith.constant 0 : index
    %c0_249 = arith.constant 0 : index
    %2164 = vector.load %arg5[%c1_246, %c1_247, %c0_248, %c0_249] : memref<12x5x1x128xf32, #tpu.memory_space<vmem>>, vector<1x1x1x128xf32>
    %2165 = vector.shape_cast %2164 : vector<1x1x1x128xf32> to vector<1x128xf32>
    %2166 = vector.shape_cast %2106 : vector<1x128xf32> to vector<1x1x1x128xf32>
    tpu.vector_store %arg5[%c1_246, %c1_247, %c0_248, %c0_249], %2166 {strides = array<i32>} : memref<12x5x1x128xf32, #tpu.memory_space<vmem>>, vector<1x1x1x128xf32>,
    %c1_250 = arith.constant 1 : index
    %c2_251 = arith.constant 2 : index
    %c0_252 = arith.constant 0 : index
    %c0_253 = arith.constant 0 : index
    %2167 = vector.load %arg5[%c1_250, %c2_251, %c0_252, %c0_253] : memref<12x5x1x128xf32, #tpu.memory_space<vmem>>, vector<1x1x1x128xf32>
    %2168 = vector.shape_cast %2167 : vector<1x1x1x128xf32> to vector<1x128xf32>
    %2169 = vector.shape_cast %2156 : vector<1x128xf32> to vector<1x1x1x128xf32>
    tpu.vector_store %arg5[%c1_250, %c2_251, %c0_252, %c0_253], %2169 {strides = array<i32>} : memref<12x5x1x128xf32, #tpu.memory_space<vmem>>, vector<1x1x1x128xf32>,
    %c1_254 = arith.constant 1 : index
    %c3_255 = arith.constant 3 : index
    %c0_256 = arith.constant 0 : index
    %c0_257 = arith.constant 0 : index
    %2170 = vector.load %arg5[%c1_254, %c3_255, %c0_256, %c0_257] : memref<12x5x1x128xf32, #tpu.memory_space<vmem>>, vector<1x1x1x128xf32>
    %2171 = vector.shape_cast %2170 : vector<1x1x1x128xf32> to vector<1x128xf32>
    %2172 = vector.shape_cast %2157 : vector<1x128xf32> to vector<1x1x1x128xf32>
    tpu.vector_store %arg5[%c1_254, %c3_255, %c0_256, %c0_257], %2172 {strides = array<i32>} : memref<12x5x1x128xf32, #tpu.memory_space<vmem>>, vector<1x1x1x128xf32>,
    %c1_258 = arith.constant 1 : index
    %c4_259 = arith.constant 4 : index
    %c0_260 = arith.constant 0 : index
    %c0_261 = arith.constant 0 : index
    %2173 = vector.load %arg5[%c1_258, %c4_259, %c0_260, %c0_261] : memref<12x5x1x128xf32, #tpu.memory_space<vmem>>, vector<1x1x1x128xf32>
    %2174 = vector.shape_cast %2173 : vector<1x1x1x128xf32> to vector<1x128xf32>
    %2175 = vector.shape_cast %2160 : vector<1x128xf32> to vector<1x1x1x128xf32>
    tpu.vector_store %arg5[%c1_258, %c4_259, %c0_260, %c0_261], %2175 {strides = array<i32>} : memref<12x5x1x128xf32, #tpu.memory_space<vmem>>, vector<1x1x1x128xf32>,
    %cst_262 = arith.constant 1.000000e-01 : f32
    %2176 = vector.broadcast %cst_262 : f32 to vector<1x128xf32>
    %2177 = arith.mulf %2176, %1857 : vector<1x128xf32>
    %2178 = arith.addf %2103, %2177 : vector<1x128xf32>
    %cst_263 = arith.constant 1.000000e-01 : f32
    %2179 = vector.broadcast %cst_263 : f32 to vector<1x128xf32>
    %2180 = arith.mulf %2179, %1865 : vector<1x128xf32>
    %2181 = arith.addf %2106, %2180 : vector<1x128xf32>
    %cst_264 = arith.constant 1.000000e-01 : f32
    %2182 = vector.broadcast %cst_264 : f32 to vector<1x128xf32>
    %2183 = arith.mulf %2182, %2120 : vector<1x128xf32>
    %2184 = arith.addf %2116, %2183 : vector<1x128xf32>
    %cst_265 = arith.constant 1.000000e-01 : f32
    %2185 = vector.broadcast %cst_265 : f32 to vector<1x128xf32>
    %2186 = arith.mulf %2185, %2135 : vector<1x128xf32>
    %2187 = arith.addf %2120, %2186 : vector<1x128xf32>
    %cst_266 = arith.constant 1.000000e-01 : f32
    %2188 = vector.broadcast %cst_266 : f32 to vector<1x128xf32>
    %2189 = arith.mulf %2188, %2187 : vector<1x128xf32>
    %2190 = arith.addf %2184, %2189 : vector<1x128xf32>
    %2191 = arith.addf %2190, %3 : vector<1x128xf32>
    %cst_267 = arith.constant 1.000000e-01 : f32
    %2192 = vector.broadcast %cst_267 : f32 to vector<1x128xf32>
    %2193 = arith.mulf %2192, %2135 : vector<1x128xf32>
    %2194 = arith.addf %2120, %2193 : vector<1x128xf32>
    %2195 = arith.addf %2194, %6 : vector<1x128xf32>
    %cst_268 = arith.constant 1.000000e-01 : f32
    %2196 = vector.broadcast %cst_268 : f32 to vector<1x128xf32>
    %2197 = arith.mulf %2196, %2139 : vector<1x128xf32>
    %2198 = arith.addf %2130, %2197 : vector<1x128xf32>
    %cst_269 = arith.constant 1.000000e-01 : f32
    %2199 = vector.broadcast %cst_269 : f32 to vector<1x128xf32>
    %2200 = arith.mulf %2199, %2140 : vector<1x128xf32>
    %2201 = arith.addf %2134, %2200 : vector<1x128xf32>
    %cst_270 = arith.constant 1.000000e-01 : f32
    %2202 = vector.broadcast %cst_270 : f32 to vector<1x128xf32>
    %2203 = arith.mulf %2202, %2201 : vector<1x128xf32>
    %2204 = arith.addf %2198, %2203 : vector<1x128xf32>
    %2205 = arith.addf %2204, %9 : vector<1x128xf32>
    %cst_271 = arith.constant 1.000000e-01 : f32
    %2206 = vector.broadcast %cst_271 : f32 to vector<1x128xf32>
    %2207 = arith.mulf %2206, %2140 : vector<1x128xf32>
    %2208 = arith.addf %2134, %2207 : vector<1x128xf32>
    %2209 = arith.addf %2208, %12 : vector<1x128xf32>
    %2210 = arith.addf %2135, %15 : vector<1x128xf32>
    %cst_272 = arith.constant 1.000000e-01 : f32
    %2211 = vector.broadcast %cst_272 : f32 to vector<1x128xf32>
    %2212 = arith.mulf %2211, %2140 : vector<1x128xf32>
    %2213 = arith.addf %2139, %2212 : vector<1x128xf32>
    %2214 = arith.addf %2213, %18 : vector<1x128xf32>
    %2215 = arith.addf %2140, %21 : vector<1x128xf32>
    %cst_273 = arith.constant 1.000000e-01 : f32
    %2216 = vector.broadcast %cst_273 : f32 to vector<1x128xf32>
    %2217 = arith.mulf %2216, %2154 : vector<1x128xf32>
    %2218 = arith.addf %2150, %2217 : vector<1x128xf32>
    %cst_274 = arith.constant 1.000000e-01 : f32
    %2219 = vector.broadcast %cst_274 : f32 to vector<1x128xf32>
    %2220 = arith.mulf %2219, %2155 : vector<1x128xf32>
    %2221 = arith.addf %2154, %2220 : vector<1x128xf32>
    %cst_275 = arith.constant 1.000000e-01 : f32
    %2222 = vector.broadcast %cst_275 : f32 to vector<1x128xf32>
    %2223 = arith.mulf %2222, %2221 : vector<1x128xf32>
    %2224 = arith.addf %2218, %2223 : vector<1x128xf32>
    %2225 = arith.addf %2224, %24 : vector<1x128xf32>
    %cst_276 = arith.constant 1.000000e-01 : f32
    %2226 = vector.broadcast %cst_276 : f32 to vector<1x128xf32>
    %2227 = arith.mulf %2226, %2155 : vector<1x128xf32>
    %2228 = arith.addf %2154, %2227 : vector<1x128xf32>
    %2229 = arith.addf %2228, %27 : vector<1x128xf32>
    %2230 = arith.addf %2155, %30 : vector<1x128xf32>
    %2231 = math.sqrt %2191 : vector<1x128xf32>
    %2232 = math.sqrt %2225 : vector<1x128xf32>
    %2233 = arith.mulf %2191, %2225 : vector<1x128xf32>
    %2234 = math.rsqrt %2233 : vector<1x128xf32>
    %2235 = arith.mulf %2205, %2234 : vector<1x128xf32>
    %c2_277 = arith.constant 2 : index
    %c0_278 = arith.constant 0 : index
    %c0_279 = arith.constant 0 : index
    %c0_280 = arith.constant 0 : index
    %2236 = vector.load %arg5[%c2_277, %c0_278, %c0_279, %c0_280] : memref<12x5x1x128xf32, #tpu.memory_space<vmem>>, vector<1x1x1x128xf32>
    %2237 = vector.shape_cast %2236 : vector<1x1x1x128xf32> to vector<1x128xf32>
    %2238 = vector.shape_cast %2178 : vector<1x128xf32> to vector<1x1x1x128xf32>
    tpu.vector_store %arg5[%c2_277, %c0_278, %c0_279, %c0_280], %2238 {strides = array<i32>} : memref<12x5x1x128xf32, #tpu.memory_space<vmem>>, vector<1x1x1x128xf32>,
    %c2_281 = arith.constant 2 : index
    %c1_282 = arith.constant 1 : index
    %c0_283 = arith.constant 0 : index
    %c0_284 = arith.constant 0 : index
    %2239 = vector.load %arg5[%c2_281, %c1_282, %c0_283, %c0_284] : memref<12x5x1x128xf32, #tpu.memory_space<vmem>>, vector<1x1x1x128xf32>
    %2240 = vector.shape_cast %2239 : vector<1x1x1x128xf32> to vector<1x128xf32>
    %2241 = vector.shape_cast %2181 : vector<1x128xf32> to vector<1x1x1x128xf32>
    tpu.vector_store %arg5[%c2_281, %c1_282, %c0_283, %c0_284], %2241 {strides = array<i32>} : memref<12x5x1x128xf32, #tpu.memory_space<vmem>>, vector<1x1x1x128xf32>,
    %c2_285 = arith.constant 2 : index
    %c2_286 = arith.constant 2 : index
    %c0_287 = arith.constant 0 : index
    %c0_288 = arith.constant 0 : index
    %2242 = vector.load %arg5[%c2_285, %c2_286, %c0_287, %c0_288] : memref<12x5x1x128xf32, #tpu.memory_space<vmem>>, vector<1x1x1x128xf32>
    %2243 = vector.shape_cast %2242 : vector<1x1x1x128xf32> to vector<1x128xf32>
    %2244 = vector.shape_cast %2231 : vector<1x128xf32> to vector<1x1x1x128xf32>
    tpu.vector_store %arg5[%c2_285, %c2_286, %c0_287, %c0_288], %2244 {strides = array<i32>} : memref<12x5x1x128xf32, #tpu.memory_space<vmem>>, vector<1x1x1x128xf32>,
    %c2_289 = arith.constant 2 : index
    %c3_290 = arith.constant 3 : index
    %c0_291 = arith.constant 0 : index
    %c0_292 = arith.constant 0 : index
    %2245 = vector.load %arg5[%c2_289, %c3_290, %c0_291, %c0_292] : memref<12x5x1x128xf32, #tpu.memory_space<vmem>>, vector<1x1x1x128xf32>
    %2246 = vector.shape_cast %2245 : vector<1x1x1x128xf32> to vector<1x128xf32>
    %2247 = vector.shape_cast %2232 : vector<1x128xf32> to vector<1x1x1x128xf32>
    tpu.vector_store %arg5[%c2_289, %c3_290, %c0_291, %c0_292], %2247 {strides = array<i32>} : memref<12x5x1x128xf32, #tpu.memory_space<vmem>>, vector<1x1x1x128xf32>,
    %c2_293 = arith.constant 2 : index
    %c4_294 = arith.constant 4 : index
    %c0_295 = arith.constant 0 : index
    %c0_296 = arith.constant 0 : index
    %2248 = vector.load %arg5[%c2_293, %c4_294, %c0_295, %c0_296] : memref<12x5x1x128xf32, #tpu.memory_space<vmem>>, vector<1x1x1x128xf32>
    %2249 = vector.shape_cast %2248 : vector<1x1x1x128xf32> to vector<1x128xf32>
    %2250 = vector.shape_cast %2235 : vector<1x128xf32> to vector<1x1x1x128xf32>
    tpu.vector_store %arg5[%c2_293, %c4_294, %c0_295, %c0_296], %2250 {strides = array<i32>} : memref<12x5x1x128xf32, #tpu.memory_space<vmem>>, vector<1x1x1x128xf32>,
    %cst_297 = arith.constant 1.000000e-01 : f32
    %2251 = vector.broadcast %cst_297 : f32 to vector<1x128xf32>
    %2252 = arith.mulf %2251, %1857 : vector<1x128xf32>
    %2253 = arith.addf %2178, %2252 : vector<1x128xf32>
    %cst_298 = arith.constant 1.000000e-01 : f32
    %2254 = vector.broadcast %cst_298 : f32 to vector<1x128xf32>
    %2255 = arith.mulf %2254, %1865 : vector<1x128xf32>
    %2256 = arith.addf %2181, %2255 : vector<1x128xf32>
    %cst_299 = arith.constant 1.000000e-01 : f32
    %2257 = vector.broadcast %cst_299 : f32 to vector<1x128xf32>
    %2258 = arith.mulf %2257, %2195 : vector<1x128xf32>
    %2259 = arith.addf %2191, %2258 : vector<1x128xf32>
    %cst_300 = arith.constant 1.000000e-01 : f32
    %2260 = vector.broadcast %cst_300 : f32 to vector<1x128xf32>
    %2261 = arith.mulf %2260, %2210 : vector<1x128xf32>
    %2262 = arith.addf %2195, %2261 : vector<1x128xf32>
    %cst_301 = arith.constant 1.000000e-01 : f32
    %2263 = vector.broadcast %cst_301 : f32 to vector<1x128xf32>
    %2264 = arith.mulf %2263, %2262 : vector<1x128xf32>
    %2265 = arith.addf %2259, %2264 : vector<1x128xf32>
    %2266 = arith.addf %2265, %3 : vector<1x128xf32>
    %cst_302 = arith.constant 1.000000e-01 : f32
    %2267 = vector.broadcast %cst_302 : f32 to vector<1x128xf32>
    %2268 = arith.mulf %2267, %2210 : vector<1x128xf32>
    %2269 = arith.addf %2195, %2268 : vector<1x128xf32>
    %2270 = arith.addf %2269, %6 : vector<1x128xf32>
    %cst_303 = arith.constant 1.000000e-01 : f32
    %2271 = vector.broadcast %cst_303 : f32 to vector<1x128xf32>
    %2272 = arith.mulf %2271, %2214 : vector<1x128xf32>
    %2273 = arith.addf %2205, %2272 : vector<1x128xf32>
    %cst_304 = arith.constant 1.000000e-01 : f32
    %2274 = vector.broadcast %cst_304 : f32 to vector<1x128xf32>
    %2275 = arith.mulf %2274, %2215 : vector<1x128xf32>
    %2276 = arith.addf %2209, %2275 : vector<1x128xf32>
    %cst_305 = arith.constant 1.000000e-01 : f32
    %2277 = vector.broadcast %cst_305 : f32 to vector<1x128xf32>
    %2278 = arith.mulf %2277, %2276 : vector<1x128xf32>
    %2279 = arith.addf %2273, %2278 : vector<1x128xf32>
    %2280 = arith.addf %2279, %9 : vector<1x128xf32>
    %cst_306 = arith.constant 1.000000e-01 : f32
    %2281 = vector.broadcast %cst_306 : f32 to vector<1x128xf32>
    %2282 = arith.mulf %2281, %2215 : vector<1x128xf32>
    %2283 = arith.addf %2209, %2282 : vector<1x128xf32>
    %2284 = arith.addf %2283, %12 : vector<1x128xf32>
    %2285 = arith.addf %2210, %15 : vector<1x128xf32>
    %cst_307 = arith.constant 1.000000e-01 : f32
    %2286 = vector.broadcast %cst_307 : f32 to vector<1x128xf32>
    %2287 = arith.mulf %2286, %2215 : vector<1x128xf32>
    %2288 = arith.addf %2214, %2287 : vector<1x128xf32>
    %2289 = arith.addf %2288, %18 : vector<1x128xf32>
    %2290 = arith.addf %2215, %21 : vector<1x128xf32>
    %cst_308 = arith.constant 1.000000e-01 : f32
    %2291 = vector.broadcast %cst_308 : f32 to vector<1x128xf32>
    %2292 = arith.mulf %2291, %2229 : vector<1x128xf32>
    %2293 = arith.addf %2225, %2292 : vector<1x128xf32>
    %cst_309 = arith.constant 1.000000e-01 : f32
    %2294 = vector.broadcast %cst_309 : f32 to vector<1x128xf32>
    %2295 = arith.mulf %2294, %2230 : vector<1x128xf32>
    %2296 = arith.addf %2229, %2295 : vector<1x128xf32>
    %cst_310 = arith.constant 1.000000e-01 : f32
    %2297 = vector.broadcast %cst_310 : f32 to vector<1x128xf32>
    %2298 = arith.mulf %2297, %2296 : vector<1x128xf32>
    %2299 = arith.addf %2293, %2298 : vector<1x128xf32>
    %2300 = arith.addf %2299, %24 : vector<1x128xf32>
    %cst_311 = arith.constant 1.000000e-01 : f32
    %2301 = vector.broadcast %cst_311 : f32 to vector<1x128xf32>
    %2302 = arith.mulf %2301, %2230 : vector<1x128xf32>
    %2303 = arith.addf %2229, %2302 : vector<1x128xf32>
    %2304 = arith.addf %2303, %27 : vector<1x128xf32>
    %2305 = arith.addf %2230, %30 : vector<1x128xf32>
    %2306 = math.sqrt %2266 : vector<1x128xf32>
    %2307 = math.sqrt %2300 : vector<1x128xf32>
    %2308 = arith.mulf %2266, %2300 : vector<1x128xf32>
    %2309 = math.rsqrt %2308 : vector<1x128xf32>
    %2310 = arith.mulf %2280, %2309 : vector<1x128xf32>
    %c3_312 = arith.constant 3 : index
    %c0_313 = arith.constant 0 : index
    %c0_314 = arith.constant 0 : index
    %c0_315 = arith.constant 0 : index
    %2311 = vector.load %arg5[%c3_312, %c0_313, %c0_314, %c0_315] : memref<12x5x1x128xf32, #tpu.memory_space<vmem>>, vector<1x1x1x128xf32>
    %2312 = vector.shape_cast %2311 : vector<1x1x1x128xf32> to vector<1x128xf32>
    %2313 = vector.shape_cast %2253 : vector<1x128xf32> to vector<1x1x1x128xf32>
    tpu.vector_store %arg5[%c3_312, %c0_313, %c0_314, %c0_315], %2313 {strides = array<i32>} : memref<12x5x1x128xf32, #tpu.memory_space<vmem>>, vector<1x1x1x128xf32>,
    %c3_316 = arith.constant 3 : index
    %c1_317 = arith.constant 1 : index
    %c0_318 = arith.constant 0 : index
    %c0_319 = arith.constant 0 : index
    %2314 = vector.load %arg5[%c3_316, %c1_317, %c0_318, %c0_319] : memref<12x5x1x128xf32, #tpu.memory_space<vmem>>, vector<1x1x1x128xf32>
    %2315 = vector.shape_cast %2314 : vector<1x1x1x128xf32> to vector<1x128xf32>
    %2316 = vector.shape_cast %2256 : vector<1x128xf32> to vector<1x1x1x128xf32>
    tpu.vector_store %arg5[%c3_316, %c1_317, %c0_318, %c0_319], %2316 {strides = array<i32>} : memref<12x5x1x128xf32, #tpu.memory_space<vmem>>, vector<1x1x1x128xf32>,
    %c3_320 = arith.constant 3 : index
    %c2_321 = arith.constant 2 : index
    %c0_322 = arith.constant 0 : index
    %c0_323 = arith.constant 0 : index
    %2317 = vector.load %arg5[%c3_320, %c2_321, %c0_322, %c0_323] : memref<12x5x1x128xf32, #tpu.memory_space<vmem>>, vector<1x1x1x128xf32>
    %2318 = vector.shape_cast %2317 : vector<1x1x1x128xf32> to vector<1x128xf32>
    %2319 = vector.shape_cast %2306 : vector<1x128xf32> to vector<1x1x1x128xf32>
    tpu.vector_store %arg5[%c3_320, %c2_321, %c0_322, %c0_323], %2319 {strides = array<i32>} : memref<12x5x1x128xf32, #tpu.memory_space<vmem>>, vector<1x1x1x128xf32>,
    %c3_324 = arith.constant 3 : index
    %c3_325 = arith.constant 3 : index
    %c0_326 = arith.constant 0 : index
    %c0_327 = arith.constant 0 : index
    %2320 = vector.load %arg5[%c3_324, %c3_325, %c0_326, %c0_327] : memref<12x5x1x128xf32, #tpu.memory_space<vmem>>, vector<1x1x1x128xf32>
    %2321 = vector.shape_cast %2320 : vector<1x1x1x128xf32> to vector<1x128xf32>
    %2322 = vector.shape_cast %2307 : vector<1x128xf32> to vector<1x1x1x128xf32>
    tpu.vector_store %arg5[%c3_324, %c3_325, %c0_326, %c0_327], %2322 {strides = array<i32>} : memref<12x5x1x128xf32, #tpu.memory_space<vmem>>, vector<1x1x1x128xf32>,
    %c3_328 = arith.constant 3 : index
    %c4_329 = arith.constant 4 : index
    %c0_330 = arith.constant 0 : index
    %c0_331 = arith.constant 0 : index
    %2323 = vector.load %arg5[%c3_328, %c4_329, %c0_330, %c0_331] : memref<12x5x1x128xf32, #tpu.memory_space<vmem>>, vector<1x1x1x128xf32>
    %2324 = vector.shape_cast %2323 : vector<1x1x1x128xf32> to vector<1x128xf32>
    %2325 = vector.shape_cast %2310 : vector<1x128xf32> to vector<1x1x1x128xf32>
    tpu.vector_store %arg5[%c3_328, %c4_329, %c0_330, %c0_331], %2325 {strides = array<i32>} : memref<12x5x1x128xf32, #tpu.memory_space<vmem>>, vector<1x1x1x128xf32>,
    %cst_332 = arith.constant 1.000000e-01 : f32
    %2326 = vector.broadcast %cst_332 : f32 to vector<1x128xf32>
    %2327 = arith.mulf %2326, %1857 : vector<1x128xf32>
    %2328 = arith.addf %2253, %2327 : vector<1x128xf32>
    %cst_333 = arith.constant 1.000000e-01 : f32
    %2329 = vector.broadcast %cst_333 : f32 to vector<1x128xf32>
    %2330 = arith.mulf %2329, %1865 : vector<1x128xf32>
    %2331 = arith.addf %2256, %2330 : vector<1x128xf32>
    %cst_334 = arith.constant 1.000000e-01 : f32
    %2332 = vector.broadcast %cst_334 : f32 to vector<1x128xf32>
    %2333 = arith.mulf %2332, %2270 : vector<1x128xf32>
    %2334 = arith.addf %2266, %2333 : vector<1x128xf32>
    %cst_335 = arith.constant 1.000000e-01 : f32
    %2335 = vector.broadcast %cst_335 : f32 to vector<1x128xf32>
    %2336 = arith.mulf %2335, %2285 : vector<1x128xf32>
    %2337 = arith.addf %2270, %2336 : vector<1x128xf32>
    %cst_336 = arith.constant 1.000000e-01 : f32
    %2338 = vector.broadcast %cst_336 : f32 to vector<1x128xf32>
    %2339 = arith.mulf %2338, %2337 : vector<1x128xf32>
    %2340 = arith.addf %2334, %2339 : vector<1x128xf32>
    %2341 = arith.addf %2340, %3 : vector<1x128xf32>
    %cst_337 = arith.constant 1.000000e-01 : f32
    %2342 = vector.broadcast %cst_337 : f32 to vector<1x128xf32>
    %2343 = arith.mulf %2342, %2285 : vector<1x128xf32>
    %2344 = arith.addf %2270, %2343 : vector<1x128xf32>
    %2345 = arith.addf %2344, %6 : vector<1x128xf32>
    %cst_338 = arith.constant 1.000000e-01 : f32
    %2346 = vector.broadcast %cst_338 : f32 to vector<1x128xf32>
    %2347 = arith.mulf %2346, %2289 : vector<1x128xf32>
    %2348 = arith.addf %2280, %2347 : vector<1x128xf32>
    %cst_339 = arith.constant 1.000000e-01 : f32
    %2349 = vector.broadcast %cst_339 : f32 to vector<1x128xf32>
    %2350 = arith.mulf %2349, %2290 : vector<1x128xf32>
    %2351 = arith.addf %2284, %2350 : vector<1x128xf32>
    %cst_340 = arith.constant 1.000000e-01 : f32
    %2352 = vector.broadcast %cst_340 : f32 to vector<1x128xf32>
    %2353 = arith.mulf %2352, %2351 : vector<1x128xf32>
    %2354 = arith.addf %2348, %2353 : vector<1x128xf32>
    %2355 = arith.addf %2354, %9 : vector<1x128xf32>
    %cst_341 = arith.constant 1.000000e-01 : f32
    %2356 = vector.broadcast %cst_341 : f32 to vector<1x128xf32>
    %2357 = arith.mulf %2356, %2290 : vector<1x128xf32>
    %2358 = arith.addf %2284, %2357 : vector<1x128xf32>
    %2359 = arith.addf %2358, %12 : vector<1x128xf32>
    %2360 = arith.addf %2285, %15 : vector<1x128xf32>
    %cst_342 = arith.constant 1.000000e-01 : f32
    %2361 = vector.broadcast %cst_342 : f32 to vector<1x128xf32>
    %2362 = arith.mulf %2361, %2290 : vector<1x128xf32>
    %2363 = arith.addf %2289, %2362 : vector<1x128xf32>
    %2364 = arith.addf %2363, %18 : vector<1x128xf32>
    %2365 = arith.addf %2290, %21 : vector<1x128xf32>
    %cst_343 = arith.constant 1.000000e-01 : f32
    %2366 = vector.broadcast %cst_343 : f32 to vector<1x128xf32>
    %2367 = arith.mulf %2366, %2304 : vector<1x128xf32>
    %2368 = arith.addf %2300, %2367 : vector<1x128xf32>
    %cst_344 = arith.constant 1.000000e-01 : f32
    %2369 = vector.broadcast %cst_344 : f32 to vector<1x128xf32>
    %2370 = arith.mulf %2369, %2305 : vector<1x128xf32>
    %2371 = arith.addf %2304, %2370 : vector<1x128xf32>
    %cst_345 = arith.constant 1.000000e-01 : f32
    %2372 = vector.broadcast %cst_345 : f32 to vector<1x128xf32>
    %2373 = arith.mulf %2372, %2371 : vector<1x128xf32>
    %2374 = arith.addf %2368, %2373 : vector<1x128xf32>
    %2375 = arith.addf %2374, %24 : vector<1x128xf32>
    %cst_346 = arith.constant 1.000000e-01 : f32
    %2376 = vector.broadcast %cst_346 : f32 to vector<1x128xf32>
    %2377 = arith.mulf %2376, %2305 : vector<1x128xf32>
    %2378 = arith.addf %2304, %2377 : vector<1x128xf32>
    %2379 = arith.addf %2378, %27 : vector<1x128xf32>
    %2380 = arith.addf %2305, %30 : vector<1x128xf32>
    %2381 = math.sqrt %2341 : vector<1x128xf32>
    %2382 = math.sqrt %2375 : vector<1x128xf32>
    %2383 = arith.mulf %2341, %2375 : vector<1x128xf32>
    %2384 = math.rsqrt %2383 : vector<1x128xf32>
    %2385 = arith.mulf %2355, %2384 : vector<1x128xf32>
    %c4_347 = arith.constant 4 : index
    %c0_348 = arith.constant 0 : index
    %c0_349 = arith.constant 0 : index
    %c0_350 = arith.constant 0 : index
    %2386 = vector.load %arg5[%c4_347, %c0_348, %c0_349, %c0_350] : memref<12x5x1x128xf32, #tpu.memory_space<vmem>>, vector<1x1x1x128xf32>
    %2387 = vector.shape_cast %2386 : vector<1x1x1x128xf32> to vector<1x128xf32>
    %2388 = vector.shape_cast %2328 : vector<1x128xf32> to vector<1x1x1x128xf32>
    tpu.vector_store %arg5[%c4_347, %c0_348, %c0_349, %c0_350], %2388 {strides = array<i32>} : memref<12x5x1x128xf32, #tpu.memory_space<vmem>>, vector<1x1x1x128xf32>,
    %c4_351 = arith.constant 4 : index
    %c1_352 = arith.constant 1 : index
    %c0_353 = arith.constant 0 : index
    %c0_354 = arith.constant 0 : index
    %2389 = vector.load %arg5[%c4_351, %c1_352, %c0_353, %c0_354] : memref<12x5x1x128xf32, #tpu.memory_space<vmem>>, vector<1x1x1x128xf32>
    %2390 = vector.shape_cast %2389 : vector<1x1x1x128xf32> to vector<1x128xf32>
    %2391 = vector.shape_cast %2331 : vector<1x128xf32> to vector<1x1x1x128xf32>
    tpu.vector_store %arg5[%c4_351, %c1_352, %c0_353, %c0_354], %2391 {strides = array<i32>} : memref<12x5x1x128xf32, #tpu.memory_space<vmem>>, vector<1x1x1x128xf32>,
    %c4_355 = arith.constant 4 : index
    %c2_356 = arith.constant 2 : index
    %c0_357 = arith.constant 0 : index
    %c0_358 = arith.constant 0 : index
    %2392 = vector.load %arg5[%c4_355, %c2_356, %c0_357, %c0_358] : memref<12x5x1x128xf32, #tpu.memory_space<vmem>>, vector<1x1x1x128xf32>
    %2393 = vector.shape_cast %2392 : vector<1x1x1x128xf32> to vector<1x128xf32>
    %2394 = vector.shape_cast %2381 : vector<1x128xf32> to vector<1x1x1x128xf32>
    tpu.vector_store %arg5[%c4_355, %c2_356, %c0_357, %c0_358], %2394 {strides = array<i32>} : memref<12x5x1x128xf32, #tpu.memory_space<vmem>>, vector<1x1x1x128xf32>,
    %c4_359 = arith.constant 4 : index
    %c3_360 = arith.constant 3 : index
    %c0_361 = arith.constant 0 : index
    %c0_362 = arith.constant 0 : index
    %2395 = vector.load %arg5[%c4_359, %c3_360, %c0_361, %c0_362] : memref<12x5x1x128xf32, #tpu.memory_space<vmem>>, vector<1x1x1x128xf32>
    %2396 = vector.shape_cast %2395 : vector<1x1x1x128xf32> to vector<1x128xf32>
    %2397 = vector.shape_cast %2382 : vector<1x128xf32> to vector<1x1x1x128xf32>
    tpu.vector_store %arg5[%c4_359, %c3_360, %c0_361, %c0_362], %2397 {strides = array<i32>} : memref<12x5x1x128xf32, #tpu.memory_space<vmem>>, vector<1x1x1x128xf32>,
    %c4_363 = arith.constant 4 : index
    %c4_364 = arith.constant 4 : index
    %c0_365 = arith.constant 0 : index
    %c0_366 = arith.constant 0 : index
    %2398 = vector.load %arg5[%c4_363, %c4_364, %c0_365, %c0_366] : memref<12x5x1x128xf32, #tpu.memory_space<vmem>>, vector<1x1x1x128xf32>
    %2399 = vector.shape_cast %2398 : vector<1x1x1x128xf32> to vector<1x128xf32>
    %2400 = vector.shape_cast %2385 : vector<1x128xf32> to vector<1x1x1x128xf32>
    tpu.vector_store %arg5[%c4_363, %c4_364, %c0_365, %c0_366], %2400 {strides = array<i32>} : memref<12x5x1x128xf32, #tpu.memory_space<vmem>>, vector<1x1x1x128xf32>,
    %cst_367 = arith.constant 1.000000e-01 : f32
    %2401 = vector.broadcast %cst_367 : f32 to vector<1x128xf32>
    %2402 = arith.mulf %2401, %1857 : vector<1x128xf32>
    %2403 = arith.addf %2328, %2402 : vector<1x128xf32>
    %cst_368 = arith.constant 1.000000e-01 : f32
    %2404 = vector.broadcast %cst_368 : f32 to vector<1x128xf32>
    %2405 = arith.mulf %2404, %1865 : vector<1x128xf32>
    %2406 = arith.addf %2331, %2405 : vector<1x128xf32>
    %cst_369 = arith.constant 1.000000e-01 : f32
    %2407 = vector.broadcast %cst_369 : f32 to vector<1x128xf32>
    %2408 = arith.mulf %2407, %2345 : vector<1x128xf32>
    %2409 = arith.addf %2341, %2408 : vector<1x128xf32>
    %cst_370 = arith.constant 1.000000e-01 : f32
    %2410 = vector.broadcast %cst_370 : f32 to vector<1x128xf32>
    %2411 = arith.mulf %2410, %2360 : vector<1x128xf32>
    %2412 = arith.addf %2345, %2411 : vector<1x128xf32>
    %cst_371 = arith.constant 1.000000e-01 : f32
    %2413 = vector.broadcast %cst_371 : f32 to vector<1x128xf32>
    %2414 = arith.mulf %2413, %2412 : vector<1x128xf32>
    %2415 = arith.addf %2409, %2414 : vector<1x128xf32>
    %2416 = arith.addf %2415, %3 : vector<1x128xf32>
    %cst_372 = arith.constant 1.000000e-01 : f32
    %2417 = vector.broadcast %cst_372 : f32 to vector<1x128xf32>
    %2418 = arith.mulf %2417, %2360 : vector<1x128xf32>
    %2419 = arith.addf %2345, %2418 : vector<1x128xf32>
    %2420 = arith.addf %2419, %6 : vector<1x128xf32>
    %cst_373 = arith.constant 1.000000e-01 : f32
    %2421 = vector.broadcast %cst_373 : f32 to vector<1x128xf32>
    %2422 = arith.mulf %2421, %2364 : vector<1x128xf32>
    %2423 = arith.addf %2355, %2422 : vector<1x128xf32>
    %cst_374 = arith.constant 1.000000e-01 : f32
    %2424 = vector.broadcast %cst_374 : f32 to vector<1x128xf32>
    %2425 = arith.mulf %2424, %2365 : vector<1x128xf32>
    %2426 = arith.addf %2359, %2425 : vector<1x128xf32>
    %cst_375 = arith.constant 1.000000e-01 : f32
    %2427 = vector.broadcast %cst_375 : f32 to vector<1x128xf32>
    %2428 = arith.mulf %2427, %2426 : vector<1x128xf32>
    %2429 = arith.addf %2423, %2428 : vector<1x128xf32>
    %2430 = arith.addf %2429, %9 : vector<1x128xf32>
    %cst_376 = arith.constant 1.000000e-01 : f32
    %2431 = vector.broadcast %cst_376 : f32 to vector<1x128xf32>
    %2432 = arith.mulf %2431, %2365 : vector<1x128xf32>
    %2433 = arith.addf %2359, %2432 : vector<1x128xf32>
    %2434 = arith.addf %2433, %12 : vector<1x128xf32>
    %2435 = arith.addf %2360, %15 : vector<1x128xf32>
    %cst_377 = arith.constant 1.000000e-01 : f32
    %2436 = vector.broadcast %cst_377 : f32 to vector<1x128xf32>
    %2437 = arith.mulf %2436, %2365 : vector<1x128xf32>
    %2438 = arith.addf %2364, %2437 : vector<1x128xf32>
    %2439 = arith.addf %2438, %18 : vector<1x128xf32>
    %2440 = arith.addf %2365, %21 : vector<1x128xf32>
    %cst_378 = arith.constant 1.000000e-01 : f32
    %2441 = vector.broadcast %cst_378 : f32 to vector<1x128xf32>
    %2442 = arith.mulf %2441, %2379 : vector<1x128xf32>
    %2443 = arith.addf %2375, %2442 : vector<1x128xf32>
    %cst_379 = arith.constant 1.000000e-01 : f32
    %2444 = vector.broadcast %cst_379 : f32 to vector<1x128xf32>
    %2445 = arith.mulf %2444, %2380 : vector<1x128xf32>
    %2446 = arith.addf %2379, %2445 : vector<1x128xf32>
    %cst_380 = arith.constant 1.000000e-01 : f32
    %2447 = vector.broadcast %cst_380 : f32 to vector<1x128xf32>
    %2448 = arith.mulf %2447, %2446 : vector<1x128xf32>
    %2449 = arith.addf %2443, %2448 : vector<1x128xf32>
    %2450 = arith.addf %2449, %24 : vector<1x128xf32>
    %cst_381 = arith.constant 1.000000e-01 : f32
    %2451 = vector.broadcast %cst_381 : f32 to vector<1x128xf32>
    %2452 = arith.mulf %2451, %2380 : vector<1x128xf32>
    %2453 = arith.addf %2379, %2452 : vector<1x128xf32>
    %2454 = arith.addf %2453, %27 : vector<1x128xf32>
    %2455 = arith.addf %2380, %30 : vector<1x128xf32>
    %2456 = math.sqrt %2416 : vector<1x128xf32>
    %2457 = math.sqrt %2450 : vector<1x128xf32>
    %2458 = arith.mulf %2416, %2450 : vector<1x128xf32>
    %2459 = math.rsqrt %2458 : vector<1x128xf32>
    %2460 = arith.mulf %2430, %2459 : vector<1x128xf32>
    %c5_382 = arith.constant 5 : index
    %c0_383 = arith.constant 0 : index
    %c0_384 = arith.constant 0 : index
    %c0_385 = arith.constant 0 : index
    %2461 = vector.load %arg5[%c5_382, %c0_383, %c0_384, %c0_385] : memref<12x5x1x128xf32, #tpu.memory_space<vmem>>, vector<1x1x1x128xf32>
    %2462 = vector.shape_cast %2461 : vector<1x1x1x128xf32> to vector<1x128xf32>
    %2463 = vector.shape_cast %2403 : vector<1x128xf32> to vector<1x1x1x128xf32>
    tpu.vector_store %arg5[%c5_382, %c0_383, %c0_384, %c0_385], %2463 {strides = array<i32>} : memref<12x5x1x128xf32, #tpu.memory_space<vmem>>, vector<1x1x1x128xf32>,
    %c5_386 = arith.constant 5 : index
    %c1_387 = arith.constant 1 : index
    %c0_388 = arith.constant 0 : index
    %c0_389 = arith.constant 0 : index
    %2464 = vector.load %arg5[%c5_386, %c1_387, %c0_388, %c0_389] : memref<12x5x1x128xf32, #tpu.memory_space<vmem>>, vector<1x1x1x128xf32>
    %2465 = vector.shape_cast %2464 : vector<1x1x1x128xf32> to vector<1x128xf32>
    %2466 = vector.shape_cast %2406 : vector<1x128xf32> to vector<1x1x1x128xf32>
    tpu.vector_store %arg5[%c5_386, %c1_387, %c0_388, %c0_389], %2466 {strides = array<i32>} : memref<12x5x1x128xf32, #tpu.memory_space<vmem>>, vector<1x1x1x128xf32>,
    %c5_390 = arith.constant 5 : index
    %c2_391 = arith.constant 2 : index
    %c0_392 = arith.constant 0 : index
    %c0_393 = arith.constant 0 : index
    %2467 = vector.load %arg5[%c5_390, %c2_391, %c0_392, %c0_393] : memref<12x5x1x128xf32, #tpu.memory_space<vmem>>, vector<1x1x1x128xf32>
    %2468 = vector.shape_cast %2467 : vector<1x1x1x128xf32> to vector<1x128xf32>
    %2469 = vector.shape_cast %2456 : vector<1x128xf32> to vector<1x1x1x128xf32>
    tpu.vector_store %arg5[%c5_390, %c2_391, %c0_392, %c0_393], %2469 {strides = array<i32>} : memref<12x5x1x128xf32, #tpu.memory_space<vmem>>, vector<1x1x1x128xf32>,
    %c5_394 = arith.constant 5 : index
    %c3_395 = arith.constant 3 : index
    %c0_396 = arith.constant 0 : index
    %c0_397 = arith.constant 0 : index
    %2470 = vector.load %arg5[%c5_394, %c3_395, %c0_396, %c0_397] : memref<12x5x1x128xf32, #tpu.memory_space<vmem>>, vector<1x1x1x128xf32>
    %2471 = vector.shape_cast %2470 : vector<1x1x1x128xf32> to vector<1x128xf32>
    %2472 = vector.shape_cast %2457 : vector<1x128xf32> to vector<1x1x1x128xf32>
    tpu.vector_store %arg5[%c5_394, %c3_395, %c0_396, %c0_397], %2472 {strides = array<i32>} : memref<12x5x1x128xf32, #tpu.memory_space<vmem>>, vector<1x1x1x128xf32>,
    %c5_398 = arith.constant 5 : index
    %c4_399 = arith.constant 4 : index
    %c0_400 = arith.constant 0 : index
    %c0_401 = arith.constant 0 : index
    %2473 = vector.load %arg5[%c5_398, %c4_399, %c0_400, %c0_401] : memref<12x5x1x128xf32, #tpu.memory_space<vmem>>, vector<1x1x1x128xf32>
    %2474 = vector.shape_cast %2473 : vector<1x1x1x128xf32> to vector<1x128xf32>
    %2475 = vector.shape_cast %2460 : vector<1x128xf32> to vector<1x1x1x128xf32>
    tpu.vector_store %arg5[%c5_398, %c4_399, %c0_400, %c0_401], %2475 {strides = array<i32>} : memref<12x5x1x128xf32, #tpu.memory_space<vmem>>, vector<1x1x1x128xf32>,
    %cst_402 = arith.constant 1.000000e-01 : f32
    %2476 = vector.broadcast %cst_402 : f32 to vector<1x128xf32>
    %2477 = arith.mulf %2476, %1857 : vector<1x128xf32>
    %2478 = arith.addf %2403, %2477 : vector<1x128xf32>
    %cst_403 = arith.constant 1.000000e-01 : f32
    %2479 = vector.broadcast %cst_403 : f32 to vector<1x128xf32>
    %2480 = arith.mulf %2479, %1865 : vector<1x128xf32>
    %2481 = arith.addf %2406, %2480 : vector<1x128xf32>
    %cst_404 = arith.constant 1.000000e-01 : f32
    %2482 = vector.broadcast %cst_404 : f32 to vector<1x128xf32>
    %2483 = arith.mulf %2482, %2420 : vector<1x128xf32>
    %2484 = arith.addf %2416, %2483 : vector<1x128xf32>
    %cst_405 = arith.constant 1.000000e-01 : f32
    %2485 = vector.broadcast %cst_405 : f32 to vector<1x128xf32>
    %2486 = arith.mulf %2485, %2435 : vector<1x128xf32>
    %2487 = arith.addf %2420, %2486 : vector<1x128xf32>
    %cst_406 = arith.constant 1.000000e-01 : f32
    %2488 = vector.broadcast %cst_406 : f32 to vector<1x128xf32>
    %2489 = arith.mulf %2488, %2487 : vector<1x128xf32>
    %2490 = arith.addf %2484, %2489 : vector<1x128xf32>
    %2491 = arith.addf %2490, %3 : vector<1x128xf32>
    %cst_407 = arith.constant 1.000000e-01 : f32
    %2492 = vector.broadcast %cst_407 : f32 to vector<1x128xf32>
    %2493 = arith.mulf %2492, %2435 : vector<1x128xf32>
    %2494 = arith.addf %2420, %2493 : vector<1x128xf32>
    %2495 = arith.addf %2494, %6 : vector<1x128xf32>
    %cst_408 = arith.constant 1.000000e-01 : f32
    %2496 = vector.broadcast %cst_408 : f32 to vector<1x128xf32>
    %2497 = arith.mulf %2496, %2439 : vector<1x128xf32>
    %2498 = arith.addf %2430, %2497 : vector<1x128xf32>
    %cst_409 = arith.constant 1.000000e-01 : f32
    %2499 = vector.broadcast %cst_409 : f32 to vector<1x128xf32>
    %2500 = arith.mulf %2499, %2440 : vector<1x128xf32>
    %2501 = arith.addf %2434, %2500 : vector<1x128xf32>
    %cst_410 = arith.constant 1.000000e-01 : f32
    %2502 = vector.broadcast %cst_410 : f32 to vector<1x128xf32>
    %2503 = arith.mulf %2502, %2501 : vector<1x128xf32>
    %2504 = arith.addf %2498, %2503 : vector<1x128xf32>
    %2505 = arith.addf %2504, %9 : vector<1x128xf32>
    %cst_411 = arith.constant 1.000000e-01 : f32
    %2506 = vector.broadcast %cst_411 : f32 to vector<1x128xf32>
    %2507 = arith.mulf %2506, %2440 : vector<1x128xf32>
    %2508 = arith.addf %2434, %2507 : vector<1x128xf32>
    %2509 = arith.addf %2508, %12 : vector<1x128xf32>
    %2510 = arith.addf %2435, %15 : vector<1x128xf32>
    %cst_412 = arith.constant 1.000000e-01 : f32
    %2511 = vector.broadcast %cst_412 : f32 to vector<1x128xf32>
    %2512 = arith.mulf %2511, %2440 : vector<1x128xf32>
    %2513 = arith.addf %2439, %2512 : vector<1x128xf32>
    %2514 = arith.addf %2513, %18 : vector<1x128xf32>
    %2515 = arith.addf %2440, %21 : vector<1x128xf32>
    %cst_413 = arith.constant 1.000000e-01 : f32
    %2516 = vector.broadcast %cst_413 : f32 to vector<1x128xf32>
    %2517 = arith.mulf %2516, %2454 : vector<1x128xf32>
    %2518 = arith.addf %2450, %2517 : vector<1x128xf32>
    %cst_414 = arith.constant 1.000000e-01 : f32
    %2519 = vector.broadcast %cst_414 : f32 to vector<1x128xf32>
    %2520 = arith.mulf %2519, %2455 : vector<1x128xf32>
    %2521 = arith.addf %2454, %2520 : vector<1x128xf32>
    %cst_415 = arith.constant 1.000000e-01 : f32
    %2522 = vector.broadcast %cst_415 : f32 to vector<1x128xf32>
    %2523 = arith.mulf %2522, %2521 : vector<1x128xf32>
    %2524 = arith.addf %2518, %2523 : vector<1x128xf32>
    %2525 = arith.addf %2524, %24 : vector<1x128xf32>
    %cst_416 = arith.constant 1.000000e-01 : f32
    %2526 = vector.broadcast %cst_416 : f32 to vector<1x128xf32>
    %2527 = arith.mulf %2526, %2455 : vector<1x128xf32>
    %2528 = arith.addf %2454, %2527 : vector<1x128xf32>
    %2529 = arith.addf %2528, %27 : vector<1x128xf32>
    %2530 = arith.addf %2455, %30 : vector<1x128xf32>
    %2531 = math.sqrt %2491 : vector<1x128xf32>
    %2532 = math.sqrt %2525 : vector<1x128xf32>
    %2533 = arith.mulf %2491, %2525 : vector<1x128xf32>
    %2534 = math.rsqrt %2533 : vector<1x128xf32>
    %2535 = arith.mulf %2505, %2534 : vector<1x128xf32>
    %c6_417 = arith.constant 6 : index
    %c0_418 = arith.constant 0 : index
    %c0_419 = arith.constant 0 : index
    %c0_420 = arith.constant 0 : index
    %2536 = vector.load %arg5[%c6_417, %c0_418, %c0_419, %c0_420] : memref<12x5x1x128xf32, #tpu.memory_space<vmem>>, vector<1x1x1x128xf32>
    %2537 = vector.shape_cast %2536 : vector<1x1x1x128xf32> to vector<1x128xf32>
    %2538 = vector.shape_cast %2478 : vector<1x128xf32> to vector<1x1x1x128xf32>
    tpu.vector_store %arg5[%c6_417, %c0_418, %c0_419, %c0_420], %2538 {strides = array<i32>} : memref<12x5x1x128xf32, #tpu.memory_space<vmem>>, vector<1x1x1x128xf32>,
    %c6_421 = arith.constant 6 : index
    %c1_422 = arith.constant 1 : index
    %c0_423 = arith.constant 0 : index
    %c0_424 = arith.constant 0 : index
    %2539 = vector.load %arg5[%c6_421, %c1_422, %c0_423, %c0_424] : memref<12x5x1x128xf32, #tpu.memory_space<vmem>>, vector<1x1x1x128xf32>
    %2540 = vector.shape_cast %2539 : vector<1x1x1x128xf32> to vector<1x128xf32>
    %2541 = vector.shape_cast %2481 : vector<1x128xf32> to vector<1x1x1x128xf32>
    tpu.vector_store %arg5[%c6_421, %c1_422, %c0_423, %c0_424], %2541 {strides = array<i32>} : memref<12x5x1x128xf32, #tpu.memory_space<vmem>>, vector<1x1x1x128xf32>,
    %c6_425 = arith.constant 6 : index
    %c2_426 = arith.constant 2 : index
    %c0_427 = arith.constant 0 : index
    %c0_428 = arith.constant 0 : index
    %2542 = vector.load %arg5[%c6_425, %c2_426, %c0_427, %c0_428] : memref<12x5x1x128xf32, #tpu.memory_space<vmem>>, vector<1x1x1x128xf32>
    %2543 = vector.shape_cast %2542 : vector<1x1x1x128xf32> to vector<1x128xf32>
    %2544 = vector.shape_cast %2531 : vector<1x128xf32> to vector<1x1x1x128xf32>
    tpu.vector_store %arg5[%c6_425, %c2_426, %c0_427, %c0_428], %2544 {strides = array<i32>} : memref<12x5x1x128xf32, #tpu.memory_space<vmem>>, vector<1x1x1x128xf32>,
    %c6_429 = arith.constant 6 : index
    %c3_430 = arith.constant 3 : index
    %c0_431 = arith.constant 0 : index
    %c0_432 = arith.constant 0 : index
    %2545 = vector.load %arg5[%c6_429, %c3_430, %c0_431, %c0_432] : memref<12x5x1x128xf32, #tpu.memory_space<vmem>>, vector<1x1x1x128xf32>
    %2546 = vector.shape_cast %2545 : vector<1x1x1x128xf32> to vector<1x128xf32>
    %2547 = vector.shape_cast %2532 : vector<1x128xf32> to vector<1x1x1x128xf32>
    tpu.vector_store %arg5[%c6_429, %c3_430, %c0_431, %c0_432], %2547 {strides = array<i32>} : memref<12x5x1x128xf32, #tpu.memory_space<vmem>>, vector<1x1x1x128xf32>,
    %c6_433 = arith.constant 6 : index
    %c4_434 = arith.constant 4 : index
    %c0_435 = arith.constant 0 : index
    %c0_436 = arith.constant 0 : index
    %2548 = vector.load %arg5[%c6_433, %c4_434, %c0_435, %c0_436] : memref<12x5x1x128xf32, #tpu.memory_space<vmem>>, vector<1x1x1x128xf32>
    %2549 = vector.shape_cast %2548 : vector<1x1x1x128xf32> to vector<1x128xf32>
    %2550 = vector.shape_cast %2535 : vector<1x128xf32> to vector<1x1x1x128xf32>
    tpu.vector_store %arg5[%c6_433, %c4_434, %c0_435, %c0_436], %2550 {strides = array<i32>} : memref<12x5x1x128xf32, #tpu.memory_space<vmem>>, vector<1x1x1x128xf32>,
    %cst_437 = arith.constant 1.000000e-01 : f32
    %2551 = vector.broadcast %cst_437 : f32 to vector<1x128xf32>
    %2552 = arith.mulf %2551, %1857 : vector<1x128xf32>
    %2553 = arith.addf %2478, %2552 : vector<1x128xf32>
    %cst_438 = arith.constant 1.000000e-01 : f32
    %2554 = vector.broadcast %cst_438 : f32 to vector<1x128xf32>
    %2555 = arith.mulf %2554, %1865 : vector<1x128xf32>
    %2556 = arith.addf %2481, %2555 : vector<1x128xf32>
    %cst_439 = arith.constant 1.000000e-01 : f32
    %2557 = vector.broadcast %cst_439 : f32 to vector<1x128xf32>
    %2558 = arith.mulf %2557, %2495 : vector<1x128xf32>
    %2559 = arith.addf %2491, %2558 : vector<1x128xf32>
    %cst_440 = arith.constant 1.000000e-01 : f32
    %2560 = vector.broadcast %cst_440 : f32 to vector<1x128xf32>
    %2561 = arith.mulf %2560, %2510 : vector<1x128xf32>
    %2562 = arith.addf %2495, %2561 : vector<1x128xf32>
    %cst_441 = arith.constant 1.000000e-01 : f32
    %2563 = vector.broadcast %cst_441 : f32 to vector<1x128xf32>
    %2564 = arith.mulf %2563, %2562 : vector<1x128xf32>
    %2565 = arith.addf %2559, %2564 : vector<1x128xf32>
    %2566 = arith.addf %2565, %3 : vector<1x128xf32>
    %cst_442 = arith.constant 1.000000e-01 : f32
    %2567 = vector.broadcast %cst_442 : f32 to vector<1x128xf32>
    %2568 = arith.mulf %2567, %2510 : vector<1x128xf32>
    %2569 = arith.addf %2495, %2568 : vector<1x128xf32>
    %2570 = arith.addf %2569, %6 : vector<1x128xf32>
    %cst_443 = arith.constant 1.000000e-01 : f32
    %2571 = vector.broadcast %cst_443 : f32 to vector<1x128xf32>
    %2572 = arith.mulf %2571, %2514 : vector<1x128xf32>
    %2573 = arith.addf %2505, %2572 : vector<1x128xf32>
    %cst_444 = arith.constant 1.000000e-01 : f32
    %2574 = vector.broadcast %cst_444 : f32 to vector<1x128xf32>
    %2575 = arith.mulf %2574, %2515 : vector<1x128xf32>
    %2576 = arith.addf %2509, %2575 : vector<1x128xf32>
    %cst_445 = arith.constant 1.000000e-01 : f32
    %2577 = vector.broadcast %cst_445 : f32 to vector<1x128xf32>
    %2578 = arith.mulf %2577, %2576 : vector<1x128xf32>
    %2579 = arith.addf %2573, %2578 : vector<1x128xf32>
    %2580 = arith.addf %2579, %9 : vector<1x128xf32>
    %cst_446 = arith.constant 1.000000e-01 : f32
    %2581 = vector.broadcast %cst_446 : f32 to vector<1x128xf32>
    %2582 = arith.mulf %2581, %2515 : vector<1x128xf32>
    %2583 = arith.addf %2509, %2582 : vector<1x128xf32>
    %2584 = arith.addf %2583, %12 : vector<1x128xf32>
    %2585 = arith.addf %2510, %15 : vector<1x128xf32>
    %cst_447 = arith.constant 1.000000e-01 : f32
    %2586 = vector.broadcast %cst_447 : f32 to vector<1x128xf32>
    %2587 = arith.mulf %2586, %2515 : vector<1x128xf32>
    %2588 = arith.addf %2514, %2587 : vector<1x128xf32>
    %2589 = arith.addf %2588, %18 : vector<1x128xf32>
    %2590 = arith.addf %2515, %21 : vector<1x128xf32>
    %cst_448 = arith.constant 1.000000e-01 : f32
    %2591 = vector.broadcast %cst_448 : f32 to vector<1x128xf32>
    %2592 = arith.mulf %2591, %2529 : vector<1x128xf32>
    %2593 = arith.addf %2525, %2592 : vector<1x128xf32>
    %cst_449 = arith.constant 1.000000e-01 : f32
    %2594 = vector.broadcast %cst_449 : f32 to vector<1x128xf32>
    %2595 = arith.mulf %2594, %2530 : vector<1x128xf32>
    %2596 = arith.addf %2529, %2595 : vector<1x128xf32>
    %cst_450 = arith.constant 1.000000e-01 : f32
    %2597 = vector.broadcast %cst_450 : f32 to vector<1x128xf32>
    %2598 = arith.mulf %2597, %2596 : vector<1x128xf32>
    %2599 = arith.addf %2593, %2598 : vector<1x128xf32>
    %2600 = arith.addf %2599, %24 : vector<1x128xf32>
    %cst_451 = arith.constant 1.000000e-01 : f32
    %2601 = vector.broadcast %cst_451 : f32 to vector<1x128xf32>
    %2602 = arith.mulf %2601, %2530 : vector<1x128xf32>
    %2603 = arith.addf %2529, %2602 : vector<1x128xf32>
    %2604 = arith.addf %2603, %27 : vector<1x128xf32>
    %2605 = arith.addf %2530, %30 : vector<1x128xf32>
    %2606 = math.sqrt %2566 : vector<1x128xf32>
    %2607 = math.sqrt %2600 : vector<1x128xf32>
    %2608 = arith.mulf %2566, %2600 : vector<1x128xf32>
    %2609 = math.rsqrt %2608 : vector<1x128xf32>
    %2610 = arith.mulf %2580, %2609 : vector<1x128xf32>
    %c7_452 = arith.constant 7 : index
    %c0_453 = arith.constant 0 : index
    %c0_454 = arith.constant 0 : index
    %c0_455 = arith.constant 0 : index
    %2611 = vector.load %arg5[%c7_452, %c0_453, %c0_454, %c0_455] : memref<12x5x1x128xf32, #tpu.memory_space<vmem>>, vector<1x1x1x128xf32>
    %2612 = vector.shape_cast %2611 : vector<1x1x1x128xf32> to vector<1x128xf32>
    %2613 = vector.shape_cast %2553 : vector<1x128xf32> to vector<1x1x1x128xf32>
    tpu.vector_store %arg5[%c7_452, %c0_453, %c0_454, %c0_455], %2613 {strides = array<i32>} : memref<12x5x1x128xf32, #tpu.memory_space<vmem>>, vector<1x1x1x128xf32>,
    %c7_456 = arith.constant 7 : index
    %c1_457 = arith.constant 1 : index
    %c0_458 = arith.constant 0 : index
    %c0_459 = arith.constant 0 : index
    %2614 = vector.load %arg5[%c7_456, %c1_457, %c0_458, %c0_459] : memref<12x5x1x128xf32, #tpu.memory_space<vmem>>, vector<1x1x1x128xf32>
    %2615 = vector.shape_cast %2614 : vector<1x1x1x128xf32> to vector<1x128xf32>
    %2616 = vector.shape_cast %2556 : vector<1x128xf32> to vector<1x1x1x128xf32>
    tpu.vector_store %arg5[%c7_456, %c1_457, %c0_458, %c0_459], %2616 {strides = array<i32>} : memref<12x5x1x128xf32, #tpu.memory_space<vmem>>, vector<1x1x1x128xf32>,
    %c7_460 = arith.constant 7 : index
    %c2_461 = arith.constant 2 : index
    %c0_462 = arith.constant 0 : index
    %c0_463 = arith.constant 0 : index
    %2617 = vector.load %arg5[%c7_460, %c2_461, %c0_462, %c0_463] : memref<12x5x1x128xf32, #tpu.memory_space<vmem>>, vector<1x1x1x128xf32>
    %2618 = vector.shape_cast %2617 : vector<1x1x1x128xf32> to vector<1x128xf32>
    %2619 = vector.shape_cast %2606 : vector<1x128xf32> to vector<1x1x1x128xf32>
    tpu.vector_store %arg5[%c7_460, %c2_461, %c0_462, %c0_463], %2619 {strides = array<i32>} : memref<12x5x1x128xf32, #tpu.memory_space<vmem>>, vector<1x1x1x128xf32>,
    %c7_464 = arith.constant 7 : index
    %c3_465 = arith.constant 3 : index
    %c0_466 = arith.constant 0 : index
    %c0_467 = arith.constant 0 : index
    %2620 = vector.load %arg5[%c7_464, %c3_465, %c0_466, %c0_467] : memref<12x5x1x128xf32, #tpu.memory_space<vmem>>, vector<1x1x1x128xf32>
    %2621 = vector.shape_cast %2620 : vector<1x1x1x128xf32> to vector<1x128xf32>
    %2622 = vector.shape_cast %2607 : vector<1x128xf32> to vector<1x1x1x128xf32>
    tpu.vector_store %arg5[%c7_464, %c3_465, %c0_466, %c0_467], %2622 {strides = array<i32>} : memref<12x5x1x128xf32, #tpu.memory_space<vmem>>, vector<1x1x1x128xf32>,
    %c7_468 = arith.constant 7 : index
    %c4_469 = arith.constant 4 : index
    %c0_470 = arith.constant 0 : index
    %c0_471 = arith.constant 0 : index
    %2623 = vector.load %arg5[%c7_468, %c4_469, %c0_470, %c0_471] : memref<12x5x1x128xf32, #tpu.memory_space<vmem>>, vector<1x1x1x128xf32>
    %2624 = vector.shape_cast %2623 : vector<1x1x1x128xf32> to vector<1x128xf32>
    %2625 = vector.shape_cast %2610 : vector<1x128xf32> to vector<1x1x1x128xf32>
    tpu.vector_store %arg5[%c7_468, %c4_469, %c0_470, %c0_471], %2625 {strides = array<i32>} : memref<12x5x1x128xf32, #tpu.memory_space<vmem>>, vector<1x1x1x128xf32>,
    %cst_472 = arith.constant 1.000000e-01 : f32
    %2626 = vector.broadcast %cst_472 : f32 to vector<1x128xf32>
    %2627 = arith.mulf %2626, %1857 : vector<1x128xf32>
    %2628 = arith.addf %2553, %2627 : vector<1x128xf32>
    %cst_473 = arith.constant 1.000000e-01 : f32
    %2629 = vector.broadcast %cst_473 : f32 to vector<1x128xf32>
    %2630 = arith.mulf %2629, %1865 : vector<1x128xf32>
    %2631 = arith.addf %2556, %2630 : vector<1x128xf32>
    %cst_474 = arith.constant 1.000000e-01 : f32
    %2632 = vector.broadcast %cst_474 : f32 to vector<1x128xf32>
    %2633 = arith.mulf %2632, %2570 : vector<1x128xf32>
    %2634 = arith.addf %2566, %2633 : vector<1x128xf32>
    %cst_475 = arith.constant 1.000000e-01 : f32
    %2635 = vector.broadcast %cst_475 : f32 to vector<1x128xf32>
    %2636 = arith.mulf %2635, %2585 : vector<1x128xf32>
    %2637 = arith.addf %2570, %2636 : vector<1x128xf32>
    %cst_476 = arith.constant 1.000000e-01 : f32
    %2638 = vector.broadcast %cst_476 : f32 to vector<1x128xf32>
    %2639 = arith.mulf %2638, %2637 : vector<1x128xf32>
    %2640 = arith.addf %2634, %2639 : vector<1x128xf32>
    %2641 = arith.addf %2640, %3 : vector<1x128xf32>
    %cst_477 = arith.constant 1.000000e-01 : f32
    %2642 = vector.broadcast %cst_477 : f32 to vector<1x128xf32>
    %2643 = arith.mulf %2642, %2585 : vector<1x128xf32>
    %2644 = arith.addf %2570, %2643 : vector<1x128xf32>
    %2645 = arith.addf %2644, %6 : vector<1x128xf32>
    %cst_478 = arith.constant 1.000000e-01 : f32
    %2646 = vector.broadcast %cst_478 : f32 to vector<1x128xf32>
    %2647 = arith.mulf %2646, %2589 : vector<1x128xf32>
    %2648 = arith.addf %2580, %2647 : vector<1x128xf32>
    %cst_479 = arith.constant 1.000000e-01 : f32
    %2649 = vector.broadcast %cst_479 : f32 to vector<1x128xf32>
    %2650 = arith.mulf %2649, %2590 : vector<1x128xf32>
    %2651 = arith.addf %2584, %2650 : vector<1x128xf32>
    %cst_480 = arith.constant 1.000000e-01 : f32
    %2652 = vector.broadcast %cst_480 : f32 to vector<1x128xf32>
    %2653 = arith.mulf %2652, %2651 : vector<1x128xf32>
    %2654 = arith.addf %2648, %2653 : vector<1x128xf32>
    %2655 = arith.addf %2654, %9 : vector<1x128xf32>
    %cst_481 = arith.constant 1.000000e-01 : f32
    %2656 = vector.broadcast %cst_481 : f32 to vector<1x128xf32>
    %2657 = arith.mulf %2656, %2590 : vector<1x128xf32>
    %2658 = arith.addf %2584, %2657 : vector<1x128xf32>
    %2659 = arith.addf %2658, %12 : vector<1x128xf32>
    %2660 = arith.addf %2585, %15 : vector<1x128xf32>
    %cst_482 = arith.constant 1.000000e-01 : f32
    %2661 = vector.broadcast %cst_482 : f32 to vector<1x128xf32>
    %2662 = arith.mulf %2661, %2590 : vector<1x128xf32>
    %2663 = arith.addf %2589, %2662 : vector<1x128xf32>
    %2664 = arith.addf %2663, %18 : vector<1x128xf32>
    %2665 = arith.addf %2590, %21 : vector<1x128xf32>
    %cst_483 = arith.constant 1.000000e-01 : f32
    %2666 = vector.broadcast %cst_483 : f32 to vector<1x128xf32>
    %2667 = arith.mulf %2666, %2604 : vector<1x128xf32>
    %2668 = arith.addf %2600, %2667 : vector<1x128xf32>
    %cst_484 = arith.constant 1.000000e-01 : f32
    %2669 = vector.broadcast %cst_484 : f32 to vector<1x128xf32>
    %2670 = arith.mulf %2669, %2605 : vector<1x128xf32>
    %2671 = arith.addf %2604, %2670 : vector<1x128xf32>
    %cst_485 = arith.constant 1.000000e-01 : f32
    %2672 = vector.broadcast %cst_485 : f32 to vector<1x128xf32>
    %2673 = arith.mulf %2672, %2671 : vector<1x128xf32>
    %2674 = arith.addf %2668, %2673 : vector<1x128xf32>
    %2675 = arith.addf %2674, %24 : vector<1x128xf32>
    %cst_486 = arith.constant 1.000000e-01 : f32
    %2676 = vector.broadcast %cst_486 : f32 to vector<1x128xf32>
    %2677 = arith.mulf %2676, %2605 : vector<1x128xf32>
    %2678 = arith.addf %2604, %2677 : vector<1x128xf32>
    %2679 = arith.addf %2678, %27 : vector<1x128xf32>
    %2680 = arith.addf %2605, %30 : vector<1x128xf32>
    %2681 = math.sqrt %2641 : vector<1x128xf32>
    %2682 = math.sqrt %2675 : vector<1x128xf32>
    %2683 = arith.mulf %2641, %2675 : vector<1x128xf32>
    %2684 = math.rsqrt %2683 : vector<1x128xf32>
    %2685 = arith.mulf %2655, %2684 : vector<1x128xf32>
    %c8 = arith.constant 8 : index
    %c0_487 = arith.constant 0 : index
    %c0_488 = arith.constant 0 : index
    %c0_489 = arith.constant 0 : index
    %2686 = vector.load %arg5[%c8, %c0_487, %c0_488, %c0_489] : memref<12x5x1x128xf32, #tpu.memory_space<vmem>>, vector<1x1x1x128xf32>
    %2687 = vector.shape_cast %2686 : vector<1x1x1x128xf32> to vector<1x128xf32>
    %2688 = vector.shape_cast %2628 : vector<1x128xf32> to vector<1x1x1x128xf32>
    tpu.vector_store %arg5[%c8, %c0_487, %c0_488, %c0_489], %2688 {strides = array<i32>} : memref<12x5x1x128xf32, #tpu.memory_space<vmem>>, vector<1x1x1x128xf32>,
    %c8_490 = arith.constant 8 : index
    %c1_491 = arith.constant 1 : index
    %c0_492 = arith.constant 0 : index
    %c0_493 = arith.constant 0 : index
    %2689 = vector.load %arg5[%c8_490, %c1_491, %c0_492, %c0_493] : memref<12x5x1x128xf32, #tpu.memory_space<vmem>>, vector<1x1x1x128xf32>
    %2690 = vector.shape_cast %2689 : vector<1x1x1x128xf32> to vector<1x128xf32>
    %2691 = vector.shape_cast %2631 : vector<1x128xf32> to vector<1x1x1x128xf32>
    tpu.vector_store %arg5[%c8_490, %c1_491, %c0_492, %c0_493], %2691 {strides = array<i32>} : memref<12x5x1x128xf32, #tpu.memory_space<vmem>>, vector<1x1x1x128xf32>,
    %c8_494 = arith.constant 8 : index
    %c2_495 = arith.constant 2 : index
    %c0_496 = arith.constant 0 : index
    %c0_497 = arith.constant 0 : index
    %2692 = vector.load %arg5[%c8_494, %c2_495, %c0_496, %c0_497] : memref<12x5x1x128xf32, #tpu.memory_space<vmem>>, vector<1x1x1x128xf32>
    %2693 = vector.shape_cast %2692 : vector<1x1x1x128xf32> to vector<1x128xf32>
    %2694 = vector.shape_cast %2681 : vector<1x128xf32> to vector<1x1x1x128xf32>
    tpu.vector_store %arg5[%c8_494, %c2_495, %c0_496, %c0_497], %2694 {strides = array<i32>} : memref<12x5x1x128xf32, #tpu.memory_space<vmem>>, vector<1x1x1x128xf32>,
    %c8_498 = arith.constant 8 : index
    %c3_499 = arith.constant 3 : index
    %c0_500 = arith.constant 0 : index
    %c0_501 = arith.constant 0 : index
    %2695 = vector.load %arg5[%c8_498, %c3_499, %c0_500, %c0_501] : memref<12x5x1x128xf32, #tpu.memory_space<vmem>>, vector<1x1x1x128xf32>
    %2696 = vector.shape_cast %2695 : vector<1x1x1x128xf32> to vector<1x128xf32>
    %2697 = vector.shape_cast %2682 : vector<1x128xf32> to vector<1x1x1x128xf32>
    tpu.vector_store %arg5[%c8_498, %c3_499, %c0_500, %c0_501], %2697 {strides = array<i32>} : memref<12x5x1x128xf32, #tpu.memory_space<vmem>>, vector<1x1x1x128xf32>,
    %c8_502 = arith.constant 8 : index
    %c4_503 = arith.constant 4 : index
    %c0_504 = arith.constant 0 : index
    %c0_505 = arith.constant 0 : index
    %2698 = vector.load %arg5[%c8_502, %c4_503, %c0_504, %c0_505] : memref<12x5x1x128xf32, #tpu.memory_space<vmem>>, vector<1x1x1x128xf32>
    %2699 = vector.shape_cast %2698 : vector<1x1x1x128xf32> to vector<1x128xf32>
    %2700 = vector.shape_cast %2685 : vector<1x128xf32> to vector<1x1x1x128xf32>
    tpu.vector_store %arg5[%c8_502, %c4_503, %c0_504, %c0_505], %2700 {strides = array<i32>} : memref<12x5x1x128xf32, #tpu.memory_space<vmem>>, vector<1x1x1x128xf32>,
    %cst_506 = arith.constant 1.000000e-01 : f32
    %2701 = vector.broadcast %cst_506 : f32 to vector<1x128xf32>
    %2702 = arith.mulf %2701, %1857 : vector<1x128xf32>
    %2703 = arith.addf %2628, %2702 : vector<1x128xf32>
    %cst_507 = arith.constant 1.000000e-01 : f32
    %2704 = vector.broadcast %cst_507 : f32 to vector<1x128xf32>
    %2705 = arith.mulf %2704, %1865 : vector<1x128xf32>
    %2706 = arith.addf %2631, %2705 : vector<1x128xf32>
    %cst_508 = arith.constant 1.000000e-01 : f32
    %2707 = vector.broadcast %cst_508 : f32 to vector<1x128xf32>
    %2708 = arith.mulf %2707, %2645 : vector<1x128xf32>
    %2709 = arith.addf %2641, %2708 : vector<1x128xf32>
    %cst_509 = arith.constant 1.000000e-01 : f32
    %2710 = vector.broadcast %cst_509 : f32 to vector<1x128xf32>
    %2711 = arith.mulf %2710, %2660 : vector<1x128xf32>
    %2712 = arith.addf %2645, %2711 : vector<1x128xf32>
    %cst_510 = arith.constant 1.000000e-01 : f32
    %2713 = vector.broadcast %cst_510 : f32 to vector<1x128xf32>
    %2714 = arith.mulf %2713, %2712 : vector<1x128xf32>
    %2715 = arith.addf %2709, %2714 : vector<1x128xf32>
    %2716 = arith.addf %2715, %3 : vector<1x128xf32>
    %cst_511 = arith.constant 1.000000e-01 : f32
    %2717 = vector.broadcast %cst_511 : f32 to vector<1x128xf32>
    %2718 = arith.mulf %2717, %2660 : vector<1x128xf32>
    %2719 = arith.addf %2645, %2718 : vector<1x128xf32>
    %2720 = arith.addf %2719, %6 : vector<1x128xf32>
    %cst_512 = arith.constant 1.000000e-01 : f32
    %2721 = vector.broadcast %cst_512 : f32 to vector<1x128xf32>
    %2722 = arith.mulf %2721, %2664 : vector<1x128xf32>
    %2723 = arith.addf %2655, %2722 : vector<1x128xf32>
    %cst_513 = arith.constant 1.000000e-01 : f32
    %2724 = vector.broadcast %cst_513 : f32 to vector<1x128xf32>
    %2725 = arith.mulf %2724, %2665 : vector<1x128xf32>
    %2726 = arith.addf %2659, %2725 : vector<1x128xf32>
    %cst_514 = arith.constant 1.000000e-01 : f32
    %2727 = vector.broadcast %cst_514 : f32 to vector<1x128xf32>
    %2728 = arith.mulf %2727, %2726 : vector<1x128xf32>
    %2729 = arith.addf %2723, %2728 : vector<1x128xf32>
    %2730 = arith.addf %2729, %9 : vector<1x128xf32>
    %cst_515 = arith.constant 1.000000e-01 : f32
    %2731 = vector.broadcast %cst_515 : f32 to vector<1x128xf32>
    %2732 = arith.mulf %2731, %2665 : vector<1x128xf32>
    %2733 = arith.addf %2659, %2732 : vector<1x128xf32>
    %2734 = arith.addf %2733, %12 : vector<1x128xf32>
    %2735 = arith.addf %2660, %15 : vector<1x128xf32>
    %cst_516 = arith.constant 1.000000e-01 : f32
    %2736 = vector.broadcast %cst_516 : f32 to vector<1x128xf32>
    %2737 = arith.mulf %2736, %2665 : vector<1x128xf32>
    %2738 = arith.addf %2664, %2737 : vector<1x128xf32>
    %2739 = arith.addf %2738, %18 : vector<1x128xf32>
    %2740 = arith.addf %2665, %21 : vector<1x128xf32>
    %cst_517 = arith.constant 1.000000e-01 : f32
    %2741 = vector.broadcast %cst_517 : f32 to vector<1x128xf32>
    %2742 = arith.mulf %2741, %2679 : vector<1x128xf32>
    %2743 = arith.addf %2675, %2742 : vector<1x128xf32>
    %cst_518 = arith.constant 1.000000e-01 : f32
    %2744 = vector.broadcast %cst_518 : f32 to vector<1x128xf32>
    %2745 = arith.mulf %2744, %2680 : vector<1x128xf32>
    %2746 = arith.addf %2679, %2745 : vector<1x128xf32>
    %cst_519 = arith.constant 1.000000e-01 : f32
    %2747 = vector.broadcast %cst_519 : f32 to vector<1x128xf32>
    %2748 = arith.mulf %2747, %2746 : vector<1x128xf32>
    %2749 = arith.addf %2743, %2748 : vector<1x128xf32>
    %2750 = arith.addf %2749, %24 : vector<1x128xf32>
    %cst_520 = arith.constant 1.000000e-01 : f32
    %2751 = vector.broadcast %cst_520 : f32 to vector<1x128xf32>
    %2752 = arith.mulf %2751, %2680 : vector<1x128xf32>
    %2753 = arith.addf %2679, %2752 : vector<1x128xf32>
    %2754 = arith.addf %2753, %27 : vector<1x128xf32>
    %2755 = arith.addf %2680, %30 : vector<1x128xf32>
    %2756 = math.sqrt %2716 : vector<1x128xf32>
    %2757 = math.sqrt %2750 : vector<1x128xf32>
    %2758 = arith.mulf %2716, %2750 : vector<1x128xf32>
    %2759 = math.rsqrt %2758 : vector<1x128xf32>
    %2760 = arith.mulf %2730, %2759 : vector<1x128xf32>
    %c9 = arith.constant 9 : index
    %c0_521 = arith.constant 0 : index
    %c0_522 = arith.constant 0 : index
    %c0_523 = arith.constant 0 : index
    %2761 = vector.load %arg5[%c9, %c0_521, %c0_522, %c0_523] : memref<12x5x1x128xf32, #tpu.memory_space<vmem>>, vector<1x1x1x128xf32>
    %2762 = vector.shape_cast %2761 : vector<1x1x1x128xf32> to vector<1x128xf32>
    %2763 = vector.shape_cast %2703 : vector<1x128xf32> to vector<1x1x1x128xf32>
    tpu.vector_store %arg5[%c9, %c0_521, %c0_522, %c0_523], %2763 {strides = array<i32>} : memref<12x5x1x128xf32, #tpu.memory_space<vmem>>, vector<1x1x1x128xf32>,
    %c9_524 = arith.constant 9 : index
    %c1_525 = arith.constant 1 : index
    %c0_526 = arith.constant 0 : index
    %c0_527 = arith.constant 0 : index
    %2764 = vector.load %arg5[%c9_524, %c1_525, %c0_526, %c0_527] : memref<12x5x1x128xf32, #tpu.memory_space<vmem>>, vector<1x1x1x128xf32>
    %2765 = vector.shape_cast %2764 : vector<1x1x1x128xf32> to vector<1x128xf32>
    %2766 = vector.shape_cast %2706 : vector<1x128xf32> to vector<1x1x1x128xf32>
    tpu.vector_store %arg5[%c9_524, %c1_525, %c0_526, %c0_527], %2766 {strides = array<i32>} : memref<12x5x1x128xf32, #tpu.memory_space<vmem>>, vector<1x1x1x128xf32>,
    %c9_528 = arith.constant 9 : index
    %c2_529 = arith.constant 2 : index
    %c0_530 = arith.constant 0 : index
    %c0_531 = arith.constant 0 : index
    %2767 = vector.load %arg5[%c9_528, %c2_529, %c0_530, %c0_531] : memref<12x5x1x128xf32, #tpu.memory_space<vmem>>, vector<1x1x1x128xf32>
    %2768 = vector.shape_cast %2767 : vector<1x1x1x128xf32> to vector<1x128xf32>
    %2769 = vector.shape_cast %2756 : vector<1x128xf32> to vector<1x1x1x128xf32>
    tpu.vector_store %arg5[%c9_528, %c2_529, %c0_530, %c0_531], %2769 {strides = array<i32>} : memref<12x5x1x128xf32, #tpu.memory_space<vmem>>, vector<1x1x1x128xf32>,
    %c9_532 = arith.constant 9 : index
    %c3_533 = arith.constant 3 : index
    %c0_534 = arith.constant 0 : index
    %c0_535 = arith.constant 0 : index
    %2770 = vector.load %arg5[%c9_532, %c3_533, %c0_534, %c0_535] : memref<12x5x1x128xf32, #tpu.memory_space<vmem>>, vector<1x1x1x128xf32>
    %2771 = vector.shape_cast %2770 : vector<1x1x1x128xf32> to vector<1x128xf32>
    %2772 = vector.shape_cast %2757 : vector<1x128xf32> to vector<1x1x1x128xf32>
    tpu.vector_store %arg5[%c9_532, %c3_533, %c0_534, %c0_535], %2772 {strides = array<i32>} : memref<12x5x1x128xf32, #tpu.memory_space<vmem>>, vector<1x1x1x128xf32>,
    %c9_536 = arith.constant 9 : index
    %c4_537 = arith.constant 4 : index
    %c0_538 = arith.constant 0 : index
    %c0_539 = arith.constant 0 : index
    %2773 = vector.load %arg5[%c9_536, %c4_537, %c0_538, %c0_539] : memref<12x5x1x128xf32, #tpu.memory_space<vmem>>, vector<1x1x1x128xf32>
    %2774 = vector.shape_cast %2773 : vector<1x1x1x128xf32> to vector<1x128xf32>
    %2775 = vector.shape_cast %2760 : vector<1x128xf32> to vector<1x1x1x128xf32>
    tpu.vector_store %arg5[%c9_536, %c4_537, %c0_538, %c0_539], %2775 {strides = array<i32>} : memref<12x5x1x128xf32, #tpu.memory_space<vmem>>, vector<1x1x1x128xf32>,
    %cst_540 = arith.constant 1.000000e-01 : f32
    %2776 = vector.broadcast %cst_540 : f32 to vector<1x128xf32>
    %2777 = arith.mulf %2776, %1857 : vector<1x128xf32>
    %2778 = arith.addf %2703, %2777 : vector<1x128xf32>
    %cst_541 = arith.constant 1.000000e-01 : f32
    %2779 = vector.broadcast %cst_541 : f32 to vector<1x128xf32>
    %2780 = arith.mulf %2779, %1865 : vector<1x128xf32>
    %2781 = arith.addf %2706, %2780 : vector<1x128xf32>
    %cst_542 = arith.constant 1.000000e-01 : f32
    %2782 = vector.broadcast %cst_542 : f32 to vector<1x128xf32>
    %2783 = arith.mulf %2782, %2720 : vector<1x128xf32>
    %2784 = arith.addf %2716, %2783 : vector<1x128xf32>
    %cst_543 = arith.constant 1.000000e-01 : f32
    %2785 = vector.broadcast %cst_543 : f32 to vector<1x128xf32>
    %2786 = arith.mulf %2785, %2735 : vector<1x128xf32>
    %2787 = arith.addf %2720, %2786 : vector<1x128xf32>
    %cst_544 = arith.constant 1.000000e-01 : f32
    %2788 = vector.broadcast %cst_544 : f32 to vector<1x128xf32>
    %2789 = arith.mulf %2788, %2787 : vector<1x128xf32>
    %2790 = arith.addf %2784, %2789 : vector<1x128xf32>
    %2791 = arith.addf %2790, %3 : vector<1x128xf32>
    %cst_545 = arith.constant 1.000000e-01 : f32
    %2792 = vector.broadcast %cst_545 : f32 to vector<1x128xf32>
    %2793 = arith.mulf %2792, %2735 : vector<1x128xf32>
    %2794 = arith.addf %2720, %2793 : vector<1x128xf32>
    %2795 = arith.addf %2794, %6 : vector<1x128xf32>
    %cst_546 = arith.constant 1.000000e-01 : f32
    %2796 = vector.broadcast %cst_546 : f32 to vector<1x128xf32>
    %2797 = arith.mulf %2796, %2739 : vector<1x128xf32>
    %2798 = arith.addf %2730, %2797 : vector<1x128xf32>
    %cst_547 = arith.constant 1.000000e-01 : f32
    %2799 = vector.broadcast %cst_547 : f32 to vector<1x128xf32>
    %2800 = arith.mulf %2799, %2740 : vector<1x128xf32>
    %2801 = arith.addf %2734, %2800 : vector<1x128xf32>
    %cst_548 = arith.constant 1.000000e-01 : f32
    %2802 = vector.broadcast %cst_548 : f32 to vector<1x128xf32>
    %2803 = arith.mulf %2802, %2801 : vector<1x128xf32>
    %2804 = arith.addf %2798, %2803 : vector<1x128xf32>
    %2805 = arith.addf %2804, %9 : vector<1x128xf32>
    %cst_549 = arith.constant 1.000000e-01 : f32
    %2806 = vector.broadcast %cst_549 : f32 to vector<1x128xf32>
    %2807 = arith.mulf %2806, %2740 : vector<1x128xf32>
    %2808 = arith.addf %2734, %2807 : vector<1x128xf32>
    %2809 = arith.addf %2808, %12 : vector<1x128xf32>
    %2810 = arith.addf %2735, %15 : vector<1x128xf32>
    %cst_550 = arith.constant 1.000000e-01 : f32
    %2811 = vector.broadcast %cst_550 : f32 to vector<1x128xf32>
    %2812 = arith.mulf %2811, %2740 : vector<1x128xf32>
    %2813 = arith.addf %2739, %2812 : vector<1x128xf32>
    %2814 = arith.addf %2813, %18 : vector<1x128xf32>
    %2815 = arith.addf %2740, %21 : vector<1x128xf32>
    %cst_551 = arith.constant 1.000000e-01 : f32
    %2816 = vector.broadcast %cst_551 : f32 to vector<1x128xf32>
    %2817 = arith.mulf %2816, %2754 : vector<1x128xf32>
    %2818 = arith.addf %2750, %2817 : vector<1x128xf32>
    %cst_552 = arith.constant 1.000000e-01 : f32
    %2819 = vector.broadcast %cst_552 : f32 to vector<1x128xf32>
    %2820 = arith.mulf %2819, %2755 : vector<1x128xf32>
    %2821 = arith.addf %2754, %2820 : vector<1x128xf32>
    %cst_553 = arith.constant 1.000000e-01 : f32
    %2822 = vector.broadcast %cst_553 : f32 to vector<1x128xf32>
    %2823 = arith.mulf %2822, %2821 : vector<1x128xf32>
    %2824 = arith.addf %2818, %2823 : vector<1x128xf32>
    %2825 = arith.addf %2824, %24 : vector<1x128xf32>
    %cst_554 = arith.constant 1.000000e-01 : f32
    %2826 = vector.broadcast %cst_554 : f32 to vector<1x128xf32>
    %2827 = arith.mulf %2826, %2755 : vector<1x128xf32>
    %2828 = arith.addf %2754, %2827 : vector<1x128xf32>
    %2829 = arith.addf %2828, %27 : vector<1x128xf32>
    %2830 = arith.addf %2755, %30 : vector<1x128xf32>
    %2831 = math.sqrt %2791 : vector<1x128xf32>
    %2832 = math.sqrt %2825 : vector<1x128xf32>
    %2833 = arith.mulf %2791, %2825 : vector<1x128xf32>
    %2834 = math.rsqrt %2833 : vector<1x128xf32>
    %2835 = arith.mulf %2805, %2834 : vector<1x128xf32>
    %c10_555 = arith.constant 10 : index
    %c0_556 = arith.constant 0 : index
    %c0_557 = arith.constant 0 : index
    %c0_558 = arith.constant 0 : index
    %2836 = vector.load %arg5[%c10_555, %c0_556, %c0_557, %c0_558] : memref<12x5x1x128xf32, #tpu.memory_space<vmem>>, vector<1x1x1x128xf32>
    %2837 = vector.shape_cast %2836 : vector<1x1x1x128xf32> to vector<1x128xf32>
    %2838 = vector.shape_cast %2778 : vector<1x128xf32> to vector<1x1x1x128xf32>
    tpu.vector_store %arg5[%c10_555, %c0_556, %c0_557, %c0_558], %2838 {strides = array<i32>} : memref<12x5x1x128xf32, #tpu.memory_space<vmem>>, vector<1x1x1x128xf32>,
    %c10_559 = arith.constant 10 : index
    %c1_560 = arith.constant 1 : index
    %c0_561 = arith.constant 0 : index
    %c0_562 = arith.constant 0 : index
    %2839 = vector.load %arg5[%c10_559, %c1_560, %c0_561, %c0_562] : memref<12x5x1x128xf32, #tpu.memory_space<vmem>>, vector<1x1x1x128xf32>
    %2840 = vector.shape_cast %2839 : vector<1x1x1x128xf32> to vector<1x128xf32>
    %2841 = vector.shape_cast %2781 : vector<1x128xf32> to vector<1x1x1x128xf32>
    tpu.vector_store %arg5[%c10_559, %c1_560, %c0_561, %c0_562], %2841 {strides = array<i32>} : memref<12x5x1x128xf32, #tpu.memory_space<vmem>>, vector<1x1x1x128xf32>,
    %c10_563 = arith.constant 10 : index
    %c2_564 = arith.constant 2 : index
    %c0_565 = arith.constant 0 : index
    %c0_566 = arith.constant 0 : index
    %2842 = vector.load %arg5[%c10_563, %c2_564, %c0_565, %c0_566] : memref<12x5x1x128xf32, #tpu.memory_space<vmem>>, vector<1x1x1x128xf32>
    %2843 = vector.shape_cast %2842 : vector<1x1x1x128xf32> to vector<1x128xf32>
    %2844 = vector.shape_cast %2831 : vector<1x128xf32> to vector<1x1x1x128xf32>
    tpu.vector_store %arg5[%c10_563, %c2_564, %c0_565, %c0_566], %2844 {strides = array<i32>} : memref<12x5x1x128xf32, #tpu.memory_space<vmem>>, vector<1x1x1x128xf32>,
    %c10_567 = arith.constant 10 : index
    %c3_568 = arith.constant 3 : index
    %c0_569 = arith.constant 0 : index
    %c0_570 = arith.constant 0 : index
    %2845 = vector.load %arg5[%c10_567, %c3_568, %c0_569, %c0_570] : memref<12x5x1x128xf32, #tpu.memory_space<vmem>>, vector<1x1x1x128xf32>
    %2846 = vector.shape_cast %2845 : vector<1x1x1x128xf32> to vector<1x128xf32>
    %2847 = vector.shape_cast %2832 : vector<1x128xf32> to vector<1x1x1x128xf32>
    tpu.vector_store %arg5[%c10_567, %c3_568, %c0_569, %c0_570], %2847 {strides = array<i32>} : memref<12x5x1x128xf32, #tpu.memory_space<vmem>>, vector<1x1x1x128xf32>,
    %c10_571 = arith.constant 10 : index
    %c4_572 = arith.constant 4 : index
    %c0_573 = arith.constant 0 : index
    %c0_574 = arith.constant 0 : index
    %2848 = vector.load %arg5[%c10_571, %c4_572, %c0_573, %c0_574] : memref<12x5x1x128xf32, #tpu.memory_space<vmem>>, vector<1x1x1x128xf32>
    %2849 = vector.shape_cast %2848 : vector<1x1x1x128xf32> to vector<1x128xf32>
    %2850 = vector.shape_cast %2835 : vector<1x128xf32> to vector<1x1x1x128xf32>
    tpu.vector_store %arg5[%c10_571, %c4_572, %c0_573, %c0_574], %2850 {strides = array<i32>} : memref<12x5x1x128xf32, #tpu.memory_space<vmem>>, vector<1x1x1x128xf32>,
    %cst_575 = arith.constant 1.000000e-01 : f32
    %2851 = vector.broadcast %cst_575 : f32 to vector<1x128xf32>
    %2852 = arith.mulf %2851, %1857 : vector<1x128xf32>
    %2853 = arith.addf %2778, %2852 : vector<1x128xf32>
    %cst_576 = arith.constant 1.000000e-01 : f32
    %2854 = vector.broadcast %cst_576 : f32 to vector<1x128xf32>
    %2855 = arith.mulf %2854, %1865 : vector<1x128xf32>
    %2856 = arith.addf %2781, %2855 : vector<1x128xf32>
    %cst_577 = arith.constant 1.000000e-01 : f32
    %2857 = vector.broadcast %cst_577 : f32 to vector<1x128xf32>
    %2858 = arith.mulf %2857, %2795 : vector<1x128xf32>
    %2859 = arith.addf %2791, %2858 : vector<1x128xf32>
    %cst_578 = arith.constant 1.000000e-01 : f32
    %2860 = vector.broadcast %cst_578 : f32 to vector<1x128xf32>
    %2861 = arith.mulf %2860, %2810 : vector<1x128xf32>
    %2862 = arith.addf %2795, %2861 : vector<1x128xf32>
    %cst_579 = arith.constant 1.000000e-01 : f32
    %2863 = vector.broadcast %cst_579 : f32 to vector<1x128xf32>
    %2864 = arith.mulf %2863, %2862 : vector<1x128xf32>
    %2865 = arith.addf %2859, %2864 : vector<1x128xf32>
    %2866 = arith.addf %2865, %3 : vector<1x128xf32>
    %cst_580 = arith.constant 1.000000e-01 : f32
    %2867 = vector.broadcast %cst_580 : f32 to vector<1x128xf32>
    %2868 = arith.mulf %2867, %2814 : vector<1x128xf32>
    %2869 = arith.addf %2805, %2868 : vector<1x128xf32>
    %cst_581 = arith.constant 1.000000e-01 : f32
    %2870 = vector.broadcast %cst_581 : f32 to vector<1x128xf32>
    %2871 = arith.mulf %2870, %2815 : vector<1x128xf32>
    %2872 = arith.addf %2809, %2871 : vector<1x128xf32>
    %cst_582 = arith.constant 1.000000e-01 : f32
    %2873 = vector.broadcast %cst_582 : f32 to vector<1x128xf32>
    %2874 = arith.mulf %2873, %2872 : vector<1x128xf32>
    %2875 = arith.addf %2869, %2874 : vector<1x128xf32>
    %2876 = arith.addf %2875, %9 : vector<1x128xf32>
    %cst_583 = arith.constant 1.000000e-01 : f32
    %2877 = vector.broadcast %cst_583 : f32 to vector<1x128xf32>
    %2878 = arith.mulf %2877, %2829 : vector<1x128xf32>
    %2879 = arith.addf %2825, %2878 : vector<1x128xf32>
    %cst_584 = arith.constant 1.000000e-01 : f32
    %2880 = vector.broadcast %cst_584 : f32 to vector<1x128xf32>
    %2881 = arith.mulf %2880, %2830 : vector<1x128xf32>
    %2882 = arith.addf %2829, %2881 : vector<1x128xf32>
    %cst_585 = arith.constant 1.000000e-01 : f32
    %2883 = vector.broadcast %cst_585 : f32 to vector<1x128xf32>
    %2884 = arith.mulf %2883, %2882 : vector<1x128xf32>
    %2885 = arith.addf %2879, %2884 : vector<1x128xf32>
    %2886 = arith.addf %2885, %24 : vector<1x128xf32>
    %2887 = math.sqrt %2866 : vector<1x128xf32>
    %2888 = math.sqrt %2886 : vector<1x128xf32>
    %2889 = arith.mulf %2866, %2886 : vector<1x128xf32>
    %2890 = math.rsqrt %2889 : vector<1x128xf32>
    %2891 = arith.mulf %2876, %2890 : vector<1x128xf32>
    %c11_586 = arith.constant 11 : index
    %c0_587 = arith.constant 0 : index
    %c0_588 = arith.constant 0 : index
    %c0_589 = arith.constant 0 : index
    %2892 = vector.load %arg5[%c11_586, %c0_587, %c0_588, %c0_589] : memref<12x5x1x128xf32, #tpu.memory_space<vmem>>, vector<1x1x1x128xf32>
    %2893 = vector.shape_cast %2892 : vector<1x1x1x128xf32> to vector<1x128xf32>
    %2894 = vector.shape_cast %2853 : vector<1x128xf32> to vector<1x1x1x128xf32>
    tpu.vector_store %arg5[%c11_586, %c0_587, %c0_588, %c0_589], %2894 {strides = array<i32>} : memref<12x5x1x128xf32, #tpu.memory_space<vmem>>, vector<1x1x1x128xf32>,
    %c11_590 = arith.constant 11 : index
    %c1_591 = arith.constant 1 : index
    %c0_592 = arith.constant 0 : index
    %c0_593 = arith.constant 0 : index
    %2895 = vector.load %arg5[%c11_590, %c1_591, %c0_592, %c0_593] : memref<12x5x1x128xf32, #tpu.memory_space<vmem>>, vector<1x1x1x128xf32>
    %2896 = vector.shape_cast %2895 : vector<1x1x1x128xf32> to vector<1x128xf32>
    %2897 = vector.shape_cast %2856 : vector<1x128xf32> to vector<1x1x1x128xf32>
    tpu.vector_store %arg5[%c11_590, %c1_591, %c0_592, %c0_593], %2897 {strides = array<i32>} : memref<12x5x1x128xf32, #tpu.memory_space<vmem>>, vector<1x1x1x128xf32>,
    %c11_594 = arith.constant 11 : index
    %c2_595 = arith.constant 2 : index
    %c0_596 = arith.constant 0 : index
    %c0_597 = arith.constant 0 : index
    %2898 = vector.load %arg5[%c11_594, %c2_595, %c0_596, %c0_597] : memref<12x5x1x128xf32, #tpu.memory_space<vmem>>, vector<1x1x1x128xf32>
    %2899 = vector.shape_cast %2898 : vector<1x1x1x128xf32> to vector<1x128xf32>
    %2900 = vector.shape_cast %2887 : vector<1x128xf32> to vector<1x1x1x128xf32>
    tpu.vector_store %arg5[%c11_594, %c2_595, %c0_596, %c0_597], %2900 {strides = array<i32>} : memref<12x5x1x128xf32, #tpu.memory_space<vmem>>, vector<1x1x1x128xf32>,
    %c11_598 = arith.constant 11 : index
    %c3_599 = arith.constant 3 : index
    %c0_600 = arith.constant 0 : index
    %c0_601 = arith.constant 0 : index
    %2901 = vector.load %arg5[%c11_598, %c3_599, %c0_600, %c0_601] : memref<12x5x1x128xf32, #tpu.memory_space<vmem>>, vector<1x1x1x128xf32>
    %2902 = vector.shape_cast %2901 : vector<1x1x1x128xf32> to vector<1x128xf32>
    %2903 = vector.shape_cast %2888 : vector<1x128xf32> to vector<1x1x1x128xf32>
    tpu.vector_store %arg5[%c11_598, %c3_599, %c0_600, %c0_601], %2903 {strides = array<i32>} : memref<12x5x1x128xf32, #tpu.memory_space<vmem>>, vector<1x1x1x128xf32>,
    %c11_602 = arith.constant 11 : index
    %c4_603 = arith.constant 4 : index
    %c0_604 = arith.constant 0 : index
    %c0_605 = arith.constant 0 : index
    %2904 = vector.load %arg5[%c11_602, %c4_603, %c0_604, %c0_605] : memref<12x5x1x128xf32, #tpu.memory_space<vmem>>, vector<1x1x1x128xf32>
    %2905 = vector.shape_cast %2904 : vector<1x1x1x128xf32> to vector<1x128xf32>
    %2906 = vector.shape_cast %2891 : vector<1x128xf32> to vector<1x1x1x128xf32>
    tpu.vector_store %arg5[%c11_602, %c4_603, %c0_604, %c0_605], %2906 {strides = array<i32>} : memref<12x5x1x128xf32, #tpu.memory_space<vmem>>, vector<1x1x1x128xf32>,
    return
  }
  func.func @transform_0(%arg0: i32) -> i32 {
    %c0_i32 = arith.constant 0 : i32
    %c0_i32_0 = arith.constant 0 : i32
    return %c0_i32 : i32
  }
  func.func @transform_1(%arg0: i32) -> i32 {
    %c0_i32 = arith.constant 0 : i32
    %c0_i32_0 = arith.constant 0 : i32
    return %c0_i32 : i32
  }
  func.func @transform_2(%arg0: i32) -> i32 {
    %c0_i32 = arith.constant 0 : i32
    %c0_i32_0 = arith.constant 0 : i32
    return %c0_i32 : i32
  }
  func.func @transform_3(%arg0: i32) -> (i32, i32, i32, i32) {
    %c0_i32 = arith.constant 0 : i32
    %c0_i32_0 = arith.constant 0 : i32
    %c0_i32_1 = arith.constant 0 : i32
    %c0_i32_2 = arith.constant 0 : i32
    return %c0_i32, %c0_i32_0, %arg0, %c0_i32_1 : i32, i32, i32, i32
  }
  func.func @transform_4(%arg0: i32) -> (i32, i32, i32, i32) {
    %c0_i32 = arith.constant 0 : i32
    %c0_i32_0 = arith.constant 0 : i32
    %c0_i32_1 = arith.constant 0 : i32
    %c0_i32_2 = arith.constant 0 : i32
    return %c0_i32, %c0_i32_0, %arg0, %c0_i32_1 : i32, i32, i32, i32
  }
}

</mosaic_0001>

<llo_original>
// kernel: tpu_custom_call.1
$region0: #{tpu_custom_call.1}
  #allocation0 [shape = 'u32[]', space=smem, size = 0x4, offset = 0x4, fixed_abs, tag = 'smem constant byte address 0x4 - core index']
  #allocation1 [shape = 'u32[72,128]{1,0:T(1,128)}', space=vmem, size = 0x9000, scoped, tag = 'internal scratch']
  %s0 = inlined_call_operand.hbm [shape: f32[16], index: 0, kind: input, shape index: {}]
  %s1 = inlined_call_operand.hbm [shape: f32[3], index: 1, kind: input, shape index: {}]
  %s2 = inlined_call_operand.vmem [shape: f32[4], index: 2, kind: input, shape index: {}]
  %s3 = inlined_call_operand.hbm [shape: f32[8,2,1,128], index: 3, kind: input, shape index: {}]
  %s4 = inlined_call_operand.hbm [shape: f32[12,5,1,128], index: 4, kind: output, shape index: {}]
  %s5 = sld [smem:[#allocation0]]
  $region42: #{tpu_custom_call.1} parent=0
    _
  %s7 = ssub.s32 1, %s5
  %s8 = scalar_select 0, %s7, %s5
  $region1: #{tpu_custom_call.1} parent=0
    #allocation2 [shape = 'u8[512]{0}', space=smem, size = 0x200, scoped, tag = 'input window, operand 0, single buffered']
    #allocation3 [shape = 's32[1]{0}', space=sflag, size = 0x4, scoped, tag = 'scoped memory for tpu_custom_call.1']
    #allocation4 [shape = 's32[1]{0}', space=sflag, size = 0x4, scoped, tag = 'scoped memory for tpu_custom_call.1']
    #allocation5 [shape = 's32[1]{0}', space=sflag, size = 0x4, scoped, tag = 'scoped memory for tpu_custom_call.1']
    #allocation6 [shape = 's32[1]{0}', space=sflag, size = 0x4, scoped, tag = 'scoped memory for tpu_custom_call.1']
    #allocation7 [shape = 'u8[512]{0}', space=smem, size = 0x200, scoped, tag = 'input window, operand 1, single buffered']
    #allocation8 [shape = 's32[1]{0}', space=sflag, size = 0x4, scoped, tag = 'scoped memory for tpu_custom_call.1']
    #allocation9 [shape = 'u8[512]{0}', space=smem, size = 0x200, scoped, tag = 'input window, operand 2, single buffered']
    #allocation10 [shape = 'u8[8192]{0}', space=vmem, size = 0x2000, scoped, tag = 'input window, operand 3, single buffered']
    #allocation11 [shape = 'u8[30720]{0}', space=vmem, size = 0x7800, scoped, tag = 'output window, operand 0, single buffered']
    %9 = vsyncpa [#allocation5], 0
    %10 = vsyncpa [#allocation8], 0
    %11 = vsyncpa [#allocation6], 0
    %12 = vsyncpa [#allocation3], 0
    %13 = vsyncpa [#allocation4], 0
    // Predicated region
    $region2: #{tpu_custom_call.1} parent=1 // pred_check
      _
    $region3: #{tpu_custom_call.1} parent=1 // pred_check_branch
      %15 = sbr.rel (0) target = $region5
    $region4: #{tpu_custom_call.1} parent=1 // pred_region
      %17 = vsyncadd [#allocation5], 0
      %s19 = sshll.u32 %s0, 4
      %s20 = int_to_ptr.hbm [resolvable:$true] %s19
      %22 = dma.hbm_to_smem %s20, 16, [#allocation2], [#allocation5]
    $region5: #{tpu_custom_call.1} parent=1 // pred_fallthru
      _
    // Predicated region
    $region6: #{tpu_custom_call.1} parent=1 // pred_check
      _
    $region7: #{tpu_custom_call.1} parent=1 // pred_check_branch
      %24 = sbr.rel (0) target = $region9
    $region8: #{tpu_custom_call.1} parent=1 // pred_region
      %26 = vsyncadd [#allocation8], 0
      %s28 = sshll.u32 %s1, 4
      %s29 = int_to_ptr.hbm [resolvable:$true] %s28
      %31 = dma.hbm_to_smem %s29, 16, [#allocation7], [#allocation8]
    $region9: #{tpu_custom_call.1} parent=1 // pred_fallthru
      _
    // Predicated region
    $region10: #{tpu_custom_call.1} parent=1 // pred_check
      _
    $region11: #{tpu_custom_call.1} parent=1 // pred_check_branch
      %33 = sbr.rel (0) target = $region13
    $region12: #{tpu_custom_call.1} parent=1 // pred_region
      %35 = vsyncadd [#allocation6], 0
      %s37 = sshll.u32 %s2, 4
      %s38 = int_to_ptr.vmem [resolvable:$true] %s37
      %40 = dma.vmem_to_smem %s38, 16, [#allocation9], [#allocation6]
    $region13: #{tpu_custom_call.1} parent=1 // pred_fallthru
      _
    // Predicated region
    $region14: #{tpu_custom_call.1} parent=1 // pred_check
      _
    $region15: #{tpu_custom_call.1} parent=1 // pred_check_branch
      %42 = sbr.rel (0) target = $region17
    $region16: #{tpu_custom_call.1} parent=1 // pred_region
      %44 = vsyncadd [#allocation3], 0
      %s45 = sshll.u32 %s3, 4
      %s46 = int_to_ptr.hbm [resolvable:$true] %s45
      %s47 = sshll.u32 [#allocation10], 4
      %s48 = int_to_ptr.vmem [resolvable:$true] %s47
      %53 = dma.hbm_to_vmem [thread:$0]  %s46, 256, %s48, [#allocation3], 16, 16, 1
    $region17: #{tpu_custom_call.1} parent=1 // pred_fallthru
      _
    // Predicated region
    $region18: #{tpu_custom_call.1} parent=1 // pred_check
      _
    $region19: #{tpu_custom_call.1} parent=1 // pred_check_branch
      %55 = sbr.rel (0) target = $region21
    $region20: #{tpu_custom_call.1} parent=1 // pred_region
      %57 = dma.done [#allocation5], 16
    $region21: #{tpu_custom_call.1} parent=1 // pred_fallthru
      _
    // Predicated region
    $region22: #{tpu_custom_call.1} parent=1 // pred_check
      _
    $region23: #{tpu_custom_call.1} parent=1 // pred_check_branch
      %59 = sbr.rel (0) target = $region25
    $region24: #{tpu_custom_call.1} parent=1 // pred_region
      %61 = dma.done [#allocation8], 16
    $region25: #{tpu_custom_call.1} parent=1 // pred_fallthru
      _
    // Predicated region
    $region26: #{tpu_custom_call.1} parent=1 // pred_check
      _
    $region27: #{tpu_custom_call.1} parent=1 // pred_check_branch
      %63 = sbr.rel (0) target = $region29
    $region28: #{tpu_custom_call.1} parent=1 // pred_region
      %65 = dma.done [#allocation6], 16
    $region29: #{tpu_custom_call.1} parent=1 // pred_fallthru
      _
    // Predicated region
    $region30: #{tpu_custom_call.1} parent=1 // pred_check
      _
    $region31: #{tpu_custom_call.1} parent=1 // pred_check_branch
      %67 = sbr.rel (0) target = $region33
    $region32: #{tpu_custom_call.1} parent=1 // pred_region
      %69 = dma.done [#allocation3], 256
    $region33: #{tpu_custom_call.1} parent=1 // pred_fallthru
      _
    %70 = sfence
    %s71 = sld [smem:[#allocation2]]
    %v72 = vstv %s71
    %v73 = vadd.f32 %v72, 0.0
    %s74 = sld [smem:[#allocation2 + $0x1]]
    %v75 = vstv %s74
    %v76 = vadd.f32 %v75, 0.0
    %s77 = sld [smem:[#allocation2 + $0x2]]
    %v78 = vstv %s77
    %v79 = vadd.f32 %v78, 0.0
    %s80 = sld [smem:[#allocation2 + $0x3]]
    %v81 = vstv %s80
    %v82 = vadd.f32 %v81, 0.0
    %s83 = sld [smem:[#allocation2 + $0x5]]
    %v84 = vstv %s83
    %v85 = vadd.f32 %v84, 0.0
    %s86 = sld [smem:[#allocation2 + $0x6]]
    %v87 = vstv %s86
    %v88 = vadd.f32 %v87, 0.0
    %s89 = sld [smem:[#allocation2 + $0x7]]
    %v90 = vstv %s89
    %v91 = vadd.f32 %v90, 0.0
    %s92 = sld [smem:[#allocation2 + $0xa]]
    %v93 = vstv %s92
    %v94 = vadd.f32 %v93, 0.0
    %s95 = sld [smem:[#allocation2 + $0xb]]
    %v96 = vstv %s95
    %v97 = vadd.f32 %v96, 0.0
    %s98 = sld [smem:[#allocation2 + $0xf]]
    %v99 = vstv %s98
    %v100 = vadd.f32 %v99, 0.0
    %s101 = sld [smem:[#allocation7]]
    %v102 = vstv %s101
    %v103 = vadd.f32 %v102, 0.0
    %s104 = sld [smem:[#allocation7 + $0x1]]
    %v105 = vstv %s104
    %v106 = vadd.f32 %v105, 0.0
    %s107 = sld [smem:[#allocation7 + $0x2]]
    %v108 = vstv %s107
    %v109 = vadd.f32 %v108, 0.0
    %s110 = sld [smem:[#allocation9]]
    %v111 = vstv %s110
    %v112 = vadd.f32 %v111, 0.0
    %s113 = sld [smem:[#allocation9 + $0x1]]
    %v114 = vstv %s113
    %v115 = vadd.f32 %v114, 0.0
    %s116 = sld [smem:[#allocation9 + $0x2]]
    %v117 = vstv %s116
    %v118 = vadd.f32 %v117, 0.0
    %s119 = sld [smem:[#allocation9 + $0x3]]
    %v120 = vstv %s119
    %v121 = vadd.f32 %v120, 0.0
    %v122 = vld [vmem:[#allocation10] sm:$0x1]
    %s123 = scalar_lea.vmem [#allocation10], 1
    %v124 = vld [vmem:[%s123] sm:$0x1]
    %s125 = scalar_lea.vmem [#allocation10], 2
    %v126 = vld [vmem:[%s125] sm:$0x1]
    %s127 = scalar_lea.vmem [#allocation10], 3
    %v128 = vld [vmem:[%s127] sm:$0x1]
    %v129 = vsub.f32 %v126, %v122
    %v130 = vmul.f32 %v129, 10.0
    %v131 = vsub.f32 %v128, %v124
    %v132 = vmul.f32 %v131, 10.0
    %v133 = vmul.f32 %v130, 0.1
    %v134 = vadd.f32 %v122, %v133
    %v135 = vmul.f32 %v132, 0.1
    %v136 = vadd.f32 %v124, %v135
    %v137 = vadd.f32 %v112, 0.0
    %v138 = vmul.f32 %v115, 0.1
    %v139 = vadd.f32 %v138, 0.0
    %v140 = vmul.f32 %v139, 0.1
    %v141 = vadd.f32 %v137, %v140
    %v142 = vadd.f32 %v141, %v73
    %v143 = vadd.f32 %v139, %v76
    %v144 = vadd.f32 %v79, 0.0
    %v145 = vadd.f32 %v82, 0.0
    %v146 = vadd.f32 %v115, %v85
    %v147 = vadd.f32 %v88, 0.0
    %v148 = vadd.f32 %v91, 0.0
    %v149 = vadd.f32 %v118, 0.0
    %v150 = vmul.f32 %v121, 0.1
    %v151 = vadd.f32 %v150, 0.0
    %v152 = vmul.f32 %v151, 0.1
    %v153 = vadd.f32 %v149, %v152
    %v154 = vadd.f32 %v153, %v94
    %v155 = vadd.f32 %v151, %v97
    %v156 = vadd.f32 %v121, %v100
    %v157 = vsub.f32 %v126, %v134
    %v158 = vsub.f32 %v128, %v136
    %v159 = vadd.f32 %v142, %v103
    %v160 = vadd.f32 %v144, %v106
    %v161 = vadd.f32 %v154, %v109
    %v162 = vmul.f32 %v159, %v161
    %v163 = vmul.f32 %v160, %v160
    %v164 = vsub.f32 %v162, %v163
    %v165 = vrcp.pop %v164
    %v166 = vmul.f32 %v164, %v165
    %v167 = vsub.f32 2.0, %v166
    %v168 = vmul.f32 %v165, %v167
    %v169 = vmul.f32 %v142, %v161
    %v170 = vmul.f32 %v144, %v160
    %v171 = vsub.f32 %v169, %v170
    %v172 = vmul.f32 %v171, %v168
    %v173 = vmul.f32 %v144, %v159
    %v174 = vmul.f32 %v142, %v160
    %v175 = vsub.f32 %v173, %v174
    %v176 = vmul.f32 %v175, %v168
    %v177 = vmul.f32 %v143, %v161
    %v178 = vmul.f32 %v147, %v160
    %v179 = vsub.f32 %v177, %v178
    %v180 = vmul.f32 %v179, %v168
    %v181 = vmul.f32 %v147, %v159
    %v182 = vmul.f32 %v143, %v160
    %v183 = vsub.f32 %v181, %v182
    %v184 = vmul.f32 %v183, %v168
    %v185 = vmul.f32 %v144, %v161
    %v186 = vmul.f32 %v154, %v160
    %v187 = vsub.f32 %v185, %v186
    %v188 = vmul.f32 %v187, %v168
    %v189 = vmul.f32 %v154, %v159
    %v190 = vsub.f32 %v189, %v170
    %v191 = vmul.f32 %v190, %v168
    %v192 = vmul.f32 %v145, %v161
    %v193 = vmul.f32 %v155, %v160
    %v194 = vsub.f32 %v192, %v193
    %v195 = vmul.f32 %v194, %v168
    %v196 = vmul.f32 %v155, %v159
    %v197 = vmul.f32 %v145, %v160
    %v198 = vsub.f32 %v196, %v197
    %v199 = vmul.f32 %v198, %v168
    %v200 = vmul.f32 %v172, %v157
    %v201 = vadd.f32 %v134, %v200
    %v202 = vmul.f32 %v176, %v158
    %v203 = vadd.f32 %v201, %v202
    %v204 = vmul.f32 %v180, %v157
    %v205 = vadd.f32 %v130, %v204
    %v206 = vmul.f32 %v184, %v158
    %v207 = vadd.f32 %v205, %v206
    %v208 = vmul.f32 %v188, %v157
    %v209 = vadd.f32 %v136, %v208
    %v210 = vmul.f32 %v191, %v158
    %v211 = vadd.f32 %v209, %v210
    %v212 = vmul.f32 %v195, %v157
    %v213 = vadd.f32 %v132, %v212
    %v214 = vmul.f32 %v199, %v158
    %v215 = vadd.f32 %v213, %v214
    %v216 = vmul.f32 %v172, %v142
    %v217 = vsub.f32 %v142, %v216
    %v218 = vmul.f32 %v176, %v144
    %v219 = vsub.f32 %v217, %v218
    %v220 = vmul.f32 %v172, %v143
    %v221 = vsub.f32 %v143, %v220
    %v222 = vmul.f32 %v176, %v147
    %v223 = vsub.f32 %v221, %v222
    %v224 = vmul.f32 %v172, %v144
    %v225 = vsub.f32 %v144, %v224
    %v226 = vmul.f32 %v176, %v154
    %v227 = vsub.f32 %v225, %v226
    %v228 = vmul.f32 %v172, %v145
    %v229 = vsub.f32 %v145, %v228
    %v230 = vmul.f32 %v176, %v155
    %v231 = vsub.f32 %v229, %v230
    %v232 = vmul.f32 %v180, %v143
    %v233 = vsub.f32 %v146, %v232
    %v234 = vmul.f32 %v184, %v147
    %v235 = vsub.f32 %v233, %v234
    %v236 = vmul.f32 %v180, %v144
    %v237 = vsub.f32 %v147, %v236
    %v238 = vmul.f32 %v184, %v154
    %v239 = vsub.f32 %v237, %v238
    %v240 = vmul.f32 %v180, %v145
    %v241 = vsub.f32 %v148, %v240
    %v242 = vmul.f32 %v184, %v155
    %v243 = vsub.f32 %v241, %v242
    %v244 = vmul.f32 %v188, %v144
    %v245 = vsub.f32 %v154, %v244
    %v246 = vmul.f32 %v191, %v154
    %v247 = vsub.f32 %v245, %v246
    %v248 = vmul.f32 %v188, %v145
    %v249 = vsub.f32 %v155, %v248
    %v250 = vmul.f32 %v191, %v155
    %v251 = vsub.f32 %v249, %v250
    %v252 = vmul.f32 %v195, %v145
    %v253 = vsub.f32 %v156, %v252
    %v254 = vmul.f32 %v199, %v155
    %v255 = vsub.f32 %v253, %v254
    %v256 = vmul.f32 %v180, %v142
    %v257 = vsub.f32 %v143, %v256
    %v258 = vmul.f32 %v184, %v144
    %v259 = vsub.f32 %v257, %v258
    %v260 = vmul.f32 %v188, %v142
    %v261 = vsub.f32 %v144, %v260
    %v262 = vmul.f32 %v191, %v144
    %v263 = vsub.f32 %v261, %v262
    %v264 = vmul.f32 %v195, %v142
    %v265 = vsub.f32 %v145, %v264
    %v266 = vmul.f32 %v199, %v144
    %v267 = vsub.f32 %v265, %v266
    %v268 = vmul.f32 %v195, %v144
    %v269 = vsub.f32 %v155, %v268
    %v270 = vmul.f32 %v199, %v154
    %v271 = vsub.f32 %v269, %v270
    %v272 = vmul.f32 %v172, %v103
    %v273 = vmul.f32 %v176, %v106
    %v274 = vadd.f32 %v272, %v273
    %v275 = vmul.f32 %v180, %v103
    %v276 = vmul.f32 %v184, %v106
    %v277 = vadd.f32 %v275, %v276
    %v278 = vmul.f32 %v188, %v103
    %v279 = vmul.f32 %v191, %v106
    %v280 = vadd.f32 %v278, %v279
    %v281 = vmul.f32 %v195, %v103
    %v282 = vmul.f32 %v199, %v106
    %v283 = vadd.f32 %v281, %v282
    %v284 = vmul.f32 %v172, %v106
    %v285 = vmul.f32 %v176, %v109
    %v286 = vadd.f32 %v284, %v285
    %v287 = vmul.f32 %v180, %v106
    %v288 = vmul.f32 %v184, %v109
    %v289 = vadd.f32 %v287, %v288
    %v290 = vmul.f32 %v188, %v106
    %v291 = vmul.f32 %v191, %v109
    %v292 = vadd.f32 %v290, %v291
    %v293 = vmul.f32 %v195, %v106
    %v294 = vmul.f32 %v199, %v109
    %v295 = vadd.f32 %v293, %v294
    %v296 = vmul.f32 %v219, %v172
    %v297 = vsub.f32 %v219, %v296
    %v298 = vmul.f32 %v227, %v176
    %v299 = vsub.f32 %v297, %v298
    %v300 = vmul.f32 %v274, %v172
    %v301 = vadd.f32 %v299, %v300
    %v302 = vmul.f32 %v286, %v176
    %v303 = vadd.f32 %v301, %v302
    %v304 = vmul.f32 %v219, %v180
    %v305 = vsub.f32 %v223, %v304
    %v306 = vmul.f32 %v227, %v184
    %v307 = vsub.f32 %v305, %v306
    %v308 = vmul.f32 %v274, %v180
    %v309 = vadd.f32 %v307, %v308
    %v310 = vmul.f32 %v286, %v184
    %v311 = vadd.f32 %v309, %v310
    %v312 = vmul.f32 %v219, %v188
    %v313 = vsub.f32 %v227, %v312
    %v314 = vmul.f32 %v227, %v191
    %v315 = vsub.f32 %v313, %v314
    %v316 = vmul.f32 %v274, %v188
    %v317 = vadd.f32 %v315, %v316
    %v318 = vmul.f32 %v286, %v191
    %v319 = vadd.f32 %v317, %v318
    %v320 = vmul.f32 %v219, %v195
    %v321 = vsub.f32 %v231, %v320
    %v322 = vmul.f32 %v227, %v199
    %v323 = vsub.f32 %v321, %v322
    %v324 = vmul.f32 %v274, %v195
    %v325 = vadd.f32 %v323, %v324
    %v326 = vmul.f32 %v286, %v199
    %v327 = vadd.f32 %v325, %v326
    %v328 = vmul.f32 %v259, %v180
    %v329 = vsub.f32 %v235, %v328
    %v330 = vmul.f32 %v239, %v184
    %v331 = vsub.f32 %v329, %v330
    %v332 = vmul.f32 %v277, %v180
    %v333 = vadd.f32 %v331, %v332
    %v334 = vmul.f32 %v289, %v184
    %v335 = vadd.f32 %v333, %v334
    %v336 = vmul.f32 %v259, %v188
    %v337 = vsub.f32 %v239, %v336
    %v338 = vmul.f32 %v239, %v191
    %v339 = vsub.f32 %v337, %v338
    %v340 = vmul.f32 %v277, %v188
    %v341 = vadd.f32 %v339, %v340
    %v342 = vmul.f32 %v289, %v191
    %v343 = vadd.f32 %v341, %v342
    %v344 = vmul.f32 %v259, %v195
    %v345 = vsub.f32 %v243, %v344
    %v346 = vmul.f32 %v239, %v199
    %v347 = vsub.f32 %v345, %v346
    %v348 = vmul.f32 %v277, %v195
    %v349 = vadd.f32 %v347, %v348
    %v350 = vmul.f32 %v289, %v199
    %v351 = vadd.f32 %v349, %v350
    %v352 = vmul.f32 %v263, %v188
    %v353 = vsub.f32 %v247, %v352
    %v354 = vmul.f32 %v247, %v191
    %v355 = vsub.f32 %v353, %v354
    %v356 = vmul.f32 %v280, %v188
    %v357 = vadd.f32 %v355, %v356
    %v358 = vmul.f32 %v292, %v191
    %v359 = vadd.f32 %v357, %v358
    %v360 = vmul.f32 %v263, %v195
    %v361 = vsub.f32 %v251, %v360
    %v362 = vmul.f32 %v247, %v199
    %v363 = vsub.f32 %v361, %v362
    %v364 = vmul.f32 %v280, %v195
    %v365 = vadd.f32 %v363, %v364
    %v366 = vmul.f32 %v292, %v199
    %v367 = vadd.f32 %v365, %v366
    %v368 = vmul.f32 %v267, %v195
    %v369 = vsub.f32 %v255, %v368
    %v370 = vmul.f32 %v271, %v199
    %v371 = vsub.f32 %v369, %v370
    %v372 = vmul.f32 %v283, %v195
    %v373 = vadd.f32 %v371, %v372
    %v374 = vmul.f32 %v295, %v199
    %v375 = vadd.f32 %v373, %v374
    %s376 = scalar_lea.vmem [#allocation10], 4
    %v377 = vld [vmem:[%s376] sm:$0x1]
    %s378 = scalar_lea.vmem [#allocation10], 5
    %v379 = vld [vmem:[%s378] sm:$0x1]
    %v380 = vmul.f32 %v207, 0.1
    %v381 = vadd.f32 %v203, %v380
    %v382 = vmul.f32 %v215, 0.1
    %v383 = vadd.f32 %v211, %v382
    %v384 = vmul.f32 %v311, 0.1
    %v385 = vadd.f32 %v303, %v384
    %v386 = vmul.f32 %v335, 0.1
    %v387 = vadd.f32 %v311, %v386
    %v388 = vmul.f32 %v387, 0.1
    %v389 = vadd.f32 %v385, %v388
    %v390 = vadd.f32 %v389, %v73
    %v391 = vadd.f32 %v387, %v76
    %v392 = vmul.f32 %v343, 0.1
    %v393 = vadd.f32 %v319, %v392
    %v394 = vmul.f32 %v351, 0.1
    %v395 = vadd.f32 %v327, %v394
    %v396 = vmul.f32 %v395, 0.1
    %v397 = vadd.f32 %v393, %v396
    %v398 = vadd.f32 %v397, %v79
    %v399 = vadd.f32 %v395, %v82
    %v400 = vadd.f32 %v335, %v85
    %v401 = vadd.f32 %v343, %v394
    %v402 = vadd.f32 %v401, %v88
    %v403 = vadd.f32 %v351, %v91
    %v404 = vmul.f32 %v367, 0.1
    %v405 = vadd.f32 %v359, %v404
    %v406 = vmul.f32 %v375, 0.1
    %v407 = vadd.f32 %v367, %v406
    %v408 = vmul.f32 %v407, 0.1
    %v409 = vadd.f32 %v405, %v408
    %v410 = vadd.f32 %v409, %v94
    %v411 = vadd.f32 %v407, %v97
    %v412 = vadd.f32 %v375, %v100
    %v413 = vsub.f32 %v377, %v381
    %v414 = vsub.f32 %v379, %v383
    %v415 = vadd.f32 %v390, %v103
    %v416 = vadd.f32 %v398, %v106
    %v417 = vadd.f32 %v410, %v109
    %v418 = vmul.f32 %v415, %v417
    %v419 = vmul.f32 %v416, %v416
    %v420 = vsub.f32 %v418, %v419
    %v421 = vrcp.pop %v420
    %v422 = vmul.f32 %v420, %v421
    %v423 = vsub.f32 2.0, %v422
    %v424 = vmul.f32 %v421, %v423
    %v425 = vmul.f32 %v390, %v417
    %v426 = vmul.f32 %v398, %v416
    %v427 = vsub.f32 %v425, %v426
    %v428 = vmul.f32 %v427, %v424
    %v429 = vmul.f32 %v398, %v415
    %v430 = vmul.f32 %v390, %v416
    %v431 = vsub.f32 %v429, %v430
    %v432 = vmul.f32 %v431, %v424
    %v433 = vmul.f32 %v391, %v417
    %v434 = vmul.f32 %v402, %v416
    %v435 = vsub.f32 %v433, %v434
    %v436 = vmul.f32 %v435, %v424
    %v437 = vmul.f32 %v402, %v415
    %v438 = vmul.f32 %v391, %v416
    %v439 = vsub.f32 %v437, %v438
    %v440 = vmul.f32 %v439, %v424
    %v441 = vmul.f32 %v398, %v417
    %v442 = vmul.f32 %v410, %v416
    %v443 = vsub.f32 %v441, %v442
    %v444 = vmul.f32 %v443, %v424
    %v445 = vmul.f32 %v410, %v415
    %v446 = vsub.f32 %v445, %v426
    %v447 = vmul.f32 %v446, %v424
    %v448 = vmul.f32 %v399, %v417
    %v449 = vmul.f32 %v411, %v416
    %v450 = vsub.f32 %v448, %v449
    %v451 = vmul.f32 %v450, %v424
    %v452 = vmul.f32 %v411, %v415
    %v453 = vmul.f32 %v399, %v416
    %v454 = vsub.f32 %v452, %v453
    %v455 = vmul.f32 %v454, %v424
    %v456 = vmul.f32 %v428, %v413
    %v457 = vadd.f32 %v381, %v456
    %v458 = vmul.f32 %v432, %v414
    %v459 = vadd.f32 %v457, %v458
    %v460 = vmul.f32 %v436, %v413
    %v461 = vadd.f32 %v207, %v460
    %v462 = vmul.f32 %v440, %v414
    %v463 = vadd.f32 %v461, %v462
    %v464 = vmul.f32 %v444, %v413
    %v465 = vadd.f32 %v383, %v464
    %v466 = vmul.f32 %v447, %v414
    %v467 = vadd.f32 %v465, %v466
    %v468 = vmul.f32 %v451, %v413
    %v469 = vadd.f32 %v215, %v468
    %v470 = vmul.f32 %v455, %v414
    %v471 = vadd.f32 %v469, %v470
    %v472 = vmul.f32 %v428, %v390
    %v473 = vsub.f32 %v390, %v472
    %v474 = vmul.f32 %v432, %v398
    %v475 = vsub.f32 %v473, %v474
    %v476 = vmul.f32 %v428, %v391
    %v477 = vsub.f32 %v391, %v476
    %v478 = vmul.f32 %v432, %v402
    %v479 = vsub.f32 %v477, %v478
    %v480 = vmul.f32 %v428, %v398
    %v481 = vsub.f32 %v398, %v480
    %v482 = vmul.f32 %v432, %v410
    %v483 = vsub.f32 %v481, %v482
    %v484 = vmul.f32 %v428, %v399
    %v485 = vsub.f32 %v399, %v484
    %v486 = vmul.f32 %v432, %v411
    %v487 = vsub.f32 %v485, %v486
    %v488 = vmul.f32 %v436, %v391
    %v489 = vsub.f32 %v400, %v488
    %v490 = vmul.f32 %v440, %v402
    %v491 = vsub.f32 %v489, %v490
    %v492 = vmul.f32 %v436, %v398
    %v493 = vsub.f32 %v402, %v492
    %v494 = vmul.f32 %v440, %v410
    %v495 = vsub.f32 %v493, %v494
    %v496 = vmul.f32 %v436, %v399
    %v497 = vsub.f32 %v403, %v496
    %v498 = vmul.f32 %v440, %v411
    %v499 = vsub.f32 %v497, %v498
    %v500 = vmul.f32 %v444, %v398
    %v501 = vsub.f32 %v410, %v500
    %v502 = vmul.f32 %v447, %v410
    %v503 = vsub.f32 %v501, %v502
    %v504 = vmul.f32 %v444, %v399
    %v505 = vsub.f32 %v411, %v504
    %v506 = vmul.f32 %v447, %v411
    %v507 = vsub.f32 %v505, %v506
    %v508 = vmul.f32 %v451, %v399
    %v509 = vsub.f32 %v412, %v508
    %v510 = vmul.f32 %v455, %v411
    %v511 = vsub.f32 %v509, %v510
    %v512 = vmul.f32 %v436, %v390
    %v513 = vsub.f32 %v391, %v512
    %v514 = vmul.f32 %v440, %v398
    %v515 = vsub.f32 %v513, %v514
    %v516 = vmul.f32 %v444, %v390
    %v517 = vsub.f32 %v398, %v516
    %v518 = vmul.f32 %v447, %v398
    %v519 = vsub.f32 %v517, %v518
    %v520 = vmul.f32 %v451, %v390
    %v521 = vsub.f32 %v399, %v520
    %v522 = vmul.f32 %v455, %v398
    %v523 = vsub.f32 %v521, %v522
    %v524 = vmul.f32 %v451, %v398
    %v525 = vsub.f32 %v411, %v524
    %v526 = vmul.f32 %v455, %v410
    %v527 = vsub.f32 %v525, %v526
    %v528 = vmul.f32 %v428, %v103
    %v529 = vmul.f32 %v432, %v106
    %v530 = vadd.f32 %v528, %v529
    %v531 = vmul.f32 %v436, %v103
    %v532 = vmul.f32 %v440, %v106
    %v533 = vadd.f32 %v531, %v532
    %v534 = vmul.f32 %v444, %v103
    %v535 = vmul.f32 %v447, %v106
    %v536 = vadd.f32 %v534, %v535
    %v537 = vmul.f32 %v451, %v103
    %v538 = vmul.f32 %v455, %v106
    %v539 = vadd.f32 %v537, %v538
    %v540 = vmul.f32 %v428, %v106
    %v541 = vmul.f32 %v432, %v109
    %v542 = vadd.f32 %v540, %v541
    %v543 = vmul.f32 %v436, %v106
    %v544 = vmul.f32 %v440, %v109
    %v545 = vadd.f32 %v543, %v544
    %v546 = vmul.f32 %v444, %v106
    %v547 = vmul.f32 %v447, %v109
    %v548 = vadd.f32 %v546, %v547
    %v549 = vmul.f32 %v451, %v106
    %v550 = vmul.f32 %v455, %v109
    %v551 = vadd.f32 %v549, %v550
    %v552 = vmul.f32 %v475, %v428
    %v553 = vsub.f32 %v475, %v552
    %v554 = vmul.f32 %v483, %v432
    %v555 = vsub.f32 %v553, %v554
    %v556 = vmul.f32 %v530, %v428
    %v557 = vadd.f32 %v555, %v556
    %v558 = vmul.f32 %v542, %v432
    %v559 = vadd.f32 %v557, %v558
    %v560 = vmul.f32 %v475, %v436
    %v561 = vsub.f32 %v479, %v560
    %v562 = vmul.f32 %v483, %v440
    %v563 = vsub.f32 %v561, %v562
    %v564 = vmul.f32 %v530, %v436
    %v565 = vadd.f32 %v563, %v564
    %v566 = vmul.f32 %v542, %v440
    %v567 = vadd.f32 %v565, %v566
    %v568 = vmul.f32 %v475, %v444
    %v569 = vsub.f32 %v483, %v568
    %v570 = vmul.f32 %v483, %v447
    %v571 = vsub.f32 %v569, %v570
    %v572 = vmul.f32 %v530, %v444
    %v573 = vadd.f32 %v571, %v572
    %v574 = vmul.f32 %v542, %v447
    %v575 = vadd.f32 %v573, %v574
    %v576 = vmul.f32 %v475, %v451
    %v577 = vsub.f32 %v487, %v576
    %v578 = vmul.f32 %v483, %v455
    %v579 = vsub.f32 %v577, %v578
    %v580 = vmul.f32 %v530, %v451
    %v581 = vadd.f32 %v579, %v580
    %v582 = vmul.f32 %v542, %v455
    %v583 = vadd.f32 %v581, %v582
    %v584 = vmul.f32 %v515, %v436
    %v585 = vsub.f32 %v491, %v584
    %v586 = vmul.f32 %v495, %v440
    %v587 = vsub.f32 %v585, %v586
    %v588 = vmul.f32 %v533, %v436
    %v589 = vadd.f32 %v587, %v588
    %v590 = vmul.f32 %v545, %v440
    %v591 = vadd.f32 %v589, %v590
    %v592 = vmul.f32 %v515, %v444
    %v593 = vsub.f32 %v495, %v592
    %v594 = vmul.f32 %v495, %v447
    %v595 = vsub.f32 %v593, %v594
    %v596 = vmul.f32 %v533, %v444
    %v597 = vadd.f32 %v595, %v596
    %v598 = vmul.f32 %v545, %v447
    %v599 = vadd.f32 %v597, %v598
    %v600 = vmul.f32 %v515, %v451
    %v601 = vsub.f32 %v499, %v600
    %v602 = vmul.f32 %v495, %v455
    %v603 = vsub.f32 %v601, %v602
    %v604 = vmul.f32 %v533, %v451
    %v605 = vadd.f32 %v603, %v604
    %v606 = vmul.f32 %v545, %v455
    %v607 = vadd.f32 %v605, %v606
    %v608 = vmul.f32 %v519, %v444
    %v609 = vsub.f32 %v503, %v608
    %v610 = vmul.f32 %v503, %v447
    %v611 = vsub.f32 %v609, %v610
    %v612 = vmul.f32 %v536, %v444
    %v613 = vadd.f32 %v611, %v612
    %v614 = vmul.f32 %v548, %v447
    %v615 = vadd.f32 %v613, %v614
    %v616 = vmul.f32 %v519, %v451
    %v617 = vsub.f32 %v507, %v616
    %v618 = vmul.f32 %v503, %v455
    %v619 = vsub.f32 %v617, %v618
    %v620 = vmul.f32 %v536, %v451
    %v621 = vadd.f32 %v619, %v620
    %v622 = vmul.f32 %v548, %v455
    %v623 = vadd.f32 %v621, %v622
    %v624 = vmul.f32 %v523, %v451
    %v625 = vsub.f32 %v511, %v624
    %v626 = vmul.f32 %v527, %v455
    %v627 = vsub.f32 %v625, %v626
    %v628 = vmul.f32 %v539, %v451
    %v629 = vadd.f32 %v627, %v628
    %v630 = vmul.f32 %v551, %v455
    %v631 = vadd.f32 %v629, %v630
    %s632 = scalar_lea.vmem [#allocation10], 6
    %v633 = vld [vmem:[%s632] sm:$0x1]
    %s634 = scalar_lea.vmem [#allocation10], 7
    %v635 = vld [vmem:[%s634] sm:$0x1]
    %v636 = vmul.f32 %v463, 0.1
    %v637 = vadd.f32 %v459, %v636
    %v638 = vmul.f32 %v471, 0.1
    %v639 = vadd.f32 %v467, %v638
    %v640 = vmul.f32 %v567, 0.1
    %v641 = vadd.f32 %v559, %v640
    %v642 = vmul.f32 %v591, 0.1
    %v643 = vadd.f32 %v567, %v642
    %v644 = vmul.f32 %v643, 0.1
    %v645 = vadd.f32 %v641, %v644
    %v646 = vadd.f32 %v645, %v73
    %v647 = vadd.f32 %v643, %v76
    %v648 = vmul.f32 %v599, 0.1
    %v649 = vadd.f32 %v575, %v648
    %v650 = vmul.f32 %v607, 0.1
    %v651 = vadd.f32 %v583, %v650
    %v652 = vmul.f32 %v651, 0.1
    %v653 = vadd.f32 %v649, %v652
    %v654 = vadd.f32 %v653, %v79
    %v655 = vadd.f32 %v651, %v82
    %v656 = vadd.f32 %v591, %v85
    %v657 = vadd.f32 %v599, %v650
    %v658 = vadd.f32 %v657, %v88
    %v659 = vadd.f32 %v607, %v91
    %v660 = vmul.f32 %v623, 0.1
    %v661 = vadd.f32 %v615, %v660
    %v662 = vmul.f32 %v631, 0.1
    %v663 = vadd.f32 %v623, %v662
    %v664 = vmul.f32 %v663, 0.1
    %v665 = vadd.f32 %v661, %v664
    %v666 = vadd.f32 %v665, %v94
    %v667 = vadd.f32 %v663, %v97
    %v668 = vadd.f32 %v631, %v100
    %v669 = vsub.f32 %v633, %v637
    %v670 = vsub.f32 %v635, %v639
    %v671 = vadd.f32 %v646, %v103
    %v672 = vadd.f32 %v654, %v106
    %v673 = vadd.f32 %v666, %v109
    %v674 = vmul.f32 %v671, %v673
    %v675 = vmul.f32 %v672, %v672
    %v676 = vsub.f32 %v674, %v675
    %v677 = vrcp.pop %v676
    %v678 = vmul.f32 %v676, %v677
    %v679 = vsub.f32 2.0, %v678
    %v680 = vmul.f32 %v677, %v679
    %v681 = vmul.f32 %v646, %v673
    %v682 = vmul.f32 %v654, %v672
    %v683 = vsub.f32 %v681, %v682
    %v684 = vmul.f32 %v683, %v680
    %v685 = vmul.f32 %v654, %v671
    %v686 = vmul.f32 %v646, %v672
    %v687 = vsub.f32 %v685, %v686
    %v688 = vmul.f32 %v687, %v680
    %v689 = vmul.f32 %v647, %v673
    %v690 = vmul.f32 %v658, %v672
    %v691 = vsub.f32 %v689, %v690
    %v692 = vmul.f32 %v691, %v680
    %v693 = vmul.f32 %v658, %v671
    %v694 = vmul.f32 %v647, %v672
    %v695 = vsub.f32 %v693, %v694
    %v696 = vmul.f32 %v695, %v680
    %v697 = vmul.f32 %v654, %v673
    %v698 = vmul.f32 %v666, %v672
    %v699 = vsub.f32 %v697, %v698
    %v700 = vmul.f32 %v699, %v680
    %v701 = vmul.f32 %v666, %v671
    %v702 = vsub.f32 %v701, %v682
    %v703 = vmul.f32 %v702, %v680
    %v704 = vmul.f32 %v655, %v673
    %v705 = vmul.f32 %v667, %v672
    %v706 = vsub.f32 %v704, %v705
    %v707 = vmul.f32 %v706, %v680
    %v708 = vmul.f32 %v667, %v671
    %v709 = vmul.f32 %v655, %v672
    %v710 = vsub.f32 %v708, %v709
    %v711 = vmul.f32 %v710, %v680
    %v712 = vmul.f32 %v684, %v669
    %v713 = vadd.f32 %v637, %v712
    %v714 = vmul.f32 %v688, %v670
    %v715 = vadd.f32 %v713, %v714
    %v716 = vmul.f32 %v692, %v669
    %v717 = vadd.f32 %v463, %v716
    %v718 = vmul.f32 %v696, %v670
    %v719 = vadd.f32 %v717, %v718
    %v720 = vmul.f32 %v700, %v669
    %v721 = vadd.f32 %v639, %v720
    %v722 = vmul.f32 %v703, %v670
    %v723 = vadd.f32 %v721, %v722
    %v724 = vmul.f32 %v707, %v669
    %v725 = vadd.f32 %v471, %v724
    %v726 = vmul.f32 %v711, %v670
    %v727 = vadd.f32 %v725, %v726
    %v728 = vmul.f32 %v684, %v646
    %v729 = vsub.f32 %v646, %v728
    %v730 = vmul.f32 %v688, %v654
    %v731 = vsub.f32 %v729, %v730
    %v732 = vmul.f32 %v684, %v647
    %v733 = vsub.f32 %v647, %v732
    %v734 = vmul.f32 %v688, %v658
    %v735 = vsub.f32 %v733, %v734
    %v736 = vmul.f32 %v684, %v654
    %v737 = vsub.f32 %v654, %v736
    %v738 = vmul.f32 %v688, %v666
    %v739 = vsub.f32 %v737, %v738
    %v740 = vmul.f32 %v684, %v655
    %v741 = vsub.f32 %v655, %v740
    %v742 = vmul.f32 %v688, %v667
    %v743 = vsub.f32 %v741, %v742
    %v744 = vmul.f32 %v692, %v647
    %v745 = vsub.f32 %v656, %v744
    %v746 = vmul.f32 %v696, %v658
    %v747 = vsub.f32 %v745, %v746
    %v748 = vmul.f32 %v692, %v654
    %v749 = vsub.f32 %v658, %v748
    %v750 = vmul.f32 %v696, %v666
    %v751 = vsub.f32 %v749, %v750
    %v752 = vmul.f32 %v692, %v655
    %v753 = vsub.f32 %v659, %v752
    %v754 = vmul.f32 %v696, %v667
    %v755 = vsub.f32 %v753, %v754
    %v756 = vmul.f32 %v700, %v654
    %v757 = vsub.f32 %v666, %v756
    %v758 = vmul.f32 %v703, %v666
    %v759 = vsub.f32 %v757, %v758
    %v760 = vmul.f32 %v700, %v655
    %v761 = vsub.f32 %v667, %v760
    %v762 = vmul.f32 %v703, %v667
    %v763 = vsub.f32 %v761, %v762
    %v764 = vmul.f32 %v707, %v655
    %v765 = vsub.f32 %v668, %v764
    %v766 = vmul.f32 %v711, %v667
    %v767 = vsub.f32 %v765, %v766
    %v768 = vmul.f32 %v692, %v646
    %v769 = vsub.f32 %v647, %v768
    %v770 = vmul.f32 %v696, %v654
    %v771 = vsub.f32 %v769, %v770
    %v772 = vmul.f32 %v700, %v646
    %v773 = vsub.f32 %v654, %v772
    %v774 = vmul.f32 %v703, %v654
    %v775 = vsub.f32 %v773, %v774
    %v776 = vmul.f32 %v707, %v646
    %v777 = vsub.f32 %v655, %v776
    %v778 = vmul.f32 %v711, %v654
    %v779 = vsub.f32 %v777, %v778
    %v780 = vmul.f32 %v707, %v654
    %v781 = vsub.f32 %v667, %v780
    %v782 = vmul.f32 %v711, %v666
    %v783 = vsub.f32 %v781, %v782
    %v784 = vmul.f32 %v684, %v103
    %v785 = vmul.f32 %v688, %v106
    %v786 = vadd.f32 %v784, %v785
    %v787 = vmul.f32 %v692, %v103
    %v788 = vmul.f32 %v696, %v106
    %v789 = vadd.f32 %v787, %v788
    %v790 = vmul.f32 %v700, %v103
    %v791 = vmul.f32 %v703, %v106
    %v792 = vadd.f32 %v790, %v791
    %v793 = vmul.f32 %v707, %v103
    %v794 = vmul.f32 %v711, %v106
    %v795 = vadd.f32 %v793, %v794
    %v796 = vmul.f32 %v684, %v106
    %v797 = vmul.f32 %v688, %v109
    %v798 = vadd.f32 %v796, %v797
    %v799 = vmul.f32 %v692, %v106
    %v800 = vmul.f32 %v696, %v109
    %v801 = vadd.f32 %v799, %v800
    %v802 = vmul.f32 %v700, %v106
    %v803 = vmul.f32 %v703, %v109
    %v804 = vadd.f32 %v802, %v803
    %v805 = vmul.f32 %v707, %v106
    %v806 = vmul.f32 %v711, %v109
    %v807 = vadd.f32 %v805, %v806
    %v808 = vmul.f32 %v731, %v684
    %v809 = vsub.f32 %v731, %v808
    %v810 = vmul.f32 %v739, %v688
    %v811 = vsub.f32 %v809, %v810
    %v812 = vmul.f32 %v786, %v684
    %v813 = vadd.f32 %v811, %v812
    %v814 = vmul.f32 %v798, %v688
    %v815 = vadd.f32 %v813, %v814
    %v816 = vmul.f32 %v731, %v692
    %v817 = vsub.f32 %v735, %v816
    %v818 = vmul.f32 %v739, %v696
    %v819 = vsub.f32 %v817, %v818
    %v820 = vmul.f32 %v786, %v692
    %v821 = vadd.f32 %v819, %v820
    %v822 = vmul.f32 %v798, %v696
    %v823 = vadd.f32 %v821, %v822
    %v824 = vmul.f32 %v731, %v700
    %v825 = vsub.f32 %v739, %v824
    %v826 = vmul.f32 %v739, %v703
    %v827 = vsub.f32 %v825, %v826
    %v828 = vmul.f32 %v786, %v700
    %v829 = vadd.f32 %v827, %v828
    %v830 = vmul.f32 %v798, %v703
    %v831 = vadd.f32 %v829, %v830
    %v832 = vmul.f32 %v731, %v707
    %v833 = vsub.f32 %v743, %v832
    %v834 = vmul.f32 %v739, %v711
    %v835 = vsub.f32 %v833, %v834
    %v836 = vmul.f32 %v786, %v707
    %v837 = vadd.f32 %v835, %v836
    %v838 = vmul.f32 %v798, %v711
    %v839 = vadd.f32 %v837, %v838
    %v840 = vmul.f32 %v771, %v692
    %v841 = vsub.f32 %v747, %v840
    %v842 = vmul.f32 %v751, %v696
    %v843 = vsub.f32 %v841, %v842
    %v844 = vmul.f32 %v789, %v692
    %v845 = vadd.f32 %v843, %v844
    %v846 = vmul.f32 %v801, %v696
    %v847 = vadd.f32 %v845, %v846
    %v848 = vmul.f32 %v771, %v700
    %v849 = vsub.f32 %v751, %v848
    %v850 = vmul.f32 %v751, %v703
    %v851 = vsub.f32 %v849, %v850
    %v852 = vmul.f32 %v789, %v700
    %v853 = vadd.f32 %v851, %v852
    %v854 = vmul.f32 %v801, %v703
    %v855 = vadd.f32 %v853, %v854
    %v856 = vmul.f32 %v771, %v707
    %v857 = vsub.f32 %v755, %v856
    %v858 = vmul.f32 %v751, %v711
    %v859 = vsub.f32 %v857, %v858
    %v860 = vmul.f32 %v789, %v707
    %v861 = vadd.f32 %v859, %v860
    %v862 = vmul.f32 %v801, %v711
    %v863 = vadd.f32 %v861, %v862
    %v864 = vmul.f32 %v775, %v700
    %v865 = vsub.f32 %v759, %v864
    %v866 = vmul.f32 %v759, %v703
    %v867 = vsub.f32 %v865, %v866
    %v868 = vmul.f32 %v792, %v700
    %v869 = vadd.f32 %v867, %v868
    %v870 = vmul.f32 %v804, %v703
    %v871 = vadd.f32 %v869, %v870
    %v872 = vmul.f32 %v775, %v707
    %v873 = vsub.f32 %v763, %v872
    %v874 = vmul.f32 %v759, %v711
    %v875 = vsub.f32 %v873, %v874
    %v876 = vmul.f32 %v792, %v707
    %v877 = vadd.f32 %v875, %v876
    %v878 = vmul.f32 %v804, %v711
    %v879 = vadd.f32 %v877, %v878
    %v880 = vmul.f32 %v779, %v707
    %v881 = vsub.f32 %v767, %v880
    %v882 = vmul.f32 %v783, %v711
    %v883 = vsub.f32 %v881, %v882
    %v884 = vmul.f32 %v795, %v707
    %v885 = vadd.f32 %v883, %v884
    %v886 = vmul.f32 %v807, %v711
    %v887 = vadd.f32 %v885, %v886
    %s888 = scalar_lea.vmem [#allocation10], 8
    %v889 = vld [vmem:[%s888] sm:$0x1]
    %s890 = scalar_lea.vmem [#allocation10], 9
    %v891 = vld [vmem:[%s890] sm:$0x1]
    %v892 = vmul.f32 %v719, 0.1
    %v893 = vadd.f32 %v715, %v892
    %v894 = vmul.f32 %v727, 0.1
    %v895 = vadd.f32 %v723, %v894
    %v896 = vmul.f32 %v823, 0.1
    %v897 = vadd.f32 %v815, %v896
    %v898 = vmul.f32 %v847, 0.1
    %v899 = vadd.f32 %v823, %v898
    %v900 = vmul.f32 %v899, 0.1
    %v901 = vadd.f32 %v897, %v900
    %v902 = vadd.f32 %v901, %v73
    %v903 = vadd.f32 %v899, %v76
    %v904 = vmul.f32 %v855, 0.1
    %v905 = vadd.f32 %v831, %v904
    %v906 = vmul.f32 %v863, 0.1
    %v907 = vadd.f32 %v839, %v906
    %v908 = vmul.f32 %v907, 0.1
    %v909 = vadd.f32 %v905, %v908
    %v910 = vadd.f32 %v909, %v79
    %v911 = vadd.f32 %v907, %v82
    %v912 = vadd.f32 %v847, %v85
    %v913 = vadd.f32 %v855, %v906
    %v914 = vadd.f32 %v913, %v88
    %v915 = vadd.f32 %v863, %v91
    %v916 = vmul.f32 %v879, 0.1
    %v917 = vadd.f32 %v871, %v916
    %v918 = vmul.f32 %v887, 0.1
    %v919 = vadd.f32 %v879, %v918
    %v920 = vmul.f32 %v919, 0.1
    %v921 = vadd.f32 %v917, %v920
    %v922 = vadd.f32 %v921, %v94
    %v923 = vadd.f32 %v919, %v97
    %v924 = vadd.f32 %v887, %v100
    %v925 = vsub.f32 %v889, %v893
    %v926 = vsub.f32 %v891, %v895
    %v927 = vadd.f32 %v902, %v103
    %v928 = vadd.f32 %v910, %v106
    %v929 = vadd.f32 %v922, %v109
    %v930 = vmul.f32 %v927, %v929
    %v931 = vmul.f32 %v928, %v928
    %v932 = vsub.f32 %v930, %v931
    %v933 = vrcp.pop %v932
    %v934 = vmul.f32 %v932, %v933
    %v935 = vsub.f32 2.0, %v934
    %v936 = vmul.f32 %v933, %v935
    %v937 = vmul.f32 %v902, %v929
    %v938 = vmul.f32 %v910, %v928
    %v939 = vsub.f32 %v937, %v938
    %v940 = vmul.f32 %v939, %v936
    %v941 = vmul.f32 %v910, %v927
    %v942 = vmul.f32 %v902, %v928
    %v943 = vsub.f32 %v941, %v942
    %v944 = vmul.f32 %v943, %v936
    %v945 = vmul.f32 %v903, %v929
    %v946 = vmul.f32 %v914, %v928
    %v947 = vsub.f32 %v945, %v946
    %v948 = vmul.f32 %v947, %v936
    %v949 = vmul.f32 %v914, %v927
    %v950 = vmul.f32 %v903, %v928
    %v951 = vsub.f32 %v949, %v950
    %v952 = vmul.f32 %v951, %v936
    %v953 = vmul.f32 %v910, %v929
    %v954 = vmul.f32 %v922, %v928
    %v955 = vsub.f32 %v953, %v954
    %v956 = vmul.f32 %v955, %v936
    %v957 = vmul.f32 %v922, %v927
    %v958 = vsub.f32 %v957, %v938
    %v959 = vmul.f32 %v958, %v936
    %v960 = vmul.f32 %v911, %v929
    %v961 = vmul.f32 %v923, %v928
    %v962 = vsub.f32 %v960, %v961
    %v963 = vmul.f32 %v962, %v936
    %v964 = vmul.f32 %v923, %v927
    %v965 = vmul.f32 %v911, %v928
    %v966 = vsub.f32 %v964, %v965
    %v967 = vmul.f32 %v966, %v936
    %v968 = vmul.f32 %v940, %v925
    %v969 = vadd.f32 %v893, %v968
    %v970 = vmul.f32 %v944, %v926
    %v971 = vadd.f32 %v969, %v970
    %v972 = vmul.f32 %v948, %v925
    %v973 = vadd.f32 %v719, %v972
    %v974 = vmul.f32 %v952, %v926
    %v975 = vadd.f32 %v973, %v974
    %v976 = vmul.f32 %v956, %v925
    %v977 = vadd.f32 %v895, %v976
    %v978 = vmul.f32 %v959, %v926
    %v979 = vadd.f32 %v977, %v978
    %v980 = vmul.f32 %v963, %v925
    %v981 = vadd.f32 %v727, %v980
    %v982 = vmul.f32 %v967, %v926
    %v983 = vadd.f32 %v981, %v982
    %v984 = vmul.f32 %v940, %v902
    %v985 = vsub.f32 %v902, %v984
    %v986 = vmul.f32 %v944, %v910
    %v987 = vsub.f32 %v985, %v986
    %v988 = vmul.f32 %v940, %v903
    %v989 = vsub.f32 %v903, %v988
    %v990 = vmul.f32 %v944, %v914
    %v991 = vsub.f32 %v989, %v990
    %v992 = vmul.f32 %v940, %v910
    %v993 = vsub.f32 %v910, %v992
    %v994 = vmul.f32 %v944, %v922
    %v995 = vsub.f32 %v993, %v994
    %v996 = vmul.f32 %v940, %v911
    %v997 = vsub.f32 %v911, %v996
    %v998 = vmul.f32 %v944, %v923
    %v999 = vsub.f32 %v997, %v998
    %v1000 = vmul.f32 %v948, %v903
    %v1001 = vsub.f32 %v912, %v1000
    %v1002 = vmul.f32 %v952, %v914
    %v1003 = vsub.f32 %v1001, %v1002
    %v1004 = vmul.f32 %v948, %v910
    %v1005 = vsub.f32 %v914, %v1004
    %v1006 = vmul.f32 %v952, %v922
    %v1007 = vsub.f32 %v1005, %v1006
    %v1008 = vmul.f32 %v948, %v911
    %v1009 = vsub.f32 %v915, %v1008
    %v1010 = vmul.f32 %v952, %v923
    %v1011 = vsub.f32 %v1009, %v1010
    %v1012 = vmul.f32 %v956, %v910
    %v1013 = vsub.f32 %v922, %v1012
    %v1014 = vmul.f32 %v959, %v922
    %v1015 = vsub.f32 %v1013, %v1014
    %v1016 = vmul.f32 %v956, %v911
    %v1017 = vsub.f32 %v923, %v1016
    %v1018 = vmul.f32 %v959, %v923
    %v1019 = vsub.f32 %v1017, %v1018
    %v1020 = vmul.f32 %v963, %v911
    %v1021 = vsub.f32 %v924, %v1020
    %v1022 = vmul.f32 %v967, %v923
    %v1023 = vsub.f32 %v1021, %v1022
    %v1024 = vmul.f32 %v948, %v902
    %v1025 = vsub.f32 %v903, %v1024
    %v1026 = vmul.f32 %v952, %v910
    %v1027 = vsub.f32 %v1025, %v1026
    %v1028 = vmul.f32 %v956, %v902
    %v1029 = vsub.f32 %v910, %v1028
    %v1030 = vmul.f32 %v959, %v910
    %v1031 = vsub.f32 %v1029, %v1030
    %v1032 = vmul.f32 %v963, %v902
    %v1033 = vsub.f32 %v911, %v1032
    %v1034 = vmul.f32 %v967, %v910
    %v1035 = vsub.f32 %v1033, %v1034
    %v1036 = vmul.f32 %v963, %v910
    %v1037 = vsub.f32 %v923, %v1036
    %v1038 = vmul.f32 %v967, %v922
    %v1039 = vsub.f32 %v1037, %v1038
    %v1040 = vmul.f32 %v940, %v103
    %v1041 = vmul.f32 %v944, %v106
    %v1042 = vadd.f32 %v1040, %v1041
    %v1043 = vmul.f32 %v948, %v103
    %v1044 = vmul.f32 %v952, %v106
    %v1045 = vadd.f32 %v1043, %v1044
    %v1046 = vmul.f32 %v956, %v103
    %v1047 = vmul.f32 %v959, %v106
    %v1048 = vadd.f32 %v1046, %v1047
    %v1049 = vmul.f32 %v963, %v103
    %v1050 = vmul.f32 %v967, %v106
    %v1051 = vadd.f32 %v1049, %v1050
    %v1052 = vmul.f32 %v940, %v106
    %v1053 = vmul.f32 %v944, %v109
    %v1054 = vadd.f32 %v1052, %v1053
    %v1055 = vmul.f32 %v948, %v106
    %v1056 = vmul.f32 %v952, %v109
    %v1057 = vadd.f32 %v1055, %v1056
    %v1058 = vmul.f32 %v956, %v106
    %v1059 = vmul.f32 %v959, %v109
    %v1060 = vadd.f32 %v1058, %v1059
    %v1061 = vmul.f32 %v963, %v106
    %v1062 = vmul.f32 %v967, %v109
    %v1063 = vadd.f32 %v1061, %v1062
    %v1064 = vmul.f32 %v987, %v940
    %v1065 = vsub.f32 %v987, %v1064
    %v1066 = vmul.f32 %v995, %v944
    %v1067 = vsub.f32 %v1065, %v1066
    %v1068 = vmul.f32 %v1042, %v940
    %v1069 = vadd.f32 %v1067, %v1068
    %v1070 = vmul.f32 %v1054, %v944
    %v1071 = vadd.f32 %v1069, %v1070
    %v1072 = vmul.f32 %v987, %v948
    %v1073 = vsub.f32 %v991, %v1072
    %v1074 = vmul.f32 %v995, %v952
    %v1075 = vsub.f32 %v1073, %v1074
    %v1076 = vmul.f32 %v1042, %v948
    %v1077 = vadd.f32 %v1075, %v1076
    %v1078 = vmul.f32 %v1054, %v952
    %v1079 = vadd.f32 %v1077, %v1078
    %v1080 = vmul.f32 %v987, %v956
    %v1081 = vsub.f32 %v995, %v1080
    %v1082 = vmul.f32 %v995, %v959
    %v1083 = vsub.f32 %v1081, %v1082
    %v1084 = vmul.f32 %v1042, %v956
    %v1085 = vadd.f32 %v1083, %v1084
    %v1086 = vmul.f32 %v1054, %v959
    %v1087 = vadd.f32 %v1085, %v1086
    %v1088 = vmul.f32 %v987, %v963
    %v1089 = vsub.f32 %v999, %v1088
    %v1090 = vmul.f32 %v995, %v967
    %v1091 = vsub.f32 %v1089, %v1090
    %v1092 = vmul.f32 %v1042, %v963
    %v1093 = vadd.f32 %v1091, %v1092
    %v1094 = vmul.f32 %v1054, %v967
    %v1095 = vadd.f32 %v1093, %v1094
    %v1096 = vmul.f32 %v1027, %v948
    %v1097 = vsub.f32 %v1003, %v1096
    %v1098 = vmul.f32 %v1007, %v952
    %v1099 = vsub.f32 %v1097, %v1098
    %v1100 = vmul.f32 %v1045, %v948
    %v1101 = vadd.f32 %v1099, %v1100
    %v1102 = vmul.f32 %v1057, %v952
    %v1103 = vadd.f32 %v1101, %v1102
    %v1104 = vmul.f32 %v1027, %v956
    %v1105 = vsub.f32 %v1007, %v1104
    %v1106 = vmul.f32 %v1007, %v959
    %v1107 = vsub.f32 %v1105, %v1106
    %v1108 = vmul.f32 %v1045, %v956
    %v1109 = vadd.f32 %v1107, %v1108
    %v1110 = vmul.f32 %v1057, %v959
    %v1111 = vadd.f32 %v1109, %v1110
    %v1112 = vmul.f32 %v1027, %v963
    %v1113 = vsub.f32 %v1011, %v1112
    %v1114 = vmul.f32 %v1007, %v967
    %v1115 = vsub.f32 %v1113, %v1114
    %v1116 = vmul.f32 %v1045, %v963
    %v1117 = vadd.f32 %v1115, %v1116
    %v1118 = vmul.f32 %v1057, %v967
    %v1119 = vadd.f32 %v1117, %v1118
    %v1120 = vmul.f32 %v1031, %v956
    %v1121 = vsub.f32 %v1015, %v1120
    %v1122 = vmul.f32 %v1015, %v959
    %v1123 = vsub.f32 %v1121, %v1122
    %v1124 = vmul.f32 %v1048, %v956
    %v1125 = vadd.f32 %v1123, %v1124
    %v1126 = vmul.f32 %v1060, %v959
    %v1127 = vadd.f32 %v1125, %v1126
    %v1128 = vmul.f32 %v1031, %v963
    %v1129 = vsub.f32 %v1019, %v1128
    %v1130 = vmul.f32 %v1015, %v967
    %v1131 = vsub.f32 %v1129, %v1130
    %v1132 = vmul.f32 %v1048, %v963
    %v1133 = vadd.f32 %v1131, %v1132
    %v1134 = vmul.f32 %v1060, %v967
    %v1135 = vadd.f32 %v1133, %v1134
    %v1136 = vmul.f32 %v1035, %v963
    %v1137 = vsub.f32 %v1023, %v1136
    %v1138 = vmul.f32 %v1039, %v967
    %v1139 = vsub.f32 %v1137, %v1138
    %v1140 = vmul.f32 %v1051, %v963
    %v1141 = vadd.f32 %v1139, %v1140
    %v1142 = vmul.f32 %v1063, %v967
    %v1143 = vadd.f32 %v1141, %v1142
    %s1144 = scalar_lea.vmem [#allocation10], 10
    %v1145 = vld [vmem:[%s1144] sm:$0x1]
    %s1146 = scalar_lea.vmem [#allocation10], 11
    %v1147 = vld [vmem:[%s1146] sm:$0x1]
    %v1148 = vmul.f32 %v975, 0.1
    %v1149 = vadd.f32 %v971, %v1148
    %v1150 = vmul.f32 %v983, 0.1
    %v1151 = vadd.f32 %v979, %v1150
    %v1152 = vmul.f32 %v1079, 0.1
    %v1153 = vadd.f32 %v1071, %v1152
    %v1154 = vmul.f32 %v1103, 0.1
    %v1155 = vadd.f32 %v1079, %v1154
    %v1156 = vmul.f32 %v1155, 0.1
    %v1157 = vadd.f32 %v1153, %v1156
    %v1158 = vadd.f32 %v1157, %v73
    %v1159 = vadd.f32 %v1155, %v76
    %v1160 = vmul.f32 %v1111, 0.1
    %v1161 = vadd.f32 %v1087, %v1160
    %v1162 = vmul.f32 %v1119, 0.1
    %v1163 = vadd.f32 %v1095, %v1162
    %v1164 = vmul.f32 %v1163, 0.1
    %v1165 = vadd.f32 %v1161, %v1164
    %v1166 = vadd.f32 %v1165, %v79
    %v1167 = vadd.f32 %v1163, %v82
    %v1168 = vadd.f32 %v1103, %v85
    %v1169 = vadd.f32 %v1111, %v1162
    %v1170 = vadd.f32 %v1169, %v88
    %v1171 = vadd.f32 %v1119, %v91
    %v1172 = vmul.f32 %v1135, 0.1
    %v1173 = vadd.f32 %v1127, %v1172
    %v1174 = vmul.f32 %v1143, 0.1
    %v1175 = vadd.f32 %v1135, %v1174
    %v1176 = vmul.f32 %v1175, 0.1
    %v1177 = vadd.f32 %v1173, %v1176
    %v1178 = vadd.f32 %v1177, %v94
    %v1179 = vadd.f32 %v1175, %v97
    %v1180 = vadd.f32 %v1143, %v100
    %v1181 = vsub.f32 %v1145, %v1149
    %v1182 = vsub.f32 %v1147, %v1151
    %v1183 = vadd.f32 %v1158, %v103
    %v1184 = vadd.f32 %v1166, %v106
    %v1185 = vadd.f32 %v1178, %v109
    %v1186 = vmul.f32 %v1183, %v1185
    %v1187 = vmul.f32 %v1184, %v1184
    %v1188 = vsub.f32 %v1186, %v1187
    %v1189 = vrcp.pop %v1188
    %v1190 = vmul.f32 %v1188, %v1189
    %v1191 = vsub.f32 2.0, %v1190
    %v1192 = vmul.f32 %v1189, %v1191
    %v1193 = vmul.f32 %v1158, %v1185
    %v1194 = vmul.f32 %v1166, %v1184
    %v1195 = vsub.f32 %v1193, %v1194
    %v1196 = vmul.f32 %v1195, %v1192
    %v1197 = vmul.f32 %v1166, %v1183
    %v1198 = vmul.f32 %v1158, %v1184
    %v1199 = vsub.f32 %v1197, %v1198
    %v1200 = vmul.f32 %v1199, %v1192
    %v1201 = vmul.f32 %v1159, %v1185
    %v1202 = vmul.f32 %v1170, %v1184
    %v1203 = vsub.f32 %v1201, %v1202
    %v1204 = vmul.f32 %v1203, %v1192
    %v1205 = vmul.f32 %v1170, %v1183
    %v1206 = vmul.f32 %v1159, %v1184
    %v1207 = vsub.f32 %v1205, %v1206
    %v1208 = vmul.f32 %v1207, %v1192
    %v1209 = vmul.f32 %v1166, %v1185
    %v1210 = vmul.f32 %v1178, %v1184
    %v1211 = vsub.f32 %v1209, %v1210
    %v1212 = vmul.f32 %v1211, %v1192
    %v1213 = vmul.f32 %v1178, %v1183
    %v1214 = vsub.f32 %v1213, %v1194
    %v1215 = vmul.f32 %v1214, %v1192
    %v1216 = vmul.f32 %v1167, %v1185
    %v1217 = vmul.f32 %v1179, %v1184
    %v1218 = vsub.f32 %v1216, %v1217
    %v1219 = vmul.f32 %v1218, %v1192
    %v1220 = vmul.f32 %v1179, %v1183
    %v1221 = vmul.f32 %v1167, %v1184
    %v1222 = vsub.f32 %v1220, %v1221
    %v1223 = vmul.f32 %v1222, %v1192
    %v1224 = vmul.f32 %v1196, %v1181
    %v1225 = vadd.f32 %v1149, %v1224
    %v1226 = vmul.f32 %v1200, %v1182
    %v1227 = vadd.f32 %v1225, %v1226
    %v1228 = vmul.f32 %v1204, %v1181
    %v1229 = vadd.f32 %v975, %v1228
    %v1230 = vmul.f32 %v1208, %v1182
    %v1231 = vadd.f32 %v1229, %v1230
    %v1232 = vmul.f32 %v1212, %v1181
    %v1233 = vadd.f32 %v1151, %v1232
    %v1234 = vmul.f32 %v1215, %v1182
    %v1235 = vadd.f32 %v1233, %v1234
    %v1236 = vmul.f32 %v1219, %v1181
    %v1237 = vadd.f32 %v983, %v1236
    %v1238 = vmul.f32 %v1223, %v1182
    %v1239 = vadd.f32 %v1237, %v1238
    %v1240 = vmul.f32 %v1196, %v1158
    %v1241 = vsub.f32 %v1158, %v1240
    %v1242 = vmul.f32 %v1200, %v1166
    %v1243 = vsub.f32 %v1241, %v1242
    %v1244 = vmul.f32 %v1196, %v1159
    %v1245 = vsub.f32 %v1159, %v1244
    %v1246 = vmul.f32 %v1200, %v1170
    %v1247 = vsub.f32 %v1245, %v1246
    %v1248 = vmul.f32 %v1196, %v1166
    %v1249 = vsub.f32 %v1166, %v1248
    %v1250 = vmul.f32 %v1200, %v1178
    %v1251 = vsub.f32 %v1249, %v1250
    %v1252 = vmul.f32 %v1196, %v1167
    %v1253 = vsub.f32 %v1167, %v1252
    %v1254 = vmul.f32 %v1200, %v1179
    %v1255 = vsub.f32 %v1253, %v1254
    %v1256 = vmul.f32 %v1204, %v1159
    %v1257 = vsub.f32 %v1168, %v1256
    %v1258 = vmul.f32 %v1208, %v1170
    %v1259 = vsub.f32 %v1257, %v1258
    %v1260 = vmul.f32 %v1204, %v1166
    %v1261 = vsub.f32 %v1170, %v1260
    %v1262 = vmul.f32 %v1208, %v1178
    %v1263 = vsub.f32 %v1261, %v1262
    %v1264 = vmul.f32 %v1204, %v1167
    %v1265 = vsub.f32 %v1171, %v1264
    %v1266 = vmul.f32 %v1208, %v1179
    %v1267 = vsub.f32 %v1265, %v1266
    %v1268 = vmul.f32 %v1212, %v1166
    %v1269 = vsub.f32 %v1178, %v1268
    %v1270 = vmul.f32 %v1215, %v1178
    %v1271 = vsub.f32 %v1269, %v1270
    %v1272 = vmul.f32 %v1212, %v1167
    %v1273 = vsub.f32 %v1179, %v1272
    %v1274 = vmul.f32 %v1215, %v1179
    %v1275 = vsub.f32 %v1273, %v1274
    %v1276 = vmul.f32 %v1219, %v1167
    %v1277 = vsub.f32 %v1180, %v1276
    %v1278 = vmul.f32 %v1223, %v1179
    %v1279 = vsub.f32 %v1277, %v1278
    %v1280 = vmul.f32 %v1204, %v1158
    %v1281 = vsub.f32 %v1159, %v1280
    %v1282 = vmul.f32 %v1208, %v1166
    %v1283 = vsub.f32 %v1281, %v1282
    %v1284 = vmul.f32 %v1212, %v1158
    %v1285 = vsub.f32 %v1166, %v1284
    %v1286 = vmul.f32 %v1215, %v1166
    %v1287 = vsub.f32 %v1285, %v1286
    %v1288 = vmul.f32 %v1219, %v1158
    %v1289 = vsub.f32 %v1167, %v1288
    %v1290 = vmul.f32 %v1223, %v1166
    %v1291 = vsub.f32 %v1289, %v1290
    %v1292 = vmul.f32 %v1219, %v1166
    %v1293 = vsub.f32 %v1179, %v1292
    %v1294 = vmul.f32 %v1223, %v1178
    %v1295 = vsub.f32 %v1293, %v1294
    %v1296 = vmul.f32 %v1196, %v103
    %v1297 = vmul.f32 %v1200, %v106
    %v1298 = vadd.f32 %v1296, %v1297
    %v1299 = vmul.f32 %v1204, %v103
    %v1300 = vmul.f32 %v1208, %v106
    %v1301 = vadd.f32 %v1299, %v1300
    %v1302 = vmul.f32 %v1212, %v103
    %v1303 = vmul.f32 %v1215, %v106
    %v1304 = vadd.f32 %v1302, %v1303
    %v1305 = vmul.f32 %v1219, %v103
    %v1306 = vmul.f32 %v1223, %v106
    %v1307 = vadd.f32 %v1305, %v1306
    %v1308 = vmul.f32 %v1196, %v106
    %v1309 = vmul.f32 %v1200, %v109
    %v1310 = vadd.f32 %v1308, %v1309
    %v1311 = vmul.f32 %v1204, %v106
    %v1312 = vmul.f32 %v1208, %v109
    %v1313 = vadd.f32 %v1311, %v1312
    %v1314 = vmul.f32 %v1212, %v106
    %v1315 = vmul.f32 %v1215, %v109
    %v1316 = vadd.f32 %v1314, %v1315
    %v1317 = vmul.f32 %v1219, %v106
    %v1318 = vmul.f32 %v1223, %v109
    %v1319 = vadd.f32 %v1317, %v1318
    %v1320 = vmul.f32 %v1243, %v1196
    %v1321 = vsub.f32 %v1243, %v1320
    %v1322 = vmul.f32 %v1251, %v1200
    %v1323 = vsub.f32 %v1321, %v1322
    %v1324 = vmul.f32 %v1298, %v1196
    %v1325 = vadd.f32 %v1323, %v1324
    %v1326 = vmul.f32 %v1310, %v1200
    %v1327 = vadd.f32 %v1325, %v1326
    %v1328 = vmul.f32 %v1243, %v1204
    %v1329 = vsub.f32 %v1247, %v1328
    %v1330 = vmul.f32 %v1251, %v1208
    %v1331 = vsub.f32 %v1329, %v1330
    %v1332 = vmul.f32 %v1298, %v1204
    %v1333 = vadd.f32 %v1331, %v1332
    %v1334 = vmul.f32 %v1310, %v1208
    %v1335 = vadd.f32 %v1333, %v1334
    %v1336 = vmul.f32 %v1243, %v1212
    %v1337 = vsub.f32 %v1251, %v1336
    %v1338 = vmul.f32 %v1251, %v1215
    %v1339 = vsub.f32 %v1337, %v1338
    %v1340 = vmul.f32 %v1298, %v1212
    %v1341 = vadd.f32 %v1339, %v1340
    %v1342 = vmul.f32 %v1310, %v1215
    %v1343 = vadd.f32 %v1341, %v1342
    %v1344 = vmul.f32 %v1243, %v1219
    %v1345 = vsub.f32 %v1255, %v1344
    %v1346 = vmul.f32 %v1251, %v1223
    %v1347 = vsub.f32 %v1345, %v1346
    %v1348 = vmul.f32 %v1298, %v1219
    %v1349 = vadd.f32 %v1347, %v1348
    %v1350 = vmul.f32 %v1310, %v1223
    %v1351 = vadd.f32 %v1349, %v1350
    %v1352 = vmul.f32 %v1283, %v1204
    %v1353 = vsub.f32 %v1259, %v1352
    %v1354 = vmul.f32 %v1263, %v1208
    %v1355 = vsub.f32 %v1353, %v1354
    %v1356 = vmul.f32 %v1301, %v1204
    %v1357 = vadd.f32 %v1355, %v1356
    %v1358 = vmul.f32 %v1313, %v1208
    %v1359 = vadd.f32 %v1357, %v1358
    %v1360 = vmul.f32 %v1283, %v1212
    %v1361 = vsub.f32 %v1263, %v1360
    %v1362 = vmul.f32 %v1263, %v1215
    %v1363 = vsub.f32 %v1361, %v1362
    %v1364 = vmul.f32 %v1301, %v1212
    %v1365 = vadd.f32 %v1363, %v1364
    %v1366 = vmul.f32 %v1313, %v1215
    %v1367 = vadd.f32 %v1365, %v1366
    %v1368 = vmul.f32 %v1283, %v1219
    %v1369 = vsub.f32 %v1267, %v1368
    %v1370 = vmul.f32 %v1263, %v1223
    %v1371 = vsub.f32 %v1369, %v1370
    %v1372 = vmul.f32 %v1301, %v1219
    %v1373 = vadd.f32 %v1371, %v1372
    %v1374 = vmul.f32 %v1313, %v1223
    %v1375 = vadd.f32 %v1373, %v1374
    %v1376 = vmul.f32 %v1287, %v1212
    %v1377 = vsub.f32 %v1271, %v1376
    %v1378 = vmul.f32 %v1271, %v1215
    %v1379 = vsub.f32 %v1377, %v1378
    %v1380 = vmul.f32 %v1304, %v1212
    %v1381 = vadd.f32 %v1379, %v1380
    %v1382 = vmul.f32 %v1316, %v1215
    %v1383 = vadd.f32 %v1381, %v1382
    %v1384 = vmul.f32 %v1287, %v1219
    %v1385 = vsub.f32 %v1275, %v1384
    %v1386 = vmul.f32 %v1271, %v1223
    %v1387 = vsub.f32 %v1385, %v1386
    %v1388 = vmul.f32 %v1304, %v1219
    %v1389 = vadd.f32 %v1387, %v1388
    %v1390 = vmul.f32 %v1316, %v1223
    %v1391 = vadd.f32 %v1389, %v1390
    %v1392 = vmul.f32 %v1291, %v1219
    %v1393 = vsub.f32 %v1279, %v1392
    %v1394 = vmul.f32 %v1295, %v1223
    %v1395 = vsub.f32 %v1393, %v1394
    %v1396 = vmul.f32 %v1307, %v1219
    %v1397 = vadd.f32 %v1395, %v1396
    %v1398 = vmul.f32 %v1319, %v1223
    %v1399 = vadd.f32 %v1397, %v1398
    %s1400 = scalar_lea.vmem [#allocation10], 12
    %v1401 = vld [vmem:[%s1400] sm:$0x1]
    %s1402 = scalar_lea.vmem [#allocation10], 13
    %v1403 = vld [vmem:[%s1402] sm:$0x1]
    %v1404 = vmul.f32 %v1231, 0.1
    %v1405 = vadd.f32 %v1227, %v1404
    %v1406 = vmul.f32 %v1239, 0.1
    %v1407 = vadd.f32 %v1235, %v1406
    %v1408 = vmul.f32 %v1335, 0.1
    %v1409 = vadd.f32 %v1327, %v1408
    %v1410 = vmul.f32 %v1359, 0.1
    %v1411 = vadd.f32 %v1335, %v1410
    %v1412 = vmul.f32 %v1411, 0.1
    %v1413 = vadd.f32 %v1409, %v1412
    %v1414 = vadd.f32 %v1413, %v73
    %v1415 = vadd.f32 %v1411, %v76
    %v1416 = vmul.f32 %v1367, 0.1
    %v1417 = vadd.f32 %v1343, %v1416
    %v1418 = vmul.f32 %v1375, 0.1
    %v1419 = vadd.f32 %v1351, %v1418
    %v1420 = vmul.f32 %v1419, 0.1
    %v1421 = vadd.f32 %v1417, %v1420
    %v1422 = vadd.f32 %v1421, %v79
    %v1423 = vadd.f32 %v1419, %v82
    %v1424 = vadd.f32 %v1359, %v85
    %v1425 = vadd.f32 %v1367, %v1418
    %v1426 = vadd.f32 %v1425, %v88
    %v1427 = vadd.f32 %v1375, %v91
    %v1428 = vmul.f32 %v1391, 0.1
    %v1429 = vadd.f32 %v1383, %v1428
    %v1430 = vmul.f32 %v1399, 0.1
    %v1431 = vadd.f32 %v1391, %v1430
    %v1432 = vmul.f32 %v1431, 0.1
    %v1433 = vadd.f32 %v1429, %v1432
    %v1434 = vadd.f32 %v1433, %v94
    %v1435 = vadd.f32 %v1431, %v97
    %v1436 = vadd.f32 %v1399, %v100
    %v1437 = vsub.f32 %v1401, %v1405
    %v1438 = vsub.f32 %v1403, %v1407
    %v1439 = vadd.f32 %v1414, %v103
    %v1440 = vadd.f32 %v1422, %v106
    %v1441 = vadd.f32 %v1434, %v109
    %v1442 = vmul.f32 %v1439, %v1441
    %v1443 = vmul.f32 %v1440, %v1440
    %v1444 = vsub.f32 %v1442, %v1443
    %v1445 = vrcp.pop %v1444
    %v1446 = vmul.f32 %v1444, %v1445
    %v1447 = vsub.f32 2.0, %v1446
    %v1448 = vmul.f32 %v1445, %v1447
    %v1449 = vmul.f32 %v1414, %v1441
    %v1450 = vmul.f32 %v1422, %v1440
    %v1451 = vsub.f32 %v1449, %v1450
    %v1452 = vmul.f32 %v1451, %v1448
    %v1453 = vmul.f32 %v1422, %v1439
    %v1454 = vmul.f32 %v1414, %v1440
    %v1455 = vsub.f32 %v1453, %v1454
    %v1456 = vmul.f32 %v1455, %v1448
    %v1457 = vmul.f32 %v1415, %v1441
    %v1458 = vmul.f32 %v1426, %v1440
    %v1459 = vsub.f32 %v1457, %v1458
    %v1460 = vmul.f32 %v1459, %v1448
    %v1461 = vmul.f32 %v1426, %v1439
    %v1462 = vmul.f32 %v1415, %v1440
    %v1463 = vsub.f32 %v1461, %v1462
    %v1464 = vmul.f32 %v1463, %v1448
    %v1465 = vmul.f32 %v1422, %v1441
    %v1466 = vmul.f32 %v1434, %v1440
    %v1467 = vsub.f32 %v1465, %v1466
    %v1468 = vmul.f32 %v1467, %v1448
    %v1469 = vmul.f32 %v1434, %v1439
    %v1470 = vsub.f32 %v1469, %v1450
    %v1471 = vmul.f32 %v1470, %v1448
    %v1472 = vmul.f32 %v1423, %v1441
    %v1473 = vmul.f32 %v1435, %v1440
    %v1474 = vsub.f32 %v1472, %v1473
    %v1475 = vmul.f32 %v1474, %v1448
    %v1476 = vmul.f32 %v1435, %v1439
    %v1477 = vmul.f32 %v1423, %v1440
    %v1478 = vsub.f32 %v1476, %v1477
    %v1479 = vmul.f32 %v1478, %v1448
    %v1480 = vmul.f32 %v1452, %v1437
    %v1481 = vadd.f32 %v1405, %v1480
    %v1482 = vmul.f32 %v1456, %v1438
    %v1483 = vadd.f32 %v1481, %v1482
    %v1484 = vmul.f32 %v1460, %v1437
    %v1485 = vadd.f32 %v1231, %v1484
    %v1486 = vmul.f32 %v1464, %v1438
    %v1487 = vadd.f32 %v1485, %v1486
    %v1488 = vmul.f32 %v1468, %v1437
    %v1489 = vadd.f32 %v1407, %v1488
    %v1490 = vmul.f32 %v1471, %v1438
    %v1491 = vadd.f32 %v1489, %v1490
    %v1492 = vmul.f32 %v1475, %v1437
    %v1493 = vadd.f32 %v1239, %v1492
    %v1494 = vmul.f32 %v1479, %v1438
    %v1495 = vadd.f32 %v1493, %v1494
    %v1496 = vmul.f32 %v1452, %v1414
    %v1497 = vsub.f32 %v1414, %v1496
    %v1498 = vmul.f32 %v1456, %v1422
    %v1499 = vsub.f32 %v1497, %v1498
    %v1500 = vmul.f32 %v1452, %v1415
    %v1501 = vsub.f32 %v1415, %v1500
    %v1502 = vmul.f32 %v1456, %v1426
    %v1503 = vsub.f32 %v1501, %v1502
    %v1504 = vmul.f32 %v1452, %v1422
    %v1505 = vsub.f32 %v1422, %v1504
    %v1506 = vmul.f32 %v1456, %v1434
    %v1507 = vsub.f32 %v1505, %v1506
    %v1508 = vmul.f32 %v1452, %v1423
    %v1509 = vsub.f32 %v1423, %v1508
    %v1510 = vmul.f32 %v1456, %v1435
    %v1511 = vsub.f32 %v1509, %v1510
    %v1512 = vmul.f32 %v1460, %v1415
    %v1513 = vsub.f32 %v1424, %v1512
    %v1514 = vmul.f32 %v1464, %v1426
    %v1515 = vsub.f32 %v1513, %v1514
    %v1516 = vmul.f32 %v1460, %v1422
    %v1517 = vsub.f32 %v1426, %v1516
    %v1518 = vmul.f32 %v1464, %v1434
    %v1519 = vsub.f32 %v1517, %v1518
    %v1520 = vmul.f32 %v1460, %v1423
    %v1521 = vsub.f32 %v1427, %v1520
    %v1522 = vmul.f32 %v1464, %v1435
    %v1523 = vsub.f32 %v1521, %v1522
    %v1524 = vmul.f32 %v1468, %v1422
    %v1525 = vsub.f32 %v1434, %v1524
    %v1526 = vmul.f32 %v1471, %v1434
    %v1527 = vsub.f32 %v1525, %v1526
    %v1528 = vmul.f32 %v1468, %v1423
    %v1529 = vsub.f32 %v1435, %v1528
    %v1530 = vmul.f32 %v1471, %v1435
    %v1531 = vsub.f32 %v1529, %v1530
    %v1532 = vmul.f32 %v1475, %v1423
    %v1533 = vsub.f32 %v1436, %v1532
    %v1534 = vmul.f32 %v1479, %v1435
    %v1535 = vsub.f32 %v1533, %v1534
    %v1536 = vmul.f32 %v1460, %v1414
    %v1537 = vsub.f32 %v1415, %v1536
    %v1538 = vmul.f32 %v1464, %v1422
    %v1539 = vsub.f32 %v1537, %v1538
    %v1540 = vmul.f32 %v1468, %v1414
    %v1541 = vsub.f32 %v1422, %v1540
    %v1542 = vmul.f32 %v1471, %v1422
    %v1543 = vsub.f32 %v1541, %v1542
    %v1544 = vmul.f32 %v1475, %v1414
    %v1545 = vsub.f32 %v1423, %v1544
    %v1546 = vmul.f32 %v1479, %v1422
    %v1547 = vsub.f32 %v1545, %v1546
    %v1548 = vmul.f32 %v1475, %v1422
    %v1549 = vsub.f32 %v1435, %v1548
    %v1550 = vmul.f32 %v1479, %v1434
    %v1551 = vsub.f32 %v1549, %v1550
    %v1552 = vmul.f32 %v1452, %v103
    %v1553 = vmul.f32 %v1456, %v106
    %v1554 = vadd.f32 %v1552, %v1553
    %v1555 = vmul.f32 %v1460, %v103
    %v1556 = vmul.f32 %v1464, %v106
    %v1557 = vadd.f32 %v1555, %v1556
    %v1558 = vmul.f32 %v1468, %v103
    %v1559 = vmul.f32 %v1471, %v106
    %v1560 = vadd.f32 %v1558, %v1559
    %v1561 = vmul.f32 %v1475, %v103
    %v1562 = vmul.f32 %v1479, %v106
    %v1563 = vadd.f32 %v1561, %v1562
    %v1564 = vmul.f32 %v1452, %v106
    %v1565 = vmul.f32 %v1456, %v109
    %v1566 = vadd.f32 %v1564, %v1565
    %v1567 = vmul.f32 %v1460, %v106
    %v1568 = vmul.f32 %v1464, %v109
    %v1569 = vadd.f32 %v1567, %v1568
    %v1570 = vmul.f32 %v1468, %v106
    %v1571 = vmul.f32 %v1471, %v109
    %v1572 = vadd.f32 %v1570, %v1571
    %v1573 = vmul.f32 %v1475, %v106
    %v1574 = vmul.f32 %v1479, %v109
    %v1575 = vadd.f32 %v1573, %v1574
    %v1576 = vmul.f32 %v1499, %v1452
    %v1577 = vsub.f32 %v1499, %v1576
    %v1578 = vmul.f32 %v1507, %v1456
    %v1579 = vsub.f32 %v1577, %v1578
    %v1580 = vmul.f32 %v1554, %v1452
    %v1581 = vadd.f32 %v1579, %v1580
    %v1582 = vmul.f32 %v1566, %v1456
    %v1583 = vadd.f32 %v1581, %v1582
    %v1584 = vmul.f32 %v1499, %v1460
    %v1585 = vsub.f32 %v1503, %v1584
    %v1586 = vmul.f32 %v1507, %v1464
    %v1587 = vsub.f32 %v1585, %v1586
    %v1588 = vmul.f32 %v1554, %v1460
    %v1589 = vadd.f32 %v1587, %v1588
    %v1590 = vmul.f32 %v1566, %v1464
    %v1591 = vadd.f32 %v1589, %v1590
    %v1592 = vmul.f32 %v1499, %v1468
    %v1593 = vsub.f32 %v1507, %v1592
    %v1594 = vmul.f32 %v1507, %v1471
    %v1595 = vsub.f32 %v1593, %v1594
    %v1596 = vmul.f32 %v1554, %v1468
    %v1597 = vadd.f32 %v1595, %v1596
    %v1598 = vmul.f32 %v1566, %v1471
    %v1599 = vadd.f32 %v1597, %v1598
    %v1600 = vmul.f32 %v1499, %v1475
    %v1601 = vsub.f32 %v1511, %v1600
    %v1602 = vmul.f32 %v1507, %v1479
    %v1603 = vsub.f32 %v1601, %v1602
    %v1604 = vmul.f32 %v1554, %v1475
    %v1605 = vadd.f32 %v1603, %v1604
    %v1606 = vmul.f32 %v1566, %v1479
    %v1607 = vadd.f32 %v1605, %v1606
    %v1608 = vmul.f32 %v1539, %v1460
    %v1609 = vsub.f32 %v1515, %v1608
    %v1610 = vmul.f32 %v1519, %v1464
    %v1611 = vsub.f32 %v1609, %v1610
    %v1612 = vmul.f32 %v1557, %v1460
    %v1613 = vadd.f32 %v1611, %v1612
    %v1614 = vmul.f32 %v1569, %v1464
    %v1615 = vadd.f32 %v1613, %v1614
    %v1616 = vmul.f32 %v1539, %v1468
    %v1617 = vsub.f32 %v1519, %v1616
    %v1618 = vmul.f32 %v1519, %v1471
    %v1619 = vsub.f32 %v1617, %v1618
    %v1620 = vmul.f32 %v1557, %v1468
    %v1621 = vadd.f32 %v1619, %v1620
    %v1622 = vmul.f32 %v1569, %v1471
    %v1623 = vadd.f32 %v1621, %v1622
    %v1624 = vmul.f32 %v1539, %v1475
    %v1625 = vsub.f32 %v1523, %v1624
    %v1626 = vmul.f32 %v1519, %v1479
    %v1627 = vsub.f32 %v1625, %v1626
    %v1628 = vmul.f32 %v1557, %v1475
    %v1629 = vadd.f32 %v1627, %v1628
    %v1630 = vmul.f32 %v1569, %v1479
    %v1631 = vadd.f32 %v1629, %v1630
    %v1632 = vmul.f32 %v1543, %v1468
    %v1633 = vsub.f32 %v1527, %v1632
    %v1634 = vmul.f32 %v1527, %v1471
    %v1635 = vsub.f32 %v1633, %v1634
    %v1636 = vmul.f32 %v1560, %v1468
    %v1637 = vadd.f32 %v1635, %v1636
    %v1638 = vmul.f32 %v1572, %v1471
    %v1639 = vadd.f32 %v1637, %v1638
    %v1640 = vmul.f32 %v1543, %v1475
    %v1641 = vsub.f32 %v1531, %v1640
    %v1642 = vmul.f32 %v1527, %v1479
    %v1643 = vsub.f32 %v1641, %v1642
    %v1644 = vmul.f32 %v1560, %v1475
    %v1645 = vadd.f32 %v1643, %v1644
    %v1646 = vmul.f32 %v1572, %v1479
    %v1647 = vadd.f32 %v1645, %v1646
    %v1648 = vmul.f32 %v1547, %v1475
    %v1649 = vsub.f32 %v1535, %v1648
    %v1650 = vmul.f32 %v1551, %v1479
    %v1651 = vsub.f32 %v1649, %v1650
    %v1652 = vmul.f32 %v1563, %v1475
    %v1653 = vadd.f32 %v1651, %v1652
    %v1654 = vmul.f32 %v1575, %v1479
    %v1655 = vadd.f32 %v1653, %v1654
    %s1656 = scalar_lea.vmem [#allocation10], 14
    %v1657 = vld [vmem:[%s1656] sm:$0x1]
    %s1658 = scalar_lea.vmem [#allocation10], 15
    %v1659 = vld [vmem:[%s1658] sm:$0x1]
    %v1660 = vmul.f32 %v1487, 0.1
    %v1661 = vadd.f32 %v1483, %v1660
    %v1662 = vmul.f32 %v1495, 0.1
    %v1663 = vadd.f32 %v1491, %v1662
    %v1664 = vmul.f32 %v1591, 0.1
    %v1665 = vadd.f32 %v1583, %v1664
    %v1666 = vmul.f32 %v1615, 0.1
    %v1667 = vadd.f32 %v1591, %v1666
    %v1668 = vmul.f32 %v1667, 0.1
    %v1669 = vadd.f32 %v1665, %v1668
    %v1670 = vadd.f32 %v1669, %v73
    %v1671 = vadd.f32 %v1667, %v76
    %v1672 = vmul.f32 %v1623, 0.1
    %v1673 = vadd.f32 %v1599, %v1672
    %v1674 = vmul.f32 %v1631, 0.1
    %v1675 = vadd.f32 %v1607, %v1674
    %v1676 = vmul.f32 %v1675, 0.1
    %v1677 = vadd.f32 %v1673, %v1676
    %v1678 = vadd.f32 %v1677, %v79
    %v1679 = vadd.f32 %v1675, %v82
    %v1680 = vadd.f32 %v1615, %v85
    %v1681 = vadd.f32 %v1623, %v1674
    %v1682 = vadd.f32 %v1681, %v88
    %v1683 = vadd.f32 %v1631, %v91
    %v1684 = vmul.f32 %v1647, 0.1
    %v1685 = vadd.f32 %v1639, %v1684
    %v1686 = vmul.f32 %v1655, 0.1
    %v1687 = vadd.f32 %v1647, %v1686
    %v1688 = vmul.f32 %v1687, 0.1
    %v1689 = vadd.f32 %v1685, %v1688
    %v1690 = vadd.f32 %v1689, %v94
    %v1691 = vadd.f32 %v1687, %v97
    %v1692 = vadd.f32 %v1655, %v100
    %v1693 = vsub.f32 %v1657, %v1661
    %v1694 = vsub.f32 %v1659, %v1663
    %v1695 = vadd.f32 %v1670, %v103
    %v1696 = vadd.f32 %v1678, %v106
    %v1697 = vadd.f32 %v1690, %v109
    %v1698 = vmul.f32 %v1695, %v1697
    %v1699 = vmul.f32 %v1696, %v1696
    %v1700 = vsub.f32 %v1698, %v1699
    %v1701 = vrcp.pop %v1700
    %v1702 = vmul.f32 %v1700, %v1701
    %v1703 = vsub.f32 2.0, %v1702
    %v1704 = vmul.f32 %v1701, %v1703
    %v1705 = vmul.f32 %v1670, %v1697
    %v1706 = vmul.f32 %v1678, %v1696
    %v1707 = vsub.f32 %v1705, %v1706
    %v1708 = vmul.f32 %v1707, %v1704
    %v1709 = vmul.f32 %v1678, %v1695
    %v1710 = vmul.f32 %v1670, %v1696
    %v1711 = vsub.f32 %v1709, %v1710
    %v1712 = vmul.f32 %v1711, %v1704
    %v1713 = vmul.f32 %v1671, %v1697
    %v1714 = vmul.f32 %v1682, %v1696
    %v1715 = vsub.f32 %v1713, %v1714
    %v1716 = vmul.f32 %v1715, %v1704
    %v1717 = vmul.f32 %v1682, %v1695
    %v1718 = vmul.f32 %v1671, %v1696
    %v1719 = vsub.f32 %v1717, %v1718
    %v1720 = vmul.f32 %v1719, %v1704
    %v1721 = vmul.f32 %v1678, %v1697
    %v1722 = vmul.f32 %v1690, %v1696
    %v1723 = vsub.f32 %v1721, %v1722
    %v1724 = vmul.f32 %v1723, %v1704
    %v1725 = vmul.f32 %v1690, %v1695
    %v1726 = vsub.f32 %v1725, %v1706
    %v1727 = vmul.f32 %v1726, %v1704
    %v1728 = vmul.f32 %v1679, %v1697
    %v1729 = vmul.f32 %v1691, %v1696
    %v1730 = vsub.f32 %v1728, %v1729
    %v1731 = vmul.f32 %v1730, %v1704
    %v1732 = vmul.f32 %v1691, %v1695
    %v1733 = vmul.f32 %v1679, %v1696
    %v1734 = vsub.f32 %v1732, %v1733
    %v1735 = vmul.f32 %v1734, %v1704
    %v1736 = vmul.f32 %v1708, %v1693
    %v1737 = vadd.f32 %v1661, %v1736
    %v1738 = vmul.f32 %v1712, %v1694
    %v1739 = vadd.f32 %v1737, %v1738
    %v1740 = vmul.f32 %v1716, %v1693
    %v1741 = vadd.f32 %v1487, %v1740
    %v1742 = vmul.f32 %v1720, %v1694
    %v1743 = vadd.f32 %v1741, %v1742
    %v1744 = vmul.f32 %v1724, %v1693
    %v1745 = vadd.f32 %v1663, %v1744
    %v1746 = vmul.f32 %v1727, %v1694
    %v1747 = vadd.f32 %v1745, %v1746
    %v1748 = vmul.f32 %v1731, %v1693
    %v1749 = vadd.f32 %v1495, %v1748
    %v1750 = vmul.f32 %v1735, %v1694
    %v1751 = vadd.f32 %v1749, %v1750
    %v1752 = vmul.f32 %v1708, %v1670
    %v1753 = vsub.f32 %v1670, %v1752
    %v1754 = vmul.f32 %v1712, %v1678
    %v1755 = vsub.f32 %v1753, %v1754
    %v1756 = vmul.f32 %v1708, %v1671
    %v1757 = vsub.f32 %v1671, %v1756
    %v1758 = vmul.f32 %v1712, %v1682
    %v1759 = vsub.f32 %v1757, %v1758
    %v1760 = vmul.f32 %v1708, %v1678
    %v1761 = vsub.f32 %v1678, %v1760
    %v1762 = vmul.f32 %v1712, %v1690
    %v1763 = vsub.f32 %v1761, %v1762
    %v1764 = vmul.f32 %v1708, %v1679
    %v1765 = vsub.f32 %v1679, %v1764
    %v1766 = vmul.f32 %v1712, %v1691
    %v1767 = vsub.f32 %v1765, %v1766
    %v1768 = vmul.f32 %v1716, %v1671
    %v1769 = vsub.f32 %v1680, %v1768
    %v1770 = vmul.f32 %v1720, %v1682
    %v1771 = vsub.f32 %v1769, %v1770
    %v1772 = vmul.f32 %v1716, %v1678
    %v1773 = vsub.f32 %v1682, %v1772
    %v1774 = vmul.f32 %v1720, %v1690
    %v1775 = vsub.f32 %v1773, %v1774
    %v1776 = vmul.f32 %v1716, %v1679
    %v1777 = vsub.f32 %v1683, %v1776
    %v1778 = vmul.f32 %v1720, %v1691
    %v1779 = vsub.f32 %v1777, %v1778
    %v1780 = vmul.f32 %v1724, %v1678
    %v1781 = vsub.f32 %v1690, %v1780
    %v1782 = vmul.f32 %v1727, %v1690
    %v1783 = vsub.f32 %v1781, %v1782
    %v1784 = vmul.f32 %v1724, %v1679
    %v1785 = vsub.f32 %v1691, %v1784
    %v1786 = vmul.f32 %v1727, %v1691
    %v1787 = vsub.f32 %v1785, %v1786
    %v1788 = vmul.f32 %v1731, %v1679
    %v1789 = vsub.f32 %v1692, %v1788
    %v1790 = vmul.f32 %v1735, %v1691
    %v1791 = vsub.f32 %v1789, %v1790
    %v1792 = vmul.f32 %v1716, %v1670
    %v1793 = vsub.f32 %v1671, %v1792
    %v1794 = vmul.f32 %v1720, %v1678
    %v1795 = vsub.f32 %v1793, %v1794
    %v1796 = vmul.f32 %v1724, %v1670
    %v1797 = vsub.f32 %v1678, %v1796
    %v1798 = vmul.f32 %v1727, %v1678
    %v1799 = vsub.f32 %v1797, %v1798
    %v1800 = vmul.f32 %v1731, %v1670
    %v1801 = vsub.f32 %v1679, %v1800
    %v1802 = vmul.f32 %v1735, %v1678
    %v1803 = vsub.f32 %v1801, %v1802
    %v1804 = vmul.f32 %v1731, %v1678
    %v1805 = vsub.f32 %v1691, %v1804
    %v1806 = vmul.f32 %v1735, %v1690
    %v1807 = vsub.f32 %v1805, %v1806
    %v1808 = vmul.f32 %v1708, %v103
    %v1809 = vmul.f32 %v1712, %v106
    %v1810 = vadd.f32 %v1808, %v1809
    %v1811 = vmul.f32 %v1716, %v103
    %v1812 = vmul.f32 %v1720, %v106
    %v1813 = vadd.f32 %v1811, %v1812
    %v1814 = vmul.f32 %v1724, %v103
    %v1815 = vmul.f32 %v1727, %v106
    %v1816 = vadd.f32 %v1814, %v1815
    %v1817 = vmul.f32 %v1731, %v103
    %v1818 = vmul.f32 %v1735, %v106
    %v1819 = vadd.f32 %v1817, %v1818
    %v1820 = vmul.f32 %v1708, %v106
    %v1821 = vmul.f32 %v1712, %v109
    %v1822 = vadd.f32 %v1820, %v1821
    %v1823 = vmul.f32 %v1716, %v106
    %v1824 = vmul.f32 %v1720, %v109
    %v1825 = vadd.f32 %v1823, %v1824
    %v1826 = vmul.f32 %v1724, %v106
    %v1827 = vmul.f32 %v1727, %v109
    %v1828 = vadd.f32 %v1826, %v1827
    %v1829 = vmul.f32 %v1731, %v106
    %v1830 = vmul.f32 %v1735, %v109
    %v1831 = vadd.f32 %v1829, %v1830
    %v1832 = vmul.f32 %v1755, %v1708
    %v1833 = vsub.f32 %v1755, %v1832
    %v1834 = vmul.f32 %v1763, %v1712
    %v1835 = vsub.f32 %v1833, %v1834
    %v1836 = vmul.f32 %v1810, %v1708
    %v1837 = vadd.f32 %v1835, %v1836
    %v1838 = vmul.f32 %v1822, %v1712
    %v1839 = vadd.f32 %v1837, %v1838
    %v1840 = vmul.f32 %v1755, %v1716
    %v1841 = vsub.f32 %v1759, %v1840
    %v1842 = vmul.f32 %v1763, %v1720
    %v1843 = vsub.f32 %v1841, %v1842
    %v1844 = vmul.f32 %v1810, %v1716
    %v1845 = vadd.f32 %v1843, %v1844
    %v1846 = vmul.f32 %v1822, %v1720
    %v1847 = vadd.f32 %v1845, %v1846
    %v1848 = vmul.f32 %v1755, %v1724
    %v1849 = vsub.f32 %v1763, %v1848
    %v1850 = vmul.f32 %v1763, %v1727
    %v1851 = vsub.f32 %v1849, %v1850
    %v1852 = vmul.f32 %v1810, %v1724
    %v1853 = vadd.f32 %v1851, %v1852
    %v1854 = vmul.f32 %v1822, %v1727
    %v1855 = vadd.f32 %v1853, %v1854
    %v1856 = vmul.f32 %v1755, %v1731
    %v1857 = vsub.f32 %v1767, %v1856
    %v1858 = vmul.f32 %v1763, %v1735
    %v1859 = vsub.f32 %v1857, %v1858
    %v1860 = vmul.f32 %v1810, %v1731
    %v1861 = vadd.f32 %v1859, %v1860
    %v1862 = vmul.f32 %v1822, %v1735
    %v1863 = vadd.f32 %v1861, %v1862
    %v1864 = vmul.f32 %v1795, %v1716
    %v1865 = vsub.f32 %v1771, %v1864
    %v1866 = vmul.f32 %v1775, %v1720
    %v1867 = vsub.f32 %v1865, %v1866
    %v1868 = vmul.f32 %v1813, %v1716
    %v1869 = vadd.f32 %v1867, %v1868
    %v1870 = vmul.f32 %v1825, %v1720
    %v1871 = vadd.f32 %v1869, %v1870
    %v1872 = vmul.f32 %v1795, %v1724
    %v1873 = vsub.f32 %v1775, %v1872
    %v1874 = vmul.f32 %v1775, %v1727
    %v1875 = vsub.f32 %v1873, %v1874
    %v1876 = vmul.f32 %v1813, %v1724
    %v1877 = vadd.f32 %v1875, %v1876
    %v1878 = vmul.f32 %v1825, %v1727
    %v1879 = vadd.f32 %v1877, %v1878
    %v1880 = vmul.f32 %v1795, %v1731
    %v1881 = vsub.f32 %v1779, %v1880
    %v1882 = vmul.f32 %v1775, %v1735
    %v1883 = vsub.f32 %v1881, %v1882
    %v1884 = vmul.f32 %v1813, %v1731
    %v1885 = vadd.f32 %v1883, %v1884
    %v1886 = vmul.f32 %v1825, %v1735
    %v1887 = vadd.f32 %v1885, %v1886
    %v1888 = vmul.f32 %v1799, %v1724
    %v1889 = vsub.f32 %v1783, %v1888
    %v1890 = vmul.f32 %v1783, %v1727
    %v1891 = vsub.f32 %v1889, %v1890
    %v1892 = vmul.f32 %v1816, %v1724
    %v1893 = vadd.f32 %v1891, %v1892
    %v1894 = vmul.f32 %v1828, %v1727
    %v1895 = vadd.f32 %v1893, %v1894
    %v1896 = vmul.f32 %v1799, %v1731
    %v1897 = vsub.f32 %v1787, %v1896
    %v1898 = vmul.f32 %v1783, %v1735
    %v1899 = vsub.f32 %v1897, %v1898
    %v1900 = vmul.f32 %v1816, %v1731
    %v1901 = vadd.f32 %v1899, %v1900
    %v1902 = vmul.f32 %v1828, %v1735
    %v1903 = vadd.f32 %v1901, %v1902
    %v1904 = vmul.f32 %v1803, %v1731
    %v1905 = vsub.f32 %v1791, %v1904
    %v1906 = vmul.f32 %v1807, %v1735
    %v1907 = vsub.f32 %v1905, %v1906
    %v1908 = vmul.f32 %v1819, %v1731
    %v1909 = vadd.f32 %v1907, %v1908
    %v1910 = vmul.f32 %v1831, %v1735
    %v1911 = vadd.f32 %v1909, %v1910
    %v1912 = vmul.f32 %v1743, 0.1
    %v1913 = vadd.f32 %v1739, %v1912
    %v1914 = vmul.f32 %v1751, 0.1
    %v1915 = vadd.f32 %v1747, %v1914
    %v1916 = vmul.f32 %v1847, 0.1
    %v1917 = vadd.f32 %v1839, %v1916
    %v1918 = vmul.f32 %v1871, 0.1
    %v1919 = vadd.f32 %v1847, %v1918
    %v1920 = vmul.f32 %v1919, 0.1
    %v1921 = vadd.f32 %v1917, %v1920
    %v1922 = vadd.f32 %v1921, %v73
    %v1923 = vadd.f32 %v1919, %v76
    %v1924 = vmul.f32 %v1879, 0.1
    %v1925 = vadd.f32 %v1855, %v1924
    %v1926 = vmul.f32 %v1887, 0.1
    %v1927 = vadd.f32 %v1863, %v1926
    %v1928 = vmul.f32 %v1927, 0.1
    %v1929 = vadd.f32 %v1925, %v1928
    %v1930 = vadd.f32 %v1929, %v79
    %v1931 = vadd.f32 %v1927, %v82
    %v1932 = vadd.f32 %v1871, %v85
    %v1933 = vadd.f32 %v1879, %v1926
    %v1934 = vadd.f32 %v1933, %v88
    %v1935 = vadd.f32 %v1887, %v91
    %v1936 = vmul.f32 %v1903, 0.1
    %v1937 = vadd.f32 %v1895, %v1936
    %v1938 = vmul.f32 %v1911, 0.1
    %v1939 = vadd.f32 %v1903, %v1938
    %v1940 = vmul.f32 %v1939, 0.1
    %v1941 = vadd.f32 %v1937, %v1940
    %v1942 = vadd.f32 %v1941, %v94
    %v1943 = vadd.f32 %v1939, %v97
    %v1944 = vadd.f32 %v1911, %v100
    %v1945 = vrsqrt.pop %v1922
    %v1946 = vmul.f32 %v1945, %v1922
    %v1947 = vmul.f32 %v1946, %v1945
    %v1948 = vmul.f32 0.5, %v1947
    %v1949 = vsub.f32 1.5, %v1948
    %v1950 = vmul.f32 %v1945, %v1949
    %v1951 = vmul.f32 %v1922, %v1950
    %vm1952 = vcmp.eq.f32.partialorder %v1922, inf
    %v1953 = vsel %vm1952, %v1922, %v1951
    %vm1954 = vcmp.eq.f32.partialorder %v1922, 0.0
    %v1955 = vand.u32 %v1922, 2147483648
    %v1956 = vsel %vm1954, %v1955, %v1953
    %v1957 = vrsqrt.pop %v1942
    %v1958 = vmul.f32 %v1957, %v1942
    %v1959 = vmul.f32 %v1958, %v1957
    %v1960 = vmul.f32 0.5, %v1959
    %v1961 = vsub.f32 1.5, %v1960
    %v1962 = vmul.f32 %v1957, %v1961
    %v1963 = vmul.f32 %v1942, %v1962
    %vm1964 = vcmp.eq.f32.partialorder %v1942, inf
    %v1965 = vsel %vm1964, %v1942, %v1963
    %vm1966 = vcmp.eq.f32.partialorder %v1942, 0.0
    %v1967 = vand.u32 %v1942, 2147483648
    %v1968 = vsel %vm1966, %v1967, %v1965
    %v1969 = vmul.f32 %v1922, %v1942
    %v1970 = vrsqrt.pop %v1969
    %v1971 = vmul.f32 %v1970, %v1969
    %v1972 = vmul.f32 %v1971, %v1970
    %v1973 = vmul.f32 0.5, %v1972
    %v1974 = vsub.f32 1.5, %v1973
    %v1975 = vmul.f32 %v1970, %v1974
    %vm1976 = vweird.f32 %v1969
    %vm1977 = vweird.f32 %v1970
    %vm1978 = vmor %vm1976, %vm1977
    %v1979 = vsel %vm1978, %v1970, %v1975
    %v1980 = vmul.f32 %v1930, %v1979
    %1981 = vst [vmem:[#allocation11] sm:$0x1] %v1913
    %s1982 = scalar_lea.vmem [#allocation11], 1
    %1983 = vst [vmem:[%s1982] sm:$0x1] %v1915
    %s1984 = scalar_lea.vmem [#allocation11], 2
    %1985 = vst [vmem:[%s1984] sm:$0x1] %v1956
    %s1986 = scalar_lea.vmem [#allocation11], 3
    %1987 = vst [vmem:[%s1986] sm:$0x1] %v1968
    %s1988 = scalar_lea.vmem [#allocation11], 4
    %1989 = vst [vmem:[%s1988] sm:$0x1] %v1980
    %v1990 = vadd.f32 %v1913, %v1912
    %v1991 = vadd.f32 %v1915, %v1914
    %v1992 = vmul.f32 %v1923, 0.1
    %v1993 = vadd.f32 %v1922, %v1992
    %v1994 = vmul.f32 %v1932, 0.1
    %v1995 = vadd.f32 %v1923, %v1994
    %v1996 = vmul.f32 %v1995, 0.1
    %v1997 = vadd.f32 %v1993, %v1996
    %v1998 = vadd.f32 %v1997, %v73
    %v1999 = vadd.f32 %v1995, %v76
    %v2000 = vmul.f32 %v1934, 0.1
    %v2001 = vadd.f32 %v1930, %v2000
    %v2002 = vmul.f32 %v1935, 0.1
    %v2003 = vadd.f32 %v1931, %v2002
    %v2004 = vmul.f32 %v2003, 0.1
    %v2005 = vadd.f32 %v2001, %v2004
    %v2006 = vadd.f32 %v2005, %v79
    %v2007 = vadd.f32 %v2003, %v82
    %v2008 = vadd.f32 %v1932, %v85
    %v2009 = vadd.f32 %v1934, %v2002
    %v2010 = vadd.f32 %v2009, %v88
    %v2011 = vadd.f32 %v1935, %v91
    %v2012 = vmul.f32 %v1943, 0.1
    %v2013 = vadd.f32 %v1942, %v2012
    %v2014 = vmul.f32 %v1944, 0.1
    %v2015 = vadd.f32 %v1943, %v2014
    %v2016 = vmul.f32 %v2015, 0.1
    %v2017 = vadd.f32 %v2013, %v2016
    %v2018 = vadd.f32 %v2017, %v94
    %v2019 = vadd.f32 %v2015, %v97
    %v2020 = vadd.f32 %v1944, %v100
    %v2021 = vrsqrt.pop %v1998
    %v2022 = vmul.f32 %v2021, %v1998
    %v2023 = vmul.f32 %v2022, %v2021
    %v2024 = vmul.f32 0.5, %v2023
    %v2025 = vsub.f32 1.5, %v2024
    %v2026 = vmul.f32 %v2021, %v2025
    %v2027 = vmul.f32 %v1998, %v2026
    %vm2028 = vcmp.eq.f32.partialorder %v1998, inf
    %v2029 = vsel %vm2028, %v1998, %v2027
    %vm2030 = vcmp.eq.f32.partialorder %v1998, 0.0
    %v2031 = vand.u32 %v1998, 2147483648
    %v2032 = vsel %vm2030, %v2031, %v2029
    %v2033 = vrsqrt.pop %v2018
    %v2034 = vmul.f32 %v2033, %v2018
    %v2035 = vmul.f32 %v2034, %v2033
    %v2036 = vmul.f32 0.5, %v2035
    %v2037 = vsub.f32 1.5, %v2036
    %v2038 = vmul.f32 %v2033, %v2037
    %v2039 = vmul.f32 %v2018, %v2038
    %vm2040 = vcmp.eq.f32.partialorder %v2018, inf
    %v2041 = vsel %vm2040, %v2018, %v2039
    %vm2042 = vcmp.eq.f32.partialorder %v2018, 0.0
    %v2043 = vand.u32 %v2018, 2147483648
    %v2044 = vsel %vm2042, %v2043, %v2041
    %v2045 = vmul.f32 %v1998, %v2018
    %v2046 = vrsqrt.pop %v2045
    %v2047 = vmul.f32 %v2046, %v2045
    %v2048 = vmul.f32 %v2047, %v2046
    %v2049 = vmul.f32 0.5, %v2048
    %v2050 = vsub.f32 1.5, %v2049
    %v2051 = vmul.f32 %v2046, %v2050
    %vm2052 = vweird.f32 %v2045
    %vm2053 = vweird.f32 %v2046
    %vm2054 = vmor %vm2052, %vm2053
    %v2055 = vsel %vm2054, %v2046, %v2051
    %v2056 = vmul.f32 %v2006, %v2055
    %s2057 = scalar_lea.vmem [#allocation11], 5
    %2058 = vst [vmem:[%s2057] sm:$0x1] %v1990
    %s2059 = scalar_lea.vmem [#allocation11], 6
    %2060 = vst [vmem:[%s2059] sm:$0x1] %v1991
    %s2061 = scalar_lea.vmem [#allocation11], 7
    %2062 = vst [vmem:[%s2061] sm:$0x1] %v2032
    %s2063 = scalar_lea.vmem [#allocation11], 8
    %2064 = vst [vmem:[%s2063] sm:$0x1] %v2044
    %s2065 = scalar_lea.vmem [#allocation11], 9
    %2066 = vst [vmem:[%s2065] sm:$0x1] %v2056
    %v2067 = vadd.f32 %v1990, %v1912
    %v2068 = vadd.f32 %v1991, %v1914
    %v2069 = vmul.f32 %v1999, 0.1
    %v2070 = vadd.f32 %v1998, %v2069
    %v2071 = vmul.f32 %v2008, 0.1
    %v2072 = vadd.f32 %v1999, %v2071
    %v2073 = vmul.f32 %v2072, 0.1
    %v2074 = vadd.f32 %v2070, %v2073
    %v2075 = vadd.f32 %v2074, %v73
    %v2076 = vadd.f32 %v2072, %v76
    %v2077 = vmul.f32 %v2010, 0.1
    %v2078 = vadd.f32 %v2006, %v2077
    %v2079 = vmul.f32 %v2011, 0.1
    %v2080 = vadd.f32 %v2007, %v2079
    %v2081 = vmul.f32 %v2080, 0.1
    %v2082 = vadd.f32 %v2078, %v2081
    %v2083 = vadd.f32 %v2082, %v79
    %v2084 = vadd.f32 %v2080, %v82
    %v2085 = vadd.f32 %v2008, %v85
    %v2086 = vadd.f32 %v2010, %v2079
    %v2087 = vadd.f32 %v2086, %v88
    %v2088 = vadd.f32 %v2011, %v91
    %v2089 = vmul.f32 %v2019, 0.1
    %v2090 = vadd.f32 %v2018, %v2089
    %v2091 = vmul.f32 %v2020, 0.1
    %v2092 = vadd.f32 %v2019, %v2091
    %v2093 = vmul.f32 %v2092, 0.1
    %v2094 = vadd.f32 %v2090, %v2093
    %v2095 = vadd.f32 %v2094, %v94
    %v2096 = vadd.f32 %v2092, %v97
    %v2097 = vadd.f32 %v2020, %v100
    %v2098 = vrsqrt.pop %v2075
    %v2099 = vmul.f32 %v2098, %v2075
    %v2100 = vmul.f32 %v2099, %v2098
    %v2101 = vmul.f32 0.5, %v2100
    %v2102 = vsub.f32 1.5, %v2101
    %v2103 = vmul.f32 %v2098, %v2102
    %v2104 = vmul.f32 %v2075, %v2103
    %vm2105 = vcmp.eq.f32.partialorder %v2075, inf
    %v2106 = vsel %vm2105, %v2075, %v2104
    %vm2107 = vcmp.eq.f32.partialorder %v2075, 0.0
    %v2108 = vand.u32 %v2075, 2147483648
    %v2109 = vsel %vm2107, %v2108, %v2106
    %v2110 = vrsqrt.pop %v2095
    %v2111 = vmul.f32 %v2110, %v2095
    %v2112 = vmul.f32 %v2111, %v2110
    %v2113 = vmul.f32 0.5, %v2112
    %v2114 = vsub.f32 1.5, %v2113
    %v2115 = vmul.f32 %v2110, %v2114
    %v2116 = vmul.f32 %v2095, %v2115
    %vm2117 = vcmp.eq.f32.partialorder %v2095, inf
    %v2118 = vsel %vm2117, %v2095, %v2116
    %vm2119 = vcmp.eq.f32.partialorder %v2095, 0.0
    %v2120 = vand.u32 %v2095, 2147483648
    %v2121 = vsel %vm2119, %v2120, %v2118
    %v2122 = vmul.f32 %v2075, %v2095
    %v2123 = vrsqrt.pop %v2122
    %v2124 = vmul.f32 %v2123, %v2122
    %v2125 = vmul.f32 %v2124, %v2123
    %v2126 = vmul.f32 0.5, %v2125
    %v2127 = vsub.f32 1.5, %v2126
    %v2128 = vmul.f32 %v2123, %v2127
    %vm2129 = vweird.f32 %v2122
    %vm2130 = vweird.f32 %v2123
    %vm2131 = vmor %vm2129, %vm2130
    %v2132 = vsel %vm2131, %v2123, %v2128
    %v2133 = vmul.f32 %v2083, %v2132
    %s2134 = scalar_lea.vmem [#allocation11], 10
    %2135 = vst [vmem:[%s2134] sm:$0x1] %v2067
    %s2136 = scalar_lea.vmem [#allocation11], 11
    %2137 = vst [vmem:[%s2136] sm:$0x1] %v2068
    %s2138 = scalar_lea.vmem [#allocation11], 12
    %2139 = vst [vmem:[%s2138] sm:$0x1] %v2109
    %s2140 = scalar_lea.vmem [#allocation11], 13
    %2141 = vst [vmem:[%s2140] sm:$0x1] %v2121
    %s2142 = scalar_lea.vmem [#allocation11], 14
    %2143 = vst [vmem:[%s2142] sm:$0x1] %v2133
    %v2144 = vadd.f32 %v2067, %v1912
    %v2145 = vadd.f32 %v2068, %v1914
    %v2146 = vmul.f32 %v2076, 0.1
    %v2147 = vadd.f32 %v2075, %v2146
    %v2148 = vmul.f32 %v2085, 0.1
    %v2149 = vadd.f32 %v2076, %v2148
    %v2150 = vmul.f32 %v2149, 0.1
    %v2151 = vadd.f32 %v2147, %v2150
    %v2152 = vadd.f32 %v2151, %v73
    %v2153 = vadd.f32 %v2149, %v76
    %v2154 = vmul.f32 %v2087, 0.1
    %v2155 = vadd.f32 %v2083, %v2154
    %v2156 = vmul.f32 %v2088, 0.1
    %v2157 = vadd.f32 %v2084, %v2156
    %v2158 = vmul.f32 %v2157, 0.1
    %v2159 = vadd.f32 %v2155, %v2158
    %v2160 = vadd.f32 %v2159, %v79
    %v2161 = vadd.f32 %v2157, %v82
    %v2162 = vadd.f32 %v2085, %v85
    %v2163 = vadd.f32 %v2087, %v2156
    %v2164 = vadd.f32 %v2163, %v88
    %v2165 = vadd.f32 %v2088, %v91
    %v2166 = vmul.f32 %v2096, 0.1
    %v2167 = vadd.f32 %v2095, %v2166
    %v2168 = vmul.f32 %v2097, 0.1
    %v2169 = vadd.f32 %v2096, %v2168
    %v2170 = vmul.f32 %v2169, 0.1
    %v2171 = vadd.f32 %v2167, %v2170
    %v2172 = vadd.f32 %v2171, %v94
    %v2173 = vadd.f32 %v2169, %v97
    %v2174 = vadd.f32 %v2097, %v100
    %v2175 = vrsqrt.pop %v2152
    %v2176 = vmul.f32 %v2175, %v2152
    %v2177 = vmul.f32 %v2176, %v2175
    %v2178 = vmul.f32 0.5, %v2177
    %v2179 = vsub.f32 1.5, %v2178
    %v2180 = vmul.f32 %v2175, %v2179
    %v2181 = vmul.f32 %v2152, %v2180
    %vm2182 = vcmp.eq.f32.partialorder %v2152, inf
    %v2183 = vsel %vm2182, %v2152, %v2181
    %vm2184 = vcmp.eq.f32.partialorder %v2152, 0.0
    %v2185 = vand.u32 %v2152, 2147483648
    %v2186 = vsel %vm2184, %v2185, %v2183
    %v2187 = vrsqrt.pop %v2172
    %v2188 = vmul.f32 %v2187, %v2172
    %v2189 = vmul.f32 %v2188, %v2187
    %v2190 = vmul.f32 0.5, %v2189
    %v2191 = vsub.f32 1.5, %v2190
    %v2192 = vmul.f32 %v2187, %v2191
    %v2193 = vmul.f32 %v2172, %v2192
    %vm2194 = vcmp.eq.f32.partialorder %v2172, inf
    %v2195 = vsel %vm2194, %v2172, %v2193
    %vm2196 = vcmp.eq.f32.partialorder %v2172, 0.0
    %v2197 = vand.u32 %v2172, 2147483648
    %v2198 = vsel %vm2196, %v2197, %v2195
    %v2199 = vmul.f32 %v2152, %v2172
    %v2200 = vrsqrt.pop %v2199
    %v2201 = vmul.f32 %v2200, %v2199
    %v2202 = vmul.f32 %v2201, %v2200
    %v2203 = vmul.f32 0.5, %v2202
    %v2204 = vsub.f32 1.5, %v2203
    %v2205 = vmul.f32 %v2200, %v2204
    %vm2206 = vweird.f32 %v2199
    %vm2207 = vweird.f32 %v2200
    %vm2208 = vmor %vm2206, %vm2207
    %v2209 = vsel %vm2208, %v2200, %v2205
    %v2210 = vmul.f32 %v2160, %v2209
    %s2211 = scalar_lea.vmem [#allocation11], 15
    %2212 = vst [vmem:[%s2211] sm:$0x1] %v2144
    %s2213 = scalar_lea.vmem [#allocation11], 16
    %2214 = vst [vmem:[%s2213] sm:$0x1] %v2145
    %s2215 = scalar_lea.vmem [#allocation11], 17
    %2216 = vst [vmem:[%s2215] sm:$0x1] %v2186
    %s2217 = scalar_lea.vmem [#allocation11], 18
    %2218 = vst [vmem:[%s2217] sm:$0x1] %v2198
    %s2219 = scalar_lea.vmem [#allocation11], 19
    %2220 = vst [vmem:[%s2219] sm:$0x1] %v2210
    %v2221 = vadd.f32 %v2144, %v1912
    %v2222 = vadd.f32 %v2145, %v1914
    %v2223 = vmul.f32 %v2153, 0.1
    %v2224 = vadd.f32 %v2152, %v2223
    %v2225 = vmul.f32 %v2162, 0.1
    %v2226 = vadd.f32 %v2153, %v2225
    %v2227 = vmul.f32 %v2226, 0.1
    %v2228 = vadd.f32 %v2224, %v2227
    %v2229 = vadd.f32 %v2228, %v73
    %v2230 = vadd.f32 %v2226, %v76
    %v2231 = vmul.f32 %v2164, 0.1
    %v2232 = vadd.f32 %v2160, %v2231
    %v2233 = vmul.f32 %v2165, 0.1
    %v2234 = vadd.f32 %v2161, %v2233
    %v2235 = vmul.f32 %v2234, 0.1
    %v2236 = vadd.f32 %v2232, %v2235
    %v2237 = vadd.f32 %v2236, %v79
    %v2238 = vadd.f32 %v2234, %v82
    %v2239 = vadd.f32 %v2162, %v85
    %v2240 = vadd.f32 %v2164, %v2233
    %v2241 = vadd.f32 %v2240, %v88
    %v2242 = vadd.f32 %v2165, %v91
    %v2243 = vmul.f32 %v2173, 0.1
    %v2244 = vadd.f32 %v2172, %v2243
    %v2245 = vmul.f32 %v2174, 0.1
    %v2246 = vadd.f32 %v2173, %v2245
    %v2247 = vmul.f32 %v2246, 0.1
    %v2248 = vadd.f32 %v2244, %v2247
    %v2249 = vadd.f32 %v2248, %v94
    %v2250 = vadd.f32 %v2246, %v97
    %v2251 = vadd.f32 %v2174, %v100
    %v2252 = vrsqrt.pop %v2229
    %v2253 = vmul.f32 %v2252, %v2229
    %v2254 = vmul.f32 %v2253, %v2252
    %v2255 = vmul.f32 0.5, %v2254
    %v2256 = vsub.f32 1.5, %v2255
    %v2257 = vmul.f32 %v2252, %v2256
    %v2258 = vmul.f32 %v2229, %v2257
    %vm2259 = vcmp.eq.f32.partialorder %v2229, inf
    %v2260 = vsel %vm2259, %v2229, %v2258
    %vm2261 = vcmp.eq.f32.partialorder %v2229, 0.0
    %v2262 = vand.u32 %v2229, 2147483648
    %v2263 = vsel %vm2261, %v2262, %v2260
    %v2264 = vrsqrt.pop %v2249
    %v2265 = vmul.f32 %v2264, %v2249
    %v2266 = vmul.f32 %v2265, %v2264
    %v2267 = vmul.f32 0.5, %v2266
    %v2268 = vsub.f32 1.5, %v2267
    %v2269 = vmul.f32 %v2264, %v2268
    %v2270 = vmul.f32 %v2249, %v2269
    %vm2271 = vcmp.eq.f32.partialorder %v2249, inf
    %v2272 = vsel %vm2271, %v2249, %v2270
    %vm2273 = vcmp.eq.f32.partialorder %v2249, 0.0
    %v2274 = vand.u32 %v2249, 2147483648
    %v2275 = vsel %vm2273, %v2274, %v2272
    %v2276 = vmul.f32 %v2229, %v2249
    %v2277 = vrsqrt.pop %v2276
    %v2278 = vmul.f32 %v2277, %v2276
    %v2279 = vmul.f32 %v2278, %v2277
    %v2280 = vmul.f32 0.5, %v2279
    %v2281 = vsub.f32 1.5, %v2280
    %v2282 = vmul.f32 %v2277, %v2281
    %vm2283 = vweird.f32 %v2276
    %vm2284 = vweird.f32 %v2277
    %vm2285 = vmor %vm2283, %vm2284
    %v2286 = vsel %vm2285, %v2277, %v2282
    %v2287 = vmul.f32 %v2237, %v2286
    %s2288 = scalar_lea.vmem [#allocation11], 20
    %2289 = vst [vmem:[%s2288] sm:$0x1] %v2221
    %s2290 = scalar_lea.vmem [#allocation11], 21
    %2291 = vst [vmem:[%s2290] sm:$0x1] %v2222
    %s2292 = scalar_lea.vmem [#allocation11], 22
    %2293 = vst [vmem:[%s2292] sm:$0x1] %v2263
    %s2294 = scalar_lea.vmem [#allocation11], 23
    %2295 = vst [vmem:[%s2294] sm:$0x1] %v2275
    %s2296 = scalar_lea.vmem [#allocation11], 24
    %2297 = vst [vmem:[%s2296] sm:$0x1] %v2287
    %v2298 = vadd.f32 %v2221, %v1912
    %v2299 = vadd.f32 %v2222, %v1914
    %v2300 = vmul.f32 %v2230, 0.1
    %v2301 = vadd.f32 %v2229, %v2300
    %v2302 = vmul.f32 %v2239, 0.1
    %v2303 = vadd.f32 %v2230, %v2302
    %v2304 = vmul.f32 %v2303, 0.1
    %v2305 = vadd.f32 %v2301, %v2304
    %v2306 = vadd.f32 %v2305, %v73
    %v2307 = vadd.f32 %v2303, %v76
    %v2308 = vmul.f32 %v2241, 0.1
    %v2309 = vadd.f32 %v2237, %v2308
    %v2310 = vmul.f32 %v2242, 0.1
    %v2311 = vadd.f32 %v2238, %v2310
    %v2312 = vmul.f32 %v2311, 0.1
    %v2313 = vadd.f32 %v2309, %v2312
    %v2314 = vadd.f32 %v2313, %v79
    %v2315 = vadd.f32 %v2311, %v82
    %v2316 = vadd.f32 %v2239, %v85
    %v2317 = vadd.f32 %v2241, %v2310
    %v2318 = vadd.f32 %v2317, %v88
    %v2319 = vadd.f32 %v2242, %v91
    %v2320 = vmul.f32 %v2250, 0.1
    %v2321 = vadd.f32 %v2249, %v2320
    %v2322 = vmul.f32 %v2251, 0.1
    %v2323 = vadd.f32 %v2250, %v2322
    %v2324 = vmul.f32 %v2323, 0.1
    %v2325 = vadd.f32 %v2321, %v2324
    %v2326 = vadd.f32 %v2325, %v94
    %v2327 = vadd.f32 %v2323, %v97
    %v2328 = vadd.f32 %v2251, %v100
    %v2329 = vrsqrt.pop %v2306
    %v2330 = vmul.f32 %v2329, %v2306
    %v2331 = vmul.f32 %v2330, %v2329
    %v2332 = vmul.f32 0.5, %v2331
    %v2333 = vsub.f32 1.5, %v2332
    %v2334 = vmul.f32 %v2329, %v2333
    %v2335 = vmul.f32 %v2306, %v2334
    %vm2336 = vcmp.eq.f32.partialorder %v2306, inf
    %v2337 = vsel %vm2336, %v2306, %v2335
    %vm2338 = vcmp.eq.f32.partialorder %v2306, 0.0
    %v2339 = vand.u32 %v2306, 2147483648
    %v2340 = vsel %vm2338, %v2339, %v2337
    %v2341 = vrsqrt.pop %v2326
    %v2342 = vmul.f32 %v2341, %v2326
    %v2343 = vmul.f32 %v2342, %v2341
    %v2344 = vmul.f32 0.5, %v2343
    %v2345 = vsub.f32 1.5, %v2344
    %v2346 = vmul.f32 %v2341, %v2345
    %v2347 = vmul.f32 %v2326, %v2346
    %vm2348 = vcmp.eq.f32.partialorder %v2326, inf
    %v2349 = vsel %vm2348, %v2326, %v2347
    %vm2350 = vcmp.eq.f32.partialorder %v2326, 0.0
    %v2351 = vand.u32 %v2326, 2147483648
    %v2352 = vsel %vm2350, %v2351, %v2349
    %v2353 = vmul.f32 %v2306, %v2326
    %v2354 = vrsqrt.pop %v2353
    %v2355 = vmul.f32 %v2354, %v2353
    %v2356 = vmul.f32 %v2355, %v2354
    %v2357 = vmul.f32 0.5, %v2356
    %v2358 = vsub.f32 1.5, %v2357
    %v2359 = vmul.f32 %v2354, %v2358
    %vm2360 = vweird.f32 %v2353
    %vm2361 = vweird.f32 %v2354
    %vm2362 = vmor %vm2360, %vm2361
    %v2363 = vsel %vm2362, %v2354, %v2359
    %v2364 = vmul.f32 %v2314, %v2363
    %s2365 = scalar_lea.vmem [#allocation11], 25
    %2366 = vst [vmem:[%s2365] sm:$0x1] %v2298
    %s2367 = scalar_lea.vmem [#allocation11], 26
    %2368 = vst [vmem:[%s2367] sm:$0x1] %v2299
    %s2369 = scalar_lea.vmem [#allocation11], 27
    %2370 = vst [vmem:[%s2369] sm:$0x1] %v2340
    %s2371 = scalar_lea.vmem [#allocation11], 28
    %2372 = vst [vmem:[%s2371] sm:$0x1] %v2352
    %s2373 = scalar_lea.vmem [#allocation11], 29
    %2374 = vst [vmem:[%s2373] sm:$0x1] %v2364
    %v2375 = vadd.f32 %v2298, %v1912
    %v2376 = vadd.f32 %v2299, %v1914
    %v2377 = vmul.f32 %v2307, 0.1
    %v2378 = vadd.f32 %v2306, %v2377
    %v2379 = vmul.f32 %v2316, 0.1
    %v2380 = vadd.f32 %v2307, %v2379
    %v2381 = vmul.f32 %v2380, 0.1
    %v2382 = vadd.f32 %v2378, %v2381
    %v2383 = vadd.f32 %v2382, %v73
    %v2384 = vadd.f32 %v2380, %v76
    %v2385 = vmul.f32 %v2318, 0.1
    %v2386 = vadd.f32 %v2314, %v2385
    %v2387 = vmul.f32 %v2319, 0.1
    %v2388 = vadd.f32 %v2315, %v2387
    %v2389 = vmul.f32 %v2388, 0.1
    %v2390 = vadd.f32 %v2386, %v2389
    %v2391 = vadd.f32 %v2390, %v79
    %v2392 = vadd.f32 %v2388, %v82
    %v2393 = vadd.f32 %v2316, %v85
    %v2394 = vadd.f32 %v2318, %v2387
    %v2395 = vadd.f32 %v2394, %v88
    %v2396 = vadd.f32 %v2319, %v91
    %v2397 = vmul.f32 %v2327, 0.1
    %v2398 = vadd.f32 %v2326, %v2397
    %v2399 = vmul.f32 %v2328, 0.1
    %v2400 = vadd.f32 %v2327, %v2399
    %v2401 = vmul.f32 %v2400, 0.1
    %v2402 = vadd.f32 %v2398, %v2401
    %v2403 = vadd.f32 %v2402, %v94
    %v2404 = vadd.f32 %v2400, %v97
    %v2405 = vadd.f32 %v2328, %v100
    %v2406 = vrsqrt.pop %v2383
    %v2407 = vmul.f32 %v2406, %v2383
    %v2408 = vmul.f32 %v2407, %v2406
    %v2409 = vmul.f32 0.5, %v2408
    %v2410 = vsub.f32 1.5, %v2409
    %v2411 = vmul.f32 %v2406, %v2410
    %v2412 = vmul.f32 %v2383, %v2411
    %vm2413 = vcmp.eq.f32.partialorder %v2383, inf
    %v2414 = vsel %vm2413, %v2383, %v2412
    %vm2415 = vcmp.eq.f32.partialorder %v2383, 0.0
    %v2416 = vand.u32 %v2383, 2147483648
    %v2417 = vsel %vm2415, %v2416, %v2414
    %v2418 = vrsqrt.pop %v2403
    %v2419 = vmul.f32 %v2418, %v2403
    %v2420 = vmul.f32 %v2419, %v2418
    %v2421 = vmul.f32 0.5, %v2420
    %v2422 = vsub.f32 1.5, %v2421
    %v2423 = vmul.f32 %v2418, %v2422
    %v2424 = vmul.f32 %v2403, %v2423
    %vm2425 = vcmp.eq.f32.partialorder %v2403, inf
    %v2426 = vsel %vm2425, %v2403, %v2424
    %vm2427 = vcmp.eq.f32.partialorder %v2403, 0.0
    %v2428 = vand.u32 %v2403, 2147483648
    %v2429 = vsel %vm2427, %v2428, %v2426
    %v2430 = vmul.f32 %v2383, %v2403
    %v2431 = vrsqrt.pop %v2430
    %v2432 = vmul.f32 %v2431, %v2430
    %v2433 = vmul.f32 %v2432, %v2431
    %v2434 = vmul.f32 0.5, %v2433
    %v2435 = vsub.f32 1.5, %v2434
    %v2436 = vmul.f32 %v2431, %v2435
    %vm2437 = vweird.f32 %v2430
    %vm2438 = vweird.f32 %v2431
    %vm2439 = vmor %vm2437, %vm2438
    %v2440 = vsel %vm2439, %v2431, %v2436
    %v2441 = vmul.f32 %v2391, %v2440
    %s2442 = scalar_lea.vmem [#allocation11], 30
    %2443 = vst [vmem:[%s2442] sm:$0x1] %v2375
    %s2444 = scalar_lea.vmem [#allocation11], 31
    %2445 = vst [vmem:[%s2444] sm:$0x1] %v2376
    %s2446 = scalar_lea.vmem [#allocation11], 32
    %2447 = vst [vmem:[%s2446] sm:$0x1] %v2417
    %s2448 = scalar_lea.vmem [#allocation11], 33
    %2449 = vst [vmem:[%s2448] sm:$0x1] %v2429
    %s2450 = scalar_lea.vmem [#allocation11], 34
    %2451 = vst [vmem:[%s2450] sm:$0x1] %v2441
    %v2452 = vadd.f32 %v2375, %v1912
    %v2453 = vadd.f32 %v2376, %v1914
    %v2454 = vmul.f32 %v2384, 0.1
    %v2455 = vadd.f32 %v2383, %v2454
    %v2456 = vmul.f32 %v2393, 0.1
    %v2457 = vadd.f32 %v2384, %v2456
    %v2458 = vmul.f32 %v2457, 0.1
    %v2459 = vadd.f32 %v2455, %v2458
    %v2460 = vadd.f32 %v2459, %v73
    %v2461 = vadd.f32 %v2457, %v76
    %v2462 = vmul.f32 %v2395, 0.1
    %v2463 = vadd.f32 %v2391, %v2462
    %v2464 = vmul.f32 %v2396, 0.1
    %v2465 = vadd.f32 %v2392, %v2464
    %v2466 = vmul.f32 %v2465, 0.1
    %v2467 = vadd.f32 %v2463, %v2466
    %v2468 = vadd.f32 %v2467, %v79
    %v2469 = vadd.f32 %v2465, %v82
    %v2470 = vadd.f32 %v2393, %v85
    %v2471 = vadd.f32 %v2395, %v2464
    %v2472 = vadd.f32 %v2471, %v88
    %v2473 = vadd.f32 %v2396, %v91
    %v2474 = vmul.f32 %v2404, 0.1
    %v2475 = vadd.f32 %v2403, %v2474
    %v2476 = vmul.f32 %v2405, 0.1
    %v2477 = vadd.f32 %v2404, %v2476
    %v2478 = vmul.f32 %v2477, 0.1
    %v2479 = vadd.f32 %v2475, %v2478
    %v2480 = vadd.f32 %v2479, %v94
    %v2481 = vadd.f32 %v2477, %v97
    %v2482 = vadd.f32 %v2405, %v100
    %v2483 = vrsqrt.pop %v2460
    %v2484 = vmul.f32 %v2483, %v2460
    %v2485 = vmul.f32 %v2484, %v2483
    %v2486 = vmul.f32 0.5, %v2485
    %v2487 = vsub.f32 1.5, %v2486
    %v2488 = vmul.f32 %v2483, %v2487
    %v2489 = vmul.f32 %v2460, %v2488
    %vm2490 = vcmp.eq.f32.partialorder %v2460, inf
    %v2491 = vsel %vm2490, %v2460, %v2489
    %vm2492 = vcmp.eq.f32.partialorder %v2460, 0.0
    %v2493 = vand.u32 %v2460, 2147483648
    %v2494 = vsel %vm2492, %v2493, %v2491
    %v2495 = vrsqrt.pop %v2480
    %v2496 = vmul.f32 %v2495, %v2480
    %v2497 = vmul.f32 %v2496, %v2495
    %v2498 = vmul.f32 0.5, %v2497
    %v2499 = vsub.f32 1.5, %v2498
    %v2500 = vmul.f32 %v2495, %v2499
    %v2501 = vmul.f32 %v2480, %v2500
    %vm2502 = vcmp.eq.f32.partialorder %v2480, inf
    %v2503 = vsel %vm2502, %v2480, %v2501
    %vm2504 = vcmp.eq.f32.partialorder %v2480, 0.0
    %v2505 = vand.u32 %v2480, 2147483648
    %v2506 = vsel %vm2504, %v2505, %v2503
    %v2507 = vmul.f32 %v2460, %v2480
    %v2508 = vrsqrt.pop %v2507
    %v2509 = vmul.f32 %v2508, %v2507
    %v2510 = vmul.f32 %v2509, %v2508
    %v2511 = vmul.f32 0.5, %v2510
    %v2512 = vsub.f32 1.5, %v2511
    %v2513 = vmul.f32 %v2508, %v2512
    %vm2514 = vweird.f32 %v2507
    %vm2515 = vweird.f32 %v2508
    %vm2516 = vmor %vm2514, %vm2515
    %v2517 = vsel %vm2516, %v2508, %v2513
    %v2518 = vmul.f32 %v2468, %v2517
    %s2519 = scalar_lea.vmem [#allocation11], 35
    %2520 = vst [vmem:[%s2519] sm:$0x1] %v2452
    %s2521 = scalar_lea.vmem [#allocation11], 36
    %2522 = vst [vmem:[%s2521] sm:$0x1] %v2453
    %s2523 = scalar_lea.vmem [#allocation11], 37
    %2524 = vst [vmem:[%s2523] sm:$0x1] %v2494
    %s2525 = scalar_lea.vmem [#allocation11], 38
    %2526 = vst [vmem:[%s2525] sm:$0x1] %v2506
    %s2527 = scalar_lea.vmem [#allocation11], 39
    %2528 = vst [vmem:[%s2527] sm:$0x1] %v2518
    %v2529 = vadd.f32 %v2452, %v1912
    %v2530 = vadd.f32 %v2453, %v1914
    %v2531 = vmul.f32 %v2461, 0.1
    %v2532 = vadd.f32 %v2460, %v2531
    %v2533 = vmul.f32 %v2470, 0.1
    %v2534 = vadd.f32 %v2461, %v2533
    %v2535 = vmul.f32 %v2534, 0.1
    %v2536 = vadd.f32 %v2532, %v2535
    %v2537 = vadd.f32 %v2536, %v73
    %v2538 = vadd.f32 %v2534, %v76
    %v2539 = vmul.f32 %v2472, 0.1
    %v2540 = vadd.f32 %v2468, %v2539
    %v2541 = vmul.f32 %v2473, 0.1
    %v2542 = vadd.f32 %v2469, %v2541
    %v2543 = vmul.f32 %v2542, 0.1
    %v2544 = vadd.f32 %v2540, %v2543
    %v2545 = vadd.f32 %v2544, %v79
    %v2546 = vadd.f32 %v2542, %v82
    %v2547 = vadd.f32 %v2470, %v85
    %v2548 = vadd.f32 %v2472, %v2541
    %v2549 = vadd.f32 %v2548, %v88
    %v2550 = vadd.f32 %v2473, %v91
    %v2551 = vmul.f32 %v2481, 0.1
    %v2552 = vadd.f32 %v2480, %v2551
    %v2553 = vmul.f32 %v2482, 0.1
    %v2554 = vadd.f32 %v2481, %v2553
    %v2555 = vmul.f32 %v2554, 0.1
    %v2556 = vadd.f32 %v2552, %v2555
    %v2557 = vadd.f32 %v2556, %v94
    %v2558 = vadd.f32 %v2554, %v97
    %v2559 = vadd.f32 %v2482, %v100
    %v2560 = vrsqrt.pop %v2537
    %v2561 = vmul.f32 %v2560, %v2537
    %v2562 = vmul.f32 %v2561, %v2560
    %v2563 = vmul.f32 0.5, %v2562
    %v2564 = vsub.f32 1.5, %v2563
    %v2565 = vmul.f32 %v2560, %v2564
    %v2566 = vmul.f32 %v2537, %v2565
    %vm2567 = vcmp.eq.f32.partialorder %v2537, inf
    %v2568 = vsel %vm2567, %v2537, %v2566
    %vm2569 = vcmp.eq.f32.partialorder %v2537, 0.0
    %v2570 = vand.u32 %v2537, 2147483648
    %v2571 = vsel %vm2569, %v2570, %v2568
    %v2572 = vrsqrt.pop %v2557
    %v2573 = vmul.f32 %v2572, %v2557
    %v2574 = vmul.f32 %v2573, %v2572
    %v2575 = vmul.f32 0.5, %v2574
    %v2576 = vsub.f32 1.5, %v2575
    %v2577 = vmul.f32 %v2572, %v2576
    %v2578 = vmul.f32 %v2557, %v2577
    %vm2579 = vcmp.eq.f32.partialorder %v2557, inf
    %v2580 = vsel %vm2579, %v2557, %v2578
    %vm2581 = vcmp.eq.f32.partialorder %v2557, 0.0
    %v2582 = vand.u32 %v2557, 2147483648
    %v2583 = vsel %vm2581, %v2582, %v2580
    %v2584 = vmul.f32 %v2537, %v2557
    %v2585 = vrsqrt.pop %v2584
    %v2586 = vmul.f32 %v2585, %v2584
    %v2587 = vmul.f32 %v2586, %v2585
    %v2588 = vmul.f32 0.5, %v2587
    %v2589 = vsub.f32 1.5, %v2588
    %v2590 = vmul.f32 %v2585, %v2589
    %vm2591 = vweird.f32 %v2584
    %vm2592 = vweird.f32 %v2585
    %vm2593 = vmor %vm2591, %vm2592
    %v2594 = vsel %vm2593, %v2585, %v2590
    %v2595 = vmul.f32 %v2545, %v2594
    %s2596 = scalar_lea.vmem [#allocation11], 40
    %2597 = vst [vmem:[%s2596] sm:$0x1] %v2529
    %s2598 = scalar_lea.vmem [#allocation11], 41
    %2599 = vst [vmem:[%s2598] sm:$0x1] %v2530
    %s2600 = scalar_lea.vmem [#allocation11], 42
    %2601 = vst [vmem:[%s2600] sm:$0x1] %v2571
    %s2602 = scalar_lea.vmem [#allocation11], 43
    %2603 = vst [vmem:[%s2602] sm:$0x1] %v2583
    %s2604 = scalar_lea.vmem [#allocation11], 44
    %2605 = vst [vmem:[%s2604] sm:$0x1] %v2595
    %v2606 = vadd.f32 %v2529, %v1912
    %v2607 = vadd.f32 %v2530, %v1914
    %v2608 = vmul.f32 %v2538, 0.1
    %v2609 = vadd.f32 %v2537, %v2608
    %v2610 = vmul.f32 %v2547, 0.1
    %v2611 = vadd.f32 %v2538, %v2610
    %v2612 = vmul.f32 %v2611, 0.1
    %v2613 = vadd.f32 %v2609, %v2612
    %v2614 = vadd.f32 %v2613, %v73
    %v2615 = vadd.f32 %v2611, %v76
    %v2616 = vmul.f32 %v2549, 0.1
    %v2617 = vadd.f32 %v2545, %v2616
    %v2618 = vmul.f32 %v2550, 0.1
    %v2619 = vadd.f32 %v2546, %v2618
    %v2620 = vmul.f32 %v2619, 0.1
    %v2621 = vadd.f32 %v2617, %v2620
    %v2622 = vadd.f32 %v2621, %v79
    %v2623 = vadd.f32 %v2619, %v82
    %v2624 = vadd.f32 %v2547, %v85
    %v2625 = vadd.f32 %v2549, %v2618
    %v2626 = vadd.f32 %v2625, %v88
    %v2627 = vadd.f32 %v2550, %v91
    %v2628 = vmul.f32 %v2558, 0.1
    %v2629 = vadd.f32 %v2557, %v2628
    %v2630 = vmul.f32 %v2559, 0.1
    %v2631 = vadd.f32 %v2558, %v2630
    %v2632 = vmul.f32 %v2631, 0.1
    %v2633 = vadd.f32 %v2629, %v2632
    %v2634 = vadd.f32 %v2633, %v94
    %v2635 = vadd.f32 %v2631, %v97
    %v2636 = vadd.f32 %v2559, %v100
    %v2637 = vrsqrt.pop %v2614
    %v2638 = vmul.f32 %v2637, %v2614
    %v2639 = vmul.f32 %v2638, %v2637
    %v2640 = vmul.f32 0.5, %v2639
    %v2641 = vsub.f32 1.5, %v2640
    %v2642 = vmul.f32 %v2637, %v2641
    %v2643 = vmul.f32 %v2614, %v2642
    %vm2644 = vcmp.eq.f32.partialorder %v2614, inf
    %v2645 = vsel %vm2644, %v2614, %v2643
    %vm2646 = vcmp.eq.f32.partialorder %v2614, 0.0
    %v2647 = vand.u32 %v2614, 2147483648
    %v2648 = vsel %vm2646, %v2647, %v2645
    %v2649 = vrsqrt.pop %v2634
    %v2650 = vmul.f32 %v2649, %v2634
    %v2651 = vmul.f32 %v2650, %v2649
    %v2652 = vmul.f32 0.5, %v2651
    %v2653 = vsub.f32 1.5, %v2652
    %v2654 = vmul.f32 %v2649, %v2653
    %v2655 = vmul.f32 %v2634, %v2654
    %vm2656 = vcmp.eq.f32.partialorder %v2634, inf
    %v2657 = vsel %vm2656, %v2634, %v2655
    %vm2658 = vcmp.eq.f32.partialorder %v2634, 0.0
    %v2659 = vand.u32 %v2634, 2147483648
    %v2660 = vsel %vm2658, %v2659, %v2657
    %v2661 = vmul.f32 %v2614, %v2634
    %v2662 = vrsqrt.pop %v2661
    %v2663 = vmul.f32 %v2662, %v2661
    %v2664 = vmul.f32 %v2663, %v2662
    %v2665 = vmul.f32 0.5, %v2664
    %v2666 = vsub.f32 1.5, %v2665
    %v2667 = vmul.f32 %v2662, %v2666
    %vm2668 = vweird.f32 %v2661
    %vm2669 = vweird.f32 %v2662
    %vm2670 = vmor %vm2668, %vm2669
    %v2671 = vsel %vm2670, %v2662, %v2667
    %v2672 = vmul.f32 %v2622, %v2671
    %s2673 = scalar_lea.vmem [#allocation11], 45
    %2674 = vst [vmem:[%s2673] sm:$0x1] %v2606
    %s2675 = scalar_lea.vmem [#allocation11], 46
    %2676 = vst [vmem:[%s2675] sm:$0x1] %v2607
    %s2677 = scalar_lea.vmem [#allocation11], 47
    %2678 = vst [vmem:[%s2677] sm:$0x1] %v2648
    %s2679 = scalar_lea.vmem [#allocation11], 48
    %2680 = vst [vmem:[%s2679] sm:$0x1] %v2660
    %s2681 = scalar_lea.vmem [#allocation11], 49
    %2682 = vst [vmem:[%s2681] sm:$0x1] %v2672
    %v2683 = vadd.f32 %v2606, %v1912
    %v2684 = vadd.f32 %v2607, %v1914
    %v2685 = vmul.f32 %v2615, 0.1
    %v2686 = vadd.f32 %v2614, %v2685
    %v2687 = vmul.f32 %v2624, 0.1
    %v2688 = vadd.f32 %v2615, %v2687
    %v2689 = vmul.f32 %v2688, 0.1
    %v2690 = vadd.f32 %v2686, %v2689
    %v2691 = vadd.f32 %v2690, %v73
    %v2692 = vadd.f32 %v2688, %v76
    %v2693 = vmul.f32 %v2626, 0.1
    %v2694 = vadd.f32 %v2622, %v2693
    %v2695 = vmul.f32 %v2627, 0.1
    %v2696 = vadd.f32 %v2623, %v2695
    %v2697 = vmul.f32 %v2696, 0.1
    %v2698 = vadd.f32 %v2694, %v2697
    %v2699 = vadd.f32 %v2698, %v79
    %v2700 = vadd.f32 %v2696, %v82
    %v2701 = vadd.f32 %v2624, %v85
    %v2702 = vadd.f32 %v2626, %v2695
    %v2703 = vadd.f32 %v2702, %v88
    %v2704 = vadd.f32 %v2627, %v91
    %v2705 = vmul.f32 %v2635, 0.1
    %v2706 = vadd.f32 %v2634, %v2705
    %v2707 = vmul.f32 %v2636, 0.1
    %v2708 = vadd.f32 %v2635, %v2707
    %v2709 = vmul.f32 %v2708, 0.1
    %v2710 = vadd.f32 %v2706, %v2709
    %v2711 = vadd.f32 %v2710, %v94
    %v2712 = vadd.f32 %v2708, %v97
    %v2713 = vadd.f32 %v2636, %v100
    %v2714 = vrsqrt.pop %v2691
    %v2715 = vmul.f32 %v2714, %v2691
    %v2716 = vmul.f32 %v2715, %v2714
    %v2717 = vmul.f32 0.5, %v2716
    %v2718 = vsub.f32 1.5, %v2717
    %v2719 = vmul.f32 %v2714, %v2718
    %v2720 = vmul.f32 %v2691, %v2719
    %vm2721 = vcmp.eq.f32.partialorder %v2691, inf
    %v2722 = vsel %vm2721, %v2691, %v2720
    %vm2723 = vcmp.eq.f32.partialorder %v2691, 0.0
    %v2724 = vand.u32 %v2691, 2147483648
    %v2725 = vsel %vm2723, %v2724, %v2722
    %v2726 = vrsqrt.pop %v2711
    %v2727 = vmul.f32 %v2726, %v2711
    %v2728 = vmul.f32 %v2727, %v2726
    %v2729 = vmul.f32 0.5, %v2728
    %v2730 = vsub.f32 1.5, %v2729
    %v2731 = vmul.f32 %v2726, %v2730
    %v2732 = vmul.f32 %v2711, %v2731
    %vm2733 = vcmp.eq.f32.partialorder %v2711, inf
    %v2734 = vsel %vm2733, %v2711, %v2732
    %vm2735 = vcmp.eq.f32.partialorder %v2711, 0.0
    %v2736 = vand.u32 %v2711, 2147483648
    %v2737 = vsel %vm2735, %v2736, %v2734
    %v2738 = vmul.f32 %v2691, %v2711
    %v2739 = vrsqrt.pop %v2738
    %v2740 = vmul.f32 %v2739, %v2738
    %v2741 = vmul.f32 %v2740, %v2739
    %v2742 = vmul.f32 0.5, %v2741
    %v2743 = vsub.f32 1.5, %v2742
    %v2744 = vmul.f32 %v2739, %v2743
    %vm2745 = vweird.f32 %v2738
    %vm2746 = vweird.f32 %v2739
    %vm2747 = vmor %vm2745, %vm2746
    %v2748 = vsel %vm2747, %v2739, %v2744
    %v2749 = vmul.f32 %v2699, %v2748
    %s2750 = scalar_lea.vmem [#allocation11], 50
    %2751 = vst [vmem:[%s2750] sm:$0x1] %v2683
    %s2752 = scalar_lea.vmem [#allocation11], 51
    %2753 = vst [vmem:[%s2752] sm:$0x1] %v2684
    %s2754 = scalar_lea.vmem [#allocation11], 52
    %2755 = vst [vmem:[%s2754] sm:$0x1] %v2725
    %s2756 = scalar_lea.vmem [#allocation11], 53
    %2757 = vst [vmem:[%s2756] sm:$0x1] %v2737
    %s2758 = scalar_lea.vmem [#allocation11], 54
    %2759 = vst [vmem:[%s2758] sm:$0x1] %v2749
    %v2760 = vadd.f32 %v2683, %v1912
    %v2761 = vadd.f32 %v2684, %v1914
    %v2762 = vmul.f32 %v2692, 0.1
    %v2763 = vadd.f32 %v2691, %v2762
    %v2764 = vmul.f32 %v2701, 0.1
    %v2765 = vadd.f32 %v2692, %v2764
    %v2766 = vmul.f32 %v2765, 0.1
    %v2767 = vadd.f32 %v2763, %v2766
    %v2768 = vadd.f32 %v2767, %v73
    %v2769 = vmul.f32 %v2703, 0.1
    %v2770 = vadd.f32 %v2699, %v2769
    %v2771 = vmul.f32 %v2704, 0.1
    %v2772 = vadd.f32 %v2700, %v2771
    %v2773 = vmul.f32 %v2772, 0.1
    %v2774 = vadd.f32 %v2770, %v2773
    %v2775 = vadd.f32 %v2774, %v79
    %v2776 = vmul.f32 %v2712, 0.1
    %v2777 = vadd.f32 %v2711, %v2776
    %v2778 = vmul.f32 %v2713, 0.1
    %v2779 = vadd.f32 %v2712, %v2778
    %v2780 = vmul.f32 %v2779, 0.1
    %v2781 = vadd.f32 %v2777, %v2780
    %v2782 = vadd.f32 %v2781, %v94
    %v2783 = vrsqrt.pop %v2768
    %v2784 = vmul.f32 %v2783, %v2768
    %v2785 = vmul.f32 %v2784, %v2783
    %v2786 = vmul.f32 0.5, %v2785
    %v2787 = vsub.f32 1.5, %v2786
    %v2788 = vmul.f32 %v2783, %v2787
    %v2789 = vmul.f32 %v2768, %v2788
    %vm2790 = vcmp.eq.f32.partialorder %v2768, inf
    %v2791 = vsel %vm2790, %v2768, %v2789
    %vm2792 = vcmp.eq.f32.partialorder %v2768, 0.0
    %v2793 = vand.u32 %v2768, 2147483648
    %v2794 = vsel %vm2792, %v2793, %v2791
    %v2795 = vrsqrt.pop %v2782
    %v2796 = vmul.f32 %v2795, %v2782
    %v2797 = vmul.f32 %v2796, %v2795
    %v2798 = vmul.f32 0.5, %v2797
    %v2799 = vsub.f32 1.5, %v2798
    %v2800 = vmul.f32 %v2795, %v2799
    %v2801 = vmul.f32 %v2782, %v2800
    %vm2802 = vcmp.eq.f32.partialorder %v2782, inf
    %v2803 = vsel %vm2802, %v2782, %v2801
    %vm2804 = vcmp.eq.f32.partialorder %v2782, 0.0
    %v2805 = vand.u32 %v2782, 2147483648
    %v2806 = vsel %vm2804, %v2805, %v2803
    %v2807 = vmul.f32 %v2768, %v2782
    %v2808 = vrsqrt.pop %v2807
    %v2809 = vmul.f32 %v2808, %v2807
    %v2810 = vmul.f32 %v2809, %v2808
    %v2811 = vmul.f32 0.5, %v2810
    %v2812 = vsub.f32 1.5, %v2811
    %v2813 = vmul.f32 %v2808, %v2812
    %vm2814 = vweird.f32 %v2807
    %vm2815 = vweird.f32 %v2808
    %vm2816 = vmor %vm2814, %vm2815
    %v2817 = vsel %vm2816, %v2808, %v2813
    %v2818 = vmul.f32 %v2775, %v2817
    %s2819 = scalar_lea.vmem [#allocation11], 55
    %2820 = vst [vmem:[%s2819] sm:$0x1] %v2760
    %s2821 = scalar_lea.vmem [#allocation11], 56
    %2822 = vst [vmem:[%s2821] sm:$0x1] %v2761
    %s2823 = scalar_lea.vmem [#allocation11], 57
    %2824 = vst [vmem:[%s2823] sm:$0x1] %v2794
    %s2825 = scalar_lea.vmem [#allocation11], 58
    %2826 = vst [vmem:[%s2825] sm:$0x1] %v2806
    %s2827 = scalar_lea.vmem [#allocation11], 59
    %2828 = vst [vmem:[%s2827] sm:$0x1] %v2818
    // Predicated region
    $region34: #{tpu_custom_call.1} parent=1 // pred_check
      _
    $region35: #{tpu_custom_call.1} parent=1 // pred_check_branch
      %2830 = sbr.rel (0) target = $region37
    $region36: #{tpu_custom_call.1} parent=1 // pred_region
      %2832 = vsyncadd [#allocation4], 0
      %s2833 = sshll.u32 [#allocation11], 4
      %s2834 = int_to_ptr.vmem [resolvable:$true] %s2833
      %s2835 = sshll.u32 %s4, 4
      %s2836 = int_to_ptr.hbm [resolvable:$true] %s2835
      %2841 = dma.vmem_to_hbm [thread:$0]  %s2834, 960, %s2836, [#allocation4], 16, 16, 1
    $region37: #{tpu_custom_call.1} parent=1 // pred_fallthru
      _
    // Predicated region
    $region38: #{tpu_custom_call.1} parent=1 // pred_check
      _
    $region39: #{tpu_custom_call.1} parent=1 // pred_check_branch
      %2843 = sbr.rel (0) target = $region41
    $region40: #{tpu_custom_call.1} parent=1 // pred_region
      %2845 = dma.done [#allocation4], 960
    $region41: #{tpu_custom_call.1} parent=1 // pred_fallthru
      _
    %2846 = vsyncpa [#allocation3], 1
    %2847 = vsyncpa [#allocation4], 1
    %2848 = vsyncpa [#allocation5], 1
    %2849 = vsyncpa [#allocation8], 1
    %2850 = vsyncpa [#allocation6], 1

</llo_original>
